<compile_context>
chip_gen: v5e
topology: v5e:2x2
jax: 0.10.0
libtpu: 0.0.40
codegen_flags: <defaults>
</compile_context>

<pallas_src>
import functools
from typing import NamedTuple

import jax
import jax.numpy as jnp
from jax.experimental import pallas as pl
from jax.experimental.pallas import tpu as pltpu


def _round_up(n, m):
    return ((n + m - 1) // m) * m


def _vmem_capacity_bytes():
    try:
        return int(pltpu.get_tpu_info().vmem_capacity_bytes)
    except Exception:
        return 64 << 20  # conservative: v7x per-TensorCore VMEM


def _default_count_dtype():
    # bf16 VALU is native on v6e/v7x (packed (16,128) vregs -> ~half the compare/add work
    # of the count loop); counts <= C so bf16 is exact.  v5e and older: keep f32.
    try:
        kind = jax.devices()[0].device_kind.lower()
    except Exception:
        return jnp.float32
    if "v6" in kind or "v7" in kind or "7x" in kind:
        return jnp.bfloat16
    return jnp.float32


def _largest_divisor_tile(Vp, max_rows):
    """Largest multiple-of-128 divisor of Vp that is <= max_rows (at least 128)."""
    m = Vp // 128
    max_d = max(1, max_rows // 128)
    best = 1
    for d in range(1, m + 1):
        if m % d == 0 and d <= max_d:
            best = d
    return 128 * best


def _choose_v_tile(Vp, Dp, vmem_cap):
    emb_bytes = Vp * Dp * 2                       # bf16 table
    if emb_bytes <= vmem_cap // 3:                # fits resident (single-buffered)
        return Vp
    # Stream double-buffered (v_tile, Dp) slabs within ~1/3 of the per-core budget.
    slab_rows = max(128, (vmem_cap // 3) // (2 * Dp * 2))
    return _largest_divisor_tile(Vp, slab_rows)


def _sde_kernel(chars_ref, emb_ref, latent_ref, out_ref, acc_ref, *,
                pad_token_id, num_latent, count_dtype):
    v = pl.program_id(1)
    nv = pl.num_programs(1)

    chars = chars_ref[...]                                   # (tn, C) int32
    tn, C = chars.shape
    Vt, Dp = emb_ref.shape
    Kp, _ = latent_ref.shape

    @pl.when(v == 0)
    def _():
        acc_ref[...] = jnp.zeros_like(acc_ref)

    # Pad chars remapped to -1: they never match any vocab id, so this (tn, C) select is
    # the entire pad-masking step (no (tn, Vp) column zeroing, and correctness does not
    # depend on emb[pad_token_id] being zero).
    chars_cmp = jnp.where(chars == pad_token_id, jnp.int32(-1), chars)

    # Streamed one-hot counts for this vocab slab: (tn, Vt), pure VPU compare+add.
    # TODO(synk): for very large vocabs (Vp >~ 1-2K) replace this one-hot + MXU matmul with a
    # scalar-prefetch / manual-DMA gather of the C embedding rows per token from an
    # HBM-resident (memory_space=pl.ANY) table; the one-hot path does ~Vp/C x the needed FLOPs.
    v_base = v * Vt
    vocab_iota = jax.lax.broadcasted_iota(jnp.int32, (tn, Vt), 1) + v_base
    counts = jnp.zeros((tn, Vt), count_dtype)
    for c in range(C):                  # C is small & static -> unrolled compare+add
        counts += (chars_cmp[:, c:c + 1] == vocab_iota).astype(count_dtype)

    # Partial sum of non-pad char embeddings via one MXU matmul (bf16 x bf16 -> f32 acc).
    acc_ref[...] += jnp.dot(counts.astype(jnp.bfloat16), emb_ref[...],
                            preferred_element_type=jnp.float32)        # (tn, Dp)

    @pl.when(v == nv - 1)
    def _():
        non_pad = (chars != pad_token_id).astype(jnp.float32)          # (tn, C)
        char_counts = jnp.maximum(non_pad.sum(axis=1, keepdims=True), 1.0)  # clamp(min=1)
        inv_cnt = pl.reciprocal(char_counts, approx=True)              # EUP slot, ~free
        lang = jnp.tanh(acc_ref[...] * inv_cnt)                        # (tn, Dp) f32

        latent = latent_ref[...]                                       # (Kp, Dp) bf16
        # latent_scores = lang @ latent.T (contract D with D), bf16 x bf16 -> f32.
        scores = jax.lax.dot_general(lang.astype(jnp.bfloat16), latent,
                                     (((1,), (1,)), ((), ())),
                                     preferred_element_type=jnp.float32)  # (tn, Kp)
        if Kp > num_latent:
            # Hoisted (1, Kp) additive bias keeps zero-padded latent rows out of the softmax.
            bias = jnp.where(
                jax.lax.broadcasted_iota(jnp.int32, (1, Kp), 1) >= num_latent,
                jnp.float32(-1e30), jnp.float32(0.0))
            scores = scores + bias

        m = jnp.max(scores, axis=-1, keepdims=True)
        e = jnp.exp(scores - m)
        inv_den = pl.reciprocal(jnp.sum(e, axis=-1, keepdims=True), approx=True)
        probs = e * inv_den                                            # softmax(dim=-1)

        latent_emb = jnp.dot(probs.astype(jnp.bfloat16), latent,
                             preferred_element_type=jnp.float32)       # (tn, Dp)

        out_ref[...] = (lang + latent_emb).astype(out_ref.dtype)


class SDETables(NamedTuple):
    emb: jax.Array          # (Vp, Dp) bf16, zero padded to multiples of 128
    lat: jax.Array          # (Kp, Dp) bf16, zero padded to multiples of 128
    vocab_size: int
    dim: int
    num_latent: int


def prepare_sde_tables(char_emb_table, latent_mat):
    """One-time prep: pad tables to lane-dense multiple-of-128 slabs and cast to bf16.

    Hoisted out of sde_forward so each call only pads the char ids; the full-table
    HBM read/write + f32->bf16 convert happens once (cache/reuse the result).
    """
    V, D = char_emb_table.shape
    K, _ = latent_mat.shape
    Dp = _round_up(D, 128)
    Vp = _round_up(V, 128)
    Kp = _round_up(K, 128)
    emb = jnp.pad(char_emb_table, ((0, Vp - V), (0, Dp - D))).astype(jnp.bfloat16)
    lat = jnp.pad(latent_mat, ((0, Kp - K), (0, Dp - D))).astype(jnp.bfloat16)
    return SDETables(emb=emb, lat=lat, vocab_size=V, dim=D, num_latent=K)


def sde_forward(x, tables, pad_token_id, *, token_tile=256, v_tile=None,
                out_dtype=jnp.float32, count_dtype=None):
    """x: (B, L, C) int32 char-ngram ids.  Returns (B, L, D) SDE embeddings.

    token_tile: 256 is a good default on every generation (fills the MXU M dim, amortizes
      the ~0.35 us/grid-step overhead); sweep 512-1024 on v6e if B*L is large.
    v_tile: vocab tile; None -> auto (table resident + single-buffered when it fits ~1/3 of
      per-core VMEM, otherwise streamed in double-buffered slabs over an inner
      "arbitrary" grid axis with a VMEM accumulator).
    out_dtype: float32 matches the PyTorch module; pass bfloat16 if downstream accepts it --
      the (Np, Dp) output slab is this kernel's dominant HBM writeback.
    Note: char ids outside [0, V) contribute nothing (no gather clamp), unlike a raw gather.
    """
    B, L, C = x.shape
    V, D, K = tables.vocab_size, tables.dim, tables.num_latent
    Vp, Dp = tables.emb.shape
    Kp, _ = tables.lat.shape
    N = B * L

    if count_dtype is None:
        count_dtype = _default_count_dtype()

    Np = _round_up(N, token_tile)        # pad tokens -> no divisibility constraint / tail mask
    chars = x.reshape(N, C).astype(jnp.int32)
    chars = jnp.pad(chars, ((0, Np - N), (0, 0)), constant_values=pad_token_id)

    vmem_cap = _vmem_capacity_bytes()
    if v_tile is None:
        v_tile = _choose_v_tile(Vp, Dp, vmem_cap)
    else:
        v_tile = _largest_divisor_tile(Vp, max(128, int(v_tile)))
    v_tile = min(v_tile, Vp)

    n_tok = Np // token_tile
    nv = Vp // v_tile
    emb_resident = nv == 1

    kernel = functools.partial(_sde_kernel, pad_token_id=int(pad_token_id),
                               num_latent=K, count_dtype=count_dtype)

    out_isz = jnp.dtype(out_dtype).itemsize
    cnt_isz = jnp.dtype(count_dtype).itemsize

    # Advisory cost so XLA does not schedule around the call as if it were free.
    flops = int(2 * Np * Dp * (Vp + 2 * Kp))
    transcendentals = int(Np * (Dp + Kp))
    emb_reads = 1 if emb_resident else n_tok
    bytes_accessed = int(Np * C * 4 + emb_reads * Vp * Dp * 2 + Kp * Dp * 2
                         + Np * Dp * out_isz)

    # Per-TensorCore VMEM budget: resident tables single-buffered, streamed emb slabs
    # double-buffered, plus the f32 accumulator and live elementwise intermediates.
    emb_vmem = Vp * Dp * 2 if emb_resident else 2 * v_tile * Dp * 2
    vmem_need = (2 * token_tile * C * 4                       # chars tiles
                 + 2 * token_tile * Dp * out_isz              # output tiles
                 + emb_vmem                                    # emb table / slabs
                 + Kp * Dp * 2                                 # latent (single-buffered)
                 + token_tile * Dp * 4                         # acc scratch
                 + token_tile * (v_tile * cnt_isz + 3 * Kp * 4 + 3 * Dp * 4))
    vmem_limit = int(max(32 << 20,
                         min(int(1.5 * vmem_need) + (4 << 20), vmem_cap - (8 << 20))))

    def build(single_buffer_tables):
        lat_kwargs = {}
        emb_kwargs = {}
        if single_buffer_tables:
            # Constant-index resident blocks: the second pipeline buffer is pure waste.
            lat_kwargs = dict(pipeline_mode=pl.Buffered(1))
            if emb_resident:
                emb_kwargs = dict(pipeline_mode=pl.Buffered(1))
        in_specs = [
            pl.BlockSpec((token_tile, C), lambda i, v: (i, 0)),            # char ids tile
            pl.BlockSpec((v_tile, Dp), lambda i, v: (v, 0), **emb_kwargs),  # emb table / slab
            pl.BlockSpec((Kp, Dp), lambda i, v: (0, 0), **lat_kwargs),      # latent (resident)
        ]
        out_spec = pl.BlockSpec((token_tile, Dp), lambda i, v: (i, 0))
        return pl.pallas_call(
            kernel,
            out_shape=jax.ShapeDtypeStruct((Np, Dp), out_dtype),
            grid_spec=pltpu.PrefetchScalarGridSpec(
                num_scalar_prefetch=0,
                grid=(n_tok, nv),
                in_specs=in_specs,
                out_specs=out_spec,
                scratch_shapes=[pltpu.VMEM((token_tile, Dp), jnp.float32)]),
            compiler_params=pltpu.CompilerParams(
                dimension_semantics=("parallel", "arbitrary"),
                vmem_limit_bytes=vmem_limit),
            cost_estimate=pl.CostEstimate(flops=flops,
                                          transcendentals=transcendentals,
                                          bytes_accessed=bytes_accessed),
        )

    try:
        out = build(single_buffer_tables=True)(chars, tables.emb, tables.lat)
    except Exception:
        # pipeline_mode=pl.Buffered(1) not supported on this jax version: default buffering.
        out = build(single_buffer_tables=False)(chars, tables.emb, tables.lat)

    return out[:N, :D].reshape(B, L, D)


def sde_reference(x, char_emb_table, latent_mat, pad_token_id):
    """Pure-JAX f32 reference mirroring the PyTorch forward exactly."""
    B, L, C = x.shape
    chars = x.reshape(-1, C)
    char_embs = char_emb_table[chars]                        # (N, C, D)
    pad_mask = chars == pad_token_id
    char_embs = jnp.where(pad_mask[..., None], 0.0, char_embs)
    s = char_embs.sum(axis=1)
    cnt = jnp.maximum((~pad_mask).sum(axis=-1), 1)
    lang = jnp.tanh(s / cnt[:, None])
    scores = lang @ latent_mat.T
    probs = jax.nn.softmax(scores, axis=-1)
    out = lang + probs @ latent_mat
    return out.reshape(B, L, -1)


if __name__ == "__main__":
    # Small, deterministic config.
    vocab_size = 64       # char-ngram vocab
    dim = 32              # embedding dim
    latent = 128          # latent matrix rows
    pad_token_id = 0
    B, L, C = 2, 8, 8     # batch, seq len, max chars per token

    key = jax.random.PRNGKey(0)
    k_emb, k_lat, k_ids, k_pad = jax.random.split(key, 4)

    # nn.Embedding default init ~ N(0,1); padding row zeroed (as in reset_parameters).
    char_emb_table = jax.random.normal(k_emb, (vocab_size, dim), dtype=jnp.float32)
    char_emb_table = char_emb_table.at[pad_token_id].set(0.0)

    # nn.init.normal_(latent_mat, mean=0, std=latent**-0.5)
    latent_mat = (latent ** -0.5) * jax.random.normal(k_lat, (latent, dim), dtype=jnp.float32)

    # Random char ids in [1, V); sprinkle some pad positions to exercise masking.
    ids = jax.random.randint(k_ids, (B, L, C), 1, vocab_size, dtype=jnp.int32)
    pad_positions = jax.random.bernoulli(k_pad, 0.3, (B, L, C))
    x = jnp.where(pad_positions, pad_token_id, ids).astype(jnp.int32)

    tables = prepare_sde_tables(char_emb_table, latent_mat)   # one-time table prep (cacheable)
    out = sde_forward(x, tables, pad_token_id)
    out = jax.block_until_ready(out)

    ref = sde_reference(x, char_emb_table, latent_mat, pad_token_id)
    assert out.shape == (B, L, dim)
    # bf16 MXU operands + approx reciprocals are a deliberate precision tradeoff
    # (f32 accumulation kept); tolerance loosened accordingly vs the f32 reference.
    assert jnp.allclose(out, ref, atol=5e-2, rtol=5e-2), "mismatch vs reference"

    print("KERNEL_OK")
</pallas_src>

<mosaic_0001>
module attributes {stable_mosaic.version = 11 : i64} {
  func.func @_sde_kernel(%arg0: i32, %arg1: i32, %arg2: memref<256x8xi32, #tpu.memory_space<vmem>>, %arg3: memref<128x128xbf16, #tpu.memory_space<vmem>>, %arg4: memref<128x128xbf16, #tpu.memory_space<vmem>>, %arg5: memref<256x128xf32, #tpu.memory_space<vmem>>, %arg6: memref<256x128xf32, #tpu.memory_space<vmem>>) attributes {dimension_semantics = [#tpu.dimension_semantics<parallel>, #tpu.dimension_semantics<arbitrary>], iteration_bounds = array<i64: 1, 1>, scalar_prefetch = 0 : i64, scratch_operands = 1 : i64, tpu.core_type = #tpu.core_type<tc>, window_params = [{transform_indices = @transform_0, window_bounds = array<i64: 256, 8>}, {pipeline_mode = #tpu.pipeline_mode<synchronous>, transform_indices = @transform_1, window_bounds = array<i64: 128, 128>}, {pipeline_mode = #tpu.pipeline_mode<synchronous>, transform_indices = @transform_2, window_bounds = array<i64: 128, 128>}, {transform_indices = @transform_3, window_bounds = array<i64: 256, 128>}]} {
    %c0 = arith.constant 0 : index
    %c0_0 = arith.constant 0 : index
    %0 = vector.load %arg2[%c0, %c0_0] : memref<256x8xi32, #tpu.memory_space<vmem>>, vector<256x8xi32>
    %c0_i32 = arith.constant 0 : i32
    %1 = arith.cmpi eq, %arg1, %c0_i32 : i32
    %2 = arith.extui %1 : i1 to i32
    %c0_i32_1 = arith.constant 0 : i32
    %3 = arith.cmpi ne, %2, %c0_i32_1 : i32
    scf.if %3 {
      %cst_12 = arith.constant 0.000000e+00 : f32
      %70 = vector.broadcast %cst_12 : f32 to vector<256x128xf32>
      %c0_13 = arith.constant 0 : index
      %c0_14 = arith.constant 0 : index
      %71 = vector.load %arg6[%c0_13, %c0_14] : memref<256x128xf32, #tpu.memory_space<vmem>>, vector<256x128xf32>
      tpu.vector_store %arg6[%c0_13, %c0_14], %70 {strides = array<i32>} : memref<256x128xf32, #tpu.memory_space<vmem>>, vector<256x128xf32>,
    } else {
    }
    %c0_i32_2 = arith.constant 0 : i32
    %4 = vector.broadcast %c0_i32_2 : i32 to vector<256x8xi32>
    %5 = arith.cmpi eq, %0, %4 : vector<256x8xi32>
    %c-1_i32 = arith.constant -1 : i32
    %6 = vector.broadcast %c-1_i32 : i32 to vector<256x8xi32>
    %7 = arith.select %5, %6, %0 : vector<256x8xi1>, vector<256x8xi32>
    %c128_i32 = arith.constant 128 : i32
    %8 = arith.muli %arg1, %c128_i32 : i32
    %9 = tpu.iota {dimensions = array<i32: 1>} : vector<256x128xi32>
    %10 = vector.broadcast %8 : i32 to vector<256x128xi32>
    %11 = arith.addi %9, %10 : vector<256x128xi32>
    %cst = arith.constant 0.000000e+00 : f32
    %12 = vector.broadcast %cst : f32 to vector<256x128xf32>
    %13 = vector.extract_strided_slice %7 {offsets = [0, 0], sizes = [256, 1], strides = [1, 1]} : vector<256x8xi32> to vector<256x1xi32>
    %14 = vector.broadcast %13 : vector<256x1xi32> to vector<256x128xi32>
    %15 = arith.cmpi eq, %14, %11 : vector<256x128xi32>
    %16 = arith.extui %15 : vector<256x128xi1> to vector<256x128xi32>
    %17 = arith.sitofp %16 : vector<256x128xi32> to vector<256x128xf32>
    %18 = arith.addf %12, %17 : vector<256x128xf32>
    %19 = vector.extract_strided_slice %7 {offsets = [0, 1], sizes = [256, 1], strides = [1, 1]} : vector<256x8xi32> to vector<256x1xi32>
    %20 = vector.broadcast %19 : vector<256x1xi32> to vector<256x128xi32>
    %21 = arith.cmpi eq, %20, %11 : vector<256x128xi32>
    %22 = arith.extui %21 : vector<256x128xi1> to vector<256x128xi32>
    %23 = arith.sitofp %22 : vector<256x128xi32> to vector<256x128xf32>
    %24 = arith.addf %18, %23 : vector<256x128xf32>
    %25 = vector.extract_strided_slice %7 {offsets = [0, 2], sizes = [256, 1], strides = [1, 1]} : vector<256x8xi32> to vector<256x1xi32>
    %26 = vector.broadcast %25 : vector<256x1xi32> to vector<256x128xi32>
    %27 = arith.cmpi eq, %26, %11 : vector<256x128xi32>
    %28 = arith.extui %27 : vector<256x128xi1> to vector<256x128xi32>
    %29 = arith.sitofp %28 : vector<256x128xi32> to vector<256x128xf32>
    %30 = arith.addf %24, %29 : vector<256x128xf32>
    %31 = vector.extract_strided_slice %7 {offsets = [0, 3], sizes = [256, 1], strides = [1, 1]} : vector<256x8xi32> to vector<256x1xi32>
    %32 = vector.broadcast %31 : vector<256x1xi32> to vector<256x128xi32>
    %33 = arith.cmpi eq, %32, %11 : vector<256x128xi32>
    %34 = arith.extui %33 : vector<256x128xi1> to vector<256x128xi32>
    %35 = arith.sitofp %34 : vector<256x128xi32> to vector<256x128xf32>
    %36 = arith.addf %30, %35 : vector<256x128xf32>
    %37 = vector.extract_strided_slice %7 {offsets = [0, 4], sizes = [256, 1], strides = [1, 1]} : vector<256x8xi32> to vector<256x1xi32>
    %38 = vector.broadcast %37 : vector<256x1xi32> to vector<256x128xi32>
    %39 = arith.cmpi eq, %38, %11 : vector<256x128xi32>
    %40 = arith.extui %39 : vector<256x128xi1> to vector<256x128xi32>
    %41 = arith.sitofp %40 : vector<256x128xi32> to vector<256x128xf32>
    %42 = arith.addf %36, %41 : vector<256x128xf32>
    %43 = vector.extract_strided_slice %7 {offsets = [0, 5], sizes = [256, 1], strides = [1, 1]} : vector<256x8xi32> to vector<256x1xi32>
    %44 = vector.broadcast %43 : vector<256x1xi32> to vector<256x128xi32>
    %45 = arith.cmpi eq, %44, %11 : vector<256x128xi32>
    %46 = arith.extui %45 : vector<256x128xi1> to vector<256x128xi32>
    %47 = arith.sitofp %46 : vector<256x128xi32> to vector<256x128xf32>
    %48 = arith.addf %42, %47 : vector<256x128xf32>
    %49 = vector.extract_strided_slice %7 {offsets = [0, 6], sizes = [256, 1], strides = [1, 1]} : vector<256x8xi32> to vector<256x1xi32>
    %50 = vector.broadcast %49 : vector<256x1xi32> to vector<256x128xi32>
    %51 = arith.cmpi eq, %50, %11 : vector<256x128xi32>
    %52 = arith.extui %51 : vector<256x128xi1> to vector<256x128xi32>
    %53 = arith.sitofp %52 : vector<256x128xi32> to vector<256x128xf32>
    %54 = arith.addf %48, %53 : vector<256x128xf32>
    %55 = vector.extract_strided_slice %7 {offsets = [0, 7], sizes = [256, 1], strides = [1, 1]} : vector<256x8xi32> to vector<256x1xi32>
    %56 = vector.broadcast %55 : vector<256x1xi32> to vector<256x128xi32>
    %57 = arith.cmpi eq, %56, %11 : vector<256x128xi32>
    %58 = arith.extui %57 : vector<256x128xi1> to vector<256x128xi32>
    %59 = arith.sitofp %58 : vector<256x128xi32> to vector<256x128xf32>
    %60 = arith.addf %54, %59 : vector<256x128xf32>
    %c0_3 = arith.constant 0 : index
    %c0_4 = arith.constant 0 : index
    %61 = vector.load %arg6[%c0_3, %c0_4] : memref<256x128xf32, #tpu.memory_space<vmem>>, vector<256x128xf32>
    %62 = arith.truncf %60 : vector<256x128xf32> to vector<256x128xbf16>
    %c0_5 = arith.constant 0 : index
    %c0_6 = arith.constant 0 : index
    %63 = vector.load %arg3[%c0_5, %c0_6] : memref<128x128xbf16, #tpu.memory_space<vmem>>, vector<128x128xbf16>
    %cst_7 = arith.constant dense<0.000000e+00> : vector<256x128xf32>
    %64 = tpu.matmul %62, %63, %cst_7 {dimension_numbers = #tpu.dot_dimension_numbers<[1], [0], [0], [1], [0, 0, 1, 1], [], []>} : vector<256x128xbf16>, vector<128x128xbf16>, vector<256x128xf32> -> vector<256x128xf32>
    %65 = arith.addf %61, %64 : vector<256x128xf32>
    %c0_8 = arith.constant 0 : index
    %c0_9 = arith.constant 0 : index
    %66 = vector.load %arg6[%c0_8, %c0_9] : memref<256x128xf32, #tpu.memory_space<vmem>>, vector<256x128xf32>
    tpu.vector_store %arg6[%c0_8, %c0_9], %65 {strides = array<i32>} : memref<256x128xf32, #tpu.memory_space<vmem>>, vector<256x128xf32>,
    %c0_i32_10 = arith.constant 0 : i32
    %67 = arith.cmpi eq, %arg1, %c0_i32_10 : i32
    %68 = arith.extui %67 : i1 to i32
    %c0_i32_11 = arith.constant 0 : i32
    %69 = arith.cmpi ne, %68, %c0_i32_11 : i32
    scf.if %69 {
      %c0_i32_12 = arith.constant 0 : i32
      %70 = vector.broadcast %c0_i32_12 : i32 to vector<256x8xi32>
      %71 = arith.cmpi ne, %0, %70 : vector<256x8xi32>
      %72 = arith.extui %71 : vector<256x8xi1> to vector<256x8xi32>
      %73 = arith.sitofp %72 : vector<256x8xi32> to vector<256x8xf32>
      %cst_13 = arith.constant dense<0.000000e+00> : vector<256xf32>
      %74 = vector.multi_reduction <add>, %73, %cst_13 [1] : vector<256x8xf32> to vector<256xf32>
      %75 = vector.shape_cast %74 : vector<256xf32> to vector<256x1xf32>
      %cst_14 = arith.constant 1.000000e+00 : f32
      %76 = vector.broadcast %cst_14 : f32 to vector<256x1xf32>
      %77 = arith.maximumf %75, %76 : vector<256x1xf32>
      %78 = tpu.reciprocal %77 {approx = true} : vector<256x1xf32> -> vector<256x1xf32>
      %c0_15 = arith.constant 0 : index
      %c0_16 = arith.constant 0 : index
      %79 = vector.load %arg6[%c0_15, %c0_16] : memref<256x128xf32, #tpu.memory_space<vmem>>, vector<256x128xf32>
      %80 = vector.broadcast %78 : vector<256x1xf32> to vector<256x128xf32>
      %81 = arith.mulf %79, %80 : vector<256x128xf32>
      %82 = math.tanh %81 : vector<256x128xf32>
      %c0_17 = arith.constant 0 : index
      %c0_18 = arith.constant 0 : index
      %83 = vector.load %arg4[%c0_17, %c0_18] : memref<128x128xbf16, #tpu.memory_space<vmem>>, vector<128x128xbf16>
      %84 = arith.truncf %82 : vector<256x128xf32> to vector<256x128xbf16>
      %cst_19 = arith.constant dense<0.000000e+00> : vector<256x128xf32>
      %85 = tpu.matmul %84, %83, %cst_19 {dimension_numbers = #tpu.dot_dimension_numbers<[1], [1], [0], [0], [0, 0, 1, 0], [], []>} : vector<256x128xbf16>, vector<128x128xbf16>, vector<256x128xf32> -> vector<256x128xf32>
      %cst_20 = arith.constant dense<0xFF800000> : vector<256xf32>
      %86 = vector.multi_reduction <maximumf>, %85, %cst_20 [1] : vector<256x128xf32> to vector<256xf32>
      %87 = vector.shape_cast %86 : vector<256xf32> to vector<256x1xf32>
      %88 = vector.broadcast %87 : vector<256x1xf32> to vector<256x128xf32>
      %89 = arith.subf %85, %88 : vector<256x128xf32>
      %90 = math.exp %89 : vector<256x128xf32>
      %cst_21 = arith.constant dense<0.000000e+00> : vector<256xf32>
      %91 = vector.multi_reduction <add>, %90, %cst_21 [1] : vector<256x128xf32> to vector<256xf32>
      %92 = vector.shape_cast %91 : vector<256xf32> to vector<256x1xf32>
      %93 = tpu.reciprocal %92 {approx = true} : vector<256x1xf32> -> vector<256x1xf32>
      %94 = vector.broadcast %93 : vector<256x1xf32> to vector<256x128xf32>
      %95 = arith.mulf %90, %94 : vector<256x128xf32>
      %96 = arith.truncf %95 : vector<256x128xf32> to vector<256x128xbf16>
      %cst_22 = arith.constant dense<0.000000e+00> : vector<256x128xf32>
      %97 = tpu.matmul %96, %83, %cst_22 {dimension_numbers = #tpu.dot_dimension_numbers<[1], [0], [0], [1], [0, 0, 1, 1], [], []>} : vector<256x128xbf16>, vector<128x128xbf16>, vector<256x128xf32> -> vector<256x128xf32>
      %98 = arith.addf %82, %97 : vector<256x128xf32>
      %c0_23 = arith.constant 0 : index
      %c0_24 = arith.constant 0 : index
      %99 = vector.load %arg5[%c0_23, %c0_24] : memref<256x128xf32, #tpu.memory_space<vmem>>, vector<256x128xf32>
      tpu.vector_store %arg5[%c0_23, %c0_24], %98 {strides = array<i32>} : memref<256x128xf32, #tpu.memory_space<vmem>>, vector<256x128xf32>,
    } else {
    }
    return
  }
  func.func @transform_0(%arg0: i32, %arg1: i32) -> (i32, i32) {
    %c0_i32 = arith.constant 0 : i32
    %c0_i32_0 = arith.constant 0 : i32
    return %arg0, %c0_i32 : i32, i32
  }
  func.func @transform_1(%arg0: i32, %arg1: i32) -> (i32, i32) {
    %c0_i32 = arith.constant 0 : i32
    %c0_i32_0 = arith.constant 0 : i32
    return %arg1, %c0_i32 : i32, i32
  }
  func.func @transform_2(%arg0: i32, %arg1: i32) -> (i32, i32) {
    %c0_i32 = arith.constant 0 : i32
    %c0_i32_0 = arith.constant 0 : i32
    %c0_i32_1 = arith.constant 0 : i32
    return %c0_i32, %c0_i32_0 : i32, i32
  }
  func.func @transform_3(%arg0: i32, %arg1: i32) -> (i32, i32) {
    %c0_i32 = arith.constant 0 : i32
    %c0_i32_0 = arith.constant 0 : i32
    return %arg0, %c0_i32 : i32, i32
  }
}

module attributes {stable_mosaic.version = 11 : i64} {
  func.func @_sde_kernel(%arg0: i32, %arg1: i32, %arg2: memref<256x8xi32, #tpu.memory_space<vmem>>, %arg3: memref<128x128xbf16, #tpu.memory_space<vmem>>, %arg4: memref<128x128xbf16, #tpu.memory_space<vmem>>, %arg5: memref<256x128xf32, #tpu.memory_space<vmem>>, %arg6: memref<256x128xf32, #tpu.memory_space<vmem>>) attributes {dimension_semantics = [#tpu.dimension_semantics<parallel>, #tpu.dimension_semantics<arbitrary>], iteration_bounds = array<i64: 1, 1>, scalar_prefetch = 0 : i64, scratch_operands = 1 : i64, tpu.core_type = #tpu.core_type<tc>, window_params = [{transform_indices = @transform_0, window_bounds = array<i64: 256, 8>}, {transform_indices = @transform_1, window_bounds = array<i64: 128, 128>}, {pipeline_mode = #tpu.pipeline_mode<synchronous>, transform_indices = @transform_2, window_bounds = array<i64: 128, 128>}, {transform_indices = @transform_3, window_bounds = array<i64: 256, 128>}]} {
    %c0 = arith.constant 0 : index
    %c0_0 = arith.constant 0 : index
    %0 = vector.load %arg2[%c0, %c0_0] : memref<256x8xi32, #tpu.memory_space<vmem>>, vector<256x8xi32>
    %c0_i32 = arith.constant 0 : i32
    %1 = arith.cmpi eq, %arg1, %c0_i32 : i32
    %2 = arith.extui %1 : i1 to i32
    %c0_i32_1 = arith.constant 0 : i32
    %3 = arith.cmpi ne, %2, %c0_i32_1 : i32
    scf.if %3 {
      %cst_12 = arith.constant 0.000000e+00 : f32
      %70 = vector.broadcast %cst_12 : f32 to vector<256x128xf32>
      %c0_13 = arith.constant 0 : index
      %c0_14 = arith.constant 0 : index
      %71 = vector.load %arg6[%c0_13, %c0_14] : memref<256x128xf32, #tpu.memory_space<vmem>>, vector<256x128xf32>
      tpu.vector_store %arg6[%c0_13, %c0_14], %70 {strides = array<i32>} : memref<256x128xf32, #tpu.memory_space<vmem>>, vector<256x128xf32>,
    } else {
    }
    %c0_i32_2 = arith.constant 0 : i32
    %4 = vector.broadcast %c0_i32_2 : i32 to vector<256x8xi32>
    %5 = arith.cmpi eq, %0, %4 : vector<256x8xi32>
    %c-1_i32 = arith.constant -1 : i32
    %6 = vector.broadcast %c-1_i32 : i32 to vector<256x8xi32>
    %7 = arith.select %5, %6, %0 : vector<256x8xi1>, vector<256x8xi32>
    %c128_i32 = arith.constant 128 : i32
    %8 = arith.muli %arg1, %c128_i32 : i32
    %9 = tpu.iota {dimensions = array<i32: 1>} : vector<256x128xi32>
    %10 = vector.broadcast %8 : i32 to vector<256x128xi32>
    %11 = arith.addi %9, %10 : vector<256x128xi32>
    %cst = arith.constant 0.000000e+00 : f32
    %12 = vector.broadcast %cst : f32 to vector<256x128xf32>
    %13 = vector.extract_strided_slice %7 {offsets = [0, 0], sizes = [256, 1], strides = [1, 1]} : vector<256x8xi32> to vector<256x1xi32>
    %14 = vector.broadcast %13 : vector<256x1xi32> to vector<256x128xi32>
    %15 = arith.cmpi eq, %14, %11 : vector<256x128xi32>
    %16 = arith.extui %15 : vector<256x128xi1> to vector<256x128xi32>
    %17 = arith.sitofp %16 : vector<256x128xi32> to vector<256x128xf32>
    %18 = arith.addf %12, %17 : vector<256x128xf32>
    %19 = vector.extract_strided_slice %7 {offsets = [0, 1], sizes = [256, 1], strides = [1, 1]} : vector<256x8xi32> to vector<256x1xi32>
    %20 = vector.broadcast %19 : vector<256x1xi32> to vector<256x128xi32>
    %21 = arith.cmpi eq, %20, %11 : vector<256x128xi32>
    %22 = arith.extui %21 : vector<256x128xi1> to vector<256x128xi32>
    %23 = arith.sitofp %22 : vector<256x128xi32> to vector<256x128xf32>
    %24 = arith.addf %18, %23 : vector<256x128xf32>
    %25 = vector.extract_strided_slice %7 {offsets = [0, 2], sizes = [256, 1], strides = [1, 1]} : vector<256x8xi32> to vector<256x1xi32>
    %26 = vector.broadcast %25 : vector<256x1xi32> to vector<256x128xi32>
    %27 = arith.cmpi eq, %26, %11 : vector<256x128xi32>
    %28 = arith.extui %27 : vector<256x128xi1> to vector<256x128xi32>
    %29 = arith.sitofp %28 : vector<256x128xi32> to vector<256x128xf32>
    %30 = arith.addf %24, %29 : vector<256x128xf32>
    %31 = vector.extract_strided_slice %7 {offsets = [0, 3], sizes = [256, 1], strides = [1, 1]} : vector<256x8xi32> to vector<256x1xi32>
    %32 = vector.broadcast %31 : vector<256x1xi32> to vector<256x128xi32>
    %33 = arith.cmpi eq, %32, %11 : vector<256x128xi32>
    %34 = arith.extui %33 : vector<256x128xi1> to vector<256x128xi32>
    %35 = arith.sitofp %34 : vector<256x128xi32> to vector<256x128xf32>
    %36 = arith.addf %30, %35 : vector<256x128xf32>
    %37 = vector.extract_strided_slice %7 {offsets = [0, 4], sizes = [256, 1], strides = [1, 1]} : vector<256x8xi32> to vector<256x1xi32>
    %38 = vector.broadcast %37 : vector<256x1xi32> to vector<256x128xi32>
    %39 = arith.cmpi eq, %38, %11 : vector<256x128xi32>
    %40 = arith.extui %39 : vector<256x128xi1> to vector<256x128xi32>
    %41 = arith.sitofp %40 : vector<256x128xi32> to vector<256x128xf32>
    %42 = arith.addf %36, %41 : vector<256x128xf32>
    %43 = vector.extract_strided_slice %7 {offsets = [0, 5], sizes = [256, 1], strides = [1, 1]} : vector<256x8xi32> to vector<256x1xi32>
    %44 = vector.broadcast %43 : vector<256x1xi32> to vector<256x128xi32>
    %45 = arith.cmpi eq, %44, %11 : vector<256x128xi32>
    %46 = arith.extui %45 : vector<256x128xi1> to vector<256x128xi32>
    %47 = arith.sitofp %46 : vector<256x128xi32> to vector<256x128xf32>
    %48 = arith.addf %42, %47 : vector<256x128xf32>
    %49 = vector.extract_strided_slice %7 {offsets = [0, 6], sizes = [256, 1], strides = [1, 1]} : vector<256x8xi32> to vector<256x1xi32>
    %50 = vector.broadcast %49 : vector<256x1xi32> to vector<256x128xi32>
    %51 = arith.cmpi eq, %50, %11 : vector<256x128xi32>
    %52 = arith.extui %51 : vector<256x128xi1> to vector<256x128xi32>
    %53 = arith.sitofp %52 : vector<256x128xi32> to vector<256x128xf32>
    %54 = arith.addf %48, %53 : vector<256x128xf32>
    %55 = vector.extract_strided_slice %7 {offsets = [0, 7], sizes = [256, 1], strides = [1, 1]} : vector<256x8xi32> to vector<256x1xi32>
    %56 = vector.broadcast %55 : vector<256x1xi32> to vector<256x128xi32>
    %57 = arith.cmpi eq, %56, %11 : vector<256x128xi32>
    %58 = arith.extui %57 : vector<256x128xi1> to vector<256x128xi32>
    %59 = arith.sitofp %58 : vector<256x128xi32> to vector<256x128xf32>
    %60 = arith.addf %54, %59 : vector<256x128xf32>
    %c0_3 = arith.constant 0 : index
    %c0_4 = arith.constant 0 : index
    %61 = vector.load %arg6[%c0_3, %c0_4] : memref<256x128xf32, #tpu.memory_space<vmem>>, vector<256x128xf32>
    %62 = arith.truncf %60 : vector<256x128xf32> to vector<256x128xbf16>
    %c0_5 = arith.constant 0 : index
    %c0_6 = arith.constant 0 : index
    %63 = vector.load %arg3[%c0_5, %c0_6] : memref<128x128xbf16, #tpu.memory_space<vmem>>, vector<128x128xbf16>
    %cst_7 = arith.constant dense<0.000000e+00> : vector<256x128xf32>
    %64 = tpu.matmul %62, %63, %cst_7 {dimension_numbers = #tpu.dot_dimension_numbers<[1], [0], [0], [1], [0, 0, 1, 1], [], []>} : vector<256x128xbf16>, vector<128x128xbf16>, vector<256x128xf32> -> vector<256x128xf32>
    %65 = arith.addf %61, %64 : vector<256x128xf32>
    %c0_8 = arith.constant 0 : index
    %c0_9 = arith.constant 0 : index
    %66 = vector.load %arg6[%c0_8, %c0_9] : memref<256x128xf32, #tpu.memory_space<vmem>>, vector<256x128xf32>
    tpu.vector_store %arg6[%c0_8, %c0_9], %65 {strides = array<i32>} : memref<256x128xf32, #tpu.memory_space<vmem>>, vector<256x128xf32>,
    %c0_i32_10 = arith.constant 0 : i32
    %67 = arith.cmpi eq, %arg1, %c0_i32_10 : i32
    %68 = arith.extui %67 : i1 to i32
    %c0_i32_11 = arith.constant 0 : i32
    %69 = arith.cmpi ne, %68, %c0_i32_11 : i32
    scf.if %69 {
      %c0_i32_12 = arith.constant 0 : i32
      %70 = vector.broadcast %c0_i32_12 : i32 to vector<256x8xi32>
      %71 = arith.cmpi ne, %0, %70 : vector<256x8xi32>
      %72 = arith.extui %71 : vector<256x8xi1> to vector<256x8xi32>
      %73 = arith.sitofp %72 : vector<256x8xi32> to vector<256x8xf32>
      %cst_13 = arith.constant dense<0.000000e+00> : vector<256xf32>
      %74 = vector.multi_reduction <add>, %73, %cst_13 [1] : vector<256x8xf32> to vector<256xf32>
      %75 = vector.shape_cast %74 : vector<256xf32> to vector<256x1xf32>
      %cst_14 = arith.constant 1.000000e+00 : f32
      %76 = vector.broadcast %cst_14 : f32 to vector<256x1xf32>
      %77 = arith.maximumf %75, %76 : vector<256x1xf32>
      %78 = tpu.reciprocal %77 {approx = true} : vector<256x1xf32> -> vector<256x1xf32>
      %c0_15 = arith.constant 0 : index
      %c0_16 = arith.constant 0 : index
      %79 = vector.load %arg6[%c0_15, %c0_16] : memref<256x128xf32, #tpu.memory_space<vmem>>, vector<256x128xf32>
      %80 = vector.broadcast %78 : vector<256x1xf32> to vector<256x128xf32>
      %81 = arith.mulf %79, %80 : vector<256x128xf32>
      %82 = math.tanh %81 : vector<256x128xf32>
      %c0_17 = arith.constant 0 : index
      %c0_18 = arith.constant 0 : index
      %83 = vector.load %arg4[%c0_17, %c0_18] : memref<128x128xbf16, #tpu.memory_space<vmem>>, vector<128x128xbf16>
      %84 = arith.truncf %82 : vector<256x128xf32> to vector<256x128xbf16>
      %cst_19 = arith.constant dense<0.000000e+00> : vector<256x128xf32>
      %85 = tpu.matmul %84, %83, %cst_19 {dimension_numbers = #tpu.dot_dimension_numbers<[1], [1], [0], [0], [0, 0, 1, 0], [], []>} : vector<256x128xbf16>, vector<128x128xbf16>, vector<256x128xf32> -> vector<256x128xf32>
      %cst_20 = arith.constant dense<0xFF800000> : vector<256xf32>
      %86 = vector.multi_reduction <maximumf>, %85, %cst_20 [1] : vector<256x128xf32> to vector<256xf32>
      %87 = vector.shape_cast %86 : vector<256xf32> to vector<256x1xf32>
      %88 = vector.broadcast %87 : vector<256x1xf32> to vector<256x128xf32>
      %89 = arith.subf %85, %88 : vector<256x128xf32>
      %90 = math.exp %89 : vector<256x128xf32>
      %cst_21 = arith.constant dense<0.000000e+00> : vector<256xf32>
      %91 = vector.multi_reduction <add>, %90, %cst_21 [1] : vector<256x128xf32> to vector<256xf32>
      %92 = vector.shape_cast %91 : vector<256xf32> to vector<256x1xf32>
      %93 = tpu.reciprocal %92 {approx = true} : vector<256x1xf32> -> vector<256x1xf32>
      %94 = vector.broadcast %93 : vector<256x1xf32> to vector<256x128xf32>
      %95 = arith.mulf %90, %94 : vector<256x128xf32>
      %96 = arith.truncf %95 : vector<256x128xf32> to vector<256x128xbf16>
      %cst_22 = arith.constant dense<0.000000e+00> : vector<256x128xf32>
      %97 = tpu.matmul %96, %83, %cst_22 {dimension_numbers = #tpu.dot_dimension_numbers<[1], [0], [0], [1], [0, 0, 1, 1], [], []>} : vector<256x128xbf16>, vector<128x128xbf16>, vector<256x128xf32> -> vector<256x128xf32>
      %98 = arith.addf %82, %97 : vector<256x128xf32>
      %c0_23 = arith.constant 0 : index
      %c0_24 = arith.constant 0 : index
      %99 = vector.load %arg5[%c0_23, %c0_24] : memref<256x128xf32, #tpu.memory_space<vmem>>, vector<256x128xf32>
      tpu.vector_store %arg5[%c0_23, %c0_24], %98 {strides = array<i32>} : memref<256x128xf32, #tpu.memory_space<vmem>>, vector<256x128xf32>,
    } else {
    }
    return
  }
  func.func @transform_0(%arg0: i32, %arg1: i32) -> (i32, i32) {
    %c0_i32 = arith.constant 0 : i32
    %c0_i32_0 = arith.constant 0 : i32
    return %arg0, %c0_i32 : i32, i32
  }
  func.func @transform_1(%arg0: i32, %arg1: i32) -> (i32, i32) {
    %c0_i32 = arith.constant 0 : i32
    %c0_i32_0 = arith.constant 0 : i32
    return %arg1, %c0_i32 : i32, i32
  }
  func.func @transform_2(%arg0: i32, %arg1: i32) -> (i32, i32) {
    %c0_i32 = arith.constant 0 : i32
    %c0_i32_0 = arith.constant 0 : i32
    %c0_i32_1 = arith.constant 0 : i32
    return %c0_i32, %c0_i32_0 : i32, i32
  }
  func.func @transform_3(%arg0: i32, %arg1: i32) -> (i32, i32) {
    %c0_i32 = arith.constant 0 : i32
    %c0_i32_0 = arith.constant 0 : i32
    return %arg0, %c0_i32 : i32, i32
  }
}

</mosaic_0001>

<llo_original>
// kernel: tpu_custom_call.1
$region0: #{tpu_custom_call.1}
  #allocation0 [shape = 'u32[]', space=smem, size = 0x4, offset = 0x4, fixed_abs, tag = 'smem constant byte address 0x4 - core index']
  #allocation1 [shape = 'u32[72,128]{1,0:T(1,128)}', space=vmem, size = 0x9000, scoped, tag = 'internal scratch']
  #allocation2 [shape = 'f32[256,128]{1,0:T(8,128)}', space=vmem, size = 0x20000, scoped, tag = 'scratch operand']
  %s0 = inlined_call_operand.vmem [shape: s32[256,8], index: 0, kind: input, shape index: {}]
  %s1 = inlined_call_operand.vmem [shape: bf16[128,128], index: 1, kind: input, shape index: {}]
  %s2 = inlined_call_operand.vmem [shape: bf16[128,128], index: 2, kind: input, shape index: {}]
  %s3 = inlined_call_operand.hbm [shape: f32[256,128], index: 3, kind: output, shape index: {}]
  %s4 = sld [smem:[#allocation0]]
  $region30: #{tpu_custom_call.1} parent=0
    _
  %s6 = ssub.s32 1, %s4
  %s7 = scalar_select 0, %s6, %s4
  $region1: #{tpu_custom_call.1} parent=0
    #allocation3 [shape = 'u8[131072]{0}', space=vmem, size = 0x20000, scoped, tag = 'output window, operand 0, single buffered']
    #allocation4 [shape = 's32[1]{0}', space=sflag, size = 0x4, scoped, tag = 'scoped memory for tpu_custom_call.1']
    %8 = vsyncpa [#allocation4], 0
    // Predicated region
    $region2: #{tpu_custom_call.1} parent=1 // pred_check
      _
    $region3: #{tpu_custom_call.1} parent=1 // pred_check_branch
      %10 = sbr.rel (0) target = $region5
    $region4: #{tpu_custom_call.1} parent=1 // pred_region
      _
    $region5: #{tpu_custom_call.1} parent=1 // pred_fallthru
      _
    // Predicated region
    $region6: #{tpu_custom_call.1} parent=1 // pred_check
      _
    $region7: #{tpu_custom_call.1} parent=1 // pred_check_branch
      %12 = sbr.rel (0) target = $region9
    $region8: #{tpu_custom_call.1} parent=1 // pred_region
      _
    $region9: #{tpu_custom_call.1} parent=1 // pred_fallthru
      _
    // Predicated region
    $region10: #{tpu_custom_call.1} parent=1 // pred_check
      _
    $region11: #{tpu_custom_call.1} parent=1 // pred_check_branch
      %14 = sbr.rel (0) target = $region13
    $region12: #{tpu_custom_call.1} parent=1 // pred_region
      _
    $region13: #{tpu_custom_call.1} parent=1 // pred_fallthru
      _
    %v15 = vld [vmem:[%s0] sm:$0xff]
    %v16 = vld [vmem:[%s0 + $0x8] sm:$0xff]
    %v17 = vld [vmem:[%s0 + $0x10] sm:$0xff]
    %v18 = vld [vmem:[%s0 + $0x18] sm:$0xff]
    %v19 = vld [vmem:[%s0 + $0x20] sm:$0xff]
    %v20 = vld [vmem:[%s0 + $0x28] sm:$0xff]
    %v21 = vld [vmem:[%s0 + $0x30] sm:$0xff]
    %v22 = vld [vmem:[%s0 + $0x38] sm:$0xff]
    %v23 = vld [vmem:[%s0 + $0x40] sm:$0xff]
    %v24 = vld [vmem:[%s0 + $0x48] sm:$0xff]
    %v25 = vld [vmem:[%s0 + $0x50] sm:$0xff]
    %v26 = vld [vmem:[%s0 + $0x58] sm:$0xff]
    %v27 = vld [vmem:[%s0 + $0x60] sm:$0xff]
    %v28 = vld [vmem:[%s0 + $0x68] sm:$0xff]
    %v29 = vld [vmem:[%s0 + $0x70] sm:$0xff]
    %v30 = vld [vmem:[%s0 + $0x78] sm:$0xff]
    %v31 = vld [vmem:[%s0 + $0x80] sm:$0xff]
    %v32 = vld [vmem:[%s0 + $0x88] sm:$0xff]
    %v33 = vld [vmem:[%s0 + $0x90] sm:$0xff]
    %v34 = vld [vmem:[%s0 + $0x98] sm:$0xff]
    %v35 = vld [vmem:[%s0 + $0xa0] sm:$0xff]
    %v36 = vld [vmem:[%s0 + $0xa8] sm:$0xff]
    %v37 = vld [vmem:[%s0 + $0xb0] sm:$0xff]
    %v38 = vld [vmem:[%s0 + $0xb8] sm:$0xff]
    %v39 = vld [vmem:[%s0 + $0xc0] sm:$0xff]
    %v40 = vld [vmem:[%s0 + $0xc8] sm:$0xff]
    %v41 = vld [vmem:[%s0 + $0xd0] sm:$0xff]
    %v42 = vld [vmem:[%s0 + $0xd8] sm:$0xff]
    %v43 = vld [vmem:[%s0 + $0xe0] sm:$0xff]
    %v44 = vld [vmem:[%s0 + $0xe8] sm:$0xff]
    %v45 = vld [vmem:[%s0 + $0xf0] sm:$0xff]
    %v46 = vld [vmem:[%s0 + $0xf8] sm:$0xff]
    %p47 = scmp.eq.s32.totalorder 0, 0
    // Predicated region
    $region14: #{tpu_custom_call.1} parent=1 // pred_check
      %p48 = pneg %p47
    $region15: #{tpu_custom_call.1} parent=1 // pred_check_branch
      %50 = sbr.rel (%p48) target = $region17
    $region16: #{tpu_custom_call.1} parent=1 // pred_region
      %51 = vst [vmem:[#allocation2] sm:$0xff] 0.0
      %52 = vst [vmem:[#allocation2 + $0x8] sm:$0xff] 0.0
      %53 = vst [vmem:[#allocation2 + $0x10] sm:$0xff] 0.0
      %54 = vst [vmem:[#allocation2 + $0x18] sm:$0xff] 0.0
      %55 = vst [vmem:[#allocation2 + $0x20] sm:$0xff] 0.0
      %56 = vst [vmem:[#allocation2 + $0x28] sm:$0xff] 0.0
      %57 = vst [vmem:[#allocation2 + $0x30] sm:$0xff] 0.0
      %58 = vst [vmem:[#allocation2 + $0x38] sm:$0xff] 0.0
      %59 = vst [vmem:[#allocation2 + $0x40] sm:$0xff] 0.0
      %60 = vst [vmem:[#allocation2 + $0x48] sm:$0xff] 0.0
      %61 = vst [vmem:[#allocation2 + $0x50] sm:$0xff] 0.0
      %62 = vst [vmem:[#allocation2 + $0x58] sm:$0xff] 0.0
      %63 = vst [vmem:[#allocation2 + $0x60] sm:$0xff] 0.0
      %64 = vst [vmem:[#allocation2 + $0x68] sm:$0xff] 0.0
      %65 = vst [vmem:[#allocation2 + $0x70] sm:$0xff] 0.0
      %66 = vst [vmem:[#allocation2 + $0x78] sm:$0xff] 0.0
      %67 = vst [vmem:[#allocation2 + $0x80] sm:$0xff] 0.0
      %68 = vst [vmem:[#allocation2 + $0x88] sm:$0xff] 0.0
      %69 = vst [vmem:[#allocation2 + $0x90] sm:$0xff] 0.0
      %70 = vst [vmem:[#allocation2 + $0x98] sm:$0xff] 0.0
      %71 = vst [vmem:[#allocation2 + $0xa0] sm:$0xff] 0.0
      %72 = vst [vmem:[#allocation2 + $0xa8] sm:$0xff] 0.0
      %73 = vst [vmem:[#allocation2 + $0xb0] sm:$0xff] 0.0
      %74 = vst [vmem:[#allocation2 + $0xb8] sm:$0xff] 0.0
      %75 = vst [vmem:[#allocation2 + $0xc0] sm:$0xff] 0.0
      %76 = vst [vmem:[#allocation2 + $0xc8] sm:$0xff] 0.0
      %77 = vst [vmem:[#allocation2 + $0xd0] sm:$0xff] 0.0
      %78 = vst [vmem:[#allocation2 + $0xd8] sm:$0xff] 0.0
      %79 = vst [vmem:[#allocation2 + $0xe0] sm:$0xff] 0.0
      %80 = vst [vmem:[#allocation2 + $0xe8] sm:$0xff] 0.0
      %81 = vst [vmem:[#allocation2 + $0xf0] sm:$0xff] 0.0
      %82 = vst [vmem:[#allocation2 + $0xf8] sm:$0xff] 0.0
    $region17: #{tpu_custom_call.1} parent=1 // pred_fallthru
      _
    %vm83 = vcmp.eq.s32.totalorder %v15, 0
    %vm84 = vcmp.eq.s32.totalorder %v16, 0
    %vm85 = vcmp.eq.s32.totalorder %v17, 0
    %vm86 = vcmp.eq.s32.totalorder %v18, 0
    %vm87 = vcmp.eq.s32.totalorder %v19, 0
    %vm88 = vcmp.eq.s32.totalorder %v20, 0
    %vm89 = vcmp.eq.s32.totalorder %v21, 0
    %vm90 = vcmp.eq.s32.totalorder %v22, 0
    %vm91 = vcmp.eq.s32.totalorder %v23, 0
    %vm92 = vcmp.eq.s32.totalorder %v24, 0
    %vm93 = vcmp.eq.s32.totalorder %v25, 0
    %vm94 = vcmp.eq.s32.totalorder %v26, 0
    %vm95 = vcmp.eq.s32.totalorder %v27, 0
    %vm96 = vcmp.eq.s32.totalorder %v28, 0
    %vm97 = vcmp.eq.s32.totalorder %v29, 0
    %vm98 = vcmp.eq.s32.totalorder %v30, 0
    %vm99 = vcmp.eq.s32.totalorder %v31, 0
    %vm100 = vcmp.eq.s32.totalorder %v32, 0
    %vm101 = vcmp.eq.s32.totalorder %v33, 0
    %vm102 = vcmp.eq.s32.totalorder %v34, 0
    %vm103 = vcmp.eq.s32.totalorder %v35, 0
    %vm104 = vcmp.eq.s32.totalorder %v36, 0
    %vm105 = vcmp.eq.s32.totalorder %v37, 0
    %vm106 = vcmp.eq.s32.totalorder %v38, 0
    %vm107 = vcmp.eq.s32.totalorder %v39, 0
    %vm108 = vcmp.eq.s32.totalorder %v40, 0
    %vm109 = vcmp.eq.s32.totalorder %v41, 0
    %vm110 = vcmp.eq.s32.totalorder %v42, 0
    %vm111 = vcmp.eq.s32.totalorder %v43, 0
    %vm112 = vcmp.eq.s32.totalorder %v44, 0
    %vm113 = vcmp.eq.s32.totalorder %v45, 0
    %vm114 = vcmp.eq.s32.totalorder %v46, 0
    %v115 = vsel %vm83, 4294967295, %v15
    %v116 = vsel %vm84, 4294967295, %v16
    %v117 = vsel %vm85, 4294967295, %v17
    %v118 = vsel %vm86, 4294967295, %v18
    %v119 = vsel %vm87, 4294967295, %v19
    %v120 = vsel %vm88, 4294967295, %v20
    %v121 = vsel %vm89, 4294967295, %v21
    %v122 = vsel %vm90, 4294967295, %v22
    %v123 = vsel %vm91, 4294967295, %v23
    %v124 = vsel %vm92, 4294967295, %v24
    %v125 = vsel %vm93, 4294967295, %v25
    %v126 = vsel %vm94, 4294967295, %v26
    %v127 = vsel %vm95, 4294967295, %v27
    %v128 = vsel %vm96, 4294967295, %v28
    %v129 = vsel %vm97, 4294967295, %v29
    %v130 = vsel %vm98, 4294967295, %v30
    %v131 = vsel %vm99, 4294967295, %v31
    %v132 = vsel %vm100, 4294967295, %v32
    %v133 = vsel %vm101, 4294967295, %v33
    %v134 = vsel %vm102, 4294967295, %v34
    %v135 = vsel %vm103, 4294967295, %v35
    %v136 = vsel %vm104, 4294967295, %v36
    %v137 = vsel %vm105, 4294967295, %v37
    %v138 = vsel %vm106, 4294967295, %v38
    %v139 = vsel %vm107, 4294967295, %v39
    %v140 = vsel %vm108, 4294967295, %v40
    %v141 = vsel %vm109, 4294967295, %v41
    %v142 = vsel %vm110, 4294967295, %v42
    %v143 = vsel %vm111, 4294967295, %v43
    %v144 = vsel %vm112, 4294967295, %v44
    %v145 = vsel %vm113, 4294967295, %v45
    %v146 = vsel %vm114, 4294967295, %v46
    %s147 = smul.u32 0, 128
    %v148 = vlaneseq
    %v149 = vand.u32 %v148, 127
    %v150 = vstv %s147
    %v151 = vadd.s32 %v149, %v150
    %152 = vset.pattern.permute.xlu0 0
    %153 = vperm.xlu0 %152, %v115
    %v154 = vpop.permute.xlu0 %153
    %155 = vset.pattern.permute.xlu0 0
    %156 = vperm.xlu0 %155, %v116
    %v157 = vpop.permute.xlu0 %156
    %158 = vset.pattern.permute.xlu0 0
    %159 = vperm.xlu0 %158, %v117
    %v160 = vpop.permute.xlu0 %159
    %161 = vset.pattern.permute.xlu0 0
    %162 = vperm.xlu0 %161, %v118
    %v163 = vpop.permute.xlu0 %162
    %164 = vset.pattern.permute.xlu0 0
    %165 = vperm.xlu0 %164, %v119
    %v166 = vpop.permute.xlu0 %165
    %167 = vset.pattern.permute.xlu0 0
    %168 = vperm.xlu0 %167, %v120
    %v169 = vpop.permute.xlu0 %168
    %170 = vset.pattern.permute.xlu0 0
    %171 = vperm.xlu0 %170, %v121
    %v172 = vpop.permute.xlu0 %171
    %173 = vset.pattern.permute.xlu0 0
    %174 = vperm.xlu0 %173, %v122
    %v175 = vpop.permute.xlu0 %174
    %176 = vset.pattern.permute.xlu0 0
    %177 = vperm.xlu0 %176, %v123
    %v178 = vpop.permute.xlu0 %177
    %179 = vset.pattern.permute.xlu0 0
    %180 = vperm.xlu0 %179, %v124
    %v181 = vpop.permute.xlu0 %180
    %182 = vset.pattern.permute.xlu0 0
    %183 = vperm.xlu0 %182, %v125
    %v184 = vpop.permute.xlu0 %183
    %185 = vset.pattern.permute.xlu0 0
    %186 = vperm.xlu0 %185, %v126
    %v187 = vpop.permute.xlu0 %186
    %188 = vset.pattern.permute.xlu0 0
    %189 = vperm.xlu0 %188, %v127
    %v190 = vpop.permute.xlu0 %189
    %191 = vset.pattern.permute.xlu0 0
    %192 = vperm.xlu0 %191, %v128
    %v193 = vpop.permute.xlu0 %192
    %194 = vset.pattern.permute.xlu0 0
    %195 = vperm.xlu0 %194, %v129
    %v196 = vpop.permute.xlu0 %195
    %197 = vset.pattern.permute.xlu0 0
    %198 = vperm.xlu0 %197, %v130
    %v199 = vpop.permute.xlu0 %198
    %200 = vset.pattern.permute.xlu0 0
    %201 = vperm.xlu0 %200, %v131
    %v202 = vpop.permute.xlu0 %201
    %203 = vset.pattern.permute.xlu0 0
    %204 = vperm.xlu0 %203, %v132
    %v205 = vpop.permute.xlu0 %204
    %206 = vset.pattern.permute.xlu0 0
    %207 = vperm.xlu0 %206, %v133
    %v208 = vpop.permute.xlu0 %207
    %209 = vset.pattern.permute.xlu0 0
    %210 = vperm.xlu0 %209, %v134
    %v211 = vpop.permute.xlu0 %210
    %212 = vset.pattern.permute.xlu0 0
    %213 = vperm.xlu0 %212, %v135
    %v214 = vpop.permute.xlu0 %213
    %215 = vset.pattern.permute.xlu0 0
    %216 = vperm.xlu0 %215, %v136
    %v217 = vpop.permute.xlu0 %216
    %218 = vset.pattern.permute.xlu0 0
    %219 = vperm.xlu0 %218, %v137
    %v220 = vpop.permute.xlu0 %219
    %221 = vset.pattern.permute.xlu0 0
    %222 = vperm.xlu0 %221, %v138
    %v223 = vpop.permute.xlu0 %222
    %224 = vset.pattern.permute.xlu0 0
    %225 = vperm.xlu0 %224, %v139
    %v226 = vpop.permute.xlu0 %225
    %227 = vset.pattern.permute.xlu0 0
    %228 = vperm.xlu0 %227, %v140
    %v229 = vpop.permute.xlu0 %228
    %230 = vset.pattern.permute.xlu0 0
    %231 = vperm.xlu0 %230, %v141
    %v232 = vpop.permute.xlu0 %231
    %233 = vset.pattern.permute.xlu0 0
    %234 = vperm.xlu0 %233, %v142
    %v235 = vpop.permute.xlu0 %234
    %236 = vset.pattern.permute.xlu0 0
    %237 = vperm.xlu0 %236, %v143
    %v238 = vpop.permute.xlu0 %237
    %239 = vset.pattern.permute.xlu0 0
    %240 = vperm.xlu0 %239, %v144
    %v241 = vpop.permute.xlu0 %240
    %242 = vset.pattern.permute.xlu0 0
    %243 = vperm.xlu0 %242, %v145
    %v244 = vpop.permute.xlu0 %243
    %245 = vset.pattern.permute.xlu0 0
    %246 = vperm.xlu0 %245, %v146
    %v247 = vpop.permute.xlu0 %246
    %vm248 = vcmp.eq.s32.totalorder %v154, %v151
    %vm249 = vcmp.eq.s32.totalorder %v157, %v151
    %vm250 = vcmp.eq.s32.totalorder %v160, %v151
    %vm251 = vcmp.eq.s32.totalorder %v163, %v151
    %vm252 = vcmp.eq.s32.totalorder %v166, %v151
    %vm253 = vcmp.eq.s32.totalorder %v169, %v151
    %vm254 = vcmp.eq.s32.totalorder %v172, %v151
    %vm255 = vcmp.eq.s32.totalorder %v175, %v151
    %vm256 = vcmp.eq.s32.totalorder %v178, %v151
    %vm257 = vcmp.eq.s32.totalorder %v181, %v151
    %vm258 = vcmp.eq.s32.totalorder %v184, %v151
    %vm259 = vcmp.eq.s32.totalorder %v187, %v151
    %vm260 = vcmp.eq.s32.totalorder %v190, %v151
    %vm261 = vcmp.eq.s32.totalorder %v193, %v151
    %vm262 = vcmp.eq.s32.totalorder %v196, %v151
    %vm263 = vcmp.eq.s32.totalorder %v199, %v151
    %vm264 = vcmp.eq.s32.totalorder %v202, %v151
    %vm265 = vcmp.eq.s32.totalorder %v205, %v151
    %vm266 = vcmp.eq.s32.totalorder %v208, %v151
    %vm267 = vcmp.eq.s32.totalorder %v211, %v151
    %vm268 = vcmp.eq.s32.totalorder %v214, %v151
    %vm269 = vcmp.eq.s32.totalorder %v217, %v151
    %vm270 = vcmp.eq.s32.totalorder %v220, %v151
    %vm271 = vcmp.eq.s32.totalorder %v223, %v151
    %vm272 = vcmp.eq.s32.totalorder %v226, %v151
    %vm273 = vcmp.eq.s32.totalorder %v229, %v151
    %vm274 = vcmp.eq.s32.totalorder %v232, %v151
    %vm275 = vcmp.eq.s32.totalorder %v235, %v151
    %vm276 = vcmp.eq.s32.totalorder %v238, %v151
    %vm277 = vcmp.eq.s32.totalorder %v241, %v151
    %vm278 = vcmp.eq.s32.totalorder %v244, %v151
    %vm279 = vcmp.eq.s32.totalorder %v247, %v151
    %v280 = vsel %vm248, 1, 0
    %v281 = vsel %vm249, 1, 0
    %v282 = vsel %vm250, 1, 0
    %v283 = vsel %vm251, 1, 0
    %v284 = vsel %vm252, 1, 0
    %v285 = vsel %vm253, 1, 0
    %v286 = vsel %vm254, 1, 0
    %v287 = vsel %vm255, 1, 0
    %v288 = vsel %vm256, 1, 0
    %v289 = vsel %vm257, 1, 0
    %v290 = vsel %vm258, 1, 0
    %v291 = vsel %vm259, 1, 0
    %v292 = vsel %vm260, 1, 0
    %v293 = vsel %vm261, 1, 0
    %v294 = vsel %vm262, 1, 0
    %v295 = vsel %vm263, 1, 0
    %v296 = vsel %vm264, 1, 0
    %v297 = vsel %vm265, 1, 0
    %v298 = vsel %vm266, 1, 0
    %v299 = vsel %vm267, 1, 0
    %v300 = vsel %vm268, 1, 0
    %v301 = vsel %vm269, 1, 0
    %v302 = vsel %vm270, 1, 0
    %v303 = vsel %vm271, 1, 0
    %v304 = vsel %vm272, 1, 0
    %v305 = vsel %vm273, 1, 0
    %v306 = vsel %vm274, 1, 0
    %v307 = vsel %vm275, 1, 0
    %v308 = vsel %vm276, 1, 0
    %v309 = vsel %vm277, 1, 0
    %v310 = vsel %vm278, 1, 0
    %v311 = vsel %vm279, 1, 0
    %v312 = vcvt.s32.f32 %v280
    %v313 = vcvt.s32.f32 %v281
    %v314 = vcvt.s32.f32 %v282
    %v315 = vcvt.s32.f32 %v283
    %v316 = vcvt.s32.f32 %v284
    %v317 = vcvt.s32.f32 %v285
    %v318 = vcvt.s32.f32 %v286
    %v319 = vcvt.s32.f32 %v287
    %v320 = vcvt.s32.f32 %v288
    %v321 = vcvt.s32.f32 %v289
    %v322 = vcvt.s32.f32 %v290
    %v323 = vcvt.s32.f32 %v291
    %v324 = vcvt.s32.f32 %v292
    %v325 = vcvt.s32.f32 %v293
    %v326 = vcvt.s32.f32 %v294
    %v327 = vcvt.s32.f32 %v295
    %v328 = vcvt.s32.f32 %v296
    %v329 = vcvt.s32.f32 %v297
    %v330 = vcvt.s32.f32 %v298
    %v331 = vcvt.s32.f32 %v299
    %v332 = vcvt.s32.f32 %v300
    %v333 = vcvt.s32.f32 %v301
    %v334 = vcvt.s32.f32 %v302
    %v335 = vcvt.s32.f32 %v303
    %v336 = vcvt.s32.f32 %v304
    %v337 = vcvt.s32.f32 %v305
    %v338 = vcvt.s32.f32 %v306
    %v339 = vcvt.s32.f32 %v307
    %v340 = vcvt.s32.f32 %v308
    %v341 = vcvt.s32.f32 %v309
    %v342 = vcvt.s32.f32 %v310
    %v343 = vcvt.s32.f32 %v311
    %v344 = vadd.f32 %v312, 0.0
    %v345 = vadd.f32 %v313, 0.0
    %v346 = vadd.f32 %v314, 0.0
    %v347 = vadd.f32 %v315, 0.0
    %v348 = vadd.f32 %v316, 0.0
    %v349 = vadd.f32 %v317, 0.0
    %v350 = vadd.f32 %v318, 0.0
    %v351 = vadd.f32 %v319, 0.0
    %v352 = vadd.f32 %v320, 0.0
    %v353 = vadd.f32 %v321, 0.0
    %v354 = vadd.f32 %v322, 0.0
    %v355 = vadd.f32 %v323, 0.0
    %v356 = vadd.f32 %v324, 0.0
    %v357 = vadd.f32 %v325, 0.0
    %v358 = vadd.f32 %v326, 0.0
    %v359 = vadd.f32 %v327, 0.0
    %v360 = vadd.f32 %v328, 0.0
    %v361 = vadd.f32 %v329, 0.0
    %v362 = vadd.f32 %v330, 0.0
    %v363 = vadd.f32 %v331, 0.0
    %v364 = vadd.f32 %v332, 0.0
    %v365 = vadd.f32 %v333, 0.0
    %v366 = vadd.f32 %v334, 0.0
    %v367 = vadd.f32 %v335, 0.0
    %v368 = vadd.f32 %v336, 0.0
    %v369 = vadd.f32 %v337, 0.0
    %v370 = vadd.f32 %v338, 0.0
    %v371 = vadd.f32 %v339, 0.0
    %v372 = vadd.f32 %v340, 0.0
    %v373 = vadd.f32 %v341, 0.0
    %v374 = vadd.f32 %v342, 0.0
    %v375 = vadd.f32 %v343, 0.0
    %376 = vset.pattern.permute.xlu0 1
    %377 = vperm.xlu0 %376, %v115
    %v378 = vpop.permute.xlu0 %377
    %379 = vset.pattern.permute.xlu0 1
    %380 = vperm.xlu0 %379, %v116
    %v381 = vpop.permute.xlu0 %380
    %382 = vset.pattern.permute.xlu0 1
    %383 = vperm.xlu0 %382, %v117
    %v384 = vpop.permute.xlu0 %383
    %385 = vset.pattern.permute.xlu0 1
    %386 = vperm.xlu0 %385, %v118
    %v387 = vpop.permute.xlu0 %386
    %388 = vset.pattern.permute.xlu0 1
    %389 = vperm.xlu0 %388, %v119
    %v390 = vpop.permute.xlu0 %389
    %391 = vset.pattern.permute.xlu0 1
    %392 = vperm.xlu0 %391, %v120
    %v393 = vpop.permute.xlu0 %392
    %394 = vset.pattern.permute.xlu0 1
    %395 = vperm.xlu0 %394, %v121
    %v396 = vpop.permute.xlu0 %395
    %397 = vset.pattern.permute.xlu0 1
    %398 = vperm.xlu0 %397, %v122
    %v399 = vpop.permute.xlu0 %398
    %400 = vset.pattern.permute.xlu0 1
    %401 = vperm.xlu0 %400, %v123
    %v402 = vpop.permute.xlu0 %401
    %403 = vset.pattern.permute.xlu0 1
    %404 = vperm.xlu0 %403, %v124
    %v405 = vpop.permute.xlu0 %404
    %406 = vset.pattern.permute.xlu0 1
    %407 = vperm.xlu0 %406, %v125
    %v408 = vpop.permute.xlu0 %407
    %409 = vset.pattern.permute.xlu0 1
    %410 = vperm.xlu0 %409, %v126
    %v411 = vpop.permute.xlu0 %410
    %412 = vset.pattern.permute.xlu0 1
    %413 = vperm.xlu0 %412, %v127
    %v414 = vpop.permute.xlu0 %413
    %415 = vset.pattern.permute.xlu0 1
    %416 = vperm.xlu0 %415, %v128
    %v417 = vpop.permute.xlu0 %416
    %418 = vset.pattern.permute.xlu0 1
    %419 = vperm.xlu0 %418, %v129
    %v420 = vpop.permute.xlu0 %419
    %421 = vset.pattern.permute.xlu0 1
    %422 = vperm.xlu0 %421, %v130
    %v423 = vpop.permute.xlu0 %422
    %424 = vset.pattern.permute.xlu0 1
    %425 = vperm.xlu0 %424, %v131
    %v426 = vpop.permute.xlu0 %425
    %427 = vset.pattern.permute.xlu0 1
    %428 = vperm.xlu0 %427, %v132
    %v429 = vpop.permute.xlu0 %428
    %430 = vset.pattern.permute.xlu0 1
    %431 = vperm.xlu0 %430, %v133
    %v432 = vpop.permute.xlu0 %431
    %433 = vset.pattern.permute.xlu0 1
    %434 = vperm.xlu0 %433, %v134
    %v435 = vpop.permute.xlu0 %434
    %436 = vset.pattern.permute.xlu0 1
    %437 = vperm.xlu0 %436, %v135
    %v438 = vpop.permute.xlu0 %437
    %439 = vset.pattern.permute.xlu0 1
    %440 = vperm.xlu0 %439, %v136
    %v441 = vpop.permute.xlu0 %440
    %442 = vset.pattern.permute.xlu0 1
    %443 = vperm.xlu0 %442, %v137
    %v444 = vpop.permute.xlu0 %443
    %445 = vset.pattern.permute.xlu0 1
    %446 = vperm.xlu0 %445, %v138
    %v447 = vpop.permute.xlu0 %446
    %448 = vset.pattern.permute.xlu0 1
    %449 = vperm.xlu0 %448, %v139
    %v450 = vpop.permute.xlu0 %449
    %451 = vset.pattern.permute.xlu0 1
    %452 = vperm.xlu0 %451, %v140
    %v453 = vpop.permute.xlu0 %452
    %454 = vset.pattern.permute.xlu0 1
    %455 = vperm.xlu0 %454, %v141
    %v456 = vpop.permute.xlu0 %455
    %457 = vset.pattern.permute.xlu0 1
    %458 = vperm.xlu0 %457, %v142
    %v459 = vpop.permute.xlu0 %458
    %460 = vset.pattern.permute.xlu0 1
    %461 = vperm.xlu0 %460, %v143
    %v462 = vpop.permute.xlu0 %461
    %463 = vset.pattern.permute.xlu0 1
    %464 = vperm.xlu0 %463, %v144
    %v465 = vpop.permute.xlu0 %464
    %466 = vset.pattern.permute.xlu0 1
    %467 = vperm.xlu0 %466, %v145
    %v468 = vpop.permute.xlu0 %467
    %469 = vset.pattern.permute.xlu0 1
    %470 = vperm.xlu0 %469, %v146
    %v471 = vpop.permute.xlu0 %470
    %vm472 = vcmp.eq.s32.totalorder %v378, %v151
    %vm473 = vcmp.eq.s32.totalorder %v381, %v151
    %vm474 = vcmp.eq.s32.totalorder %v384, %v151
    %vm475 = vcmp.eq.s32.totalorder %v387, %v151
    %vm476 = vcmp.eq.s32.totalorder %v390, %v151
    %vm477 = vcmp.eq.s32.totalorder %v393, %v151
    %vm478 = vcmp.eq.s32.totalorder %v396, %v151
    %vm479 = vcmp.eq.s32.totalorder %v399, %v151
    %vm480 = vcmp.eq.s32.totalorder %v402, %v151
    %vm481 = vcmp.eq.s32.totalorder %v405, %v151
    %vm482 = vcmp.eq.s32.totalorder %v408, %v151
    %vm483 = vcmp.eq.s32.totalorder %v411, %v151
    %vm484 = vcmp.eq.s32.totalorder %v414, %v151
    %vm485 = vcmp.eq.s32.totalorder %v417, %v151
    %vm486 = vcmp.eq.s32.totalorder %v420, %v151
    %vm487 = vcmp.eq.s32.totalorder %v423, %v151
    %vm488 = vcmp.eq.s32.totalorder %v426, %v151
    %vm489 = vcmp.eq.s32.totalorder %v429, %v151
    %vm490 = vcmp.eq.s32.totalorder %v432, %v151
    %vm491 = vcmp.eq.s32.totalorder %v435, %v151
    %vm492 = vcmp.eq.s32.totalorder %v438, %v151
    %vm493 = vcmp.eq.s32.totalorder %v441, %v151
    %vm494 = vcmp.eq.s32.totalorder %v444, %v151
    %vm495 = vcmp.eq.s32.totalorder %v447, %v151
    %vm496 = vcmp.eq.s32.totalorder %v450, %v151
    %vm497 = vcmp.eq.s32.totalorder %v453, %v151
    %vm498 = vcmp.eq.s32.totalorder %v456, %v151
    %vm499 = vcmp.eq.s32.totalorder %v459, %v151
    %vm500 = vcmp.eq.s32.totalorder %v462, %v151
    %vm501 = vcmp.eq.s32.totalorder %v465, %v151
    %vm502 = vcmp.eq.s32.totalorder %v468, %v151
    %vm503 = vcmp.eq.s32.totalorder %v471, %v151
    %v504 = vsel %vm472, 1, 0
    %v505 = vsel %vm473, 1, 0
    %v506 = vsel %vm474, 1, 0
    %v507 = vsel %vm475, 1, 0
    %v508 = vsel %vm476, 1, 0
    %v509 = vsel %vm477, 1, 0
    %v510 = vsel %vm478, 1, 0
    %v511 = vsel %vm479, 1, 0
    %v512 = vsel %vm480, 1, 0
    %v513 = vsel %vm481, 1, 0
    %v514 = vsel %vm482, 1, 0
    %v515 = vsel %vm483, 1, 0
    %v516 = vsel %vm484, 1, 0
    %v517 = vsel %vm485, 1, 0
    %v518 = vsel %vm486, 1, 0
    %v519 = vsel %vm487, 1, 0
    %v520 = vsel %vm488, 1, 0
    %v521 = vsel %vm489, 1, 0
    %v522 = vsel %vm490, 1, 0
    %v523 = vsel %vm491, 1, 0
    %v524 = vsel %vm492, 1, 0
    %v525 = vsel %vm493, 1, 0
    %v526 = vsel %vm494, 1, 0
    %v527 = vsel %vm495, 1, 0
    %v528 = vsel %vm496, 1, 0
    %v529 = vsel %vm497, 1, 0
    %v530 = vsel %vm498, 1, 0
    %v531 = vsel %vm499, 1, 0
    %v532 = vsel %vm500, 1, 0
    %v533 = vsel %vm501, 1, 0
    %v534 = vsel %vm502, 1, 0
    %v535 = vsel %vm503, 1, 0
    %v536 = vcvt.s32.f32 %v504
    %v537 = vcvt.s32.f32 %v505
    %v538 = vcvt.s32.f32 %v506
    %v539 = vcvt.s32.f32 %v507
    %v540 = vcvt.s32.f32 %v508
    %v541 = vcvt.s32.f32 %v509
    %v542 = vcvt.s32.f32 %v510
    %v543 = vcvt.s32.f32 %v511
    %v544 = vcvt.s32.f32 %v512
    %v545 = vcvt.s32.f32 %v513
    %v546 = vcvt.s32.f32 %v514
    %v547 = vcvt.s32.f32 %v515
    %v548 = vcvt.s32.f32 %v516
    %v549 = vcvt.s32.f32 %v517
    %v550 = vcvt.s32.f32 %v518
    %v551 = vcvt.s32.f32 %v519
    %v552 = vcvt.s32.f32 %v520
    %v553 = vcvt.s32.f32 %v521
    %v554 = vcvt.s32.f32 %v522
    %v555 = vcvt.s32.f32 %v523
    %v556 = vcvt.s32.f32 %v524
    %v557 = vcvt.s32.f32 %v525
    %v558 = vcvt.s32.f32 %v526
    %v559 = vcvt.s32.f32 %v527
    %v560 = vcvt.s32.f32 %v528
    %v561 = vcvt.s32.f32 %v529
    %v562 = vcvt.s32.f32 %v530
    %v563 = vcvt.s32.f32 %v531
    %v564 = vcvt.s32.f32 %v532
    %v565 = vcvt.s32.f32 %v533
    %v566 = vcvt.s32.f32 %v534
    %v567 = vcvt.s32.f32 %v535
    %v568 = vadd.f32 %v344, %v536
    %v569 = vadd.f32 %v345, %v537
    %v570 = vadd.f32 %v346, %v538
    %v571 = vadd.f32 %v347, %v539
    %v572 = vadd.f32 %v348, %v540
    %v573 = vadd.f32 %v349, %v541
    %v574 = vadd.f32 %v350, %v542
    %v575 = vadd.f32 %v351, %v543
    %v576 = vadd.f32 %v352, %v544
    %v577 = vadd.f32 %v353, %v545
    %v578 = vadd.f32 %v354, %v546
    %v579 = vadd.f32 %v355, %v547
    %v580 = vadd.f32 %v356, %v548
    %v581 = vadd.f32 %v357, %v549
    %v582 = vadd.f32 %v358, %v550
    %v583 = vadd.f32 %v359, %v551
    %v584 = vadd.f32 %v360, %v552
    %v585 = vadd.f32 %v361, %v553
    %v586 = vadd.f32 %v362, %v554
    %v587 = vadd.f32 %v363, %v555
    %v588 = vadd.f32 %v364, %v556
    %v589 = vadd.f32 %v365, %v557
    %v590 = vadd.f32 %v366, %v558
    %v591 = vadd.f32 %v367, %v559
    %v592 = vadd.f32 %v368, %v560
    %v593 = vadd.f32 %v369, %v561
    %v594 = vadd.f32 %v370, %v562
    %v595 = vadd.f32 %v371, %v563
    %v596 = vadd.f32 %v372, %v564
    %v597 = vadd.f32 %v373, %v565
    %v598 = vadd.f32 %v374, %v566
    %v599 = vadd.f32 %v375, %v567
    %600 = vset.pattern.permute.xlu0 2
    %601 = vperm.xlu0 %600, %v115
    %v602 = vpop.permute.xlu0 %601
    %603 = vset.pattern.permute.xlu0 2
    %604 = vperm.xlu0 %603, %v116
    %v605 = vpop.permute.xlu0 %604
    %606 = vset.pattern.permute.xlu0 2
    %607 = vperm.xlu0 %606, %v117
    %v608 = vpop.permute.xlu0 %607
    %609 = vset.pattern.permute.xlu0 2
    %610 = vperm.xlu0 %609, %v118
    %v611 = vpop.permute.xlu0 %610
    %612 = vset.pattern.permute.xlu0 2
    %613 = vperm.xlu0 %612, %v119
    %v614 = vpop.permute.xlu0 %613
    %615 = vset.pattern.permute.xlu0 2
    %616 = vperm.xlu0 %615, %v120
    %v617 = vpop.permute.xlu0 %616
    %618 = vset.pattern.permute.xlu0 2
    %619 = vperm.xlu0 %618, %v121
    %v620 = vpop.permute.xlu0 %619
    %621 = vset.pattern.permute.xlu0 2
    %622 = vperm.xlu0 %621, %v122
    %v623 = vpop.permute.xlu0 %622
    %624 = vset.pattern.permute.xlu0 2
    %625 = vperm.xlu0 %624, %v123
    %v626 = vpop.permute.xlu0 %625
    %627 = vset.pattern.permute.xlu0 2
    %628 = vperm.xlu0 %627, %v124
    %v629 = vpop.permute.xlu0 %628
    %630 = vset.pattern.permute.xlu0 2
    %631 = vperm.xlu0 %630, %v125
    %v632 = vpop.permute.xlu0 %631
    %633 = vset.pattern.permute.xlu0 2
    %634 = vperm.xlu0 %633, %v126
    %v635 = vpop.permute.xlu0 %634
    %636 = vset.pattern.permute.xlu0 2
    %637 = vperm.xlu0 %636, %v127
    %v638 = vpop.permute.xlu0 %637
    %639 = vset.pattern.permute.xlu0 2
    %640 = vperm.xlu0 %639, %v128
    %v641 = vpop.permute.xlu0 %640
    %642 = vset.pattern.permute.xlu0 2
    %643 = vperm.xlu0 %642, %v129
    %v644 = vpop.permute.xlu0 %643
    %645 = vset.pattern.permute.xlu0 2
    %646 = vperm.xlu0 %645, %v130
    %v647 = vpop.permute.xlu0 %646
    %648 = vset.pattern.permute.xlu0 2
    %649 = vperm.xlu0 %648, %v131
    %v650 = vpop.permute.xlu0 %649
    %651 = vset.pattern.permute.xlu0 2
    %652 = vperm.xlu0 %651, %v132
    %v653 = vpop.permute.xlu0 %652
    %654 = vset.pattern.permute.xlu0 2
    %655 = vperm.xlu0 %654, %v133
    %v656 = vpop.permute.xlu0 %655
    %657 = vset.pattern.permute.xlu0 2
    %658 = vperm.xlu0 %657, %v134
    %v659 = vpop.permute.xlu0 %658
    %660 = vset.pattern.permute.xlu0 2
    %661 = vperm.xlu0 %660, %v135
    %v662 = vpop.permute.xlu0 %661
    %663 = vset.pattern.permute.xlu0 2
    %664 = vperm.xlu0 %663, %v136
    %v665 = vpop.permute.xlu0 %664
    %666 = vset.pattern.permute.xlu0 2
    %667 = vperm.xlu0 %666, %v137
    %v668 = vpop.permute.xlu0 %667
    %669 = vset.pattern.permute.xlu0 2
    %670 = vperm.xlu0 %669, %v138
    %v671 = vpop.permute.xlu0 %670
    %672 = vset.pattern.permute.xlu0 2
    %673 = vperm.xlu0 %672, %v139
    %v674 = vpop.permute.xlu0 %673
    %675 = vset.pattern.permute.xlu0 2
    %676 = vperm.xlu0 %675, %v140
    %v677 = vpop.permute.xlu0 %676
    %678 = vset.pattern.permute.xlu0 2
    %679 = vperm.xlu0 %678, %v141
    %v680 = vpop.permute.xlu0 %679
    %681 = vset.pattern.permute.xlu0 2
    %682 = vperm.xlu0 %681, %v142
    %v683 = vpop.permute.xlu0 %682
    %684 = vset.pattern.permute.xlu0 2
    %685 = vperm.xlu0 %684, %v143
    %v686 = vpop.permute.xlu0 %685
    %687 = vset.pattern.permute.xlu0 2
    %688 = vperm.xlu0 %687, %v144
    %v689 = vpop.permute.xlu0 %688
    %690 = vset.pattern.permute.xlu0 2
    %691 = vperm.xlu0 %690, %v145
    %v692 = vpop.permute.xlu0 %691
    %693 = vset.pattern.permute.xlu0 2
    %694 = vperm.xlu0 %693, %v146
    %v695 = vpop.permute.xlu0 %694
    %vm696 = vcmp.eq.s32.totalorder %v602, %v151
    %vm697 = vcmp.eq.s32.totalorder %v605, %v151
    %vm698 = vcmp.eq.s32.totalorder %v608, %v151
    %vm699 = vcmp.eq.s32.totalorder %v611, %v151
    %vm700 = vcmp.eq.s32.totalorder %v614, %v151
    %vm701 = vcmp.eq.s32.totalorder %v617, %v151
    %vm702 = vcmp.eq.s32.totalorder %v620, %v151
    %vm703 = vcmp.eq.s32.totalorder %v623, %v151
    %vm704 = vcmp.eq.s32.totalorder %v626, %v151
    %vm705 = vcmp.eq.s32.totalorder %v629, %v151
    %vm706 = vcmp.eq.s32.totalorder %v632, %v151
    %vm707 = vcmp.eq.s32.totalorder %v635, %v151
    %vm708 = vcmp.eq.s32.totalorder %v638, %v151
    %vm709 = vcmp.eq.s32.totalorder %v641, %v151
    %vm710 = vcmp.eq.s32.totalorder %v644, %v151
    %vm711 = vcmp.eq.s32.totalorder %v647, %v151
    %vm712 = vcmp.eq.s32.totalorder %v650, %v151
    %vm713 = vcmp.eq.s32.totalorder %v653, %v151
    %vm714 = vcmp.eq.s32.totalorder %v656, %v151
    %vm715 = vcmp.eq.s32.totalorder %v659, %v151
    %vm716 = vcmp.eq.s32.totalorder %v662, %v151
    %vm717 = vcmp.eq.s32.totalorder %v665, %v151
    %vm718 = vcmp.eq.s32.totalorder %v668, %v151
    %vm719 = vcmp.eq.s32.totalorder %v671, %v151
    %vm720 = vcmp.eq.s32.totalorder %v674, %v151
    %vm721 = vcmp.eq.s32.totalorder %v677, %v151
    %vm722 = vcmp.eq.s32.totalorder %v680, %v151
    %vm723 = vcmp.eq.s32.totalorder %v683, %v151
    %vm724 = vcmp.eq.s32.totalorder %v686, %v151
    %vm725 = vcmp.eq.s32.totalorder %v689, %v151
    %vm726 = vcmp.eq.s32.totalorder %v692, %v151
    %vm727 = vcmp.eq.s32.totalorder %v695, %v151
    %v728 = vsel %vm696, 1, 0
    %v729 = vsel %vm697, 1, 0
    %v730 = vsel %vm698, 1, 0
    %v731 = vsel %vm699, 1, 0
    %v732 = vsel %vm700, 1, 0
    %v733 = vsel %vm701, 1, 0
    %v734 = vsel %vm702, 1, 0
    %v735 = vsel %vm703, 1, 0
    %v736 = vsel %vm704, 1, 0
    %v737 = vsel %vm705, 1, 0
    %v738 = vsel %vm706, 1, 0
    %v739 = vsel %vm707, 1, 0
    %v740 = vsel %vm708, 1, 0
    %v741 = vsel %vm709, 1, 0
    %v742 = vsel %vm710, 1, 0
    %v743 = vsel %vm711, 1, 0
    %v744 = vsel %vm712, 1, 0
    %v745 = vsel %vm713, 1, 0
    %v746 = vsel %vm714, 1, 0
    %v747 = vsel %vm715, 1, 0
    %v748 = vsel %vm716, 1, 0
    %v749 = vsel %vm717, 1, 0
    %v750 = vsel %vm718, 1, 0
    %v751 = vsel %vm719, 1, 0
    %v752 = vsel %vm720, 1, 0
    %v753 = vsel %vm721, 1, 0
    %v754 = vsel %vm722, 1, 0
    %v755 = vsel %vm723, 1, 0
    %v756 = vsel %vm724, 1, 0
    %v757 = vsel %vm725, 1, 0
    %v758 = vsel %vm726, 1, 0
    %v759 = vsel %vm727, 1, 0
    %v760 = vcvt.s32.f32 %v728
    %v761 = vcvt.s32.f32 %v729
    %v762 = vcvt.s32.f32 %v730
    %v763 = vcvt.s32.f32 %v731
    %v764 = vcvt.s32.f32 %v732
    %v765 = vcvt.s32.f32 %v733
    %v766 = vcvt.s32.f32 %v734
    %v767 = vcvt.s32.f32 %v735
    %v768 = vcvt.s32.f32 %v736
    %v769 = vcvt.s32.f32 %v737
    %v770 = vcvt.s32.f32 %v738
    %v771 = vcvt.s32.f32 %v739
    %v772 = vcvt.s32.f32 %v740
    %v773 = vcvt.s32.f32 %v741
    %v774 = vcvt.s32.f32 %v742
    %v775 = vcvt.s32.f32 %v743
    %v776 = vcvt.s32.f32 %v744
    %v777 = vcvt.s32.f32 %v745
    %v778 = vcvt.s32.f32 %v746
    %v779 = vcvt.s32.f32 %v747
    %v780 = vcvt.s32.f32 %v748
    %v781 = vcvt.s32.f32 %v749
    %v782 = vcvt.s32.f32 %v750
    %v783 = vcvt.s32.f32 %v751
    %v784 = vcvt.s32.f32 %v752
    %v785 = vcvt.s32.f32 %v753
    %v786 = vcvt.s32.f32 %v754
    %v787 = vcvt.s32.f32 %v755
    %v788 = vcvt.s32.f32 %v756
    %v789 = vcvt.s32.f32 %v757
    %v790 = vcvt.s32.f32 %v758
    %v791 = vcvt.s32.f32 %v759
    %v792 = vadd.f32 %v568, %v760
    %v793 = vadd.f32 %v569, %v761
    %v794 = vadd.f32 %v570, %v762
    %v795 = vadd.f32 %v571, %v763
    %v796 = vadd.f32 %v572, %v764
    %v797 = vadd.f32 %v573, %v765
    %v798 = vadd.f32 %v574, %v766
    %v799 = vadd.f32 %v575, %v767
    %v800 = vadd.f32 %v576, %v768
    %v801 = vadd.f32 %v577, %v769
    %v802 = vadd.f32 %v578, %v770
    %v803 = vadd.f32 %v579, %v771
    %v804 = vadd.f32 %v580, %v772
    %v805 = vadd.f32 %v581, %v773
    %v806 = vadd.f32 %v582, %v774
    %v807 = vadd.f32 %v583, %v775
    %v808 = vadd.f32 %v584, %v776
    %v809 = vadd.f32 %v585, %v777
    %v810 = vadd.f32 %v586, %v778
    %v811 = vadd.f32 %v587, %v779
    %v812 = vadd.f32 %v588, %v780
    %v813 = vadd.f32 %v589, %v781
    %v814 = vadd.f32 %v590, %v782
    %v815 = vadd.f32 %v591, %v783
    %v816 = vadd.f32 %v592, %v784
    %v817 = vadd.f32 %v593, %v785
    %v818 = vadd.f32 %v594, %v786
    %v819 = vadd.f32 %v595, %v787
    %v820 = vadd.f32 %v596, %v788
    %v821 = vadd.f32 %v597, %v789
    %v822 = vadd.f32 %v598, %v790
    %v823 = vadd.f32 %v599, %v791
    %824 = vset.pattern.permute.xlu0 3
    %825 = vperm.xlu0 %824, %v115
    %v826 = vpop.permute.xlu0 %825
    %827 = vset.pattern.permute.xlu0 3
    %828 = vperm.xlu0 %827, %v116
    %v829 = vpop.permute.xlu0 %828
    %830 = vset.pattern.permute.xlu0 3
    %831 = vperm.xlu0 %830, %v117
    %v832 = vpop.permute.xlu0 %831
    %833 = vset.pattern.permute.xlu0 3
    %834 = vperm.xlu0 %833, %v118
    %v835 = vpop.permute.xlu0 %834
    %836 = vset.pattern.permute.xlu0 3
    %837 = vperm.xlu0 %836, %v119
    %v838 = vpop.permute.xlu0 %837
    %839 = vset.pattern.permute.xlu0 3
    %840 = vperm.xlu0 %839, %v120
    %v841 = vpop.permute.xlu0 %840
    %842 = vset.pattern.permute.xlu0 3
    %843 = vperm.xlu0 %842, %v121
    %v844 = vpop.permute.xlu0 %843
    %845 = vset.pattern.permute.xlu0 3
    %846 = vperm.xlu0 %845, %v122
    %v847 = vpop.permute.xlu0 %846
    %848 = vset.pattern.permute.xlu0 3
    %849 = vperm.xlu0 %848, %v123
    %v850 = vpop.permute.xlu0 %849
    %851 = vset.pattern.permute.xlu0 3
    %852 = vperm.xlu0 %851, %v124
    %v853 = vpop.permute.xlu0 %852
    %854 = vset.pattern.permute.xlu0 3
    %855 = vperm.xlu0 %854, %v125
    %v856 = vpop.permute.xlu0 %855
    %857 = vset.pattern.permute.xlu0 3
    %858 = vperm.xlu0 %857, %v126
    %v859 = vpop.permute.xlu0 %858
    %860 = vset.pattern.permute.xlu0 3
    %861 = vperm.xlu0 %860, %v127
    %v862 = vpop.permute.xlu0 %861
    %863 = vset.pattern.permute.xlu0 3
    %864 = vperm.xlu0 %863, %v128
    %v865 = vpop.permute.xlu0 %864
    %866 = vset.pattern.permute.xlu0 3
    %867 = vperm.xlu0 %866, %v129
    %v868 = vpop.permute.xlu0 %867
    %869 = vset.pattern.permute.xlu0 3
    %870 = vperm.xlu0 %869, %v130
    %v871 = vpop.permute.xlu0 %870
    %872 = vset.pattern.permute.xlu0 3
    %873 = vperm.xlu0 %872, %v131
    %v874 = vpop.permute.xlu0 %873
    %875 = vset.pattern.permute.xlu0 3
    %876 = vperm.xlu0 %875, %v132
    %v877 = vpop.permute.xlu0 %876
    %878 = vset.pattern.permute.xlu0 3
    %879 = vperm.xlu0 %878, %v133
    %v880 = vpop.permute.xlu0 %879
    %881 = vset.pattern.permute.xlu0 3
    %882 = vperm.xlu0 %881, %v134
    %v883 = vpop.permute.xlu0 %882
    %884 = vset.pattern.permute.xlu0 3
    %885 = vperm.xlu0 %884, %v135
    %v886 = vpop.permute.xlu0 %885
    %887 = vset.pattern.permute.xlu0 3
    %888 = vperm.xlu0 %887, %v136
    %v889 = vpop.permute.xlu0 %888
    %890 = vset.pattern.permute.xlu0 3
    %891 = vperm.xlu0 %890, %v137
    %v892 = vpop.permute.xlu0 %891
    %893 = vset.pattern.permute.xlu0 3
    %894 = vperm.xlu0 %893, %v138
    %v895 = vpop.permute.xlu0 %894
    %896 = vset.pattern.permute.xlu0 3
    %897 = vperm.xlu0 %896, %v139
    %v898 = vpop.permute.xlu0 %897
    %899 = vset.pattern.permute.xlu0 3
    %900 = vperm.xlu0 %899, %v140
    %v901 = vpop.permute.xlu0 %900
    %902 = vset.pattern.permute.xlu0 3
    %903 = vperm.xlu0 %902, %v141
    %v904 = vpop.permute.xlu0 %903
    %905 = vset.pattern.permute.xlu0 3
    %906 = vperm.xlu0 %905, %v142
    %v907 = vpop.permute.xlu0 %906
    %908 = vset.pattern.permute.xlu0 3
    %909 = vperm.xlu0 %908, %v143
    %v910 = vpop.permute.xlu0 %909
    %911 = vset.pattern.permute.xlu0 3
    %912 = vperm.xlu0 %911, %v144
    %v913 = vpop.permute.xlu0 %912
    %914 = vset.pattern.permute.xlu0 3
    %915 = vperm.xlu0 %914, %v145
    %v916 = vpop.permute.xlu0 %915
    %917 = vset.pattern.permute.xlu0 3
    %918 = vperm.xlu0 %917, %v146
    %v919 = vpop.permute.xlu0 %918
    %vm920 = vcmp.eq.s32.totalorder %v826, %v151
    %vm921 = vcmp.eq.s32.totalorder %v829, %v151
    %vm922 = vcmp.eq.s32.totalorder %v832, %v151
    %vm923 = vcmp.eq.s32.totalorder %v835, %v151
    %vm924 = vcmp.eq.s32.totalorder %v838, %v151
    %vm925 = vcmp.eq.s32.totalorder %v841, %v151
    %vm926 = vcmp.eq.s32.totalorder %v844, %v151
    %vm927 = vcmp.eq.s32.totalorder %v847, %v151
    %vm928 = vcmp.eq.s32.totalorder %v850, %v151
    %vm929 = vcmp.eq.s32.totalorder %v853, %v151
    %vm930 = vcmp.eq.s32.totalorder %v856, %v151
    %vm931 = vcmp.eq.s32.totalorder %v859, %v151
    %vm932 = vcmp.eq.s32.totalorder %v862, %v151
    %vm933 = vcmp.eq.s32.totalorder %v865, %v151
    %vm934 = vcmp.eq.s32.totalorder %v868, %v151
    %vm935 = vcmp.eq.s32.totalorder %v871, %v151
    %vm936 = vcmp.eq.s32.totalorder %v874, %v151
    %vm937 = vcmp.eq.s32.totalorder %v877, %v151
    %vm938 = vcmp.eq.s32.totalorder %v880, %v151
    %vm939 = vcmp.eq.s32.totalorder %v883, %v151
    %vm940 = vcmp.eq.s32.totalorder %v886, %v151
    %vm941 = vcmp.eq.s32.totalorder %v889, %v151
    %vm942 = vcmp.eq.s32.totalorder %v892, %v151
    %vm943 = vcmp.eq.s32.totalorder %v895, %v151
    %vm944 = vcmp.eq.s32.totalorder %v898, %v151
    %vm945 = vcmp.eq.s32.totalorder %v901, %v151
    %vm946 = vcmp.eq.s32.totalorder %v904, %v151
    %vm947 = vcmp.eq.s32.totalorder %v907, %v151
    %vm948 = vcmp.eq.s32.totalorder %v910, %v151
    %vm949 = vcmp.eq.s32.totalorder %v913, %v151
    %vm950 = vcmp.eq.s32.totalorder %v916, %v151
    %vm951 = vcmp.eq.s32.totalorder %v919, %v151
    %v952 = vsel %vm920, 1, 0
    %v953 = vsel %vm921, 1, 0
    %v954 = vsel %vm922, 1, 0
    %v955 = vsel %vm923, 1, 0
    %v956 = vsel %vm924, 1, 0
    %v957 = vsel %vm925, 1, 0
    %v958 = vsel %vm926, 1, 0
    %v959 = vsel %vm927, 1, 0
    %v960 = vsel %vm928, 1, 0
    %v961 = vsel %vm929, 1, 0
    %v962 = vsel %vm930, 1, 0
    %v963 = vsel %vm931, 1, 0
    %v964 = vsel %vm932, 1, 0
    %v965 = vsel %vm933, 1, 0
    %v966 = vsel %vm934, 1, 0
    %v967 = vsel %vm935, 1, 0
    %v968 = vsel %vm936, 1, 0
    %v969 = vsel %vm937, 1, 0
    %v970 = vsel %vm938, 1, 0
    %v971 = vsel %vm939, 1, 0
    %v972 = vsel %vm940, 1, 0
    %v973 = vsel %vm941, 1, 0
    %v974 = vsel %vm942, 1, 0
    %v975 = vsel %vm943, 1, 0
    %v976 = vsel %vm944, 1, 0
    %v977 = vsel %vm945, 1, 0
    %v978 = vsel %vm946, 1, 0
    %v979 = vsel %vm947, 1, 0
    %v980 = vsel %vm948, 1, 0
    %v981 = vsel %vm949, 1, 0
    %v982 = vsel %vm950, 1, 0
    %v983 = vsel %vm951, 1, 0
    %v984 = vcvt.s32.f32 %v952
    %v985 = vcvt.s32.f32 %v953
    %v986 = vcvt.s32.f32 %v954
    %v987 = vcvt.s32.f32 %v955
    %v988 = vcvt.s32.f32 %v956
    %v989 = vcvt.s32.f32 %v957
    %v990 = vcvt.s32.f32 %v958
    %v991 = vcvt.s32.f32 %v959
    %v992 = vcvt.s32.f32 %v960
    %v993 = vcvt.s32.f32 %v961
    %v994 = vcvt.s32.f32 %v962
    %v995 = vcvt.s32.f32 %v963
    %v996 = vcvt.s32.f32 %v964
    %v997 = vcvt.s32.f32 %v965
    %v998 = vcvt.s32.f32 %v966
    %v999 = vcvt.s32.f32 %v967
    %v1000 = vcvt.s32.f32 %v968
    %v1001 = vcvt.s32.f32 %v969
    %v1002 = vcvt.s32.f32 %v970
    %v1003 = vcvt.s32.f32 %v971
    %v1004 = vcvt.s32.f32 %v972
    %v1005 = vcvt.s32.f32 %v973
    %v1006 = vcvt.s32.f32 %v974
    %v1007 = vcvt.s32.f32 %v975
    %v1008 = vcvt.s32.f32 %v976
    %v1009 = vcvt.s32.f32 %v977
    %v1010 = vcvt.s32.f32 %v978
    %v1011 = vcvt.s32.f32 %v979
    %v1012 = vcvt.s32.f32 %v980
    %v1013 = vcvt.s32.f32 %v981
    %v1014 = vcvt.s32.f32 %v982
    %v1015 = vcvt.s32.f32 %v983
    %v1016 = vadd.f32 %v792, %v984
    %v1017 = vadd.f32 %v793, %v985
    %v1018 = vadd.f32 %v794, %v986
    %v1019 = vadd.f32 %v795, %v987
    %v1020 = vadd.f32 %v796, %v988
    %v1021 = vadd.f32 %v797, %v989
    %v1022 = vadd.f32 %v798, %v990
    %v1023 = vadd.f32 %v799, %v991
    %v1024 = vadd.f32 %v800, %v992
    %v1025 = vadd.f32 %v801, %v993
    %v1026 = vadd.f32 %v802, %v994
    %v1027 = vadd.f32 %v803, %v995
    %v1028 = vadd.f32 %v804, %v996
    %v1029 = vadd.f32 %v805, %v997
    %v1030 = vadd.f32 %v806, %v998
    %v1031 = vadd.f32 %v807, %v999
    %v1032 = vadd.f32 %v808, %v1000
    %v1033 = vadd.f32 %v809, %v1001
    %v1034 = vadd.f32 %v810, %v1002
    %v1035 = vadd.f32 %v811, %v1003
    %v1036 = vadd.f32 %v812, %v1004
    %v1037 = vadd.f32 %v813, %v1005
    %v1038 = vadd.f32 %v814, %v1006
    %v1039 = vadd.f32 %v815, %v1007
    %v1040 = vadd.f32 %v816, %v1008
    %v1041 = vadd.f32 %v817, %v1009
    %v1042 = vadd.f32 %v818, %v1010
    %v1043 = vadd.f32 %v819, %v1011
    %v1044 = vadd.f32 %v820, %v1012
    %v1045 = vadd.f32 %v821, %v1013
    %v1046 = vadd.f32 %v822, %v1014
    %v1047 = vadd.f32 %v823, %v1015
    %1048 = vset.pattern.permute.xlu0 4
    %1049 = vperm.xlu0 %1048, %v115
    %v1050 = vpop.permute.xlu0 %1049
    %1051 = vset.pattern.permute.xlu0 4
    %1052 = vperm.xlu0 %1051, %v116
    %v1053 = vpop.permute.xlu0 %1052
    %1054 = vset.pattern.permute.xlu0 4
    %1055 = vperm.xlu0 %1054, %v117
    %v1056 = vpop.permute.xlu0 %1055
    %1057 = vset.pattern.permute.xlu0 4
    %1058 = vperm.xlu0 %1057, %v118
    %v1059 = vpop.permute.xlu0 %1058
    %1060 = vset.pattern.permute.xlu0 4
    %1061 = vperm.xlu0 %1060, %v119
    %v1062 = vpop.permute.xlu0 %1061
    %1063 = vset.pattern.permute.xlu0 4
    %1064 = vperm.xlu0 %1063, %v120
    %v1065 = vpop.permute.xlu0 %1064
    %1066 = vset.pattern.permute.xlu0 4
    %1067 = vperm.xlu0 %1066, %v121
    %v1068 = vpop.permute.xlu0 %1067
    %1069 = vset.pattern.permute.xlu0 4
    %1070 = vperm.xlu0 %1069, %v122
    %v1071 = vpop.permute.xlu0 %1070
    %1072 = vset.pattern.permute.xlu0 4
    %1073 = vperm.xlu0 %1072, %v123
    %v1074 = vpop.permute.xlu0 %1073
    %1075 = vset.pattern.permute.xlu0 4
    %1076 = vperm.xlu0 %1075, %v124
    %v1077 = vpop.permute.xlu0 %1076
    %1078 = vset.pattern.permute.xlu0 4
    %1079 = vperm.xlu0 %1078, %v125
    %v1080 = vpop.permute.xlu0 %1079
    %1081 = vset.pattern.permute.xlu0 4
    %1082 = vperm.xlu0 %1081, %v126
    %v1083 = vpop.permute.xlu0 %1082
    %1084 = vset.pattern.permute.xlu0 4
    %1085 = vperm.xlu0 %1084, %v127
    %v1086 = vpop.permute.xlu0 %1085
    %1087 = vset.pattern.permute.xlu0 4
    %1088 = vperm.xlu0 %1087, %v128
    %v1089 = vpop.permute.xlu0 %1088
    %1090 = vset.pattern.permute.xlu0 4
    %1091 = vperm.xlu0 %1090, %v129
    %v1092 = vpop.permute.xlu0 %1091
    %1093 = vset.pattern.permute.xlu0 4
    %1094 = vperm.xlu0 %1093, %v130
    %v1095 = vpop.permute.xlu0 %1094
    %1096 = vset.pattern.permute.xlu0 4
    %1097 = vperm.xlu0 %1096, %v131
    %v1098 = vpop.permute.xlu0 %1097
    %1099 = vset.pattern.permute.xlu0 4
    %1100 = vperm.xlu0 %1099, %v132
    %v1101 = vpop.permute.xlu0 %1100
    %1102 = vset.pattern.permute.xlu0 4
    %1103 = vperm.xlu0 %1102, %v133
    %v1104 = vpop.permute.xlu0 %1103
    %1105 = vset.pattern.permute.xlu0 4
    %1106 = vperm.xlu0 %1105, %v134
    %v1107 = vpop.permute.xlu0 %1106
    %1108 = vset.pattern.permute.xlu0 4
    %1109 = vperm.xlu0 %1108, %v135
    %v1110 = vpop.permute.xlu0 %1109
    %1111 = vset.pattern.permute.xlu0 4
    %1112 = vperm.xlu0 %1111, %v136
    %v1113 = vpop.permute.xlu0 %1112
    %1114 = vset.pattern.permute.xlu0 4
    %1115 = vperm.xlu0 %1114, %v137
    %v1116 = vpop.permute.xlu0 %1115
    %1117 = vset.pattern.permute.xlu0 4
    %1118 = vperm.xlu0 %1117, %v138
    %v1119 = vpop.permute.xlu0 %1118
    %1120 = vset.pattern.permute.xlu0 4
    %1121 = vperm.xlu0 %1120, %v139
    %v1122 = vpop.permute.xlu0 %1121
    %1123 = vset.pattern.permute.xlu0 4
    %1124 = vperm.xlu0 %1123, %v140
    %v1125 = vpop.permute.xlu0 %1124
    %1126 = vset.pattern.permute.xlu0 4
    %1127 = vperm.xlu0 %1126, %v141
    %v1128 = vpop.permute.xlu0 %1127
    %1129 = vset.pattern.permute.xlu0 4
    %1130 = vperm.xlu0 %1129, %v142
    %v1131 = vpop.permute.xlu0 %1130
    %1132 = vset.pattern.permute.xlu0 4
    %1133 = vperm.xlu0 %1132, %v143
    %v1134 = vpop.permute.xlu0 %1133
    %1135 = vset.pattern.permute.xlu0 4
    %1136 = vperm.xlu0 %1135, %v144
    %v1137 = vpop.permute.xlu0 %1136
    %1138 = vset.pattern.permute.xlu0 4
    %1139 = vperm.xlu0 %1138, %v145
    %v1140 = vpop.permute.xlu0 %1139
    %1141 = vset.pattern.permute.xlu0 4
    %1142 = vperm.xlu0 %1141, %v146
    %v1143 = vpop.permute.xlu0 %1142
    %vm1144 = vcmp.eq.s32.totalorder %v1050, %v151
    %vm1145 = vcmp.eq.s32.totalorder %v1053, %v151
    %vm1146 = vcmp.eq.s32.totalorder %v1056, %v151
    %vm1147 = vcmp.eq.s32.totalorder %v1059, %v151
    %vm1148 = vcmp.eq.s32.totalorder %v1062, %v151
    %vm1149 = vcmp.eq.s32.totalorder %v1065, %v151
    %vm1150 = vcmp.eq.s32.totalorder %v1068, %v151
    %vm1151 = vcmp.eq.s32.totalorder %v1071, %v151
    %vm1152 = vcmp.eq.s32.totalorder %v1074, %v151
    %vm1153 = vcmp.eq.s32.totalorder %v1077, %v151
    %vm1154 = vcmp.eq.s32.totalorder %v1080, %v151
    %vm1155 = vcmp.eq.s32.totalorder %v1083, %v151
    %vm1156 = vcmp.eq.s32.totalorder %v1086, %v151
    %vm1157 = vcmp.eq.s32.totalorder %v1089, %v151
    %vm1158 = vcmp.eq.s32.totalorder %v1092, %v151
    %vm1159 = vcmp.eq.s32.totalorder %v1095, %v151
    %vm1160 = vcmp.eq.s32.totalorder %v1098, %v151
    %vm1161 = vcmp.eq.s32.totalorder %v1101, %v151
    %vm1162 = vcmp.eq.s32.totalorder %v1104, %v151
    %vm1163 = vcmp.eq.s32.totalorder %v1107, %v151
    %vm1164 = vcmp.eq.s32.totalorder %v1110, %v151
    %vm1165 = vcmp.eq.s32.totalorder %v1113, %v151
    %vm1166 = vcmp.eq.s32.totalorder %v1116, %v151
    %vm1167 = vcmp.eq.s32.totalorder %v1119, %v151
    %vm1168 = vcmp.eq.s32.totalorder %v1122, %v151
    %vm1169 = vcmp.eq.s32.totalorder %v1125, %v151
    %vm1170 = vcmp.eq.s32.totalorder %v1128, %v151
    %vm1171 = vcmp.eq.s32.totalorder %v1131, %v151
    %vm1172 = vcmp.eq.s32.totalorder %v1134, %v151
    %vm1173 = vcmp.eq.s32.totalorder %v1137, %v151
    %vm1174 = vcmp.eq.s32.totalorder %v1140, %v151
    %vm1175 = vcmp.eq.s32.totalorder %v1143, %v151
    %v1176 = vsel %vm1144, 1, 0
    %v1177 = vsel %vm1145, 1, 0
    %v1178 = vsel %vm1146, 1, 0
    %v1179 = vsel %vm1147, 1, 0
    %v1180 = vsel %vm1148, 1, 0
    %v1181 = vsel %vm1149, 1, 0
    %v1182 = vsel %vm1150, 1, 0
    %v1183 = vsel %vm1151, 1, 0
    %v1184 = vsel %vm1152, 1, 0
    %v1185 = vsel %vm1153, 1, 0
    %v1186 = vsel %vm1154, 1, 0
    %v1187 = vsel %vm1155, 1, 0
    %v1188 = vsel %vm1156, 1, 0
    %v1189 = vsel %vm1157, 1, 0
    %v1190 = vsel %vm1158, 1, 0
    %v1191 = vsel %vm1159, 1, 0
    %v1192 = vsel %vm1160, 1, 0
    %v1193 = vsel %vm1161, 1, 0
    %v1194 = vsel %vm1162, 1, 0
    %v1195 = vsel %vm1163, 1, 0
    %v1196 = vsel %vm1164, 1, 0
    %v1197 = vsel %vm1165, 1, 0
    %v1198 = vsel %vm1166, 1, 0
    %v1199 = vsel %vm1167, 1, 0
    %v1200 = vsel %vm1168, 1, 0
    %v1201 = vsel %vm1169, 1, 0
    %v1202 = vsel %vm1170, 1, 0
    %v1203 = vsel %vm1171, 1, 0
    %v1204 = vsel %vm1172, 1, 0
    %v1205 = vsel %vm1173, 1, 0
    %v1206 = vsel %vm1174, 1, 0
    %v1207 = vsel %vm1175, 1, 0
    %v1208 = vcvt.s32.f32 %v1176
    %v1209 = vcvt.s32.f32 %v1177
    %v1210 = vcvt.s32.f32 %v1178
    %v1211 = vcvt.s32.f32 %v1179
    %v1212 = vcvt.s32.f32 %v1180
    %v1213 = vcvt.s32.f32 %v1181
    %v1214 = vcvt.s32.f32 %v1182
    %v1215 = vcvt.s32.f32 %v1183
    %v1216 = vcvt.s32.f32 %v1184
    %v1217 = vcvt.s32.f32 %v1185
    %v1218 = vcvt.s32.f32 %v1186
    %v1219 = vcvt.s32.f32 %v1187
    %v1220 = vcvt.s32.f32 %v1188
    %v1221 = vcvt.s32.f32 %v1189
    %v1222 = vcvt.s32.f32 %v1190
    %v1223 = vcvt.s32.f32 %v1191
    %v1224 = vcvt.s32.f32 %v1192
    %v1225 = vcvt.s32.f32 %v1193
    %v1226 = vcvt.s32.f32 %v1194
    %v1227 = vcvt.s32.f32 %v1195
    %v1228 = vcvt.s32.f32 %v1196
    %v1229 = vcvt.s32.f32 %v1197
    %v1230 = vcvt.s32.f32 %v1198
    %v1231 = vcvt.s32.f32 %v1199
    %v1232 = vcvt.s32.f32 %v1200
    %v1233 = vcvt.s32.f32 %v1201
    %v1234 = vcvt.s32.f32 %v1202
    %v1235 = vcvt.s32.f32 %v1203
    %v1236 = vcvt.s32.f32 %v1204
    %v1237 = vcvt.s32.f32 %v1205
    %v1238 = vcvt.s32.f32 %v1206
    %v1239 = vcvt.s32.f32 %v1207
    %v1240 = vadd.f32 %v1016, %v1208
    %v1241 = vadd.f32 %v1017, %v1209
    %v1242 = vadd.f32 %v1018, %v1210
    %v1243 = vadd.f32 %v1019, %v1211
    %v1244 = vadd.f32 %v1020, %v1212
    %v1245 = vadd.f32 %v1021, %v1213
    %v1246 = vadd.f32 %v1022, %v1214
    %v1247 = vadd.f32 %v1023, %v1215
    %v1248 = vadd.f32 %v1024, %v1216
    %v1249 = vadd.f32 %v1025, %v1217
    %v1250 = vadd.f32 %v1026, %v1218
    %v1251 = vadd.f32 %v1027, %v1219
    %v1252 = vadd.f32 %v1028, %v1220
    %v1253 = vadd.f32 %v1029, %v1221
    %v1254 = vadd.f32 %v1030, %v1222
    %v1255 = vadd.f32 %v1031, %v1223
    %v1256 = vadd.f32 %v1032, %v1224
    %v1257 = vadd.f32 %v1033, %v1225
    %v1258 = vadd.f32 %v1034, %v1226
    %v1259 = vadd.f32 %v1035, %v1227
    %v1260 = vadd.f32 %v1036, %v1228
    %v1261 = vadd.f32 %v1037, %v1229
    %v1262 = vadd.f32 %v1038, %v1230
    %v1263 = vadd.f32 %v1039, %v1231
    %v1264 = vadd.f32 %v1040, %v1232
    %v1265 = vadd.f32 %v1041, %v1233
    %v1266 = vadd.f32 %v1042, %v1234
    %v1267 = vadd.f32 %v1043, %v1235
    %v1268 = vadd.f32 %v1044, %v1236
    %v1269 = vadd.f32 %v1045, %v1237
    %v1270 = vadd.f32 %v1046, %v1238
    %v1271 = vadd.f32 %v1047, %v1239
    %1272 = vset.pattern.permute.xlu0 5
    %1273 = vperm.xlu0 %1272, %v115
    %v1274 = vpop.permute.xlu0 %1273
    %1275 = vset.pattern.permute.xlu0 5
    %1276 = vperm.xlu0 %1275, %v116
    %v1277 = vpop.permute.xlu0 %1276
    %1278 = vset.pattern.permute.xlu0 5
    %1279 = vperm.xlu0 %1278, %v117
    %v1280 = vpop.permute.xlu0 %1279
    %1281 = vset.pattern.permute.xlu0 5
    %1282 = vperm.xlu0 %1281, %v118
    %v1283 = vpop.permute.xlu0 %1282
    %1284 = vset.pattern.permute.xlu0 5
    %1285 = vperm.xlu0 %1284, %v119
    %v1286 = vpop.permute.xlu0 %1285
    %1287 = vset.pattern.permute.xlu0 5
    %1288 = vperm.xlu0 %1287, %v120
    %v1289 = vpop.permute.xlu0 %1288
    %1290 = vset.pattern.permute.xlu0 5
    %1291 = vperm.xlu0 %1290, %v121
    %v1292 = vpop.permute.xlu0 %1291
    %1293 = vset.pattern.permute.xlu0 5
    %1294 = vperm.xlu0 %1293, %v122
    %v1295 = vpop.permute.xlu0 %1294
    %1296 = vset.pattern.permute.xlu0 5
    %1297 = vperm.xlu0 %1296, %v123
    %v1298 = vpop.permute.xlu0 %1297
    %1299 = vset.pattern.permute.xlu0 5
    %1300 = vperm.xlu0 %1299, %v124
    %v1301 = vpop.permute.xlu0 %1300
    %1302 = vset.pattern.permute.xlu0 5
    %1303 = vperm.xlu0 %1302, %v125
    %v1304 = vpop.permute.xlu0 %1303
    %1305 = vset.pattern.permute.xlu0 5
    %1306 = vperm.xlu0 %1305, %v126
    %v1307 = vpop.permute.xlu0 %1306
    %1308 = vset.pattern.permute.xlu0 5
    %1309 = vperm.xlu0 %1308, %v127
    %v1310 = vpop.permute.xlu0 %1309
    %1311 = vset.pattern.permute.xlu0 5
    %1312 = vperm.xlu0 %1311, %v128
    %v1313 = vpop.permute.xlu0 %1312
    %1314 = vset.pattern.permute.xlu0 5
    %1315 = vperm.xlu0 %1314, %v129
    %v1316 = vpop.permute.xlu0 %1315
    %1317 = vset.pattern.permute.xlu0 5
    %1318 = vperm.xlu0 %1317, %v130
    %v1319 = vpop.permute.xlu0 %1318
    %1320 = vset.pattern.permute.xlu0 5
    %1321 = vperm.xlu0 %1320, %v131
    %v1322 = vpop.permute.xlu0 %1321
    %1323 = vset.pattern.permute.xlu0 5
    %1324 = vperm.xlu0 %1323, %v132
    %v1325 = vpop.permute.xlu0 %1324
    %1326 = vset.pattern.permute.xlu0 5
    %1327 = vperm.xlu0 %1326, %v133
    %v1328 = vpop.permute.xlu0 %1327
    %1329 = vset.pattern.permute.xlu0 5
    %1330 = vperm.xlu0 %1329, %v134
    %v1331 = vpop.permute.xlu0 %1330
    %1332 = vset.pattern.permute.xlu0 5
    %1333 = vperm.xlu0 %1332, %v135
    %v1334 = vpop.permute.xlu0 %1333
    %1335 = vset.pattern.permute.xlu0 5
    %1336 = vperm.xlu0 %1335, %v136
    %v1337 = vpop.permute.xlu0 %1336
    %1338 = vset.pattern.permute.xlu0 5
    %1339 = vperm.xlu0 %1338, %v137
    %v1340 = vpop.permute.xlu0 %1339
    %1341 = vset.pattern.permute.xlu0 5
    %1342 = vperm.xlu0 %1341, %v138
    %v1343 = vpop.permute.xlu0 %1342
    %1344 = vset.pattern.permute.xlu0 5
    %1345 = vperm.xlu0 %1344, %v139
    %v1346 = vpop.permute.xlu0 %1345
    %1347 = vset.pattern.permute.xlu0 5
    %1348 = vperm.xlu0 %1347, %v140
    %v1349 = vpop.permute.xlu0 %1348
    %1350 = vset.pattern.permute.xlu0 5
    %1351 = vperm.xlu0 %1350, %v141
    %v1352 = vpop.permute.xlu0 %1351
    %1353 = vset.pattern.permute.xlu0 5
    %1354 = vperm.xlu0 %1353, %v142
    %v1355 = vpop.permute.xlu0 %1354
    %1356 = vset.pattern.permute.xlu0 5
    %1357 = vperm.xlu0 %1356, %v143
    %v1358 = vpop.permute.xlu0 %1357
    %1359 = vset.pattern.permute.xlu0 5
    %1360 = vperm.xlu0 %1359, %v144
    %v1361 = vpop.permute.xlu0 %1360
    %1362 = vset.pattern.permute.xlu0 5
    %1363 = vperm.xlu0 %1362, %v145
    %v1364 = vpop.permute.xlu0 %1363
    %1365 = vset.pattern.permute.xlu0 5
    %1366 = vperm.xlu0 %1365, %v146
    %v1367 = vpop.permute.xlu0 %1366
    %vm1368 = vcmp.eq.s32.totalorder %v1274, %v151
    %vm1369 = vcmp.eq.s32.totalorder %v1277, %v151
    %vm1370 = vcmp.eq.s32.totalorder %v1280, %v151
    %vm1371 = vcmp.eq.s32.totalorder %v1283, %v151
    %vm1372 = vcmp.eq.s32.totalorder %v1286, %v151
    %vm1373 = vcmp.eq.s32.totalorder %v1289, %v151
    %vm1374 = vcmp.eq.s32.totalorder %v1292, %v151
    %vm1375 = vcmp.eq.s32.totalorder %v1295, %v151
    %vm1376 = vcmp.eq.s32.totalorder %v1298, %v151
    %vm1377 = vcmp.eq.s32.totalorder %v1301, %v151
    %vm1378 = vcmp.eq.s32.totalorder %v1304, %v151
    %vm1379 = vcmp.eq.s32.totalorder %v1307, %v151
    %vm1380 = vcmp.eq.s32.totalorder %v1310, %v151
    %vm1381 = vcmp.eq.s32.totalorder %v1313, %v151
    %vm1382 = vcmp.eq.s32.totalorder %v1316, %v151
    %vm1383 = vcmp.eq.s32.totalorder %v1319, %v151
    %vm1384 = vcmp.eq.s32.totalorder %v1322, %v151
    %vm1385 = vcmp.eq.s32.totalorder %v1325, %v151
    %vm1386 = vcmp.eq.s32.totalorder %v1328, %v151
    %vm1387 = vcmp.eq.s32.totalorder %v1331, %v151
    %vm1388 = vcmp.eq.s32.totalorder %v1334, %v151
    %vm1389 = vcmp.eq.s32.totalorder %v1337, %v151
    %vm1390 = vcmp.eq.s32.totalorder %v1340, %v151
    %vm1391 = vcmp.eq.s32.totalorder %v1343, %v151
    %vm1392 = vcmp.eq.s32.totalorder %v1346, %v151
    %vm1393 = vcmp.eq.s32.totalorder %v1349, %v151
    %vm1394 = vcmp.eq.s32.totalorder %v1352, %v151
    %vm1395 = vcmp.eq.s32.totalorder %v1355, %v151
    %vm1396 = vcmp.eq.s32.totalorder %v1358, %v151
    %vm1397 = vcmp.eq.s32.totalorder %v1361, %v151
    %vm1398 = vcmp.eq.s32.totalorder %v1364, %v151
    %vm1399 = vcmp.eq.s32.totalorder %v1367, %v151
    %v1400 = vsel %vm1368, 1, 0
    %v1401 = vsel %vm1369, 1, 0
    %v1402 = vsel %vm1370, 1, 0
    %v1403 = vsel %vm1371, 1, 0
    %v1404 = vsel %vm1372, 1, 0
    %v1405 = vsel %vm1373, 1, 0
    %v1406 = vsel %vm1374, 1, 0
    %v1407 = vsel %vm1375, 1, 0
    %v1408 = vsel %vm1376, 1, 0
    %v1409 = vsel %vm1377, 1, 0
    %v1410 = vsel %vm1378, 1, 0
    %v1411 = vsel %vm1379, 1, 0
    %v1412 = vsel %vm1380, 1, 0
    %v1413 = vsel %vm1381, 1, 0
    %v1414 = vsel %vm1382, 1, 0
    %v1415 = vsel %vm1383, 1, 0
    %v1416 = vsel %vm1384, 1, 0
    %v1417 = vsel %vm1385, 1, 0
    %v1418 = vsel %vm1386, 1, 0
    %v1419 = vsel %vm1387, 1, 0
    %v1420 = vsel %vm1388, 1, 0
    %v1421 = vsel %vm1389, 1, 0
    %v1422 = vsel %vm1390, 1, 0
    %v1423 = vsel %vm1391, 1, 0
    %v1424 = vsel %vm1392, 1, 0
    %v1425 = vsel %vm1393, 1, 0
    %v1426 = vsel %vm1394, 1, 0
    %v1427 = vsel %vm1395, 1, 0
    %v1428 = vsel %vm1396, 1, 0
    %v1429 = vsel %vm1397, 1, 0
    %v1430 = vsel %vm1398, 1, 0
    %v1431 = vsel %vm1399, 1, 0
    %v1432 = vcvt.s32.f32 %v1400
    %v1433 = vcvt.s32.f32 %v1401
    %v1434 = vcvt.s32.f32 %v1402
    %v1435 = vcvt.s32.f32 %v1403
    %v1436 = vcvt.s32.f32 %v1404
    %v1437 = vcvt.s32.f32 %v1405
    %v1438 = vcvt.s32.f32 %v1406
    %v1439 = vcvt.s32.f32 %v1407
    %v1440 = vcvt.s32.f32 %v1408
    %v1441 = vcvt.s32.f32 %v1409
    %v1442 = vcvt.s32.f32 %v1410
    %v1443 = vcvt.s32.f32 %v1411
    %v1444 = vcvt.s32.f32 %v1412
    %v1445 = vcvt.s32.f32 %v1413
    %v1446 = vcvt.s32.f32 %v1414
    %v1447 = vcvt.s32.f32 %v1415
    %v1448 = vcvt.s32.f32 %v1416
    %v1449 = vcvt.s32.f32 %v1417
    %v1450 = vcvt.s32.f32 %v1418
    %v1451 = vcvt.s32.f32 %v1419
    %v1452 = vcvt.s32.f32 %v1420
    %v1453 = vcvt.s32.f32 %v1421
    %v1454 = vcvt.s32.f32 %v1422
    %v1455 = vcvt.s32.f32 %v1423
    %v1456 = vcvt.s32.f32 %v1424
    %v1457 = vcvt.s32.f32 %v1425
    %v1458 = vcvt.s32.f32 %v1426
    %v1459 = vcvt.s32.f32 %v1427
    %v1460 = vcvt.s32.f32 %v1428
    %v1461 = vcvt.s32.f32 %v1429
    %v1462 = vcvt.s32.f32 %v1430
    %v1463 = vcvt.s32.f32 %v1431
    %v1464 = vadd.f32 %v1240, %v1432
    %v1465 = vadd.f32 %v1241, %v1433
    %v1466 = vadd.f32 %v1242, %v1434
    %v1467 = vadd.f32 %v1243, %v1435
    %v1468 = vadd.f32 %v1244, %v1436
    %v1469 = vadd.f32 %v1245, %v1437
    %v1470 = vadd.f32 %v1246, %v1438
    %v1471 = vadd.f32 %v1247, %v1439
    %v1472 = vadd.f32 %v1248, %v1440
    %v1473 = vadd.f32 %v1249, %v1441
    %v1474 = vadd.f32 %v1250, %v1442
    %v1475 = vadd.f32 %v1251, %v1443
    %v1476 = vadd.f32 %v1252, %v1444
    %v1477 = vadd.f32 %v1253, %v1445
    %v1478 = vadd.f32 %v1254, %v1446
    %v1479 = vadd.f32 %v1255, %v1447
    %v1480 = vadd.f32 %v1256, %v1448
    %v1481 = vadd.f32 %v1257, %v1449
    %v1482 = vadd.f32 %v1258, %v1450
    %v1483 = vadd.f32 %v1259, %v1451
    %v1484 = vadd.f32 %v1260, %v1452
    %v1485 = vadd.f32 %v1261, %v1453
    %v1486 = vadd.f32 %v1262, %v1454
    %v1487 = vadd.f32 %v1263, %v1455
    %v1488 = vadd.f32 %v1264, %v1456
    %v1489 = vadd.f32 %v1265, %v1457
    %v1490 = vadd.f32 %v1266, %v1458
    %v1491 = vadd.f32 %v1267, %v1459
    %v1492 = vadd.f32 %v1268, %v1460
    %v1493 = vadd.f32 %v1269, %v1461
    %v1494 = vadd.f32 %v1270, %v1462
    %v1495 = vadd.f32 %v1271, %v1463
    %1496 = vset.pattern.permute.xlu0 6
    %1497 = vperm.xlu0 %1496, %v115
    %v1498 = vpop.permute.xlu0 %1497
    %1499 = vset.pattern.permute.xlu0 6
    %1500 = vperm.xlu0 %1499, %v116
    %v1501 = vpop.permute.xlu0 %1500
    %1502 = vset.pattern.permute.xlu0 6
    %1503 = vperm.xlu0 %1502, %v117
    %v1504 = vpop.permute.xlu0 %1503
    %1505 = vset.pattern.permute.xlu0 6
    %1506 = vperm.xlu0 %1505, %v118
    %v1507 = vpop.permute.xlu0 %1506
    %1508 = vset.pattern.permute.xlu0 6
    %1509 = vperm.xlu0 %1508, %v119
    %v1510 = vpop.permute.xlu0 %1509
    %1511 = vset.pattern.permute.xlu0 6
    %1512 = vperm.xlu0 %1511, %v120
    %v1513 = vpop.permute.xlu0 %1512
    %1514 = vset.pattern.permute.xlu0 6
    %1515 = vperm.xlu0 %1514, %v121
    %v1516 = vpop.permute.xlu0 %1515
    %1517 = vset.pattern.permute.xlu0 6
    %1518 = vperm.xlu0 %1517, %v122
    %v1519 = vpop.permute.xlu0 %1518
    %1520 = vset.pattern.permute.xlu0 6
    %1521 = vperm.xlu0 %1520, %v123
    %v1522 = vpop.permute.xlu0 %1521
    %1523 = vset.pattern.permute.xlu0 6
    %1524 = vperm.xlu0 %1523, %v124
    %v1525 = vpop.permute.xlu0 %1524
    %1526 = vset.pattern.permute.xlu0 6
    %1527 = vperm.xlu0 %1526, %v125
    %v1528 = vpop.permute.xlu0 %1527
    %1529 = vset.pattern.permute.xlu0 6
    %1530 = vperm.xlu0 %1529, %v126
    %v1531 = vpop.permute.xlu0 %1530
    %1532 = vset.pattern.permute.xlu0 6
    %1533 = vperm.xlu0 %1532, %v127
    %v1534 = vpop.permute.xlu0 %1533
    %1535 = vset.pattern.permute.xlu0 6
    %1536 = vperm.xlu0 %1535, %v128
    %v1537 = vpop.permute.xlu0 %1536
    %1538 = vset.pattern.permute.xlu0 6
    %1539 = vperm.xlu0 %1538, %v129
    %v1540 = vpop.permute.xlu0 %1539
    %1541 = vset.pattern.permute.xlu0 6
    %1542 = vperm.xlu0 %1541, %v130
    %v1543 = vpop.permute.xlu0 %1542
    %1544 = vset.pattern.permute.xlu0 6
    %1545 = vperm.xlu0 %1544, %v131
    %v1546 = vpop.permute.xlu0 %1545
    %1547 = vset.pattern.permute.xlu0 6
    %1548 = vperm.xlu0 %1547, %v132
    %v1549 = vpop.permute.xlu0 %1548
    %1550 = vset.pattern.permute.xlu0 6
    %1551 = vperm.xlu0 %1550, %v133
    %v1552 = vpop.permute.xlu0 %1551
    %1553 = vset.pattern.permute.xlu0 6
    %1554 = vperm.xlu0 %1553, %v134
    %v1555 = vpop.permute.xlu0 %1554
    %1556 = vset.pattern.permute.xlu0 6
    %1557 = vperm.xlu0 %1556, %v135
    %v1558 = vpop.permute.xlu0 %1557
    %1559 = vset.pattern.permute.xlu0 6
    %1560 = vperm.xlu0 %1559, %v136
    %v1561 = vpop.permute.xlu0 %1560
    %1562 = vset.pattern.permute.xlu0 6
    %1563 = vperm.xlu0 %1562, %v137
    %v1564 = vpop.permute.xlu0 %1563
    %1565 = vset.pattern.permute.xlu0 6
    %1566 = vperm.xlu0 %1565, %v138
    %v1567 = vpop.permute.xlu0 %1566
    %1568 = vset.pattern.permute.xlu0 6
    %1569 = vperm.xlu0 %1568, %v139
    %v1570 = vpop.permute.xlu0 %1569
    %1571 = vset.pattern.permute.xlu0 6
    %1572 = vperm.xlu0 %1571, %v140
    %v1573 = vpop.permute.xlu0 %1572
    %1574 = vset.pattern.permute.xlu0 6
    %1575 = vperm.xlu0 %1574, %v141
    %v1576 = vpop.permute.xlu0 %1575
    %1577 = vset.pattern.permute.xlu0 6
    %1578 = vperm.xlu0 %1577, %v142
    %v1579 = vpop.permute.xlu0 %1578
    %1580 = vset.pattern.permute.xlu0 6
    %1581 = vperm.xlu0 %1580, %v143
    %v1582 = vpop.permute.xlu0 %1581
    %1583 = vset.pattern.permute.xlu0 6
    %1584 = vperm.xlu0 %1583, %v144
    %v1585 = vpop.permute.xlu0 %1584
    %1586 = vset.pattern.permute.xlu0 6
    %1587 = vperm.xlu0 %1586, %v145
    %v1588 = vpop.permute.xlu0 %1587
    %1589 = vset.pattern.permute.xlu0 6
    %1590 = vperm.xlu0 %1589, %v146
    %v1591 = vpop.permute.xlu0 %1590
    %vm1592 = vcmp.eq.s32.totalorder %v1498, %v151
    %vm1593 = vcmp.eq.s32.totalorder %v1501, %v151
    %vm1594 = vcmp.eq.s32.totalorder %v1504, %v151
    %vm1595 = vcmp.eq.s32.totalorder %v1507, %v151
    %vm1596 = vcmp.eq.s32.totalorder %v1510, %v151
    %vm1597 = vcmp.eq.s32.totalorder %v1513, %v151
    %vm1598 = vcmp.eq.s32.totalorder %v1516, %v151
    %vm1599 = vcmp.eq.s32.totalorder %v1519, %v151
    %vm1600 = vcmp.eq.s32.totalorder %v1522, %v151
    %vm1601 = vcmp.eq.s32.totalorder %v1525, %v151
    %vm1602 = vcmp.eq.s32.totalorder %v1528, %v151
    %vm1603 = vcmp.eq.s32.totalorder %v1531, %v151
    %vm1604 = vcmp.eq.s32.totalorder %v1534, %v151
    %vm1605 = vcmp.eq.s32.totalorder %v1537, %v151
    %vm1606 = vcmp.eq.s32.totalorder %v1540, %v151
    %vm1607 = vcmp.eq.s32.totalorder %v1543, %v151
    %vm1608 = vcmp.eq.s32.totalorder %v1546, %v151
    %vm1609 = vcmp.eq.s32.totalorder %v1549, %v151
    %vm1610 = vcmp.eq.s32.totalorder %v1552, %v151
    %vm1611 = vcmp.eq.s32.totalorder %v1555, %v151
    %vm1612 = vcmp.eq.s32.totalorder %v1558, %v151
    %vm1613 = vcmp.eq.s32.totalorder %v1561, %v151
    %vm1614 = vcmp.eq.s32.totalorder %v1564, %v151
    %vm1615 = vcmp.eq.s32.totalorder %v1567, %v151
    %vm1616 = vcmp.eq.s32.totalorder %v1570, %v151
    %vm1617 = vcmp.eq.s32.totalorder %v1573, %v151
    %vm1618 = vcmp.eq.s32.totalorder %v1576, %v151
    %vm1619 = vcmp.eq.s32.totalorder %v1579, %v151
    %vm1620 = vcmp.eq.s32.totalorder %v1582, %v151
    %vm1621 = vcmp.eq.s32.totalorder %v1585, %v151
    %vm1622 = vcmp.eq.s32.totalorder %v1588, %v151
    %vm1623 = vcmp.eq.s32.totalorder %v1591, %v151
    %v1624 = vsel %vm1592, 1, 0
    %v1625 = vsel %vm1593, 1, 0
    %v1626 = vsel %vm1594, 1, 0
    %v1627 = vsel %vm1595, 1, 0
    %v1628 = vsel %vm1596, 1, 0
    %v1629 = vsel %vm1597, 1, 0
    %v1630 = vsel %vm1598, 1, 0
    %v1631 = vsel %vm1599, 1, 0
    %v1632 = vsel %vm1600, 1, 0
    %v1633 = vsel %vm1601, 1, 0
    %v1634 = vsel %vm1602, 1, 0
    %v1635 = vsel %vm1603, 1, 0
    %v1636 = vsel %vm1604, 1, 0
    %v1637 = vsel %vm1605, 1, 0
    %v1638 = vsel %vm1606, 1, 0
    %v1639 = vsel %vm1607, 1, 0
    %v1640 = vsel %vm1608, 1, 0
    %v1641 = vsel %vm1609, 1, 0
    %v1642 = vsel %vm1610, 1, 0
    %v1643 = vsel %vm1611, 1, 0
    %v1644 = vsel %vm1612, 1, 0
    %v1645 = vsel %vm1613, 1, 0
    %v1646 = vsel %vm1614, 1, 0
    %v1647 = vsel %vm1615, 1, 0
    %v1648 = vsel %vm1616, 1, 0
    %v1649 = vsel %vm1617, 1, 0
    %v1650 = vsel %vm1618, 1, 0
    %v1651 = vsel %vm1619, 1, 0
    %v1652 = vsel %vm1620, 1, 0
    %v1653 = vsel %vm1621, 1, 0
    %v1654 = vsel %vm1622, 1, 0
    %v1655 = vsel %vm1623, 1, 0
    %v1656 = vcvt.s32.f32 %v1624
    %v1657 = vcvt.s32.f32 %v1625
    %v1658 = vcvt.s32.f32 %v1626
    %v1659 = vcvt.s32.f32 %v1627
    %v1660 = vcvt.s32.f32 %v1628
    %v1661 = vcvt.s32.f32 %v1629
    %v1662 = vcvt.s32.f32 %v1630
    %v1663 = vcvt.s32.f32 %v1631
    %v1664 = vcvt.s32.f32 %v1632
    %v1665 = vcvt.s32.f32 %v1633
    %v1666 = vcvt.s32.f32 %v1634
    %v1667 = vcvt.s32.f32 %v1635
    %v1668 = vcvt.s32.f32 %v1636
    %v1669 = vcvt.s32.f32 %v1637
    %v1670 = vcvt.s32.f32 %v1638
    %v1671 = vcvt.s32.f32 %v1639
    %v1672 = vcvt.s32.f32 %v1640
    %v1673 = vcvt.s32.f32 %v1641
    %v1674 = vcvt.s32.f32 %v1642
    %v1675 = vcvt.s32.f32 %v1643
    %v1676 = vcvt.s32.f32 %v1644
    %v1677 = vcvt.s32.f32 %v1645
    %v1678 = vcvt.s32.f32 %v1646
    %v1679 = vcvt.s32.f32 %v1647
    %v1680 = vcvt.s32.f32 %v1648
    %v1681 = vcvt.s32.f32 %v1649
    %v1682 = vcvt.s32.f32 %v1650
    %v1683 = vcvt.s32.f32 %v1651
    %v1684 = vcvt.s32.f32 %v1652
    %v1685 = vcvt.s32.f32 %v1653
    %v1686 = vcvt.s32.f32 %v1654
    %v1687 = vcvt.s32.f32 %v1655
    %v1688 = vadd.f32 %v1464, %v1656
    %v1689 = vadd.f32 %v1465, %v1657
    %v1690 = vadd.f32 %v1466, %v1658
    %v1691 = vadd.f32 %v1467, %v1659
    %v1692 = vadd.f32 %v1468, %v1660
    %v1693 = vadd.f32 %v1469, %v1661
    %v1694 = vadd.f32 %v1470, %v1662
    %v1695 = vadd.f32 %v1471, %v1663
    %v1696 = vadd.f32 %v1472, %v1664
    %v1697 = vadd.f32 %v1473, %v1665
    %v1698 = vadd.f32 %v1474, %v1666
    %v1699 = vadd.f32 %v1475, %v1667
    %v1700 = vadd.f32 %v1476, %v1668
    %v1701 = vadd.f32 %v1477, %v1669
    %v1702 = vadd.f32 %v1478, %v1670
    %v1703 = vadd.f32 %v1479, %v1671
    %v1704 = vadd.f32 %v1480, %v1672
    %v1705 = vadd.f32 %v1481, %v1673
    %v1706 = vadd.f32 %v1482, %v1674
    %v1707 = vadd.f32 %v1483, %v1675
    %v1708 = vadd.f32 %v1484, %v1676
    %v1709 = vadd.f32 %v1485, %v1677
    %v1710 = vadd.f32 %v1486, %v1678
    %v1711 = vadd.f32 %v1487, %v1679
    %v1712 = vadd.f32 %v1488, %v1680
    %v1713 = vadd.f32 %v1489, %v1681
    %v1714 = vadd.f32 %v1490, %v1682
    %v1715 = vadd.f32 %v1491, %v1683
    %v1716 = vadd.f32 %v1492, %v1684
    %v1717 = vadd.f32 %v1493, %v1685
    %v1718 = vadd.f32 %v1494, %v1686
    %v1719 = vadd.f32 %v1495, %v1687
    %1720 = vset.pattern.permute.xlu0 7
    %1721 = vperm.xlu0 %1720, %v115
    %v1722 = vpop.permute.xlu0 %1721
    %1723 = vset.pattern.permute.xlu0 7
    %1724 = vperm.xlu0 %1723, %v116
    %v1725 = vpop.permute.xlu0 %1724
    %1726 = vset.pattern.permute.xlu0 7
    %1727 = vperm.xlu0 %1726, %v117
    %v1728 = vpop.permute.xlu0 %1727
    %1729 = vset.pattern.permute.xlu0 7
    %1730 = vperm.xlu0 %1729, %v118
    %v1731 = vpop.permute.xlu0 %1730
    %1732 = vset.pattern.permute.xlu0 7
    %1733 = vperm.xlu0 %1732, %v119
    %v1734 = vpop.permute.xlu0 %1733
    %1735 = vset.pattern.permute.xlu0 7
    %1736 = vperm.xlu0 %1735, %v120
    %v1737 = vpop.permute.xlu0 %1736
    %1738 = vset.pattern.permute.xlu0 7
    %1739 = vperm.xlu0 %1738, %v121
    %v1740 = vpop.permute.xlu0 %1739
    %1741 = vset.pattern.permute.xlu0 7
    %1742 = vperm.xlu0 %1741, %v122
    %v1743 = vpop.permute.xlu0 %1742
    %1744 = vset.pattern.permute.xlu0 7
    %1745 = vperm.xlu0 %1744, %v123
    %v1746 = vpop.permute.xlu0 %1745
    %1747 = vset.pattern.permute.xlu0 7
    %1748 = vperm.xlu0 %1747, %v124
    %v1749 = vpop.permute.xlu0 %1748
    %1750 = vset.pattern.permute.xlu0 7
    %1751 = vperm.xlu0 %1750, %v125
    %v1752 = vpop.permute.xlu0 %1751
    %1753 = vset.pattern.permute.xlu0 7
    %1754 = vperm.xlu0 %1753, %v126
    %v1755 = vpop.permute.xlu0 %1754
    %1756 = vset.pattern.permute.xlu0 7
    %1757 = vperm.xlu0 %1756, %v127
    %v1758 = vpop.permute.xlu0 %1757
    %1759 = vset.pattern.permute.xlu0 7
    %1760 = vperm.xlu0 %1759, %v128
    %v1761 = vpop.permute.xlu0 %1760
    %1762 = vset.pattern.permute.xlu0 7
    %1763 = vperm.xlu0 %1762, %v129
    %v1764 = vpop.permute.xlu0 %1763
    %1765 = vset.pattern.permute.xlu0 7
    %1766 = vperm.xlu0 %1765, %v130
    %v1767 = vpop.permute.xlu0 %1766
    %1768 = vset.pattern.permute.xlu0 7
    %1769 = vperm.xlu0 %1768, %v131
    %v1770 = vpop.permute.xlu0 %1769
    %1771 = vset.pattern.permute.xlu0 7
    %1772 = vperm.xlu0 %1771, %v132
    %v1773 = vpop.permute.xlu0 %1772
    %1774 = vset.pattern.permute.xlu0 7
    %1775 = vperm.xlu0 %1774, %v133
    %v1776 = vpop.permute.xlu0 %1775
    %1777 = vset.pattern.permute.xlu0 7
    %1778 = vperm.xlu0 %1777, %v134
    %v1779 = vpop.permute.xlu0 %1778
    %1780 = vset.pattern.permute.xlu0 7
    %1781 = vperm.xlu0 %1780, %v135
    %v1782 = vpop.permute.xlu0 %1781
    %1783 = vset.pattern.permute.xlu0 7
    %1784 = vperm.xlu0 %1783, %v136
    %v1785 = vpop.permute.xlu0 %1784
    %1786 = vset.pattern.permute.xlu0 7
    %1787 = vperm.xlu0 %1786, %v137
    %v1788 = vpop.permute.xlu0 %1787
    %1789 = vset.pattern.permute.xlu0 7
    %1790 = vperm.xlu0 %1789, %v138
    %v1791 = vpop.permute.xlu0 %1790
    %1792 = vset.pattern.permute.xlu0 7
    %1793 = vperm.xlu0 %1792, %v139
    %v1794 = vpop.permute.xlu0 %1793
    %1795 = vset.pattern.permute.xlu0 7
    %1796 = vperm.xlu0 %1795, %v140
    %v1797 = vpop.permute.xlu0 %1796
    %1798 = vset.pattern.permute.xlu0 7
    %1799 = vperm.xlu0 %1798, %v141
    %v1800 = vpop.permute.xlu0 %1799
    %1801 = vset.pattern.permute.xlu0 7
    %1802 = vperm.xlu0 %1801, %v142
    %v1803 = vpop.permute.xlu0 %1802
    %1804 = vset.pattern.permute.xlu0 7
    %1805 = vperm.xlu0 %1804, %v143
    %v1806 = vpop.permute.xlu0 %1805
    %1807 = vset.pattern.permute.xlu0 7
    %1808 = vperm.xlu0 %1807, %v144
    %v1809 = vpop.permute.xlu0 %1808
    %1810 = vset.pattern.permute.xlu0 7
    %1811 = vperm.xlu0 %1810, %v145
    %v1812 = vpop.permute.xlu0 %1811
    %1813 = vset.pattern.permute.xlu0 7
    %1814 = vperm.xlu0 %1813, %v146
    %v1815 = vpop.permute.xlu0 %1814
    %vm1816 = vcmp.eq.s32.totalorder %v1722, %v151
    %vm1817 = vcmp.eq.s32.totalorder %v1725, %v151
    %vm1818 = vcmp.eq.s32.totalorder %v1728, %v151
    %vm1819 = vcmp.eq.s32.totalorder %v1731, %v151
    %vm1820 = vcmp.eq.s32.totalorder %v1734, %v151
    %vm1821 = vcmp.eq.s32.totalorder %v1737, %v151
    %vm1822 = vcmp.eq.s32.totalorder %v1740, %v151
    %vm1823 = vcmp.eq.s32.totalorder %v1743, %v151
    %vm1824 = vcmp.eq.s32.totalorder %v1746, %v151
    %vm1825 = vcmp.eq.s32.totalorder %v1749, %v151
    %vm1826 = vcmp.eq.s32.totalorder %v1752, %v151
    %vm1827 = vcmp.eq.s32.totalorder %v1755, %v151
    %vm1828 = vcmp.eq.s32.totalorder %v1758, %v151
    %vm1829 = vcmp.eq.s32.totalorder %v1761, %v151
    %vm1830 = vcmp.eq.s32.totalorder %v1764, %v151
    %vm1831 = vcmp.eq.s32.totalorder %v1767, %v151
    %vm1832 = vcmp.eq.s32.totalorder %v1770, %v151
    %vm1833 = vcmp.eq.s32.totalorder %v1773, %v151
    %vm1834 = vcmp.eq.s32.totalorder %v1776, %v151
    %vm1835 = vcmp.eq.s32.totalorder %v1779, %v151
    %vm1836 = vcmp.eq.s32.totalorder %v1782, %v151
    %vm1837 = vcmp.eq.s32.totalorder %v1785, %v151
    %vm1838 = vcmp.eq.s32.totalorder %v1788, %v151
    %vm1839 = vcmp.eq.s32.totalorder %v1791, %v151
    %vm1840 = vcmp.eq.s32.totalorder %v1794, %v151
    %vm1841 = vcmp.eq.s32.totalorder %v1797, %v151
    %vm1842 = vcmp.eq.s32.totalorder %v1800, %v151
    %vm1843 = vcmp.eq.s32.totalorder %v1803, %v151
    %vm1844 = vcmp.eq.s32.totalorder %v1806, %v151
    %vm1845 = vcmp.eq.s32.totalorder %v1809, %v151
    %vm1846 = vcmp.eq.s32.totalorder %v1812, %v151
    %vm1847 = vcmp.eq.s32.totalorder %v1815, %v151
    %v1848 = vsel %vm1816, 1, 0
    %v1849 = vsel %vm1817, 1, 0
    %v1850 = vsel %vm1818, 1, 0
    %v1851 = vsel %vm1819, 1, 0
    %v1852 = vsel %vm1820, 1, 0
    %v1853 = vsel %vm1821, 1, 0
    %v1854 = vsel %vm1822, 1, 0
    %v1855 = vsel %vm1823, 1, 0
    %v1856 = vsel %vm1824, 1, 0
    %v1857 = vsel %vm1825, 1, 0
    %v1858 = vsel %vm1826, 1, 0
    %v1859 = vsel %vm1827, 1, 0
    %v1860 = vsel %vm1828, 1, 0
    %v1861 = vsel %vm1829, 1, 0
    %v1862 = vsel %vm1830, 1, 0
    %v1863 = vsel %vm1831, 1, 0
    %v1864 = vsel %vm1832, 1, 0
    %v1865 = vsel %vm1833, 1, 0
    %v1866 = vsel %vm1834, 1, 0
    %v1867 = vsel %vm1835, 1, 0
    %v1868 = vsel %vm1836, 1, 0
    %v1869 = vsel %vm1837, 1, 0
    %v1870 = vsel %vm1838, 1, 0
    %v1871 = vsel %vm1839, 1, 0
    %v1872 = vsel %vm1840, 1, 0
    %v1873 = vsel %vm1841, 1, 0
    %v1874 = vsel %vm1842, 1, 0
    %v1875 = vsel %vm1843, 1, 0
    %v1876 = vsel %vm1844, 1, 0
    %v1877 = vsel %vm1845, 1, 0
    %v1878 = vsel %vm1846, 1, 0
    %v1879 = vsel %vm1847, 1, 0
    %v1880 = vcvt.s32.f32 %v1848
    %v1881 = vcvt.s32.f32 %v1849
    %v1882 = vcvt.s32.f32 %v1850
    %v1883 = vcvt.s32.f32 %v1851
    %v1884 = vcvt.s32.f32 %v1852
    %v1885 = vcvt.s32.f32 %v1853
    %v1886 = vcvt.s32.f32 %v1854
    %v1887 = vcvt.s32.f32 %v1855
    %v1888 = vcvt.s32.f32 %v1856
    %v1889 = vcvt.s32.f32 %v1857
    %v1890 = vcvt.s32.f32 %v1858
    %v1891 = vcvt.s32.f32 %v1859
    %v1892 = vcvt.s32.f32 %v1860
    %v1893 = vcvt.s32.f32 %v1861
    %v1894 = vcvt.s32.f32 %v1862
    %v1895 = vcvt.s32.f32 %v1863
    %v1896 = vcvt.s32.f32 %v1864
    %v1897 = vcvt.s32.f32 %v1865
    %v1898 = vcvt.s32.f32 %v1866
    %v1899 = vcvt.s32.f32 %v1867
    %v1900 = vcvt.s32.f32 %v1868
    %v1901 = vcvt.s32.f32 %v1869
    %v1902 = vcvt.s32.f32 %v1870
    %v1903 = vcvt.s32.f32 %v1871
    %v1904 = vcvt.s32.f32 %v1872
    %v1905 = vcvt.s32.f32 %v1873
    %v1906 = vcvt.s32.f32 %v1874
    %v1907 = vcvt.s32.f32 %v1875
    %v1908 = vcvt.s32.f32 %v1876
    %v1909 = vcvt.s32.f32 %v1877
    %v1910 = vcvt.s32.f32 %v1878
    %v1911 = vcvt.s32.f32 %v1879
    %v1912 = vadd.f32 %v1688, %v1880
    %v1913 = vadd.f32 %v1689, %v1881
    %v1914 = vadd.f32 %v1690, %v1882
    %v1915 = vadd.f32 %v1691, %v1883
    %v1916 = vadd.f32 %v1692, %v1884
    %v1917 = vadd.f32 %v1693, %v1885
    %v1918 = vadd.f32 %v1694, %v1886
    %v1919 = vadd.f32 %v1695, %v1887
    %v1920 = vadd.f32 %v1696, %v1888
    %v1921 = vadd.f32 %v1697, %v1889
    %v1922 = vadd.f32 %v1698, %v1890
    %v1923 = vadd.f32 %v1699, %v1891
    %v1924 = vadd.f32 %v1700, %v1892
    %v1925 = vadd.f32 %v1701, %v1893
    %v1926 = vadd.f32 %v1702, %v1894
    %v1927 = vadd.f32 %v1703, %v1895
    %v1928 = vadd.f32 %v1704, %v1896
    %v1929 = vadd.f32 %v1705, %v1897
    %v1930 = vadd.f32 %v1706, %v1898
    %v1931 = vadd.f32 %v1707, %v1899
    %v1932 = vadd.f32 %v1708, %v1900
    %v1933 = vadd.f32 %v1709, %v1901
    %v1934 = vadd.f32 %v1710, %v1902
    %v1935 = vadd.f32 %v1711, %v1903
    %v1936 = vadd.f32 %v1712, %v1904
    %v1937 = vadd.f32 %v1713, %v1905
    %v1938 = vadd.f32 %v1714, %v1906
    %v1939 = vadd.f32 %v1715, %v1907
    %v1940 = vadd.f32 %v1716, %v1908
    %v1941 = vadd.f32 %v1717, %v1909
    %v1942 = vadd.f32 %v1718, %v1910
    %v1943 = vadd.f32 %v1719, %v1911
    %v1944 = vld [vmem:[#allocation2] sm:$0xff]
    %v1945 = vld [vmem:[#allocation2 + $0x8] sm:$0xff]
    %v1946 = vld [vmem:[#allocation2 + $0x10] sm:$0xff]
    %v1947 = vld [vmem:[#allocation2 + $0x18] sm:$0xff]
    %v1948 = vld [vmem:[#allocation2 + $0x20] sm:$0xff]
    %v1949 = vld [vmem:[#allocation2 + $0x28] sm:$0xff]
    %v1950 = vld [vmem:[#allocation2 + $0x30] sm:$0xff]
    %v1951 = vld [vmem:[#allocation2 + $0x38] sm:$0xff]
    %v1952 = vld [vmem:[#allocation2 + $0x40] sm:$0xff]
    %v1953 = vld [vmem:[#allocation2 + $0x48] sm:$0xff]
    %v1954 = vld [vmem:[#allocation2 + $0x50] sm:$0xff]
    %v1955 = vld [vmem:[#allocation2 + $0x58] sm:$0xff]
    %v1956 = vld [vmem:[#allocation2 + $0x60] sm:$0xff]
    %v1957 = vld [vmem:[#allocation2 + $0x68] sm:$0xff]
    %v1958 = vld [vmem:[#allocation2 + $0x70] sm:$0xff]
    %v1959 = vld [vmem:[#allocation2 + $0x78] sm:$0xff]
    %v1960 = vld [vmem:[#allocation2 + $0x80] sm:$0xff]
    %v1961 = vld [vmem:[#allocation2 + $0x88] sm:$0xff]
    %v1962 = vld [vmem:[#allocation2 + $0x90] sm:$0xff]
    %v1963 = vld [vmem:[#allocation2 + $0x98] sm:$0xff]
    %v1964 = vld [vmem:[#allocation2 + $0xa0] sm:$0xff]
    %v1965 = vld [vmem:[#allocation2 + $0xa8] sm:$0xff]
    %v1966 = vld [vmem:[#allocation2 + $0xb0] sm:$0xff]
    %v1967 = vld [vmem:[#allocation2 + $0xb8] sm:$0xff]
    %v1968 = vld [vmem:[#allocation2 + $0xc0] sm:$0xff]
    %v1969 = vld [vmem:[#allocation2 + $0xc8] sm:$0xff]
    %v1970 = vld [vmem:[#allocation2 + $0xd0] sm:$0xff]
    %v1971 = vld [vmem:[#allocation2 + $0xd8] sm:$0xff]
    %v1972 = vld [vmem:[#allocation2 + $0xe0] sm:$0xff]
    %v1973 = vld [vmem:[#allocation2 + $0xe8] sm:$0xff]
    %v1974 = vld [vmem:[#allocation2 + $0xf0] sm:$0xff]
    %v1975 = vld [vmem:[#allocation2 + $0xf8] sm:$0xff]
    %v1976 = vpack.c.bf16 %v1913, %v1912
    %v1977 = vpack.c.bf16 %v1915, %v1914
    %v1978 = vpack.c.bf16 %v1917, %v1916
    %v1979 = vpack.c.bf16 %v1919, %v1918
    %v1980 = vpack.c.bf16 %v1921, %v1920
    %v1981 = vpack.c.bf16 %v1923, %v1922
    %v1982 = vpack.c.bf16 %v1925, %v1924
    %v1983 = vpack.c.bf16 %v1927, %v1926
    %v1984 = vpack.c.bf16 %v1929, %v1928
    %v1985 = vpack.c.bf16 %v1931, %v1930
    %v1986 = vpack.c.bf16 %v1933, %v1932
    %v1987 = vpack.c.bf16 %v1935, %v1934
    %v1988 = vpack.c.bf16 %v1937, %v1936
    %v1989 = vpack.c.bf16 %v1939, %v1938
    %v1990 = vpack.c.bf16 %v1941, %v1940
    %v1991 = vpack.c.bf16 %v1943, %v1942
    %v1992 = vld [vmem:[%s1] sm:$0xf]
    %v1993 = vld [vmem:[%s1 + $0x4] sm:$0xf]
    %v1994 = vld [vmem:[%s1 + $0x8] sm:$0xf]
    %v1995 = vld [vmem:[%s1 + $0xc] sm:$0xf]
    %v1996 = vld [vmem:[%s1 + $0x10] sm:$0xf]
    %v1997 = vld [vmem:[%s1 + $0x14] sm:$0xf]
    %v1998 = vld [vmem:[%s1 + $0x18] sm:$0xf]
    %v1999 = vld [vmem:[%s1 + $0x1c] sm:$0xf]
    %v2000 = vld [vmem:[%s1 + $0x20] sm:$0xf]
    %v2001 = vld [vmem:[%s1 + $0x24] sm:$0xf]
    %v2002 = vld [vmem:[%s1 + $0x28] sm:$0xf]
    %v2003 = vld [vmem:[%s1 + $0x2c] sm:$0xf]
    %v2004 = vld [vmem:[%s1 + $0x30] sm:$0xf]
    %v2005 = vld [vmem:[%s1 + $0x34] sm:$0xf]
    %v2006 = vld [vmem:[%s1 + $0x38] sm:$0xf]
    %v2007 = vld [vmem:[%s1 + $0x3c] sm:$0xf]
    %v2024 = vunpack.c.l.b16 %v1992
    %v2025 = vunpack.c.l.b16 %v1993
    %v2026 = vunpack.c.l.b16 %v1994
    %v2027 = vunpack.c.l.b16 %v1995
    %v2028 = vunpack.c.l.b16 %v1996
    %v2029 = vunpack.c.l.b16 %v1997
    %v2030 = vunpack.c.l.b16 %v1998
    %v2031 = vunpack.c.l.b16 %v1999
    %v2032 = vunpack.c.l.b16 %v2000
    %v2033 = vunpack.c.l.b16 %v2001
    %v2034 = vunpack.c.l.b16 %v2002
    %v2035 = vunpack.c.l.b16 %v2003
    %v2036 = vunpack.c.l.b16 %v2004
    %v2037 = vunpack.c.l.b16 %v2005
    %v2038 = vunpack.c.l.b16 %v2006
    %v2039 = vunpack.c.l.b16 %v2007
    %v2040 = vpack.c.b16 %v2025, %v2024
    %v2041 = vpack.c.b16 %v2027, %v2026
    %v2042 = vpack.c.b16 %v2029, %v2028
    %v2043 = vpack.c.b16 %v2031, %v2030
    %v2044 = vpack.c.b16 %v2033, %v2032
    %v2045 = vpack.c.b16 %v2035, %v2034
    %v2046 = vpack.c.b16 %v2037, %v2036
    %v2047 = vpack.c.b16 %v2039, %v2038
    %2056 = vmatpush.bf16.msra.mxu0 %v2047
    %2057 = vmatpush.bf16.msra.mxu0 %v2046
    %2058 = vmatpush.bf16.msra.mxu0 %v2045
    %2059 = vmatpush.bf16.msra.mxu0 %v2044
    %2060 = vmatpush.bf16.msra.mxu0 %v2043
    %2061 = vmatpush.bf16.msra.mxu0 %v2042
    %2062 = vmatpush.bf16.msra.mxu0 %v2041
    %2063 = vmatpush.bf16.msra.mxu0 %v2040
    %2064 = vmatmul.bf16.gmra.mxu0 %v1976
    %v2065 = vpop.f32.mrf.mxu0
    %v2066 = vadd.f32 0.0, %v2065
    %v2067 = vpop.f32.mrf.mxu0
    %v2068 = vadd.f32 0.0, %v2067
    %2069 = vmatmul.bf16.gmra.mxu0 %v1977
    %v2070 = vpop.f32.mrf.mxu0
    %v2071 = vadd.f32 0.0, %v2070
    %v2072 = vpop.f32.mrf.mxu0
    %v2073 = vadd.f32 0.0, %v2072
    %2074 = vmatmul.bf16.gmra.mxu0 %v1978
    %v2075 = vpop.f32.mrf.mxu0
    %v2076 = vadd.f32 0.0, %v2075
    %v2077 = vpop.f32.mrf.mxu0
    %v2078 = vadd.f32 0.0, %v2077
    %2079 = vmatmul.bf16.gmra.mxu0 %v1979
    %v2080 = vpop.f32.mrf.mxu0
    %v2081 = vadd.f32 0.0, %v2080
    %v2082 = vpop.f32.mrf.mxu0
    %v2083 = vadd.f32 0.0, %v2082
    %2084 = vmatmul.bf16.gmra.mxu0 %v1980
    %v2085 = vpop.f32.mrf.mxu0
    %v2086 = vadd.f32 0.0, %v2085
    %v2087 = vpop.f32.mrf.mxu0
    %v2088 = vadd.f32 0.0, %v2087
    %2089 = vmatmul.bf16.gmra.mxu0 %v1981
    %v2090 = vpop.f32.mrf.mxu0
    %v2091 = vadd.f32 0.0, %v2090
    %v2092 = vpop.f32.mrf.mxu0
    %v2093 = vadd.f32 0.0, %v2092
    %2094 = vmatmul.bf16.gmra.mxu0 %v1982
    %v2095 = vpop.f32.mrf.mxu0
    %v2096 = vadd.f32 0.0, %v2095
    %v2097 = vpop.f32.mrf.mxu0
    %v2098 = vadd.f32 0.0, %v2097
    %2099 = vmatmul.bf16.gmra.mxu0 %v1983
    %v2100 = vpop.f32.mrf.mxu0
    %v2101 = vadd.f32 0.0, %v2100
    %v2102 = vpop.f32.mrf.mxu0
    %v2103 = vadd.f32 0.0, %v2102
    %2104 = vmatmul.bf16.gmra.mxu0 %v1984
    %v2105 = vpop.f32.mrf.mxu0
    %v2106 = vadd.f32 0.0, %v2105
    %v2107 = vpop.f32.mrf.mxu0
    %v2108 = vadd.f32 0.0, %v2107
    %2109 = vmatmul.bf16.gmra.mxu0 %v1985
    %v2110 = vpop.f32.mrf.mxu0
    %v2111 = vadd.f32 0.0, %v2110
    %v2112 = vpop.f32.mrf.mxu0
    %v2113 = vadd.f32 0.0, %v2112
    %2114 = vmatmul.bf16.gmra.mxu0 %v1986
    %v2115 = vpop.f32.mrf.mxu0
    %v2116 = vadd.f32 0.0, %v2115
    %v2117 = vpop.f32.mrf.mxu0
    %v2118 = vadd.f32 0.0, %v2117
    %2119 = vmatmul.bf16.gmra.mxu0 %v1987
    %v2120 = vpop.f32.mrf.mxu0
    %v2121 = vadd.f32 0.0, %v2120
    %v2122 = vpop.f32.mrf.mxu0
    %v2123 = vadd.f32 0.0, %v2122
    %2124 = vmatmul.bf16.gmra.mxu0 %v1988
    %v2125 = vpop.f32.mrf.mxu0
    %v2126 = vadd.f32 0.0, %v2125
    %v2127 = vpop.f32.mrf.mxu0
    %v2128 = vadd.f32 0.0, %v2127
    %2129 = vmatmul.bf16.gmra.mxu0 %v1989
    %v2130 = vpop.f32.mrf.mxu0
    %v2131 = vadd.f32 0.0, %v2130
    %v2132 = vpop.f32.mrf.mxu0
    %v2133 = vadd.f32 0.0, %v2132
    %2134 = vmatmul.bf16.gmra.mxu0 %v1990
    %v2135 = vpop.f32.mrf.mxu0
    %v2136 = vadd.f32 0.0, %v2135
    %v2137 = vpop.f32.mrf.mxu0
    %v2138 = vadd.f32 0.0, %v2137
    %2139 = vmatmul.bf16.gmra.mxu0 %v1991
    %v2140 = vpop.f32.mrf.mxu0
    %v2141 = vadd.f32 0.0, %v2140
    %v2142 = vpop.f32.mrf.mxu0
    %v2143 = vadd.f32 0.0, %v2142
    %2144 = vdwg.mxu0
    %v2145 = vadd.f32 %v1944, %v2066
    %v2146 = vadd.f32 %v1945, %v2068
    %v2147 = vadd.f32 %v1946, %v2071
    %v2148 = vadd.f32 %v1947, %v2073
    %v2149 = vadd.f32 %v1948, %v2076
    %v2150 = vadd.f32 %v1949, %v2078
    %v2151 = vadd.f32 %v1950, %v2081
    %v2152 = vadd.f32 %v1951, %v2083
    %v2153 = vadd.f32 %v1952, %v2086
    %v2154 = vadd.f32 %v1953, %v2088
    %v2155 = vadd.f32 %v1954, %v2091
    %v2156 = vadd.f32 %v1955, %v2093
    %v2157 = vadd.f32 %v1956, %v2096
    %v2158 = vadd.f32 %v1957, %v2098
    %v2159 = vadd.f32 %v1958, %v2101
    %v2160 = vadd.f32 %v1959, %v2103
    %v2161 = vadd.f32 %v1960, %v2106
    %v2162 = vadd.f32 %v1961, %v2108
    %v2163 = vadd.f32 %v1962, %v2111
    %v2164 = vadd.f32 %v1963, %v2113
    %v2165 = vadd.f32 %v1964, %v2116
    %v2166 = vadd.f32 %v1965, %v2118
    %v2167 = vadd.f32 %v1966, %v2121
    %v2168 = vadd.f32 %v1967, %v2123
    %v2169 = vadd.f32 %v1968, %v2126
    %v2170 = vadd.f32 %v1969, %v2128
    %v2171 = vadd.f32 %v1970, %v2131
    %v2172 = vadd.f32 %v1971, %v2133
    %v2173 = vadd.f32 %v1972, %v2136
    %v2174 = vadd.f32 %v1973, %v2138
    %v2175 = vadd.f32 %v1974, %v2141
    %v2176 = vadd.f32 %v1975, %v2143
    %2177 = vst [vmem:[#allocation2] sm:$0xff] %v2145
    %2178 = vst [vmem:[#allocation2 + $0x8] sm:$0xff] %v2146
    %2179 = vst [vmem:[#allocation2 + $0x10] sm:$0xff] %v2147
    %2180 = vst [vmem:[#allocation2 + $0x18] sm:$0xff] %v2148
    %2181 = vst [vmem:[#allocation2 + $0x20] sm:$0xff] %v2149
    %2182 = vst [vmem:[#allocation2 + $0x28] sm:$0xff] %v2150
    %2183 = vst [vmem:[#allocation2 + $0x30] sm:$0xff] %v2151
    %2184 = vst [vmem:[#allocation2 + $0x38] sm:$0xff] %v2152
    %2185 = vst [vmem:[#allocation2 + $0x40] sm:$0xff] %v2153
    %2186 = vst [vmem:[#allocation2 + $0x48] sm:$0xff] %v2154
    %2187 = vst [vmem:[#allocation2 + $0x50] sm:$0xff] %v2155
    %2188 = vst [vmem:[#allocation2 + $0x58] sm:$0xff] %v2156
    %2189 = vst [vmem:[#allocation2 + $0x60] sm:$0xff] %v2157
    %2190 = vst [vmem:[#allocation2 + $0x68] sm:$0xff] %v2158
    %2191 = vst [vmem:[#allocation2 + $0x70] sm:$0xff] %v2159
    %2192 = vst [vmem:[#allocation2 + $0x78] sm:$0xff] %v2160
    %2193 = vst [vmem:[#allocation2 + $0x80] sm:$0xff] %v2161
    %2194 = vst [vmem:[#allocation2 + $0x88] sm:$0xff] %v2162
    %2195 = vst [vmem:[#allocation2 + $0x90] sm:$0xff] %v2163
    %2196 = vst [vmem:[#allocation2 + $0x98] sm:$0xff] %v2164
    %2197 = vst [vmem:[#allocation2 + $0xa0] sm:$0xff] %v2165
    %2198 = vst [vmem:[#allocation2 + $0xa8] sm:$0xff] %v2166
    %2199 = vst [vmem:[#allocation2 + $0xb0] sm:$0xff] %v2167
    %2200 = vst [vmem:[#allocation2 + $0xb8] sm:$0xff] %v2168
    %2201 = vst [vmem:[#allocation2 + $0xc0] sm:$0xff] %v2169
    %2202 = vst [vmem:[#allocation2 + $0xc8] sm:$0xff] %v2170
    %2203 = vst [vmem:[#allocation2 + $0xd0] sm:$0xff] %v2171
    %2204 = vst [vmem:[#allocation2 + $0xd8] sm:$0xff] %v2172
    %2205 = vst [vmem:[#allocation2 + $0xe0] sm:$0xff] %v2173
    %2206 = vst [vmem:[#allocation2 + $0xe8] sm:$0xff] %v2174
    %2207 = vst [vmem:[#allocation2 + $0xf0] sm:$0xff] %v2175
    %2208 = vst [vmem:[#allocation2 + $0xf8] sm:$0xff] %v2176
    // Predicated region
    $region18: #{tpu_custom_call.1} parent=1 // pred_check
      %p2209 = pneg %p47
    $region19: #{tpu_custom_call.1} parent=1 // pred_check_branch
      %2211 = sbr.rel (%p2209) target = $region21
    $region20: #{tpu_custom_call.1} parent=1 // pred_region
      %vm2212 = vcmp.ne.s32.totalorder %v15, 0
      %vm2213 = vcmp.ne.s32.totalorder %v16, 0
      %vm2214 = vcmp.ne.s32.totalorder %v17, 0
      %vm2215 = vcmp.ne.s32.totalorder %v18, 0
      %vm2216 = vcmp.ne.s32.totalorder %v19, 0
      %vm2217 = vcmp.ne.s32.totalorder %v20, 0
      %vm2218 = vcmp.ne.s32.totalorder %v21, 0
      %vm2219 = vcmp.ne.s32.totalorder %v22, 0
      %vm2220 = vcmp.ne.s32.totalorder %v23, 0
      %vm2221 = vcmp.ne.s32.totalorder %v24, 0
      %vm2222 = vcmp.ne.s32.totalorder %v25, 0
      %vm2223 = vcmp.ne.s32.totalorder %v26, 0
      %vm2224 = vcmp.ne.s32.totalorder %v27, 0
      %vm2225 = vcmp.ne.s32.totalorder %v28, 0
      %vm2226 = vcmp.ne.s32.totalorder %v29, 0
      %vm2227 = vcmp.ne.s32.totalorder %v30, 0
      %vm2228 = vcmp.ne.s32.totalorder %v31, 0
      %vm2229 = vcmp.ne.s32.totalorder %v32, 0
      %vm2230 = vcmp.ne.s32.totalorder %v33, 0
      %vm2231 = vcmp.ne.s32.totalorder %v34, 0
      %vm2232 = vcmp.ne.s32.totalorder %v35, 0
      %vm2233 = vcmp.ne.s32.totalorder %v36, 0
      %vm2234 = vcmp.ne.s32.totalorder %v37, 0
      %vm2235 = vcmp.ne.s32.totalorder %v38, 0
      %vm2236 = vcmp.ne.s32.totalorder %v39, 0
      %vm2237 = vcmp.ne.s32.totalorder %v40, 0
      %vm2238 = vcmp.ne.s32.totalorder %v41, 0
      %vm2239 = vcmp.ne.s32.totalorder %v42, 0
      %vm2240 = vcmp.ne.s32.totalorder %v43, 0
      %vm2241 = vcmp.ne.s32.totalorder %v44, 0
      %vm2242 = vcmp.ne.s32.totalorder %v45, 0
      %vm2243 = vcmp.ne.s32.totalorder %v46, 0
      %v2244 = vsel %vm2212, 1, 0
      %v2245 = vsel %vm2213, 1, 0
      %v2246 = vsel %vm2214, 1, 0
      %v2247 = vsel %vm2215, 1, 0
      %v2248 = vsel %vm2216, 1, 0
      %v2249 = vsel %vm2217, 1, 0
      %v2250 = vsel %vm2218, 1, 0
      %v2251 = vsel %vm2219, 1, 0
      %v2252 = vsel %vm2220, 1, 0
      %v2253 = vsel %vm2221, 1, 0
      %v2254 = vsel %vm2222, 1, 0
      %v2255 = vsel %vm2223, 1, 0
      %v2256 = vsel %vm2224, 1, 0
      %v2257 = vsel %vm2225, 1, 0
      %v2258 = vsel %vm2226, 1, 0
      %v2259 = vsel %vm2227, 1, 0
      %v2260 = vsel %vm2228, 1, 0
      %v2261 = vsel %vm2229, 1, 0
      %v2262 = vsel %vm2230, 1, 0
      %v2263 = vsel %vm2231, 1, 0
      %v2264 = vsel %vm2232, 1, 0
      %v2265 = vsel %vm2233, 1, 0
      %v2266 = vsel %vm2234, 1, 0
      %v2267 = vsel %vm2235, 1, 0
      %v2268 = vsel %vm2236, 1, 0
      %v2269 = vsel %vm2237, 1, 0
      %v2270 = vsel %vm2238, 1, 0
      %v2271 = vsel %vm2239, 1, 0
      %v2272 = vsel %vm2240, 1, 0
      %v2273 = vsel %vm2241, 1, 0
      %v2274 = vsel %vm2242, 1, 0
      %v2275 = vsel %vm2243, 1, 0
      %v2276 = vcvt.s32.f32 %v2244
      %v2277 = vcvt.s32.f32 %v2245
      %v2278 = vcvt.s32.f32 %v2246
      %v2279 = vcvt.s32.f32 %v2247
      %v2280 = vcvt.s32.f32 %v2248
      %v2281 = vcvt.s32.f32 %v2249
      %v2282 = vcvt.s32.f32 %v2250
      %v2283 = vcvt.s32.f32 %v2251
      %v2284 = vcvt.s32.f32 %v2252
      %v2285 = vcvt.s32.f32 %v2253
      %v2286 = vcvt.s32.f32 %v2254
      %v2287 = vcvt.s32.f32 %v2255
      %v2288 = vcvt.s32.f32 %v2256
      %v2289 = vcvt.s32.f32 %v2257
      %v2290 = vcvt.s32.f32 %v2258
      %v2291 = vcvt.s32.f32 %v2259
      %v2292 = vcvt.s32.f32 %v2260
      %v2293 = vcvt.s32.f32 %v2261
      %v2294 = vcvt.s32.f32 %v2262
      %v2295 = vcvt.s32.f32 %v2263
      %v2296 = vcvt.s32.f32 %v2264
      %v2297 = vcvt.s32.f32 %v2265
      %v2298 = vcvt.s32.f32 %v2266
      %v2299 = vcvt.s32.f32 %v2267
      %v2300 = vcvt.s32.f32 %v2268
      %v2301 = vcvt.s32.f32 %v2269
      %v2302 = vcvt.s32.f32 %v2270
      %v2303 = vcvt.s32.f32 %v2271
      %v2304 = vcvt.s32.f32 %v2272
      %v2305 = vcvt.s32.f32 %v2273
      %v2306 = vcvt.s32.f32 %v2274
      %v2307 = vcvt.s32.f32 %v2275
      %vm2308 = vcmask 64512
      %v2309 = vsel %vm2308, %v2276, 0.0
      %2310 = vadd.xlane.f32.xlu0 %v2309
      %v2311 = vpop.xlane.xlu0 %2310
      %v2312 = vsel %vm2308, %v2277, 0.0
      %2313 = vadd.xlane.f32.xlu0 %v2312
      %v2314 = vpop.xlane.xlu0 %2313
      %v2315 = vsel %vm2308, %v2278, 0.0
      %2316 = vadd.xlane.f32.xlu0 %v2315
      %v2317 = vpop.xlane.xlu0 %2316
      %v2318 = vsel %vm2308, %v2279, 0.0
      %2319 = vadd.xlane.f32.xlu0 %v2318
      %v2320 = vpop.xlane.xlu0 %2319
      %v2321 = vsel %vm2308, %v2280, 0.0
      %2322 = vadd.xlane.f32.xlu0 %v2321
      %v2323 = vpop.xlane.xlu0 %2322
      %v2324 = vsel %vm2308, %v2281, 0.0
      %2325 = vadd.xlane.f32.xlu0 %v2324
      %v2326 = vpop.xlane.xlu0 %2325
      %v2327 = vsel %vm2308, %v2282, 0.0
      %2328 = vadd.xlane.f32.xlu0 %v2327
      %v2329 = vpop.xlane.xlu0 %2328
      %v2330 = vsel %vm2308, %v2283, 0.0
      %2331 = vadd.xlane.f32.xlu0 %v2330
      %v2332 = vpop.xlane.xlu0 %2331
      %v2333 = vsel %vm2308, %v2284, 0.0
      %2334 = vadd.xlane.f32.xlu0 %v2333
      %v2335 = vpop.xlane.xlu0 %2334
      %v2336 = vsel %vm2308, %v2285, 0.0
      %2337 = vadd.xlane.f32.xlu0 %v2336
      %v2338 = vpop.xlane.xlu0 %2337
      %v2339 = vsel %vm2308, %v2286, 0.0
      %2340 = vadd.xlane.f32.xlu0 %v2339
      %v2341 = vpop.xlane.xlu0 %2340
      %v2342 = vsel %vm2308, %v2287, 0.0
      %2343 = vadd.xlane.f32.xlu0 %v2342
      %v2344 = vpop.xlane.xlu0 %2343
      %v2345 = vsel %vm2308, %v2288, 0.0
      %2346 = vadd.xlane.f32.xlu0 %v2345
      %v2347 = vpop.xlane.xlu0 %2346
      %v2348 = vsel %vm2308, %v2289, 0.0
      %2349 = vadd.xlane.f32.xlu0 %v2348
      %v2350 = vpop.xlane.xlu0 %2349
      %v2351 = vsel %vm2308, %v2290, 0.0
      %2352 = vadd.xlane.f32.xlu0 %v2351
      %v2353 = vpop.xlane.xlu0 %2352
      %v2354 = vsel %vm2308, %v2291, 0.0
      %2355 = vadd.xlane.f32.xlu0 %v2354
      %v2356 = vpop.xlane.xlu0 %2355
      %v2357 = vsel %vm2308, %v2292, 0.0
      %2358 = vadd.xlane.f32.xlu0 %v2357
      %v2359 = vpop.xlane.xlu0 %2358
      %v2360 = vsel %vm2308, %v2293, 0.0
      %2361 = vadd.xlane.f32.xlu0 %v2360
      %v2362 = vpop.xlane.xlu0 %2361
      %v2363 = vsel %vm2308, %v2294, 0.0
      %2364 = vadd.xlane.f32.xlu0 %v2363
      %v2365 = vpop.xlane.xlu0 %2364
      %v2366 = vsel %vm2308, %v2295, 0.0
      %2367 = vadd.xlane.f32.xlu0 %v2366
      %v2368 = vpop.xlane.xlu0 %2367
      %v2369 = vsel %vm2308, %v2296, 0.0
      %2370 = vadd.xlane.f32.xlu0 %v2369
      %v2371 = vpop.xlane.xlu0 %2370
      %v2372 = vsel %vm2308, %v2297, 0.0
      %2373 = vadd.xlane.f32.xlu0 %v2372
      %v2374 = vpop.xlane.xlu0 %2373
      %v2375 = vsel %vm2308, %v2298, 0.0
      %2376 = vadd.xlane.f32.xlu0 %v2375
      %v2377 = vpop.xlane.xlu0 %2376
      %v2378 = vsel %vm2308, %v2299, 0.0
      %2379 = vadd.xlane.f32.xlu0 %v2378
      %v2380 = vpop.xlane.xlu0 %2379
      %v2381 = vsel %vm2308, %v2300, 0.0
      %2382 = vadd.xlane.f32.xlu0 %v2381
      %v2383 = vpop.xlane.xlu0 %2382
      %v2384 = vsel %vm2308, %v2301, 0.0
      %2385 = vadd.xlane.f32.xlu0 %v2384
      %v2386 = vpop.xlane.xlu0 %2385
      %v2387 = vsel %vm2308, %v2302, 0.0
      %2388 = vadd.xlane.f32.xlu0 %v2387
      %v2389 = vpop.xlane.xlu0 %2388
      %v2390 = vsel %vm2308, %v2303, 0.0
      %2391 = vadd.xlane.f32.xlu0 %v2390
      %v2392 = vpop.xlane.xlu0 %2391
      %v2393 = vsel %vm2308, %v2304, 0.0
      %2394 = vadd.xlane.f32.xlu0 %v2393
      %v2395 = vpop.xlane.xlu0 %2394
      %v2396 = vsel %vm2308, %v2305, 0.0
      %2397 = vadd.xlane.f32.xlu0 %v2396
      %v2398 = vpop.xlane.xlu0 %2397
      %v2399 = vsel %vm2308, %v2306, 0.0
      %2400 = vadd.xlane.f32.xlu0 %v2399
      %v2401 = vpop.xlane.xlu0 %2400
      %v2402 = vsel %vm2308, %v2307, 0.0
      %2403 = vadd.xlane.f32.xlu0 %v2402
      %v2404 = vpop.xlane.xlu0 %2403
      %v2405 = vmax.f32 %v2311, 1.0
      %v2406 = vmax.f32 %v2314, 1.0
      %v2407 = vmax.f32 %v2317, 1.0
      %v2408 = vmax.f32 %v2320, 1.0
      %v2409 = vmax.f32 %v2323, 1.0
      %v2410 = vmax.f32 %v2326, 1.0
      %v2411 = vmax.f32 %v2329, 1.0
      %v2412 = vmax.f32 %v2332, 1.0
      %v2413 = vmax.f32 %v2335, 1.0
      %v2414 = vmax.f32 %v2338, 1.0
      %v2415 = vmax.f32 %v2341, 1.0
      %v2416 = vmax.f32 %v2344, 1.0
      %v2417 = vmax.f32 %v2347, 1.0
      %v2418 = vmax.f32 %v2350, 1.0
      %v2419 = vmax.f32 %v2353, 1.0
      %v2420 = vmax.f32 %v2356, 1.0
      %v2421 = vmax.f32 %v2359, 1.0
      %v2422 = vmax.f32 %v2362, 1.0
      %v2423 = vmax.f32 %v2365, 1.0
      %v2424 = vmax.f32 %v2368, 1.0
      %v2425 = vmax.f32 %v2371, 1.0
      %v2426 = vmax.f32 %v2374, 1.0
      %v2427 = vmax.f32 %v2377, 1.0
      %v2428 = vmax.f32 %v2380, 1.0
      %v2429 = vmax.f32 %v2383, 1.0
      %v2430 = vmax.f32 %v2386, 1.0
      %v2431 = vmax.f32 %v2389, 1.0
      %v2432 = vmax.f32 %v2392, 1.0
      %v2433 = vmax.f32 %v2395, 1.0
      %v2434 = vmax.f32 %v2398, 1.0
      %v2435 = vmax.f32 %v2401, 1.0
      %v2436 = vmax.f32 %v2404, 1.0
      %v2437 = vrcp.pop %v2405
      %v2438 = vrcp.pop %v2406
      %v2439 = vrcp.pop %v2407
      %v2440 = vrcp.pop %v2408
      %v2441 = vrcp.pop %v2409
      %v2442 = vrcp.pop %v2410
      %v2443 = vrcp.pop %v2411
      %v2444 = vrcp.pop %v2412
      %v2445 = vrcp.pop %v2413
      %v2446 = vrcp.pop %v2414
      %v2447 = vrcp.pop %v2415
      %v2448 = vrcp.pop %v2416
      %v2449 = vrcp.pop %v2417
      %v2450 = vrcp.pop %v2418
      %v2451 = vrcp.pop %v2419
      %v2452 = vrcp.pop %v2420
      %v2453 = vrcp.pop %v2421
      %v2454 = vrcp.pop %v2422
      %v2455 = vrcp.pop %v2423
      %v2456 = vrcp.pop %v2424
      %v2457 = vrcp.pop %v2425
      %v2458 = vrcp.pop %v2426
      %v2459 = vrcp.pop %v2427
      %v2460 = vrcp.pop %v2428
      %v2461 = vrcp.pop %v2429
      %v2462 = vrcp.pop %v2430
      %v2463 = vrcp.pop %v2431
      %v2464 = vrcp.pop %v2432
      %v2465 = vrcp.pop %v2433
      %v2466 = vrcp.pop %v2434
      %v2467 = vrcp.pop %v2435
      %v2468 = vrcp.pop %v2436
      %v2469 = vld [vmem:[#allocation2] sm:$0xff]
      %v2470 = vld [vmem:[#allocation2 + $0x8] sm:$0xff]
      %v2471 = vld [vmem:[#allocation2 + $0x10] sm:$0xff]
      %v2472 = vld [vmem:[#allocation2 + $0x18] sm:$0xff]
      %v2473 = vld [vmem:[#allocation2 + $0x20] sm:$0xff]
      %v2474 = vld [vmem:[#allocation2 + $0x28] sm:$0xff]
      %v2475 = vld [vmem:[#allocation2 + $0x30] sm:$0xff]
      %v2476 = vld [vmem:[#allocation2 + $0x38] sm:$0xff]
      %v2477 = vld [vmem:[#allocation2 + $0x40] sm:$0xff]
      %v2478 = vld [vmem:[#allocation2 + $0x48] sm:$0xff]
      %v2479 = vld [vmem:[#allocation2 + $0x50] sm:$0xff]
      %v2480 = vld [vmem:[#allocation2 + $0x58] sm:$0xff]
      %v2481 = vld [vmem:[#allocation2 + $0x60] sm:$0xff]
      %v2482 = vld [vmem:[#allocation2 + $0x68] sm:$0xff]
      %v2483 = vld [vmem:[#allocation2 + $0x70] sm:$0xff]
      %v2484 = vld [vmem:[#allocation2 + $0x78] sm:$0xff]
      %v2485 = vld [vmem:[#allocation2 + $0x80] sm:$0xff]
      %v2486 = vld [vmem:[#allocation2 + $0x88] sm:$0xff]
      %v2487 = vld [vmem:[#allocation2 + $0x90] sm:$0xff]
      %v2488 = vld [vmem:[#allocation2 + $0x98] sm:$0xff]
      %v2489 = vld [vmem:[#allocation2 + $0xa0] sm:$0xff]
      %v2490 = vld [vmem:[#allocation2 + $0xa8] sm:$0xff]
      %v2491 = vld [vmem:[#allocation2 + $0xb0] sm:$0xff]
      %v2492 = vld [vmem:[#allocation2 + $0xb8] sm:$0xff]
      %v2493 = vld [vmem:[#allocation2 + $0xc0] sm:$0xff]
      %v2494 = vld [vmem:[#allocation2 + $0xc8] sm:$0xff]
      %v2495 = vld [vmem:[#allocation2 + $0xd0] sm:$0xff]
      %v2496 = vld [vmem:[#allocation2 + $0xd8] sm:$0xff]
      %v2497 = vld [vmem:[#allocation2 + $0xe0] sm:$0xff]
      %v2498 = vld [vmem:[#allocation2 + $0xe8] sm:$0xff]
      %v2499 = vld [vmem:[#allocation2 + $0xf0] sm:$0xff]
      %v2500 = vld [vmem:[#allocation2 + $0xf8] sm:$0xff]
      %v2501 = vmul.f32 %v2469, %v2437
      %v2502 = vmul.f32 %v2470, %v2438
      %v2503 = vmul.f32 %v2471, %v2439
      %v2504 = vmul.f32 %v2472, %v2440
      %v2505 = vmul.f32 %v2473, %v2441
      %v2506 = vmul.f32 %v2474, %v2442
      %v2507 = vmul.f32 %v2475, %v2443
      %v2508 = vmul.f32 %v2476, %v2444
      %v2509 = vmul.f32 %v2477, %v2445
      %v2510 = vmul.f32 %v2478, %v2446
      %v2511 = vmul.f32 %v2479, %v2447
      %v2512 = vmul.f32 %v2480, %v2448
      %v2513 = vmul.f32 %v2481, %v2449
      %v2514 = vmul.f32 %v2482, %v2450
      %v2515 = vmul.f32 %v2483, %v2451
      %v2516 = vmul.f32 %v2484, %v2452
      %v2517 = vmul.f32 %v2485, %v2453
      %v2518 = vmul.f32 %v2486, %v2454
      %v2519 = vmul.f32 %v2487, %v2455
      %v2520 = vmul.f32 %v2488, %v2456
      %v2521 = vmul.f32 %v2489, %v2457
      %v2522 = vmul.f32 %v2490, %v2458
      %v2523 = vmul.f32 %v2491, %v2459
      %v2524 = vmul.f32 %v2492, %v2460
      %v2525 = vmul.f32 %v2493, %v2461
      %v2526 = vmul.f32 %v2494, %v2462
      %v2527 = vmul.f32 %v2495, %v2463
      %v2528 = vmul.f32 %v2496, %v2464
      %v2529 = vmul.f32 %v2497, %v2465
      %v2530 = vmul.f32 %v2498, %v2466
      %v2531 = vmul.f32 %v2499, %v2467
      %v2532 = vmul.f32 %v2500, %v2468
      %v2533 = vtanh.pop %v2501
      %v2534 = vtanh.pop %v2502
      %v2535 = vtanh.pop %v2503
      %v2536 = vtanh.pop %v2504
      %v2537 = vtanh.pop %v2505
      %v2538 = vtanh.pop %v2506
      %v2539 = vtanh.pop %v2507
      %v2540 = vtanh.pop %v2508
      %v2541 = vtanh.pop %v2509
      %v2542 = vtanh.pop %v2510
      %v2543 = vtanh.pop %v2511
      %v2544 = vtanh.pop %v2512
      %v2545 = vtanh.pop %v2513
      %v2546 = vtanh.pop %v2514
      %v2547 = vtanh.pop %v2515
      %v2548 = vtanh.pop %v2516
      %v2549 = vtanh.pop %v2517
      %v2550 = vtanh.pop %v2518
      %v2551 = vtanh.pop %v2519
      %v2552 = vtanh.pop %v2520
      %v2553 = vtanh.pop %v2521
      %v2554 = vtanh.pop %v2522
      %v2555 = vtanh.pop %v2523
      %v2556 = vtanh.pop %v2524
      %v2557 = vtanh.pop %v2525
      %v2558 = vtanh.pop %v2526
      %v2559 = vtanh.pop %v2527
      %v2560 = vtanh.pop %v2528
      %v2561 = vtanh.pop %v2529
      %v2562 = vtanh.pop %v2530
      %v2563 = vtanh.pop %v2531
      %v2564 = vtanh.pop %v2532
      %v2565 = vld [vmem:[%s2] sm:$0xf]
      %v2566 = vld [vmem:[%s2 + $0x4] sm:$0xf]
      %v2567 = vld [vmem:[%s2 + $0x8] sm:$0xf]
      %v2568 = vld [vmem:[%s2 + $0xc] sm:$0xf]
      %v2569 = vld [vmem:[%s2 + $0x10] sm:$0xf]
      %v2570 = vld [vmem:[%s2 + $0x14] sm:$0xf]
      %v2571 = vld [vmem:[%s2 + $0x18] sm:$0xf]
      %v2572 = vld [vmem:[%s2 + $0x1c] sm:$0xf]
      %v2573 = vld [vmem:[%s2 + $0x20] sm:$0xf]
      %v2574 = vld [vmem:[%s2 + $0x24] sm:$0xf]
      %v2575 = vld [vmem:[%s2 + $0x28] sm:$0xf]
      %v2576 = vld [vmem:[%s2 + $0x2c] sm:$0xf]
      %v2577 = vld [vmem:[%s2 + $0x30] sm:$0xf]
      %v2578 = vld [vmem:[%s2 + $0x34] sm:$0xf]
      %v2579 = vld [vmem:[%s2 + $0x38] sm:$0xf]
      %v2580 = vld [vmem:[%s2 + $0x3c] sm:$0xf]
      %v2581 = vpack.c.bf16 %v2534, %v2533
      %v2582 = vpack.c.bf16 %v2536, %v2535
      %v2583 = vpack.c.bf16 %v2538, %v2537
      %v2584 = vpack.c.bf16 %v2540, %v2539
      %v2585 = vpack.c.bf16 %v2542, %v2541
      %v2586 = vpack.c.bf16 %v2544, %v2543
      %v2587 = vpack.c.bf16 %v2546, %v2545
      %v2588 = vpack.c.bf16 %v2548, %v2547
      %v2589 = vpack.c.bf16 %v2550, %v2549
      %v2590 = vpack.c.bf16 %v2552, %v2551
      %v2591 = vpack.c.bf16 %v2554, %v2553
      %v2592 = vpack.c.bf16 %v2556, %v2555
      %v2593 = vpack.c.bf16 %v2558, %v2557
      %v2594 = vpack.c.bf16 %v2560, %v2559
      %v2595 = vpack.c.bf16 %v2562, %v2561
      %v2596 = vpack.c.bf16 %v2564, %v2563
      %v2613 = vunpack.c.l.b16 %v2565
      %v2614 = vunpack.c.l.b16 %v2566
      %v2615 = vunpack.c.l.b16 %v2567
      %v2616 = vunpack.c.l.b16 %v2568
      %v2617 = vunpack.c.l.b16 %v2569
      %v2618 = vunpack.c.l.b16 %v2570
      %v2619 = vunpack.c.l.b16 %v2571
      %v2620 = vunpack.c.l.b16 %v2572
      %v2621 = vunpack.c.l.b16 %v2573
      %v2622 = vunpack.c.l.b16 %v2574
      %v2623 = vunpack.c.l.b16 %v2575
      %v2624 = vunpack.c.l.b16 %v2576
      %v2625 = vunpack.c.l.b16 %v2577
      %v2626 = vunpack.c.l.b16 %v2578
      %v2627 = vunpack.c.l.b16 %v2579
      %v2628 = vunpack.c.l.b16 %v2580
      %v2629 = vpack.c.b16 %v2614, %v2613
      %v2630 = vpack.c.b16 %v2616, %v2615
      %v2631 = vpack.c.b16 %v2618, %v2617
      %v2632 = vpack.c.b16 %v2620, %v2619
      %v2633 = vpack.c.b16 %v2622, %v2621
      %v2634 = vpack.c.b16 %v2624, %v2623
      %v2635 = vpack.c.b16 %v2626, %v2625
      %v2636 = vpack.c.b16 %v2628, %v2627
      %2645 = vmatpush.bf16.xpose.msra.mxu0 %v2636
      %2646 = vmatpush.bf16.xpose.msra.mxu0 %v2635
      %2647 = vmatpush.bf16.xpose.msra.mxu0 %v2634
      %2648 = vmatpush.bf16.xpose.msra.mxu0 %v2633
      %2649 = vmatpush.bf16.xpose.msra.mxu0 %v2632
      %2650 = vmatpush.bf16.xpose.msra.mxu0 %v2631
      %2651 = vmatpush.bf16.xpose.msra.mxu0 %v2630
      %2652 = vmatpush.bf16.xpose.msra.mxu0 %v2629
      %2653 = vmatmul.bf16.gmra.mxu0 %v2581
      %v2654 = vpop.f32.mrf.mxu0
      %v2655 = vadd.f32 0.0, %v2654
      %v2656 = vpop.f32.mrf.mxu0
      %v2657 = vadd.f32 0.0, %v2656
      %2658 = vmatmul.bf16.gmra.mxu0 %v2582
      %v2659 = vpop.f32.mrf.mxu0
      %v2660 = vadd.f32 0.0, %v2659
      %v2661 = vpop.f32.mrf.mxu0
      %v2662 = vadd.f32 0.0, %v2661
      %2663 = vmatmul.bf16.gmra.mxu0 %v2583
      %v2664 = vpop.f32.mrf.mxu0
      %v2665 = vadd.f32 0.0, %v2664
      %v2666 = vpop.f32.mrf.mxu0
      %v2667 = vadd.f32 0.0, %v2666
      %2668 = vmatmul.bf16.gmra.mxu0 %v2584
      %v2669 = vpop.f32.mrf.mxu0
      %v2670 = vadd.f32 0.0, %v2669
      %v2671 = vpop.f32.mrf.mxu0
      %v2672 = vadd.f32 0.0, %v2671
      %2673 = vmatmul.bf16.gmra.mxu0 %v2585
      %v2674 = vpop.f32.mrf.mxu0
      %v2675 = vadd.f32 0.0, %v2674
      %v2676 = vpop.f32.mrf.mxu0
      %v2677 = vadd.f32 0.0, %v2676
      %2678 = vmatmul.bf16.gmra.mxu0 %v2586
      %v2679 = vpop.f32.mrf.mxu0
      %v2680 = vadd.f32 0.0, %v2679
      %v2681 = vpop.f32.mrf.mxu0
      %v2682 = vadd.f32 0.0, %v2681
      %2683 = vmatmul.bf16.gmra.mxu0 %v2587
      %v2684 = vpop.f32.mrf.mxu0
      %v2685 = vadd.f32 0.0, %v2684
      %v2686 = vpop.f32.mrf.mxu0
      %v2687 = vadd.f32 0.0, %v2686
      %2688 = vmatmul.bf16.gmra.mxu0 %v2588
      %v2689 = vpop.f32.mrf.mxu0
      %v2690 = vadd.f32 0.0, %v2689
      %v2691 = vpop.f32.mrf.mxu0
      %v2692 = vadd.f32 0.0, %v2691
      %2693 = vmatmul.bf16.gmra.mxu0 %v2589
      %v2694 = vpop.f32.mrf.mxu0
      %v2695 = vadd.f32 0.0, %v2694
      %v2696 = vpop.f32.mrf.mxu0
      %v2697 = vadd.f32 0.0, %v2696
      %2698 = vmatmul.bf16.gmra.mxu0 %v2590
      %v2699 = vpop.f32.mrf.mxu0
      %v2700 = vadd.f32 0.0, %v2699
      %v2701 = vpop.f32.mrf.mxu0
      %v2702 = vadd.f32 0.0, %v2701
      %2703 = vmatmul.bf16.gmra.mxu0 %v2591
      %v2704 = vpop.f32.mrf.mxu0
      %v2705 = vadd.f32 0.0, %v2704
      %v2706 = vpop.f32.mrf.mxu0
      %v2707 = vadd.f32 0.0, %v2706
      %2708 = vmatmul.bf16.gmra.mxu0 %v2592
      %v2709 = vpop.f32.mrf.mxu0
      %v2710 = vadd.f32 0.0, %v2709
      %v2711 = vpop.f32.mrf.mxu0
      %v2712 = vadd.f32 0.0, %v2711
      %2713 = vmatmul.bf16.gmra.mxu0 %v2593
      %v2714 = vpop.f32.mrf.mxu0
      %v2715 = vadd.f32 0.0, %v2714
      %v2716 = vpop.f32.mrf.mxu0
      %v2717 = vadd.f32 0.0, %v2716
      %2718 = vmatmul.bf16.gmra.mxu0 %v2594
      %v2719 = vpop.f32.mrf.mxu0
      %v2720 = vadd.f32 0.0, %v2719
      %v2721 = vpop.f32.mrf.mxu0
      %v2722 = vadd.f32 0.0, %v2721
      %2723 = vmatmul.bf16.gmra.mxu0 %v2595
      %v2724 = vpop.f32.mrf.mxu0
      %v2725 = vadd.f32 0.0, %v2724
      %v2726 = vpop.f32.mrf.mxu0
      %v2727 = vadd.f32 0.0, %v2726
      %2728 = vmatmul.bf16.gmra.mxu0 %v2596
      %v2729 = vpop.f32.mrf.mxu0
      %v2730 = vadd.f32 0.0, %v2729
      %v2731 = vpop.f32.mrf.mxu0
      %v2732 = vadd.f32 0.0, %v2731
      %2733 = vdwg.mxu0
      %2734 = vmax.xlane.f32.xlu0 %v2655
      %v2735 = vpop.xlane.xlu0 %2734
      %2736 = vmax.xlane.f32.xlu0 %v2657
      %v2737 = vpop.xlane.xlu0 %2736
      %2738 = vmax.xlane.f32.xlu0 %v2660
      %v2739 = vpop.xlane.xlu0 %2738
      %2740 = vmax.xlane.f32.xlu0 %v2662
      %v2741 = vpop.xlane.xlu0 %2740
      %2742 = vmax.xlane.f32.xlu0 %v2665
      %v2743 = vpop.xlane.xlu0 %2742
      %2744 = vmax.xlane.f32.xlu0 %v2667
      %v2745 = vpop.xlane.xlu0 %2744
      %2746 = vmax.xlane.f32.xlu0 %v2670
      %v2747 = vpop.xlane.xlu0 %2746
      %2748 = vmax.xlane.f32.xlu0 %v2672
      %v2749 = vpop.xlane.xlu0 %2748
      %2750 = vmax.xlane.f32.xlu0 %v2675
      %v2751 = vpop.xlane.xlu0 %2750
      %2752 = vmax.xlane.f32.xlu0 %v2677
      %v2753 = vpop.xlane.xlu0 %2752
      %2754 = vmax.xlane.f32.xlu0 %v2680
      %v2755 = vpop.xlane.xlu0 %2754
      %2756 = vmax.xlane.f32.xlu0 %v2682
      %v2757 = vpop.xlane.xlu0 %2756
      %2758 = vmax.xlane.f32.xlu0 %v2685
      %v2759 = vpop.xlane.xlu0 %2758
      %2760 = vmax.xlane.f32.xlu0 %v2687
      %v2761 = vpop.xlane.xlu0 %2760
      %2762 = vmax.xlane.f32.xlu0 %v2690
      %v2763 = vpop.xlane.xlu0 %2762
      %2764 = vmax.xlane.f32.xlu0 %v2692
      %v2765 = vpop.xlane.xlu0 %2764
      %2766 = vmax.xlane.f32.xlu0 %v2695
      %v2767 = vpop.xlane.xlu0 %2766
      %2768 = vmax.xlane.f32.xlu0 %v2697
      %v2769 = vpop.xlane.xlu0 %2768
      %2770 = vmax.xlane.f32.xlu0 %v2700
      %v2771 = vpop.xlane.xlu0 %2770
      %2772 = vmax.xlane.f32.xlu0 %v2702
      %v2773 = vpop.xlane.xlu0 %2772
      %2774 = vmax.xlane.f32.xlu0 %v2705
      %v2775 = vpop.xlane.xlu0 %2774
      %2776 = vmax.xlane.f32.xlu0 %v2707
      %v2777 = vpop.xlane.xlu0 %2776
      %2778 = vmax.xlane.f32.xlu0 %v2710
      %v2779 = vpop.xlane.xlu0 %2778
      %2780 = vmax.xlane.f32.xlu0 %v2712
      %v2781 = vpop.xlane.xlu0 %2780
      %2782 = vmax.xlane.f32.xlu0 %v2715
      %v2783 = vpop.xlane.xlu0 %2782
      %2784 = vmax.xlane.f32.xlu0 %v2717
      %v2785 = vpop.xlane.xlu0 %2784
      %2786 = vmax.xlane.f32.xlu0 %v2720
      %v2787 = vpop.xlane.xlu0 %2786
      %2788 = vmax.xlane.f32.xlu0 %v2722
      %v2789 = vpop.xlane.xlu0 %2788
      %2790 = vmax.xlane.f32.xlu0 %v2725
      %v2791 = vpop.xlane.xlu0 %2790
      %2792 = vmax.xlane.f32.xlu0 %v2727
      %v2793 = vpop.xlane.xlu0 %2792
      %2794 = vmax.xlane.f32.xlu0 %v2730
      %v2795 = vpop.xlane.xlu0 %2794
      %2796 = vmax.xlane.f32.xlu0 %v2732
      %v2797 = vpop.xlane.xlu0 %2796
      %v2798 = vsub.f32 %v2655, %v2735
      %v2799 = vsub.f32 %v2657, %v2737
      %v2800 = vsub.f32 %v2660, %v2739
      %v2801 = vsub.f32 %v2662, %v2741
      %v2802 = vsub.f32 %v2665, %v2743
      %v2803 = vsub.f32 %v2667, %v2745
      %v2804 = vsub.f32 %v2670, %v2747
      %v2805 = vsub.f32 %v2672, %v2749
      %v2806 = vsub.f32 %v2675, %v2751
      %v2807 = vsub.f32 %v2677, %v2753
      %v2808 = vsub.f32 %v2680, %v2755
      %v2809 = vsub.f32 %v2682, %v2757
      %v2810 = vsub.f32 %v2685, %v2759
      %v2811 = vsub.f32 %v2687, %v2761
      %v2812 = vsub.f32 %v2690, %v2763
      %v2813 = vsub.f32 %v2692, %v2765
      %v2814 = vsub.f32 %v2695, %v2767
      %v2815 = vsub.f32 %v2697, %v2769
      %v2816 = vsub.f32 %v2700, %v2771
      %v2817 = vsub.f32 %v2702, %v2773
      %v2818 = vsub.f32 %v2705, %v2775
      %v2819 = vsub.f32 %v2707, %v2777
      %v2820 = vsub.f32 %v2710, %v2779
      %v2821 = vsub.f32 %v2712, %v2781
      %v2822 = vsub.f32 %v2715, %v2783
      %v2823 = vsub.f32 %v2717, %v2785
      %v2824 = vsub.f32 %v2720, %v2787
      %v2825 = vsub.f32 %v2722, %v2789
      %v2826 = vsub.f32 %v2725, %v2791
      %v2827 = vsub.f32 %v2727, %v2793
      %v2828 = vsub.f32 %v2730, %v2795
      %v2829 = vsub.f32 %v2732, %v2797
      %v2830 = vmul.f32 %v2798, 1.442695
      %v2831 = vpow.pop %v2830
      %v2832 = vmul.f32 %v2799, 1.442695
      %v2833 = vpow.pop %v2832
      %v2834 = vmul.f32 %v2800, 1.442695
      %v2835 = vpow.pop %v2834
      %v2836 = vmul.f32 %v2801, 1.442695
      %v2837 = vpow.pop %v2836
      %v2838 = vmul.f32 %v2802, 1.442695
      %v2839 = vpow.pop %v2838
      %v2840 = vmul.f32 %v2803, 1.442695
      %v2841 = vpow.pop %v2840
      %v2842 = vmul.f32 %v2804, 1.442695
      %v2843 = vpow.pop %v2842
      %v2844 = vmul.f32 %v2805, 1.442695
      %v2845 = vpow.pop %v2844
      %v2846 = vmul.f32 %v2806, 1.442695
      %v2847 = vpow.pop %v2846
      %v2848 = vmul.f32 %v2807, 1.442695
      %v2849 = vpow.pop %v2848
      %v2850 = vmul.f32 %v2808, 1.442695
      %v2851 = vpow.pop %v2850
      %v2852 = vmul.f32 %v2809, 1.442695
      %v2853 = vpow.pop %v2852
      %v2854 = vmul.f32 %v2810, 1.442695
      %v2855 = vpow.pop %v2854
      %v2856 = vmul.f32 %v2811, 1.442695
      %v2857 = vpow.pop %v2856
      %v2858 = vmul.f32 %v2812, 1.442695
      %v2859 = vpow.pop %v2858
      %v2860 = vmul.f32 %v2813, 1.442695
      %v2861 = vpow.pop %v2860
      %v2862 = vmul.f32 %v2814, 1.442695
      %v2863 = vpow.pop %v2862
      %v2864 = vmul.f32 %v2815, 1.442695
      %v2865 = vpow.pop %v2864
      %v2866 = vmul.f32 %v2816, 1.442695
      %v2867 = vpow.pop %v2866
      %v2868 = vmul.f32 %v2817, 1.442695
      %v2869 = vpow.pop %v2868
      %v2870 = vmul.f32 %v2818, 1.442695
      %v2871 = vpow.pop %v2870
      %v2872 = vmul.f32 %v2819, 1.442695
      %v2873 = vpow.pop %v2872
      %v2874 = vmul.f32 %v2820, 1.442695
      %v2875 = vpow.pop %v2874
      %v2876 = vmul.f32 %v2821, 1.442695
      %v2877 = vpow.pop %v2876
      %v2878 = vmul.f32 %v2822, 1.442695
      %v2879 = vpow.pop %v2878
      %v2880 = vmul.f32 %v2823, 1.442695
      %v2881 = vpow.pop %v2880
      %v2882 = vmul.f32 %v2824, 1.442695
      %v2883 = vpow.pop %v2882
      %v2884 = vmul.f32 %v2825, 1.442695
      %v2885 = vpow.pop %v2884
      %v2886 = vmul.f32 %v2826, 1.442695
      %v2887 = vpow.pop %v2886
      %v2888 = vmul.f32 %v2827, 1.442695
      %v2889 = vpow.pop %v2888
      %v2890 = vmul.f32 %v2828, 1.442695
      %v2891 = vpow.pop %v2890
      %v2892 = vmul.f32 %v2829, 1.442695
      %v2893 = vpow.pop %v2892
      %2894 = vadd.xlane.f32.xlu0 %v2831
      %v2895 = vpop.xlane.xlu0 %2894
      %2896 = vadd.xlane.f32.xlu0 %v2833
      %v2897 = vpop.xlane.xlu0 %2896
      %2898 = vadd.xlane.f32.xlu0 %v2835
      %v2899 = vpop.xlane.xlu0 %2898
      %2900 = vadd.xlane.f32.xlu0 %v2837
      %v2901 = vpop.xlane.xlu0 %2900
      %2902 = vadd.xlane.f32.xlu0 %v2839
      %v2903 = vpop.xlane.xlu0 %2902
      %2904 = vadd.xlane.f32.xlu0 %v2841
      %v2905 = vpop.xlane.xlu0 %2904
      %2906 = vadd.xlane.f32.xlu0 %v2843
      %v2907 = vpop.xlane.xlu0 %2906
      %2908 = vadd.xlane.f32.xlu0 %v2845
      %v2909 = vpop.xlane.xlu0 %2908
      %2910 = vadd.xlane.f32.xlu0 %v2847
      %v2911 = vpop.xlane.xlu0 %2910
      %2912 = vadd.xlane.f32.xlu0 %v2849
      %v2913 = vpop.xlane.xlu0 %2912
      %2914 = vadd.xlane.f32.xlu0 %v2851
      %v2915 = vpop.xlane.xlu0 %2914
      %2916 = vadd.xlane.f32.xlu0 %v2853
      %v2917 = vpop.xlane.xlu0 %2916
      %2918 = vadd.xlane.f32.xlu0 %v2855
      %v2919 = vpop.xlane.xlu0 %2918
      %2920 = vadd.xlane.f32.xlu0 %v2857
      %v2921 = vpop.xlane.xlu0 %2920
      %2922 = vadd.xlane.f32.xlu0 %v2859
      %v2923 = vpop.xlane.xlu0 %2922
      %2924 = vadd.xlane.f32.xlu0 %v2861
      %v2925 = vpop.xlane.xlu0 %2924
      %2926 = vadd.xlane.f32.xlu0 %v2863
      %v2927 = vpop.xlane.xlu0 %2926
      %2928 = vadd.xlane.f32.xlu0 %v2865
      %v2929 = vpop.xlane.xlu0 %2928
      %2930 = vadd.xlane.f32.xlu0 %v2867
      %v2931 = vpop.xlane.xlu0 %2930
      %2932 = vadd.xlane.f32.xlu0 %v2869
      %v2933 = vpop.xlane.xlu0 %2932
      %2934 = vadd.xlane.f32.xlu0 %v2871
      %v2935 = vpop.xlane.xlu0 %2934
      %2936 = vadd.xlane.f32.xlu0 %v2873
      %v2937 = vpop.xlane.xlu0 %2936
      %2938 = vadd.xlane.f32.xlu0 %v2875
      %v2939 = vpop.xlane.xlu0 %2938
      %2940 = vadd.xlane.f32.xlu0 %v2877
      %v2941 = vpop.xlane.xlu0 %2940
      %2942 = vadd.xlane.f32.xlu0 %v2879
      %v2943 = vpop.xlane.xlu0 %2942
      %2944 = vadd.xlane.f32.xlu0 %v2881
      %v2945 = vpop.xlane.xlu0 %2944
      %2946 = vadd.xlane.f32.xlu0 %v2883
      %v2947 = vpop.xlane.xlu0 %2946
      %2948 = vadd.xlane.f32.xlu0 %v2885
      %v2949 = vpop.xlane.xlu0 %2948
      %2950 = vadd.xlane.f32.xlu0 %v2887
      %v2951 = vpop.xlane.xlu0 %2950
      %2952 = vadd.xlane.f32.xlu0 %v2889
      %v2953 = vpop.xlane.xlu0 %2952
      %2954 = vadd.xlane.f32.xlu0 %v2891
      %v2955 = vpop.xlane.xlu0 %2954
      %2956 = vadd.xlane.f32.xlu0 %v2893
      %v2957 = vpop.xlane.xlu0 %2956
      %v2958 = vrcp.pop %v2895
      %v2959 = vrcp.pop %v2897
      %v2960 = vrcp.pop %v2899
      %v2961 = vrcp.pop %v2901
      %v2962 = vrcp.pop %v2903
      %v2963 = vrcp.pop %v2905
      %v2964 = vrcp.pop %v2907
      %v2965 = vrcp.pop %v2909
      %v2966 = vrcp.pop %v2911
      %v2967 = vrcp.pop %v2913
      %v2968 = vrcp.pop %v2915
      %v2969 = vrcp.pop %v2917
      %v2970 = vrcp.pop %v2919
      %v2971 = vrcp.pop %v2921
      %v2972 = vrcp.pop %v2923
      %v2973 = vrcp.pop %v2925
      %v2974 = vrcp.pop %v2927
      %v2975 = vrcp.pop %v2929
      %v2976 = vrcp.pop %v2931
      %v2977 = vrcp.pop %v2933
      %v2978 = vrcp.pop %v2935
      %v2979 = vrcp.pop %v2937
      %v2980 = vrcp.pop %v2939
      %v2981 = vrcp.pop %v2941
      %v2982 = vrcp.pop %v2943
      %v2983 = vrcp.pop %v2945
      %v2984 = vrcp.pop %v2947
      %v2985 = vrcp.pop %v2949
      %v2986 = vrcp.pop %v2951
      %v2987 = vrcp.pop %v2953
      %v2988 = vrcp.pop %v2955
      %v2989 = vrcp.pop %v2957
      %v2990 = vmul.f32 %v2831, %v2958
      %v2991 = vmul.f32 %v2833, %v2959
      %v2992 = vmul.f32 %v2835, %v2960
      %v2993 = vmul.f32 %v2837, %v2961
      %v2994 = vmul.f32 %v2839, %v2962
      %v2995 = vmul.f32 %v2841, %v2963
      %v2996 = vmul.f32 %v2843, %v2964
      %v2997 = vmul.f32 %v2845, %v2965
      %v2998 = vmul.f32 %v2847, %v2966
      %v2999 = vmul.f32 %v2849, %v2967
      %v3000 = vmul.f32 %v2851, %v2968
      %v3001 = vmul.f32 %v2853, %v2969
      %v3002 = vmul.f32 %v2855, %v2970
      %v3003 = vmul.f32 %v2857, %v2971
      %v3004 = vmul.f32 %v2859, %v2972
      %v3005 = vmul.f32 %v2861, %v2973
      %v3006 = vmul.f32 %v2863, %v2974
      %v3007 = vmul.f32 %v2865, %v2975
      %v3008 = vmul.f32 %v2867, %v2976
      %v3009 = vmul.f32 %v2869, %v2977
      %v3010 = vmul.f32 %v2871, %v2978
      %v3011 = vmul.f32 %v2873, %v2979
      %v3012 = vmul.f32 %v2875, %v2980
      %v3013 = vmul.f32 %v2877, %v2981
      %v3014 = vmul.f32 %v2879, %v2982
      %v3015 = vmul.f32 %v2881, %v2983
      %v3016 = vmul.f32 %v2883, %v2984
      %v3017 = vmul.f32 %v2885, %v2985
      %v3018 = vmul.f32 %v2887, %v2986
      %v3019 = vmul.f32 %v2889, %v2987
      %v3020 = vmul.f32 %v2891, %v2988
      %v3021 = vmul.f32 %v2893, %v2989
      %v3022 = vpack.c.bf16 %v2991, %v2990
      %v3023 = vpack.c.bf16 %v2993, %v2992
      %v3024 = vpack.c.bf16 %v2995, %v2994
      %v3025 = vpack.c.bf16 %v2997, %v2996
      %v3026 = vpack.c.bf16 %v2999, %v2998
      %v3027 = vpack.c.bf16 %v3001, %v3000
      %v3028 = vpack.c.bf16 %v3003, %v3002
      %v3029 = vpack.c.bf16 %v3005, %v3004
      %v3030 = vpack.c.bf16 %v3007, %v3006
      %v3031 = vpack.c.bf16 %v3009, %v3008
      %v3032 = vpack.c.bf16 %v3011, %v3010
      %v3033 = vpack.c.bf16 %v3013, %v3012
      %v3034 = vpack.c.bf16 %v3015, %v3014
      %v3035 = vpack.c.bf16 %v3017, %v3016
      %v3036 = vpack.c.bf16 %v3019, %v3018
      %v3037 = vpack.c.bf16 %v3021, %v3020
      %3038 = vmatpush.bf16.msra.mxu0 %v2636
      %3039 = vmatpush.bf16.msra.mxu0 %v2635
      %3040 = vmatpush.bf16.msra.mxu0 %v2634
      %3041 = vmatpush.bf16.msra.mxu0 %v2633
      %3042 = vmatpush.bf16.msra.mxu0 %v2632
      %3043 = vmatpush.bf16.msra.mxu0 %v2631
      %3044 = vmatpush.bf16.msra.mxu0 %v2630
      %3045 = vmatpush.bf16.msra.mxu0 %v2629
      %3046 = vmatmul.bf16.gmra.mxu0 %v3022
      %v3047 = vpop.f32.mrf.mxu0
      %v3048 = vadd.f32 0.0, %v3047
      %v3049 = vpop.f32.mrf.mxu0
      %v3050 = vadd.f32 0.0, %v3049
      %3051 = vmatmul.bf16.gmra.mxu0 %v3023
      %v3052 = vpop.f32.mrf.mxu0
      %v3053 = vadd.f32 0.0, %v3052
      %v3054 = vpop.f32.mrf.mxu0
      %v3055 = vadd.f32 0.0, %v3054
      %3056 = vmatmul.bf16.gmra.mxu0 %v3024
      %v3057 = vpop.f32.mrf.mxu0
      %v3058 = vadd.f32 0.0, %v3057
      %v3059 = vpop.f32.mrf.mxu0
      %v3060 = vadd.f32 0.0, %v3059
      %3061 = vmatmul.bf16.gmra.mxu0 %v3025
      %v3062 = vpop.f32.mrf.mxu0
      %v3063 = vadd.f32 0.0, %v3062
      %v3064 = vpop.f32.mrf.mxu0
      %v3065 = vadd.f32 0.0, %v3064
      %3066 = vmatmul.bf16.gmra.mxu0 %v3026
      %v3067 = vpop.f32.mrf.mxu0
      %v3068 = vadd.f32 0.0, %v3067
      %v3069 = vpop.f32.mrf.mxu0
      %v3070 = vadd.f32 0.0, %v3069
      %3071 = vmatmul.bf16.gmra.mxu0 %v3027
      %v3072 = vpop.f32.mrf.mxu0
      %v3073 = vadd.f32 0.0, %v3072
      %v3074 = vpop.f32.mrf.mxu0
      %v3075 = vadd.f32 0.0, %v3074
      %3076 = vmatmul.bf16.gmra.mxu0 %v3028
      %v3077 = vpop.f32.mrf.mxu0
      %v3078 = vadd.f32 0.0, %v3077
      %v3079 = vpop.f32.mrf.mxu0
      %v3080 = vadd.f32 0.0, %v3079
      %3081 = vmatmul.bf16.gmra.mxu0 %v3029
      %v3082 = vpop.f32.mrf.mxu0
      %v3083 = vadd.f32 0.0, %v3082
      %v3084 = vpop.f32.mrf.mxu0
      %v3085 = vadd.f32 0.0, %v3084
      %3086 = vmatmul.bf16.gmra.mxu0 %v3030
      %v3087 = vpop.f32.mrf.mxu0
      %v3088 = vadd.f32 0.0, %v3087
      %v3089 = vpop.f32.mrf.mxu0
      %v3090 = vadd.f32 0.0, %v3089
      %3091 = vmatmul.bf16.gmra.mxu0 %v3031
      %v3092 = vpop.f32.mrf.mxu0
      %v3093 = vadd.f32 0.0, %v3092
      %v3094 = vpop.f32.mrf.mxu0
      %v3095 = vadd.f32 0.0, %v3094
      %3096 = vmatmul.bf16.gmra.mxu0 %v3032
      %v3097 = vpop.f32.mrf.mxu0
      %v3098 = vadd.f32 0.0, %v3097
      %v3099 = vpop.f32.mrf.mxu0
      %v3100 = vadd.f32 0.0, %v3099
      %3101 = vmatmul.bf16.gmra.mxu0 %v3033
      %v3102 = vpop.f32.mrf.mxu0
      %v3103 = vadd.f32 0.0, %v3102
      %v3104 = vpop.f32.mrf.mxu0
      %v3105 = vadd.f32 0.0, %v3104
      %3106 = vmatmul.bf16.gmra.mxu0 %v3034
      %v3107 = vpop.f32.mrf.mxu0
      %v3108 = vadd.f32 0.0, %v3107
      %v3109 = vpop.f32.mrf.mxu0
      %v3110 = vadd.f32 0.0, %v3109
      %3111 = vmatmul.bf16.gmra.mxu0 %v3035
      %v3112 = vpop.f32.mrf.mxu0
      %v3113 = vadd.f32 0.0, %v3112
      %v3114 = vpop.f32.mrf.mxu0
      %v3115 = vadd.f32 0.0, %v3114
      %3116 = vmatmul.bf16.gmra.mxu0 %v3036
      %v3117 = vpop.f32.mrf.mxu0
      %v3118 = vadd.f32 0.0, %v3117
      %v3119 = vpop.f32.mrf.mxu0
      %v3120 = vadd.f32 0.0, %v3119
      %3121 = vmatmul.bf16.gmra.mxu0 %v3037
      %v3122 = vpop.f32.mrf.mxu0
      %v3123 = vadd.f32 0.0, %v3122
      %v3124 = vpop.f32.mrf.mxu0
      %v3125 = vadd.f32 0.0, %v3124
      %3126 = vdwg.mxu0
      %v3127 = vadd.f32 %v2533, %v3048
      %v3128 = vadd.f32 %v2534, %v3050
      %v3129 = vadd.f32 %v2535, %v3053
      %v3130 = vadd.f32 %v2536, %v3055
      %v3131 = vadd.f32 %v2537, %v3058
      %v3132 = vadd.f32 %v2538, %v3060
      %v3133 = vadd.f32 %v2539, %v3063
      %v3134 = vadd.f32 %v2540, %v3065
      %v3135 = vadd.f32 %v2541, %v3068
      %v3136 = vadd.f32 %v2542, %v3070
      %v3137 = vadd.f32 %v2543, %v3073
      %v3138 = vadd.f32 %v2544, %v3075
      %v3139 = vadd.f32 %v2545, %v3078
      %v3140 = vadd.f32 %v2546, %v3080
      %v3141 = vadd.f32 %v2547, %v3083
      %v3142 = vadd.f32 %v2548, %v3085
      %v3143 = vadd.f32 %v2549, %v3088
      %v3144 = vadd.f32 %v2550, %v3090
      %v3145 = vadd.f32 %v2551, %v3093
      %v3146 = vadd.f32 %v2552, %v3095
      %v3147 = vadd.f32 %v2553, %v3098
      %v3148 = vadd.f32 %v2554, %v3100
      %v3149 = vadd.f32 %v2555, %v3103
      %v3150 = vadd.f32 %v2556, %v3105
      %v3151 = vadd.f32 %v2557, %v3108
      %v3152 = vadd.f32 %v2558, %v3110
      %v3153 = vadd.f32 %v2559, %v3113
      %v3154 = vadd.f32 %v2560, %v3115
      %v3155 = vadd.f32 %v2561, %v3118
      %v3156 = vadd.f32 %v2562, %v3120
      %v3157 = vadd.f32 %v2563, %v3123
      %v3158 = vadd.f32 %v2564, %v3125
      %3159 = vst [vmem:[#allocation3] sm:$0xff] %v3127
      %3160 = vst [vmem:[#allocation3 + $0x8] sm:$0xff] %v3128
      %3161 = vst [vmem:[#allocation3 + $0x10] sm:$0xff] %v3129
      %3162 = vst [vmem:[#allocation3 + $0x18] sm:$0xff] %v3130
      %3163 = vst [vmem:[#allocation3 + $0x20] sm:$0xff] %v3131
      %3164 = vst [vmem:[#allocation3 + $0x28] sm:$0xff] %v3132
      %3165 = vst [vmem:[#allocation3 + $0x30] sm:$0xff] %v3133
      %3166 = vst [vmem:[#allocation3 + $0x38] sm:$0xff] %v3134
      %3167 = vst [vmem:[#allocation3 + $0x40] sm:$0xff] %v3135
      %3168 = vst [vmem:[#allocation3 + $0x48] sm:$0xff] %v3136
      %3169 = vst [vmem:[#allocation3 + $0x50] sm:$0xff] %v3137
      %3170 = vst [vmem:[#allocation3 + $0x58] sm:$0xff] %v3138
      %3171 = vst [vmem:[#allocation3 + $0x60] sm:$0xff] %v3139
      %3172 = vst [vmem:[#allocation3 + $0x68] sm:$0xff] %v3140
      %3173 = vst [vmem:[#allocation3 + $0x70] sm:$0xff] %v3141
      %3174 = vst [vmem:[#allocation3 + $0x78] sm:$0xff] %v3142
      %3175 = vst [vmem:[#allocation3 + $0x80] sm:$0xff] %v3143
      %3176 = vst [vmem:[#allocation3 + $0x88] sm:$0xff] %v3144
      %3177 = vst [vmem:[#allocation3 + $0x90] sm:$0xff] %v3145
      %3178 = vst [vmem:[#allocation3 + $0x98] sm:$0xff] %v3146
      %3179 = vst [vmem:[#allocation3 + $0xa0] sm:$0xff] %v3147
      %3180 = vst [vmem:[#allocation3 + $0xa8] sm:$0xff] %v3148
      %3181 = vst [vmem:[#allocation3 + $0xb0] sm:$0xff] %v3149
      %3182 = vst [vmem:[#allocation3 + $0xb8] sm:$0xff] %v3150
      %3183 = vst [vmem:[#allocation3 + $0xc0] sm:$0xff] %v3151
      %3184 = vst [vmem:[#allocation3 + $0xc8] sm:$0xff] %v3152
      %3185 = vst [vmem:[#allocation3 + $0xd0] sm:$0xff] %v3153
      %3186 = vst [vmem:[#allocation3 + $0xd8] sm:$0xff] %v3154
      %3187 = vst [vmem:[#allocation3 + $0xe0] sm:$0xff] %v3155
      %3188 = vst [vmem:[#allocation3 + $0xe8] sm:$0xff] %v3156
      %3189 = vst [vmem:[#allocation3 + $0xf0] sm:$0xff] %v3157
      %3190 = vst [vmem:[#allocation3 + $0xf8] sm:$0xff] %v3158
    $region21: #{tpu_custom_call.1} parent=1 // pred_fallthru
      _
    // Predicated region
    $region22: #{tpu_custom_call.1} parent=1 // pred_check
      _
    $region23: #{tpu_custom_call.1} parent=1 // pred_check_branch
      %3192 = sbr.rel (0) target = $region25
    $region24: #{tpu_custom_call.1} parent=1 // pred_region
      %3194 = vsyncadd [#allocation4], 0
      %s3195 = sshll.u32 [#allocation3], 4
      %s3196 = int_to_ptr.vmem [resolvable:$true] %s3195
      %s3197 = sshll.u32 %s3, 4
      %s3198 = int_to_ptr.hbm [resolvable:$true] %s3197
      %3203 = dma.vmem_to_hbm [thread:$0]  %s3196, 4096, %s3198, [#allocation4], 128, 128, 8
    $region25: #{tpu_custom_call.1} parent=1 // pred_fallthru
      _
    // Predicated region
    $region26: #{tpu_custom_call.1} parent=1 // pred_check
      _
    $region27: #{tpu_custom_call.1} parent=1 // pred_check_branch
      %3205 = sbr.rel (0) target = $region29
    $region28: #{tpu_custom_call.1} parent=1 // pred_region
      %3207 = dma.done [#allocation4], 4096
    $region29: #{tpu_custom_call.1} parent=1 // pred_fallthru
      _
    %3208 = vsyncpa [#allocation4], 1

// kernel: tpu_custom_call.1
$region0: #{tpu_custom_call.1}
  #allocation0 [shape = 'u32[]', space=smem, size = 0x4, offset = 0x4, fixed_abs, tag = 'smem constant byte address 0x4 - core index']
  #allocation1 [shape = 'u32[72,128]{1,0:T(1,128)}', space=vmem, size = 0x9000, scoped, tag = 'internal scratch']
  #allocation2 [shape = 'f32[256,128]{1,0:T(8,128)}', space=vmem, size = 0x20000, scoped, tag = 'scratch operand']
  %s0 = inlined_call_operand.vmem [shape: s32[256,8], index: 0, kind: input, shape index: {}]
  %s1 = inlined_call_operand.vmem [shape: bf16[128,128], index: 1, kind: input, shape index: {}]
  %s2 = inlined_call_operand.vmem [shape: bf16[128,128], index: 2, kind: input, shape index: {}]
  %s3 = inlined_call_operand.hbm [shape: f32[256,128], index: 3, kind: output, shape index: {}]
  %s4 = sld [smem:[#allocation0]]
  $region30: #{tpu_custom_call.1} parent=0
    _
  %s6 = ssub.s32 1, %s4
  %s7 = scalar_select 0, %s6, %s4
  $region1: #{tpu_custom_call.1} parent=0
    #allocation3 [shape = 'u8[131072]{0}', space=vmem, size = 0x20000, scoped, tag = 'output window, operand 0, single buffered']
    #allocation4 [shape = 's32[1]{0}', space=sflag, size = 0x4, scoped, tag = 'scoped memory for tpu_custom_call.1']
    %8 = vsyncpa [#allocation4], 0
    // Predicated region
    $region2: #{tpu_custom_call.1} parent=1 // pred_check
      _
    $region3: #{tpu_custom_call.1} parent=1 // pred_check_branch
      %10 = sbr.rel (0) target = $region5
    $region4: #{tpu_custom_call.1} parent=1 // pred_region
      _
    $region5: #{tpu_custom_call.1} parent=1 // pred_fallthru
      _
    // Predicated region
    $region6: #{tpu_custom_call.1} parent=1 // pred_check
      _
    $region7: #{tpu_custom_call.1} parent=1 // pred_check_branch
      %12 = sbr.rel (0) target = $region9
    $region8: #{tpu_custom_call.1} parent=1 // pred_region
      _
    $region9: #{tpu_custom_call.1} parent=1 // pred_fallthru
      _
    // Predicated region
    $region10: #{tpu_custom_call.1} parent=1 // pred_check
      _
    $region11: #{tpu_custom_call.1} parent=1 // pred_check_branch
      %14 = sbr.rel (0) target = $region13
    $region12: #{tpu_custom_call.1} parent=1 // pred_region
      _
    $region13: #{tpu_custom_call.1} parent=1 // pred_fallthru
      _
    %v15 = vld [vmem:[%s0] sm:$0xff]
    %v16 = vld [vmem:[%s0 + $0x8] sm:$0xff]
    %v17 = vld [vmem:[%s0 + $0x10] sm:$0xff]
    %v18 = vld [vmem:[%s0 + $0x18] sm:$0xff]
    %v19 = vld [vmem:[%s0 + $0x20] sm:$0xff]
    %v20 = vld [vmem:[%s0 + $0x28] sm:$0xff]
    %v21 = vld [vmem:[%s0 + $0x30] sm:$0xff]
    %v22 = vld [vmem:[%s0 + $0x38] sm:$0xff]
    %v23 = vld [vmem:[%s0 + $0x40] sm:$0xff]
    %v24 = vld [vmem:[%s0 + $0x48] sm:$0xff]
    %v25 = vld [vmem:[%s0 + $0x50] sm:$0xff]
    %v26 = vld [vmem:[%s0 + $0x58] sm:$0xff]
    %v27 = vld [vmem:[%s0 + $0x60] sm:$0xff]
    %v28 = vld [vmem:[%s0 + $0x68] sm:$0xff]
    %v29 = vld [vmem:[%s0 + $0x70] sm:$0xff]
    %v30 = vld [vmem:[%s0 + $0x78] sm:$0xff]
    %v31 = vld [vmem:[%s0 + $0x80] sm:$0xff]
    %v32 = vld [vmem:[%s0 + $0x88] sm:$0xff]
    %v33 = vld [vmem:[%s0 + $0x90] sm:$0xff]
    %v34 = vld [vmem:[%s0 + $0x98] sm:$0xff]
    %v35 = vld [vmem:[%s0 + $0xa0] sm:$0xff]
    %v36 = vld [vmem:[%s0 + $0xa8] sm:$0xff]
    %v37 = vld [vmem:[%s0 + $0xb0] sm:$0xff]
    %v38 = vld [vmem:[%s0 + $0xb8] sm:$0xff]
    %v39 = vld [vmem:[%s0 + $0xc0] sm:$0xff]
    %v40 = vld [vmem:[%s0 + $0xc8] sm:$0xff]
    %v41 = vld [vmem:[%s0 + $0xd0] sm:$0xff]
    %v42 = vld [vmem:[%s0 + $0xd8] sm:$0xff]
    %v43 = vld [vmem:[%s0 + $0xe0] sm:$0xff]
    %v44 = vld [vmem:[%s0 + $0xe8] sm:$0xff]
    %v45 = vld [vmem:[%s0 + $0xf0] sm:$0xff]
    %v46 = vld [vmem:[%s0 + $0xf8] sm:$0xff]
    %p47 = scmp.eq.s32.totalorder 0, 0
    // Predicated region
    $region14: #{tpu_custom_call.1} parent=1 // pred_check
      %p48 = pneg %p47
    $region15: #{tpu_custom_call.1} parent=1 // pred_check_branch
      %50 = sbr.rel (%p48) target = $region17
    $region16: #{tpu_custom_call.1} parent=1 // pred_region
      %51 = vst [vmem:[#allocation2] sm:$0xff] 0.0
      %52 = vst [vmem:[#allocation2 + $0x8] sm:$0xff] 0.0
      %53 = vst [vmem:[#allocation2 + $0x10] sm:$0xff] 0.0
      %54 = vst [vmem:[#allocation2 + $0x18] sm:$0xff] 0.0
      %55 = vst [vmem:[#allocation2 + $0x20] sm:$0xff] 0.0
      %56 = vst [vmem:[#allocation2 + $0x28] sm:$0xff] 0.0
      %57 = vst [vmem:[#allocation2 + $0x30] sm:$0xff] 0.0
      %58 = vst [vmem:[#allocation2 + $0x38] sm:$0xff] 0.0
      %59 = vst [vmem:[#allocation2 + $0x40] sm:$0xff] 0.0
      %60 = vst [vmem:[#allocation2 + $0x48] sm:$0xff] 0.0
      %61 = vst [vmem:[#allocation2 + $0x50] sm:$0xff] 0.0
      %62 = vst [vmem:[#allocation2 + $0x58] sm:$0xff] 0.0
      %63 = vst [vmem:[#allocation2 + $0x60] sm:$0xff] 0.0
      %64 = vst [vmem:[#allocation2 + $0x68] sm:$0xff] 0.0
      %65 = vst [vmem:[#allocation2 + $0x70] sm:$0xff] 0.0
      %66 = vst [vmem:[#allocation2 + $0x78] sm:$0xff] 0.0
      %67 = vst [vmem:[#allocation2 + $0x80] sm:$0xff] 0.0
      %68 = vst [vmem:[#allocation2 + $0x88] sm:$0xff] 0.0
      %69 = vst [vmem:[#allocation2 + $0x90] sm:$0xff] 0.0
      %70 = vst [vmem:[#allocation2 + $0x98] sm:$0xff] 0.0
      %71 = vst [vmem:[#allocation2 + $0xa0] sm:$0xff] 0.0
      %72 = vst [vmem:[#allocation2 + $0xa8] sm:$0xff] 0.0
      %73 = vst [vmem:[#allocation2 + $0xb0] sm:$0xff] 0.0
      %74 = vst [vmem:[#allocation2 + $0xb8] sm:$0xff] 0.0
      %75 = vst [vmem:[#allocation2 + $0xc0] sm:$0xff] 0.0
      %76 = vst [vmem:[#allocation2 + $0xc8] sm:$0xff] 0.0
      %77 = vst [vmem:[#allocation2 + $0xd0] sm:$0xff] 0.0
      %78 = vst [vmem:[#allocation2 + $0xd8] sm:$0xff] 0.0
      %79 = vst [vmem:[#allocation2 + $0xe0] sm:$0xff] 0.0
      %80 = vst [vmem:[#allocation2 + $0xe8] sm:$0xff] 0.0
      %81 = vst [vmem:[#allocation2 + $0xf0] sm:$0xff] 0.0
      %82 = vst [vmem:[#allocation2 + $0xf8] sm:$0xff] 0.0
    $region17: #{tpu_custom_call.1} parent=1 // pred_fallthru
      _
    %vm83 = vcmp.eq.s32.totalorder %v15, 0
    %vm84 = vcmp.eq.s32.totalorder %v16, 0
    %vm85 = vcmp.eq.s32.totalorder %v17, 0
    %vm86 = vcmp.eq.s32.totalorder %v18, 0
    %vm87 = vcmp.eq.s32.totalorder %v19, 0
    %vm88 = vcmp.eq.s32.totalorder %v20, 0
    %vm89 = vcmp.eq.s32.totalorder %v21, 0
    %vm90 = vcmp.eq.s32.totalorder %v22, 0
    %vm91 = vcmp.eq.s32.totalorder %v23, 0
    %vm92 = vcmp.eq.s32.totalorder %v24, 0
    %vm93 = vcmp.eq.s32.totalorder %v25, 0
    %vm94 = vcmp.eq.s32.totalorder %v26, 0
    %vm95 = vcmp.eq.s32.totalorder %v27, 0
    %vm96 = vcmp.eq.s32.totalorder %v28, 0
    %vm97 = vcmp.eq.s32.totalorder %v29, 0
    %vm98 = vcmp.eq.s32.totalorder %v30, 0
    %vm99 = vcmp.eq.s32.totalorder %v31, 0
    %vm100 = vcmp.eq.s32.totalorder %v32, 0
    %vm101 = vcmp.eq.s32.totalorder %v33, 0
    %vm102 = vcmp.eq.s32.totalorder %v34, 0
    %vm103 = vcmp.eq.s32.totalorder %v35, 0
    %vm104 = vcmp.eq.s32.totalorder %v36, 0
    %vm105 = vcmp.eq.s32.totalorder %v37, 0
    %vm106 = vcmp.eq.s32.totalorder %v38, 0
    %vm107 = vcmp.eq.s32.totalorder %v39, 0
    %vm108 = vcmp.eq.s32.totalorder %v40, 0
    %vm109 = vcmp.eq.s32.totalorder %v41, 0
    %vm110 = vcmp.eq.s32.totalorder %v42, 0
    %vm111 = vcmp.eq.s32.totalorder %v43, 0
    %vm112 = vcmp.eq.s32.totalorder %v44, 0
    %vm113 = vcmp.eq.s32.totalorder %v45, 0
    %vm114 = vcmp.eq.s32.totalorder %v46, 0
    %v115 = vsel %vm83, 4294967295, %v15
    %v116 = vsel %vm84, 4294967295, %v16
    %v117 = vsel %vm85, 4294967295, %v17
    %v118 = vsel %vm86, 4294967295, %v18
    %v119 = vsel %vm87, 4294967295, %v19
    %v120 = vsel %vm88, 4294967295, %v20
    %v121 = vsel %vm89, 4294967295, %v21
    %v122 = vsel %vm90, 4294967295, %v22
    %v123 = vsel %vm91, 4294967295, %v23
    %v124 = vsel %vm92, 4294967295, %v24
    %v125 = vsel %vm93, 4294967295, %v25
    %v126 = vsel %vm94, 4294967295, %v26
    %v127 = vsel %vm95, 4294967295, %v27
    %v128 = vsel %vm96, 4294967295, %v28
    %v129 = vsel %vm97, 4294967295, %v29
    %v130 = vsel %vm98, 4294967295, %v30
    %v131 = vsel %vm99, 4294967295, %v31
    %v132 = vsel %vm100, 4294967295, %v32
    %v133 = vsel %vm101, 4294967295, %v33
    %v134 = vsel %vm102, 4294967295, %v34
    %v135 = vsel %vm103, 4294967295, %v35
    %v136 = vsel %vm104, 4294967295, %v36
    %v137 = vsel %vm105, 4294967295, %v37
    %v138 = vsel %vm106, 4294967295, %v38
    %v139 = vsel %vm107, 4294967295, %v39
    %v140 = vsel %vm108, 4294967295, %v40
    %v141 = vsel %vm109, 4294967295, %v41
    %v142 = vsel %vm110, 4294967295, %v42
    %v143 = vsel %vm111, 4294967295, %v43
    %v144 = vsel %vm112, 4294967295, %v44
    %v145 = vsel %vm113, 4294967295, %v45
    %v146 = vsel %vm114, 4294967295, %v46
    %s147 = smul.u32 0, 128
    %v148 = vlaneseq
    %v149 = vand.u32 %v148, 127
    %v150 = vstv %s147
    %v151 = vadd.s32 %v149, %v150
    %152 = vset.pattern.permute.xlu0 0
    %153 = vperm.xlu0 %152, %v115
    %v154 = vpop.permute.xlu0 %153
    %155 = vset.pattern.permute.xlu0 0
    %156 = vperm.xlu0 %155, %v116
    %v157 = vpop.permute.xlu0 %156
    %158 = vset.pattern.permute.xlu0 0
    %159 = vperm.xlu0 %158, %v117
    %v160 = vpop.permute.xlu0 %159
    %161 = vset.pattern.permute.xlu0 0
    %162 = vperm.xlu0 %161, %v118
    %v163 = vpop.permute.xlu0 %162
    %164 = vset.pattern.permute.xlu0 0
    %165 = vperm.xlu0 %164, %v119
    %v166 = vpop.permute.xlu0 %165
    %167 = vset.pattern.permute.xlu0 0
    %168 = vperm.xlu0 %167, %v120
    %v169 = vpop.permute.xlu0 %168
    %170 = vset.pattern.permute.xlu0 0
    %171 = vperm.xlu0 %170, %v121
    %v172 = vpop.permute.xlu0 %171
    %173 = vset.pattern.permute.xlu0 0
    %174 = vperm.xlu0 %173, %v122
    %v175 = vpop.permute.xlu0 %174
    %176 = vset.pattern.permute.xlu0 0
    %177 = vperm.xlu0 %176, %v123
    %v178 = vpop.permute.xlu0 %177
    %179 = vset.pattern.permute.xlu0 0
    %180 = vperm.xlu0 %179, %v124
    %v181 = vpop.permute.xlu0 %180
    %182 = vset.pattern.permute.xlu0 0
    %183 = vperm.xlu0 %182, %v125
    %v184 = vpop.permute.xlu0 %183
    %185 = vset.pattern.permute.xlu0 0
    %186 = vperm.xlu0 %185, %v126
    %v187 = vpop.permute.xlu0 %186
    %188 = vset.pattern.permute.xlu0 0
    %189 = vperm.xlu0 %188, %v127
    %v190 = vpop.permute.xlu0 %189
    %191 = vset.pattern.permute.xlu0 0
    %192 = vperm.xlu0 %191, %v128
    %v193 = vpop.permute.xlu0 %192
    %194 = vset.pattern.permute.xlu0 0
    %195 = vperm.xlu0 %194, %v129
    %v196 = vpop.permute.xlu0 %195
    %197 = vset.pattern.permute.xlu0 0
    %198 = vperm.xlu0 %197, %v130
    %v199 = vpop.permute.xlu0 %198
    %200 = vset.pattern.permute.xlu0 0
    %201 = vperm.xlu0 %200, %v131
    %v202 = vpop.permute.xlu0 %201
    %203 = vset.pattern.permute.xlu0 0
    %204 = vperm.xlu0 %203, %v132
    %v205 = vpop.permute.xlu0 %204
    %206 = vset.pattern.permute.xlu0 0
    %207 = vperm.xlu0 %206, %v133
    %v208 = vpop.permute.xlu0 %207
    %209 = vset.pattern.permute.xlu0 0
    %210 = vperm.xlu0 %209, %v134
    %v211 = vpop.permute.xlu0 %210
    %212 = vset.pattern.permute.xlu0 0
    %213 = vperm.xlu0 %212, %v135
    %v214 = vpop.permute.xlu0 %213
    %215 = vset.pattern.permute.xlu0 0
    %216 = vperm.xlu0 %215, %v136
    %v217 = vpop.permute.xlu0 %216
    %218 = vset.pattern.permute.xlu0 0
    %219 = vperm.xlu0 %218, %v137
    %v220 = vpop.permute.xlu0 %219
    %221 = vset.pattern.permute.xlu0 0
    %222 = vperm.xlu0 %221, %v138
    %v223 = vpop.permute.xlu0 %222
    %224 = vset.pattern.permute.xlu0 0
    %225 = vperm.xlu0 %224, %v139
    %v226 = vpop.permute.xlu0 %225
    %227 = vset.pattern.permute.xlu0 0
    %228 = vperm.xlu0 %227, %v140
    %v229 = vpop.permute.xlu0 %228
    %230 = vset.pattern.permute.xlu0 0
    %231 = vperm.xlu0 %230, %v141
    %v232 = vpop.permute.xlu0 %231
    %233 = vset.pattern.permute.xlu0 0
    %234 = vperm.xlu0 %233, %v142
    %v235 = vpop.permute.xlu0 %234
    %236 = vset.pattern.permute.xlu0 0
    %237 = vperm.xlu0 %236, %v143
    %v238 = vpop.permute.xlu0 %237
    %239 = vset.pattern.permute.xlu0 0
    %240 = vperm.xlu0 %239, %v144
    %v241 = vpop.permute.xlu0 %240
    %242 = vset.pattern.permute.xlu0 0
    %243 = vperm.xlu0 %242, %v145
    %v244 = vpop.permute.xlu0 %243
    %245 = vset.pattern.permute.xlu0 0
    %246 = vperm.xlu0 %245, %v146
    %v247 = vpop.permute.xlu0 %246
    %vm248 = vcmp.eq.s32.totalorder %v154, %v151
    %vm249 = vcmp.eq.s32.totalorder %v157, %v151
    %vm250 = vcmp.eq.s32.totalorder %v160, %v151
    %vm251 = vcmp.eq.s32.totalorder %v163, %v151
    %vm252 = vcmp.eq.s32.totalorder %v166, %v151
    %vm253 = vcmp.eq.s32.totalorder %v169, %v151
    %vm254 = vcmp.eq.s32.totalorder %v172, %v151
    %vm255 = vcmp.eq.s32.totalorder %v175, %v151
    %vm256 = vcmp.eq.s32.totalorder %v178, %v151
    %vm257 = vcmp.eq.s32.totalorder %v181, %v151
    %vm258 = vcmp.eq.s32.totalorder %v184, %v151
    %vm259 = vcmp.eq.s32.totalorder %v187, %v151
    %vm260 = vcmp.eq.s32.totalorder %v190, %v151
    %vm261 = vcmp.eq.s32.totalorder %v193, %v151
    %vm262 = vcmp.eq.s32.totalorder %v196, %v151
    %vm263 = vcmp.eq.s32.totalorder %v199, %v151
    %vm264 = vcmp.eq.s32.totalorder %v202, %v151
    %vm265 = vcmp.eq.s32.totalorder %v205, %v151
    %vm266 = vcmp.eq.s32.totalorder %v208, %v151
    %vm267 = vcmp.eq.s32.totalorder %v211, %v151
    %vm268 = vcmp.eq.s32.totalorder %v214, %v151
    %vm269 = vcmp.eq.s32.totalorder %v217, %v151
    %vm270 = vcmp.eq.s32.totalorder %v220, %v151
    %vm271 = vcmp.eq.s32.totalorder %v223, %v151
    %vm272 = vcmp.eq.s32.totalorder %v226, %v151
    %vm273 = vcmp.eq.s32.totalorder %v229, %v151
    %vm274 = vcmp.eq.s32.totalorder %v232, %v151
    %vm275 = vcmp.eq.s32.totalorder %v235, %v151
    %vm276 = vcmp.eq.s32.totalorder %v238, %v151
    %vm277 = vcmp.eq.s32.totalorder %v241, %v151
    %vm278 = vcmp.eq.s32.totalorder %v244, %v151
    %vm279 = vcmp.eq.s32.totalorder %v247, %v151
    %v280 = vsel %vm248, 1, 0
    %v281 = vsel %vm249, 1, 0
    %v282 = vsel %vm250, 1, 0
    %v283 = vsel %vm251, 1, 0
    %v284 = vsel %vm252, 1, 0
    %v285 = vsel %vm253, 1, 0
    %v286 = vsel %vm254, 1, 0
    %v287 = vsel %vm255, 1, 0
    %v288 = vsel %vm256, 1, 0
    %v289 = vsel %vm257, 1, 0
    %v290 = vsel %vm258, 1, 0
    %v291 = vsel %vm259, 1, 0
    %v292 = vsel %vm260, 1, 0
    %v293 = vsel %vm261, 1, 0
    %v294 = vsel %vm262, 1, 0
    %v295 = vsel %vm263, 1, 0
    %v296 = vsel %vm264, 1, 0
    %v297 = vsel %vm265, 1, 0
    %v298 = vsel %vm266, 1, 0
    %v299 = vsel %vm267, 1, 0
    %v300 = vsel %vm268, 1, 0
    %v301 = vsel %vm269, 1, 0
    %v302 = vsel %vm270, 1, 0
    %v303 = vsel %vm271, 1, 0
    %v304 = vsel %vm272, 1, 0
    %v305 = vsel %vm273, 1, 0
    %v306 = vsel %vm274, 1, 0
    %v307 = vsel %vm275, 1, 0
    %v308 = vsel %vm276, 1, 0
    %v309 = vsel %vm277, 1, 0
    %v310 = vsel %vm278, 1, 0
    %v311 = vsel %vm279, 1, 0
    %v312 = vcvt.s32.f32 %v280
    %v313 = vcvt.s32.f32 %v281
    %v314 = vcvt.s32.f32 %v282
    %v315 = vcvt.s32.f32 %v283
    %v316 = vcvt.s32.f32 %v284
    %v317 = vcvt.s32.f32 %v285
    %v318 = vcvt.s32.f32 %v286
    %v319 = vcvt.s32.f32 %v287
    %v320 = vcvt.s32.f32 %v288
    %v321 = vcvt.s32.f32 %v289
    %v322 = vcvt.s32.f32 %v290
    %v323 = vcvt.s32.f32 %v291
    %v324 = vcvt.s32.f32 %v292
    %v325 = vcvt.s32.f32 %v293
    %v326 = vcvt.s32.f32 %v294
    %v327 = vcvt.s32.f32 %v295
    %v328 = vcvt.s32.f32 %v296
    %v329 = vcvt.s32.f32 %v297
    %v330 = vcvt.s32.f32 %v298
    %v331 = vcvt.s32.f32 %v299
    %v332 = vcvt.s32.f32 %v300
    %v333 = vcvt.s32.f32 %v301
    %v334 = vcvt.s32.f32 %v302
    %v335 = vcvt.s32.f32 %v303
    %v336 = vcvt.s32.f32 %v304
    %v337 = vcvt.s32.f32 %v305
    %v338 = vcvt.s32.f32 %v306
    %v339 = vcvt.s32.f32 %v307
    %v340 = vcvt.s32.f32 %v308
    %v341 = vcvt.s32.f32 %v309
    %v342 = vcvt.s32.f32 %v310
    %v343 = vcvt.s32.f32 %v311
    %v344 = vadd.f32 %v312, 0.0
    %v345 = vadd.f32 %v313, 0.0
    %v346 = vadd.f32 %v314, 0.0
    %v347 = vadd.f32 %v315, 0.0
    %v348 = vadd.f32 %v316, 0.0
    %v349 = vadd.f32 %v317, 0.0
    %v350 = vadd.f32 %v318, 0.0
    %v351 = vadd.f32 %v319, 0.0
    %v352 = vadd.f32 %v320, 0.0
    %v353 = vadd.f32 %v321, 0.0
    %v354 = vadd.f32 %v322, 0.0
    %v355 = vadd.f32 %v323, 0.0
    %v356 = vadd.f32 %v324, 0.0
    %v357 = vadd.f32 %v325, 0.0
    %v358 = vadd.f32 %v326, 0.0
    %v359 = vadd.f32 %v327, 0.0
    %v360 = vadd.f32 %v328, 0.0
    %v361 = vadd.f32 %v329, 0.0
    %v362 = vadd.f32 %v330, 0.0
    %v363 = vadd.f32 %v331, 0.0
    %v364 = vadd.f32 %v332, 0.0
    %v365 = vadd.f32 %v333, 0.0
    %v366 = vadd.f32 %v334, 0.0
    %v367 = vadd.f32 %v335, 0.0
    %v368 = vadd.f32 %v336, 0.0
    %v369 = vadd.f32 %v337, 0.0
    %v370 = vadd.f32 %v338, 0.0
    %v371 = vadd.f32 %v339, 0.0
    %v372 = vadd.f32 %v340, 0.0
    %v373 = vadd.f32 %v341, 0.0
    %v374 = vadd.f32 %v342, 0.0
    %v375 = vadd.f32 %v343, 0.0
    %376 = vset.pattern.permute.xlu0 1
    %377 = vperm.xlu0 %376, %v115
    %v378 = vpop.permute.xlu0 %377
    %379 = vset.pattern.permute.xlu0 1
    %380 = vperm.xlu0 %379, %v116
    %v381 = vpop.permute.xlu0 %380
    %382 = vset.pattern.permute.xlu0 1
    %383 = vperm.xlu0 %382, %v117
    %v384 = vpop.permute.xlu0 %383
    %385 = vset.pattern.permute.xlu0 1
    %386 = vperm.xlu0 %385, %v118
    %v387 = vpop.permute.xlu0 %386
    %388 = vset.pattern.permute.xlu0 1
    %389 = vperm.xlu0 %388, %v119
    %v390 = vpop.permute.xlu0 %389
    %391 = vset.pattern.permute.xlu0 1
    %392 = vperm.xlu0 %391, %v120
    %v393 = vpop.permute.xlu0 %392
    %394 = vset.pattern.permute.xlu0 1
    %395 = vperm.xlu0 %394, %v121
    %v396 = vpop.permute.xlu0 %395
    %397 = vset.pattern.permute.xlu0 1
    %398 = vperm.xlu0 %397, %v122
    %v399 = vpop.permute.xlu0 %398
    %400 = vset.pattern.permute.xlu0 1
    %401 = vperm.xlu0 %400, %v123
    %v402 = vpop.permute.xlu0 %401
    %403 = vset.pattern.permute.xlu0 1
    %404 = vperm.xlu0 %403, %v124
    %v405 = vpop.permute.xlu0 %404
    %406 = vset.pattern.permute.xlu0 1
    %407 = vperm.xlu0 %406, %v125
    %v408 = vpop.permute.xlu0 %407
    %409 = vset.pattern.permute.xlu0 1
    %410 = vperm.xlu0 %409, %v126
    %v411 = vpop.permute.xlu0 %410
    %412 = vset.pattern.permute.xlu0 1
    %413 = vperm.xlu0 %412, %v127
    %v414 = vpop.permute.xlu0 %413
    %415 = vset.pattern.permute.xlu0 1
    %416 = vperm.xlu0 %415, %v128
    %v417 = vpop.permute.xlu0 %416
    %418 = vset.pattern.permute.xlu0 1
    %419 = vperm.xlu0 %418, %v129
    %v420 = vpop.permute.xlu0 %419
    %421 = vset.pattern.permute.xlu0 1
    %422 = vperm.xlu0 %421, %v130
    %v423 = vpop.permute.xlu0 %422
    %424 = vset.pattern.permute.xlu0 1
    %425 = vperm.xlu0 %424, %v131
    %v426 = vpop.permute.xlu0 %425
    %427 = vset.pattern.permute.xlu0 1
    %428 = vperm.xlu0 %427, %v132
    %v429 = vpop.permute.xlu0 %428
    %430 = vset.pattern.permute.xlu0 1
    %431 = vperm.xlu0 %430, %v133
    %v432 = vpop.permute.xlu0 %431
    %433 = vset.pattern.permute.xlu0 1
    %434 = vperm.xlu0 %433, %v134
    %v435 = vpop.permute.xlu0 %434
    %436 = vset.pattern.permute.xlu0 1
    %437 = vperm.xlu0 %436, %v135
    %v438 = vpop.permute.xlu0 %437
    %439 = vset.pattern.permute.xlu0 1
    %440 = vperm.xlu0 %439, %v136
    %v441 = vpop.permute.xlu0 %440
    %442 = vset.pattern.permute.xlu0 1
    %443 = vperm.xlu0 %442, %v137
    %v444 = vpop.permute.xlu0 %443
    %445 = vset.pattern.permute.xlu0 1
    %446 = vperm.xlu0 %445, %v138
    %v447 = vpop.permute.xlu0 %446
    %448 = vset.pattern.permute.xlu0 1
    %449 = vperm.xlu0 %448, %v139
    %v450 = vpop.permute.xlu0 %449
    %451 = vset.pattern.permute.xlu0 1
    %452 = vperm.xlu0 %451, %v140
    %v453 = vpop.permute.xlu0 %452
    %454 = vset.pattern.permute.xlu0 1
    %455 = vperm.xlu0 %454, %v141
    %v456 = vpop.permute.xlu0 %455
    %457 = vset.pattern.permute.xlu0 1
    %458 = vperm.xlu0 %457, %v142
    %v459 = vpop.permute.xlu0 %458
    %460 = vset.pattern.permute.xlu0 1
    %461 = vperm.xlu0 %460, %v143
    %v462 = vpop.permute.xlu0 %461
    %463 = vset.pattern.permute.xlu0 1
    %464 = vperm.xlu0 %463, %v144
    %v465 = vpop.permute.xlu0 %464
    %466 = vset.pattern.permute.xlu0 1
    %467 = vperm.xlu0 %466, %v145
    %v468 = vpop.permute.xlu0 %467
    %469 = vset.pattern.permute.xlu0 1
    %470 = vperm.xlu0 %469, %v146
    %v471 = vpop.permute.xlu0 %470
    %vm472 = vcmp.eq.s32.totalorder %v378, %v151
    %vm473 = vcmp.eq.s32.totalorder %v381, %v151
    %vm474 = vcmp.eq.s32.totalorder %v384, %v151
    %vm475 = vcmp.eq.s32.totalorder %v387, %v151
    %vm476 = vcmp.eq.s32.totalorder %v390, %v151
    %vm477 = vcmp.eq.s32.totalorder %v393, %v151
    %vm478 = vcmp.eq.s32.totalorder %v396, %v151
    %vm479 = vcmp.eq.s32.totalorder %v399, %v151
    %vm480 = vcmp.eq.s32.totalorder %v402, %v151
    %vm481 = vcmp.eq.s32.totalorder %v405, %v151
    %vm482 = vcmp.eq.s32.totalorder %v408, %v151
    %vm483 = vcmp.eq.s32.totalorder %v411, %v151
    %vm484 = vcmp.eq.s32.totalorder %v414, %v151
    %vm485 = vcmp.eq.s32.totalorder %v417, %v151
    %vm486 = vcmp.eq.s32.totalorder %v420, %v151
    %vm487 = vcmp.eq.s32.totalorder %v423, %v151
    %vm488 = vcmp.eq.s32.totalorder %v426, %v151
    %vm489 = vcmp.eq.s32.totalorder %v429, %v151
    %vm490 = vcmp.eq.s32.totalorder %v432, %v151
    %vm491 = vcmp.eq.s32.totalorder %v435, %v151
    %vm492 = vcmp.eq.s32.totalorder %v438, %v151
    %vm493 = vcmp.eq.s32.totalorder %v441, %v151
    %vm494 = vcmp.eq.s32.totalorder %v444, %v151
    %vm495 = vcmp.eq.s32.totalorder %v447, %v151
    %vm496 = vcmp.eq.s32.totalorder %v450, %v151
    %vm497 = vcmp.eq.s32.totalorder %v453, %v151
    %vm498 = vcmp.eq.s32.totalorder %v456, %v151
    %vm499 = vcmp.eq.s32.totalorder %v459, %v151
    %vm500 = vcmp.eq.s32.totalorder %v462, %v151
    %vm501 = vcmp.eq.s32.totalorder %v465, %v151
    %vm502 = vcmp.eq.s32.totalorder %v468, %v151
    %vm503 = vcmp.eq.s32.totalorder %v471, %v151
    %v504 = vsel %vm472, 1, 0
    %v505 = vsel %vm473, 1, 0
    %v506 = vsel %vm474, 1, 0
    %v507 = vsel %vm475, 1, 0
    %v508 = vsel %vm476, 1, 0
    %v509 = vsel %vm477, 1, 0
    %v510 = vsel %vm478, 1, 0
    %v511 = vsel %vm479, 1, 0
    %v512 = vsel %vm480, 1, 0
    %v513 = vsel %vm481, 1, 0
    %v514 = vsel %vm482, 1, 0
    %v515 = vsel %vm483, 1, 0
    %v516 = vsel %vm484, 1, 0
    %v517 = vsel %vm485, 1, 0
    %v518 = vsel %vm486, 1, 0
    %v519 = vsel %vm487, 1, 0
    %v520 = vsel %vm488, 1, 0
    %v521 = vsel %vm489, 1, 0
    %v522 = vsel %vm490, 1, 0
    %v523 = vsel %vm491, 1, 0
    %v524 = vsel %vm492, 1, 0
    %v525 = vsel %vm493, 1, 0
    %v526 = vsel %vm494, 1, 0
    %v527 = vsel %vm495, 1, 0
    %v528 = vsel %vm496, 1, 0
    %v529 = vsel %vm497, 1, 0
    %v530 = vsel %vm498, 1, 0
    %v531 = vsel %vm499, 1, 0
    %v532 = vsel %vm500, 1, 0
    %v533 = vsel %vm501, 1, 0
    %v534 = vsel %vm502, 1, 0
    %v535 = vsel %vm503, 1, 0
    %v536 = vcvt.s32.f32 %v504
    %v537 = vcvt.s32.f32 %v505
    %v538 = vcvt.s32.f32 %v506
    %v539 = vcvt.s32.f32 %v507
    %v540 = vcvt.s32.f32 %v508
    %v541 = vcvt.s32.f32 %v509
    %v542 = vcvt.s32.f32 %v510
    %v543 = vcvt.s32.f32 %v511
    %v544 = vcvt.s32.f32 %v512
    %v545 = vcvt.s32.f32 %v513
    %v546 = vcvt.s32.f32 %v514
    %v547 = vcvt.s32.f32 %v515
    %v548 = vcvt.s32.f32 %v516
    %v549 = vcvt.s32.f32 %v517
    %v550 = vcvt.s32.f32 %v518
    %v551 = vcvt.s32.f32 %v519
    %v552 = vcvt.s32.f32 %v520
    %v553 = vcvt.s32.f32 %v521
    %v554 = vcvt.s32.f32 %v522
    %v555 = vcvt.s32.f32 %v523
    %v556 = vcvt.s32.f32 %v524
    %v557 = vcvt.s32.f32 %v525
    %v558 = vcvt.s32.f32 %v526
    %v559 = vcvt.s32.f32 %v527
    %v560 = vcvt.s32.f32 %v528
    %v561 = vcvt.s32.f32 %v529
    %v562 = vcvt.s32.f32 %v530
    %v563 = vcvt.s32.f32 %v531
    %v564 = vcvt.s32.f32 %v532
    %v565 = vcvt.s32.f32 %v533
    %v566 = vcvt.s32.f32 %v534
    %v567 = vcvt.s32.f32 %v535
    %v568 = vadd.f32 %v344, %v536
    %v569 = vadd.f32 %v345, %v537
    %v570 = vadd.f32 %v346, %v538
    %v571 = vadd.f32 %v347, %v539
    %v572 = vadd.f32 %v348, %v540
    %v573 = vadd.f32 %v349, %v541
    %v574 = vadd.f32 %v350, %v542
    %v575 = vadd.f32 %v351, %v543
    %v576 = vadd.f32 %v352, %v544
    %v577 = vadd.f32 %v353, %v545
    %v578 = vadd.f32 %v354, %v546
    %v579 = vadd.f32 %v355, %v547
    %v580 = vadd.f32 %v356, %v548
    %v581 = vadd.f32 %v357, %v549
    %v582 = vadd.f32 %v358, %v550
    %v583 = vadd.f32 %v359, %v551
    %v584 = vadd.f32 %v360, %v552
    %v585 = vadd.f32 %v361, %v553
    %v586 = vadd.f32 %v362, %v554
    %v587 = vadd.f32 %v363, %v555
    %v588 = vadd.f32 %v364, %v556
    %v589 = vadd.f32 %v365, %v557
    %v590 = vadd.f32 %v366, %v558
    %v591 = vadd.f32 %v367, %v559
    %v592 = vadd.f32 %v368, %v560
    %v593 = vadd.f32 %v369, %v561
    %v594 = vadd.f32 %v370, %v562
    %v595 = vadd.f32 %v371, %v563
    %v596 = vadd.f32 %v372, %v564
    %v597 = vadd.f32 %v373, %v565
    %v598 = vadd.f32 %v374, %v566
    %v599 = vadd.f32 %v375, %v567
    %600 = vset.pattern.permute.xlu0 2
    %601 = vperm.xlu0 %600, %v115
    %v602 = vpop.permute.xlu0 %601
    %603 = vset.pattern.permute.xlu0 2
    %604 = vperm.xlu0 %603, %v116
    %v605 = vpop.permute.xlu0 %604
    %606 = vset.pattern.permute.xlu0 2
    %607 = vperm.xlu0 %606, %v117
    %v608 = vpop.permute.xlu0 %607
    %609 = vset.pattern.permute.xlu0 2
    %610 = vperm.xlu0 %609, %v118
    %v611 = vpop.permute.xlu0 %610
    %612 = vset.pattern.permute.xlu0 2
    %613 = vperm.xlu0 %612, %v119
    %v614 = vpop.permute.xlu0 %613
    %615 = vset.pattern.permute.xlu0 2
    %616 = vperm.xlu0 %615, %v120
    %v617 = vpop.permute.xlu0 %616
    %618 = vset.pattern.permute.xlu0 2
    %619 = vperm.xlu0 %618, %v121
    %v620 = vpop.permute.xlu0 %619
    %621 = vset.pattern.permute.xlu0 2
    %622 = vperm.xlu0 %621, %v122
    %v623 = vpop.permute.xlu0 %622
    %624 = vset.pattern.permute.xlu0 2
    %625 = vperm.xlu0 %624, %v123
    %v626 = vpop.permute.xlu0 %625
    %627 = vset.pattern.permute.xlu0 2
    %628 = vperm.xlu0 %627, %v124
    %v629 = vpop.permute.xlu0 %628
    %630 = vset.pattern.permute.xlu0 2
    %631 = vperm.xlu0 %630, %v125
    %v632 = vpop.permute.xlu0 %631
    %633 = vset.pattern.permute.xlu0 2
    %634 = vperm.xlu0 %633, %v126
    %v635 = vpop.permute.xlu0 %634
    %636 = vset.pattern.permute.xlu0 2
    %637 = vperm.xlu0 %636, %v127
    %v638 = vpop.permute.xlu0 %637
    %639 = vset.pattern.permute.xlu0 2
    %640 = vperm.xlu0 %639, %v128
    %v641 = vpop.permute.xlu0 %640
    %642 = vset.pattern.permute.xlu0 2
    %643 = vperm.xlu0 %642, %v129
    %v644 = vpop.permute.xlu0 %643
    %645 = vset.pattern.permute.xlu0 2
    %646 = vperm.xlu0 %645, %v130
    %v647 = vpop.permute.xlu0 %646
    %648 = vset.pattern.permute.xlu0 2
    %649 = vperm.xlu0 %648, %v131
    %v650 = vpop.permute.xlu0 %649
    %651 = vset.pattern.permute.xlu0 2
    %652 = vperm.xlu0 %651, %v132
    %v653 = vpop.permute.xlu0 %652
    %654 = vset.pattern.permute.xlu0 2
    %655 = vperm.xlu0 %654, %v133
    %v656 = vpop.permute.xlu0 %655
    %657 = vset.pattern.permute.xlu0 2
    %658 = vperm.xlu0 %657, %v134
    %v659 = vpop.permute.xlu0 %658
    %660 = vset.pattern.permute.xlu0 2
    %661 = vperm.xlu0 %660, %v135
    %v662 = vpop.permute.xlu0 %661
    %663 = vset.pattern.permute.xlu0 2
    %664 = vperm.xlu0 %663, %v136
    %v665 = vpop.permute.xlu0 %664
    %666 = vset.pattern.permute.xlu0 2
    %667 = vperm.xlu0 %666, %v137
    %v668 = vpop.permute.xlu0 %667
    %669 = vset.pattern.permute.xlu0 2
    %670 = vperm.xlu0 %669, %v138
    %v671 = vpop.permute.xlu0 %670
    %672 = vset.pattern.permute.xlu0 2
    %673 = vperm.xlu0 %672, %v139
    %v674 = vpop.permute.xlu0 %673
    %675 = vset.pattern.permute.xlu0 2
    %676 = vperm.xlu0 %675, %v140
    %v677 = vpop.permute.xlu0 %676
    %678 = vset.pattern.permute.xlu0 2
    %679 = vperm.xlu0 %678, %v141
    %v680 = vpop.permute.xlu0 %679
    %681 = vset.pattern.permute.xlu0 2
    %682 = vperm.xlu0 %681, %v142
    %v683 = vpop.permute.xlu0 %682
    %684 = vset.pattern.permute.xlu0 2
    %685 = vperm.xlu0 %684, %v143
    %v686 = vpop.permute.xlu0 %685
    %687 = vset.pattern.permute.xlu0 2
    %688 = vperm.xlu0 %687, %v144
    %v689 = vpop.permute.xlu0 %688
    %690 = vset.pattern.permute.xlu0 2
    %691 = vperm.xlu0 %690, %v145
    %v692 = vpop.permute.xlu0 %691
    %693 = vset.pattern.permute.xlu0 2
    %694 = vperm.xlu0 %693, %v146
    %v695 = vpop.permute.xlu0 %694
    %vm696 = vcmp.eq.s32.totalorder %v602, %v151
    %vm697 = vcmp.eq.s32.totalorder %v605, %v151
    %vm698 = vcmp.eq.s32.totalorder %v608, %v151
    %vm699 = vcmp.eq.s32.totalorder %v611, %v151
    %vm700 = vcmp.eq.s32.totalorder %v614, %v151
    %vm701 = vcmp.eq.s32.totalorder %v617, %v151
    %vm702 = vcmp.eq.s32.totalorder %v620, %v151
    %vm703 = vcmp.eq.s32.totalorder %v623, %v151
    %vm704 = vcmp.eq.s32.totalorder %v626, %v151
    %vm705 = vcmp.eq.s32.totalorder %v629, %v151
    %vm706 = vcmp.eq.s32.totalorder %v632, %v151
    %vm707 = vcmp.eq.s32.totalorder %v635, %v151
    %vm708 = vcmp.eq.s32.totalorder %v638, %v151
    %vm709 = vcmp.eq.s32.totalorder %v641, %v151
    %vm710 = vcmp.eq.s32.totalorder %v644, %v151
    %vm711 = vcmp.eq.s32.totalorder %v647, %v151
    %vm712 = vcmp.eq.s32.totalorder %v650, %v151
    %vm713 = vcmp.eq.s32.totalorder %v653, %v151
    %vm714 = vcmp.eq.s32.totalorder %v656, %v151
    %vm715 = vcmp.eq.s32.totalorder %v659, %v151
    %vm716 = vcmp.eq.s32.totalorder %v662, %v151
    %vm717 = vcmp.eq.s32.totalorder %v665, %v151
    %vm718 = vcmp.eq.s32.totalorder %v668, %v151
    %vm719 = vcmp.eq.s32.totalorder %v671, %v151
    %vm720 = vcmp.eq.s32.totalorder %v674, %v151
    %vm721 = vcmp.eq.s32.totalorder %v677, %v151
    %vm722 = vcmp.eq.s32.totalorder %v680, %v151
    %vm723 = vcmp.eq.s32.totalorder %v683, %v151
    %vm724 = vcmp.eq.s32.totalorder %v686, %v151
    %vm725 = vcmp.eq.s32.totalorder %v689, %v151
    %vm726 = vcmp.eq.s32.totalorder %v692, %v151
    %vm727 = vcmp.eq.s32.totalorder %v695, %v151
    %v728 = vsel %vm696, 1, 0
    %v729 = vsel %vm697, 1, 0
    %v730 = vsel %vm698, 1, 0
    %v731 = vsel %vm699, 1, 0
    %v732 = vsel %vm700, 1, 0
    %v733 = vsel %vm701, 1, 0
    %v734 = vsel %vm702, 1, 0
    %v735 = vsel %vm703, 1, 0
    %v736 = vsel %vm704, 1, 0
    %v737 = vsel %vm705, 1, 0
    %v738 = vsel %vm706, 1, 0
    %v739 = vsel %vm707, 1, 0
    %v740 = vsel %vm708, 1, 0
    %v741 = vsel %vm709, 1, 0
    %v742 = vsel %vm710, 1, 0
    %v743 = vsel %vm711, 1, 0
    %v744 = vsel %vm712, 1, 0
    %v745 = vsel %vm713, 1, 0
    %v746 = vsel %vm714, 1, 0
    %v747 = vsel %vm715, 1, 0
    %v748 = vsel %vm716, 1, 0
    %v749 = vsel %vm717, 1, 0
    %v750 = vsel %vm718, 1, 0
    %v751 = vsel %vm719, 1, 0
    %v752 = vsel %vm720, 1, 0
    %v753 = vsel %vm721, 1, 0
    %v754 = vsel %vm722, 1, 0
    %v755 = vsel %vm723, 1, 0
    %v756 = vsel %vm724, 1, 0
    %v757 = vsel %vm725, 1, 0
    %v758 = vsel %vm726, 1, 0
    %v759 = vsel %vm727, 1, 0
    %v760 = vcvt.s32.f32 %v728
    %v761 = vcvt.s32.f32 %v729
    %v762 = vcvt.s32.f32 %v730
    %v763 = vcvt.s32.f32 %v731
    %v764 = vcvt.s32.f32 %v732
    %v765 = vcvt.s32.f32 %v733
    %v766 = vcvt.s32.f32 %v734
    %v767 = vcvt.s32.f32 %v735
    %v768 = vcvt.s32.f32 %v736
    %v769 = vcvt.s32.f32 %v737
    %v770 = vcvt.s32.f32 %v738
    %v771 = vcvt.s32.f32 %v739
    %v772 = vcvt.s32.f32 %v740
    %v773 = vcvt.s32.f32 %v741
    %v774 = vcvt.s32.f32 %v742
    %v775 = vcvt.s32.f32 %v743
    %v776 = vcvt.s32.f32 %v744
    %v777 = vcvt.s32.f32 %v745
    %v778 = vcvt.s32.f32 %v746
    %v779 = vcvt.s32.f32 %v747
    %v780 = vcvt.s32.f32 %v748
    %v781 = vcvt.s32.f32 %v749
    %v782 = vcvt.s32.f32 %v750
    %v783 = vcvt.s32.f32 %v751
    %v784 = vcvt.s32.f32 %v752
    %v785 = vcvt.s32.f32 %v753
    %v786 = vcvt.s32.f32 %v754
    %v787 = vcvt.s32.f32 %v755
    %v788 = vcvt.s32.f32 %v756
    %v789 = vcvt.s32.f32 %v757
    %v790 = vcvt.s32.f32 %v758
    %v791 = vcvt.s32.f32 %v759
    %v792 = vadd.f32 %v568, %v760
    %v793 = vadd.f32 %v569, %v761
    %v794 = vadd.f32 %v570, %v762
    %v795 = vadd.f32 %v571, %v763
    %v796 = vadd.f32 %v572, %v764
    %v797 = vadd.f32 %v573, %v765
    %v798 = vadd.f32 %v574, %v766
    %v799 = vadd.f32 %v575, %v767
    %v800 = vadd.f32 %v576, %v768
    %v801 = vadd.f32 %v577, %v769
    %v802 = vadd.f32 %v578, %v770
    %v803 = vadd.f32 %v579, %v771
    %v804 = vadd.f32 %v580, %v772
    %v805 = vadd.f32 %v581, %v773
    %v806 = vadd.f32 %v582, %v774
    %v807 = vadd.f32 %v583, %v775
    %v808 = vadd.f32 %v584, %v776
    %v809 = vadd.f32 %v585, %v777
    %v810 = vadd.f32 %v586, %v778
    %v811 = vadd.f32 %v587, %v779
    %v812 = vadd.f32 %v588, %v780
    %v813 = vadd.f32 %v589, %v781
    %v814 = vadd.f32 %v590, %v782
    %v815 = vadd.f32 %v591, %v783
    %v816 = vadd.f32 %v592, %v784
    %v817 = vadd.f32 %v593, %v785
    %v818 = vadd.f32 %v594, %v786
    %v819 = vadd.f32 %v595, %v787
    %v820 = vadd.f32 %v596, %v788
    %v821 = vadd.f32 %v597, %v789
    %v822 = vadd.f32 %v598, %v790
    %v823 = vadd.f32 %v599, %v791
    %824 = vset.pattern.permute.xlu0 3
    %825 = vperm.xlu0 %824, %v115
    %v826 = vpop.permute.xlu0 %825
    %827 = vset.pattern.permute.xlu0 3
    %828 = vperm.xlu0 %827, %v116
    %v829 = vpop.permute.xlu0 %828
    %830 = vset.pattern.permute.xlu0 3
    %831 = vperm.xlu0 %830, %v117
    %v832 = vpop.permute.xlu0 %831
    %833 = vset.pattern.permute.xlu0 3
    %834 = vperm.xlu0 %833, %v118
    %v835 = vpop.permute.xlu0 %834
    %836 = vset.pattern.permute.xlu0 3
    %837 = vperm.xlu0 %836, %v119
    %v838 = vpop.permute.xlu0 %837
    %839 = vset.pattern.permute.xlu0 3
    %840 = vperm.xlu0 %839, %v120
    %v841 = vpop.permute.xlu0 %840
    %842 = vset.pattern.permute.xlu0 3
    %843 = vperm.xlu0 %842, %v121
    %v844 = vpop.permute.xlu0 %843
    %845 = vset.pattern.permute.xlu0 3
    %846 = vperm.xlu0 %845, %v122
    %v847 = vpop.permute.xlu0 %846
    %848 = vset.pattern.permute.xlu0 3
    %849 = vperm.xlu0 %848, %v123
    %v850 = vpop.permute.xlu0 %849
    %851 = vset.pattern.permute.xlu0 3
    %852 = vperm.xlu0 %851, %v124
    %v853 = vpop.permute.xlu0 %852
    %854 = vset.pattern.permute.xlu0 3
    %855 = vperm.xlu0 %854, %v125
    %v856 = vpop.permute.xlu0 %855
    %857 = vset.pattern.permute.xlu0 3
    %858 = vperm.xlu0 %857, %v126
    %v859 = vpop.permute.xlu0 %858
    %860 = vset.pattern.permute.xlu0 3
    %861 = vperm.xlu0 %860, %v127
    %v862 = vpop.permute.xlu0 %861
    %863 = vset.pattern.permute.xlu0 3
    %864 = vperm.xlu0 %863, %v128
    %v865 = vpop.permute.xlu0 %864
    %866 = vset.pattern.permute.xlu0 3
    %867 = vperm.xlu0 %866, %v129
    %v868 = vpop.permute.xlu0 %867
    %869 = vset.pattern.permute.xlu0 3
    %870 = vperm.xlu0 %869, %v130
    %v871 = vpop.permute.xlu0 %870
    %872 = vset.pattern.permute.xlu0 3
    %873 = vperm.xlu0 %872, %v131
    %v874 = vpop.permute.xlu0 %873
    %875 = vset.pattern.permute.xlu0 3
    %876 = vperm.xlu0 %875, %v132
    %v877 = vpop.permute.xlu0 %876
    %878 = vset.pattern.permute.xlu0 3
    %879 = vperm.xlu0 %878, %v133
    %v880 = vpop.permute.xlu0 %879
    %881 = vset.pattern.permute.xlu0 3
    %882 = vperm.xlu0 %881, %v134
    %v883 = vpop.permute.xlu0 %882
    %884 = vset.pattern.permute.xlu0 3
    %885 = vperm.xlu0 %884, %v135
    %v886 = vpop.permute.xlu0 %885
    %887 = vset.pattern.permute.xlu0 3
    %888 = vperm.xlu0 %887, %v136
    %v889 = vpop.permute.xlu0 %888
    %890 = vset.pattern.permute.xlu0 3
    %891 = vperm.xlu0 %890, %v137
    %v892 = vpop.permute.xlu0 %891
    %893 = vset.pattern.permute.xlu0 3
    %894 = vperm.xlu0 %893, %v138
    %v895 = vpop.permute.xlu0 %894
    %896 = vset.pattern.permute.xlu0 3
    %897 = vperm.xlu0 %896, %v139
    %v898 = vpop.permute.xlu0 %897
    %899 = vset.pattern.permute.xlu0 3
    %900 = vperm.xlu0 %899, %v140
    %v901 = vpop.permute.xlu0 %900
    %902 = vset.pattern.permute.xlu0 3
    %903 = vperm.xlu0 %902, %v141
    %v904 = vpop.permute.xlu0 %903
    %905 = vset.pattern.permute.xlu0 3
    %906 = vperm.xlu0 %905, %v142
    %v907 = vpop.permute.xlu0 %906
    %908 = vset.pattern.permute.xlu0 3
    %909 = vperm.xlu0 %908, %v143
    %v910 = vpop.permute.xlu0 %909
    %911 = vset.pattern.permute.xlu0 3
    %912 = vperm.xlu0 %911, %v144
    %v913 = vpop.permute.xlu0 %912
    %914 = vset.pattern.permute.xlu0 3
    %915 = vperm.xlu0 %914, %v145
    %v916 = vpop.permute.xlu0 %915
    %917 = vset.pattern.permute.xlu0 3
    %918 = vperm.xlu0 %917, %v146
    %v919 = vpop.permute.xlu0 %918
    %vm920 = vcmp.eq.s32.totalorder %v826, %v151
    %vm921 = vcmp.eq.s32.totalorder %v829, %v151
    %vm922 = vcmp.eq.s32.totalorder %v832, %v151
    %vm923 = vcmp.eq.s32.totalorder %v835, %v151
    %vm924 = vcmp.eq.s32.totalorder %v838, %v151
    %vm925 = vcmp.eq.s32.totalorder %v841, %v151
    %vm926 = vcmp.eq.s32.totalorder %v844, %v151
    %vm927 = vcmp.eq.s32.totalorder %v847, %v151
    %vm928 = vcmp.eq.s32.totalorder %v850, %v151
    %vm929 = vcmp.eq.s32.totalorder %v853, %v151
    %vm930 = vcmp.eq.s32.totalorder %v856, %v151
    %vm931 = vcmp.eq.s32.totalorder %v859, %v151
    %vm932 = vcmp.eq.s32.totalorder %v862, %v151
    %vm933 = vcmp.eq.s32.totalorder %v865, %v151
    %vm934 = vcmp.eq.s32.totalorder %v868, %v151
    %vm935 = vcmp.eq.s32.totalorder %v871, %v151
    %vm936 = vcmp.eq.s32.totalorder %v874, %v151
    %vm937 = vcmp.eq.s32.totalorder %v877, %v151
    %vm938 = vcmp.eq.s32.totalorder %v880, %v151
    %vm939 = vcmp.eq.s32.totalorder %v883, %v151
    %vm940 = vcmp.eq.s32.totalorder %v886, %v151
    %vm941 = vcmp.eq.s32.totalorder %v889, %v151
    %vm942 = vcmp.eq.s32.totalorder %v892, %v151
    %vm943 = vcmp.eq.s32.totalorder %v895, %v151
    %vm944 = vcmp.eq.s32.totalorder %v898, %v151
    %vm945 = vcmp.eq.s32.totalorder %v901, %v151
    %vm946 = vcmp.eq.s32.totalorder %v904, %v151
    %vm947 = vcmp.eq.s32.totalorder %v907, %v151
    %vm948 = vcmp.eq.s32.totalorder %v910, %v151
    %vm949 = vcmp.eq.s32.totalorder %v913, %v151
    %vm950 = vcmp.eq.s32.totalorder %v916, %v151
    %vm951 = vcmp.eq.s32.totalorder %v919, %v151
    %v952 = vsel %vm920, 1, 0
    %v953 = vsel %vm921, 1, 0
    %v954 = vsel %vm922, 1, 0
    %v955 = vsel %vm923, 1, 0
    %v956 = vsel %vm924, 1, 0
    %v957 = vsel %vm925, 1, 0
    %v958 = vsel %vm926, 1, 0
    %v959 = vsel %vm927, 1, 0
    %v960 = vsel %vm928, 1, 0
    %v961 = vsel %vm929, 1, 0
    %v962 = vsel %vm930, 1, 0
    %v963 = vsel %vm931, 1, 0
    %v964 = vsel %vm932, 1, 0
    %v965 = vsel %vm933, 1, 0
    %v966 = vsel %vm934, 1, 0
    %v967 = vsel %vm935, 1, 0
    %v968 = vsel %vm936, 1, 0
    %v969 = vsel %vm937, 1, 0
    %v970 = vsel %vm938, 1, 0
    %v971 = vsel %vm939, 1, 0
    %v972 = vsel %vm940, 1, 0
    %v973 = vsel %vm941, 1, 0
    %v974 = vsel %vm942, 1, 0
    %v975 = vsel %vm943, 1, 0
    %v976 = vsel %vm944, 1, 0
    %v977 = vsel %vm945, 1, 0
    %v978 = vsel %vm946, 1, 0
    %v979 = vsel %vm947, 1, 0
    %v980 = vsel %vm948, 1, 0
    %v981 = vsel %vm949, 1, 0
    %v982 = vsel %vm950, 1, 0
    %v983 = vsel %vm951, 1, 0
    %v984 = vcvt.s32.f32 %v952
    %v985 = vcvt.s32.f32 %v953
    %v986 = vcvt.s32.f32 %v954
    %v987 = vcvt.s32.f32 %v955
    %v988 = vcvt.s32.f32 %v956
    %v989 = vcvt.s32.f32 %v957
    %v990 = vcvt.s32.f32 %v958
    %v991 = vcvt.s32.f32 %v959
    %v992 = vcvt.s32.f32 %v960
    %v993 = vcvt.s32.f32 %v961
    %v994 = vcvt.s32.f32 %v962
    %v995 = vcvt.s32.f32 %v963
    %v996 = vcvt.s32.f32 %v964
    %v997 = vcvt.s32.f32 %v965
    %v998 = vcvt.s32.f32 %v966
    %v999 = vcvt.s32.f32 %v967
    %v1000 = vcvt.s32.f32 %v968
    %v1001 = vcvt.s32.f32 %v969
    %v1002 = vcvt.s32.f32 %v970
    %v1003 = vcvt.s32.f32 %v971
    %v1004 = vcvt.s32.f32 %v972
    %v1005 = vcvt.s32.f32 %v973
    %v1006 = vcvt.s32.f32 %v974
    %v1007 = vcvt.s32.f32 %v975
    %v1008 = vcvt.s32.f32 %v976
    %v1009 = vcvt.s32.f32 %v977
    %v1010 = vcvt.s32.f32 %v978
    %v1011 = vcvt.s32.f32 %v979
    %v1012 = vcvt.s32.f32 %v980
    %v1013 = vcvt.s32.f32 %v981
    %v1014 = vcvt.s32.f32 %v982
    %v1015 = vcvt.s32.f32 %v983
    %v1016 = vadd.f32 %v792, %v984
    %v1017 = vadd.f32 %v793, %v985
    %v1018 = vadd.f32 %v794, %v986
    %v1019 = vadd.f32 %v795, %v987
    %v1020 = vadd.f32 %v796, %v988
    %v1021 = vadd.f32 %v797, %v989
    %v1022 = vadd.f32 %v798, %v990
    %v1023 = vadd.f32 %v799, %v991
    %v1024 = vadd.f32 %v800, %v992
    %v1025 = vadd.f32 %v801, %v993
    %v1026 = vadd.f32 %v802, %v994
    %v1027 = vadd.f32 %v803, %v995
    %v1028 = vadd.f32 %v804, %v996
    %v1029 = vadd.f32 %v805, %v997
    %v1030 = vadd.f32 %v806, %v998
    %v1031 = vadd.f32 %v807, %v999
    %v1032 = vadd.f32 %v808, %v1000
    %v1033 = vadd.f32 %v809, %v1001
    %v1034 = vadd.f32 %v810, %v1002
    %v1035 = vadd.f32 %v811, %v1003
    %v1036 = vadd.f32 %v812, %v1004
    %v1037 = vadd.f32 %v813, %v1005
    %v1038 = vadd.f32 %v814, %v1006
    %v1039 = vadd.f32 %v815, %v1007
    %v1040 = vadd.f32 %v816, %v1008
    %v1041 = vadd.f32 %v817, %v1009
    %v1042 = vadd.f32 %v818, %v1010
    %v1043 = vadd.f32 %v819, %v1011
    %v1044 = vadd.f32 %v820, %v1012
    %v1045 = vadd.f32 %v821, %v1013
    %v1046 = vadd.f32 %v822, %v1014
    %v1047 = vadd.f32 %v823, %v1015
    %1048 = vset.pattern.permute.xlu0 4
    %1049 = vperm.xlu0 %1048, %v115
    %v1050 = vpop.permute.xlu0 %1049
    %1051 = vset.pattern.permute.xlu0 4
    %1052 = vperm.xlu0 %1051, %v116
    %v1053 = vpop.permute.xlu0 %1052
    %1054 = vset.pattern.permute.xlu0 4
    %1055 = vperm.xlu0 %1054, %v117
    %v1056 = vpop.permute.xlu0 %1055
    %1057 = vset.pattern.permute.xlu0 4
    %1058 = vperm.xlu0 %1057, %v118
    %v1059 = vpop.permute.xlu0 %1058
    %1060 = vset.pattern.permute.xlu0 4
    %1061 = vperm.xlu0 %1060, %v119
    %v1062 = vpop.permute.xlu0 %1061
    %1063 = vset.pattern.permute.xlu0 4
    %1064 = vperm.xlu0 %1063, %v120
    %v1065 = vpop.permute.xlu0 %1064
    %1066 = vset.pattern.permute.xlu0 4
    %1067 = vperm.xlu0 %1066, %v121
    %v1068 = vpop.permute.xlu0 %1067
    %1069 = vset.pattern.permute.xlu0 4
    %1070 = vperm.xlu0 %1069, %v122
    %v1071 = vpop.permute.xlu0 %1070
    %1072 = vset.pattern.permute.xlu0 4
    %1073 = vperm.xlu0 %1072, %v123
    %v1074 = vpop.permute.xlu0 %1073
    %1075 = vset.pattern.permute.xlu0 4
    %1076 = vperm.xlu0 %1075, %v124
    %v1077 = vpop.permute.xlu0 %1076
    %1078 = vset.pattern.permute.xlu0 4
    %1079 = vperm.xlu0 %1078, %v125
    %v1080 = vpop.permute.xlu0 %1079
    %1081 = vset.pattern.permute.xlu0 4
    %1082 = vperm.xlu0 %1081, %v126
    %v1083 = vpop.permute.xlu0 %1082
    %1084 = vset.pattern.permute.xlu0 4
    %1085 = vperm.xlu0 %1084, %v127
    %v1086 = vpop.permute.xlu0 %1085
    %1087 = vset.pattern.permute.xlu0 4
    %1088 = vperm.xlu0 %1087, %v128
    %v1089 = vpop.permute.xlu0 %1088
    %1090 = vset.pattern.permute.xlu0 4
    %1091 = vperm.xlu0 %1090, %v129
    %v1092 = vpop.permute.xlu0 %1091
    %1093 = vset.pattern.permute.xlu0 4
    %1094 = vperm.xlu0 %1093, %v130
    %v1095 = vpop.permute.xlu0 %1094
    %1096 = vset.pattern.permute.xlu0 4
    %1097 = vperm.xlu0 %1096, %v131
    %v1098 = vpop.permute.xlu0 %1097
    %1099 = vset.pattern.permute.xlu0 4
    %1100 = vperm.xlu0 %1099, %v132
    %v1101 = vpop.permute.xlu0 %1100
    %1102 = vset.pattern.permute.xlu0 4
    %1103 = vperm.xlu0 %1102, %v133
    %v1104 = vpop.permute.xlu0 %1103
    %1105 = vset.pattern.permute.xlu0 4
    %1106 = vperm.xlu0 %1105, %v134
    %v1107 = vpop.permute.xlu0 %1106
    %1108 = vset.pattern.permute.xlu0 4
    %1109 = vperm.xlu0 %1108, %v135
    %v1110 = vpop.permute.xlu0 %1109
    %1111 = vset.pattern.permute.xlu0 4
    %1112 = vperm.xlu0 %1111, %v136
    %v1113 = vpop.permute.xlu0 %1112
    %1114 = vset.pattern.permute.xlu0 4
    %1115 = vperm.xlu0 %1114, %v137
    %v1116 = vpop.permute.xlu0 %1115
    %1117 = vset.pattern.permute.xlu0 4
    %1118 = vperm.xlu0 %1117, %v138
    %v1119 = vpop.permute.xlu0 %1118
    %1120 = vset.pattern.permute.xlu0 4
    %1121 = vperm.xlu0 %1120, %v139
    %v1122 = vpop.permute.xlu0 %1121
    %1123 = vset.pattern.permute.xlu0 4
    %1124 = vperm.xlu0 %1123, %v140
    %v1125 = vpop.permute.xlu0 %1124
    %1126 = vset.pattern.permute.xlu0 4
    %1127 = vperm.xlu0 %1126, %v141
    %v1128 = vpop.permute.xlu0 %1127
    %1129 = vset.pattern.permute.xlu0 4
    %1130 = vperm.xlu0 %1129, %v142
    %v1131 = vpop.permute.xlu0 %1130
    %1132 = vset.pattern.permute.xlu0 4
    %1133 = vperm.xlu0 %1132, %v143
    %v1134 = vpop.permute.xlu0 %1133
    %1135 = vset.pattern.permute.xlu0 4
    %1136 = vperm.xlu0 %1135, %v144
    %v1137 = vpop.permute.xlu0 %1136
    %1138 = vset.pattern.permute.xlu0 4
    %1139 = vperm.xlu0 %1138, %v145
    %v1140 = vpop.permute.xlu0 %1139
    %1141 = vset.pattern.permute.xlu0 4
    %1142 = vperm.xlu0 %1141, %v146
    %v1143 = vpop.permute.xlu0 %1142
    %vm1144 = vcmp.eq.s32.totalorder %v1050, %v151
    %vm1145 = vcmp.eq.s32.totalorder %v1053, %v151
    %vm1146 = vcmp.eq.s32.totalorder %v1056, %v151
    %vm1147 = vcmp.eq.s32.totalorder %v1059, %v151
    %vm1148 = vcmp.eq.s32.totalorder %v1062, %v151
    %vm1149 = vcmp.eq.s32.totalorder %v1065, %v151
    %vm1150 = vcmp.eq.s32.totalorder %v1068, %v151
    %vm1151 = vcmp.eq.s32.totalorder %v1071, %v151
    %vm1152 = vcmp.eq.s32.totalorder %v1074, %v151
    %vm1153 = vcmp.eq.s32.totalorder %v1077, %v151
    %vm1154 = vcmp.eq.s32.totalorder %v1080, %v151
    %vm1155 = vcmp.eq.s32.totalorder %v1083, %v151
    %vm1156 = vcmp.eq.s32.totalorder %v1086, %v151
    %vm1157 = vcmp.eq.s32.totalorder %v1089, %v151
    %vm1158 = vcmp.eq.s32.totalorder %v1092, %v151
    %vm1159 = vcmp.eq.s32.totalorder %v1095, %v151
    %vm1160 = vcmp.eq.s32.totalorder %v1098, %v151
    %vm1161 = vcmp.eq.s32.totalorder %v1101, %v151
    %vm1162 = vcmp.eq.s32.totalorder %v1104, %v151
    %vm1163 = vcmp.eq.s32.totalorder %v1107, %v151
    %vm1164 = vcmp.eq.s32.totalorder %v1110, %v151
    %vm1165 = vcmp.eq.s32.totalorder %v1113, %v151
    %vm1166 = vcmp.eq.s32.totalorder %v1116, %v151
    %vm1167 = vcmp.eq.s32.totalorder %v1119, %v151
    %vm1168 = vcmp.eq.s32.totalorder %v1122, %v151
    %vm1169 = vcmp.eq.s32.totalorder %v1125, %v151
    %vm1170 = vcmp.eq.s32.totalorder %v1128, %v151
    %vm1171 = vcmp.eq.s32.totalorder %v1131, %v151
    %vm1172 = vcmp.eq.s32.totalorder %v1134, %v151
    %vm1173 = vcmp.eq.s32.totalorder %v1137, %v151
    %vm1174 = vcmp.eq.s32.totalorder %v1140, %v151
    %vm1175 = vcmp.eq.s32.totalorder %v1143, %v151
    %v1176 = vsel %vm1144, 1, 0
    %v1177 = vsel %vm1145, 1, 0
    %v1178 = vsel %vm1146, 1, 0
    %v1179 = vsel %vm1147, 1, 0
    %v1180 = vsel %vm1148, 1, 0
    %v1181 = vsel %vm1149, 1, 0
    %v1182 = vsel %vm1150, 1, 0
    %v1183 = vsel %vm1151, 1, 0
    %v1184 = vsel %vm1152, 1, 0
    %v1185 = vsel %vm1153, 1, 0
    %v1186 = vsel %vm1154, 1, 0
    %v1187 = vsel %vm1155, 1, 0
    %v1188 = vsel %vm1156, 1, 0
    %v1189 = vsel %vm1157, 1, 0
    %v1190 = vsel %vm1158, 1, 0
    %v1191 = vsel %vm1159, 1, 0
    %v1192 = vsel %vm1160, 1, 0
    %v1193 = vsel %vm1161, 1, 0
    %v1194 = vsel %vm1162, 1, 0
    %v1195 = vsel %vm1163, 1, 0
    %v1196 = vsel %vm1164, 1, 0
    %v1197 = vsel %vm1165, 1, 0
    %v1198 = vsel %vm1166, 1, 0
    %v1199 = vsel %vm1167, 1, 0
    %v1200 = vsel %vm1168, 1, 0
    %v1201 = vsel %vm1169, 1, 0
    %v1202 = vsel %vm1170, 1, 0
    %v1203 = vsel %vm1171, 1, 0
    %v1204 = vsel %vm1172, 1, 0
    %v1205 = vsel %vm1173, 1, 0
    %v1206 = vsel %vm1174, 1, 0
    %v1207 = vsel %vm1175, 1, 0
    %v1208 = vcvt.s32.f32 %v1176
    %v1209 = vcvt.s32.f32 %v1177
    %v1210 = vcvt.s32.f32 %v1178
    %v1211 = vcvt.s32.f32 %v1179
    %v1212 = vcvt.s32.f32 %v1180
    %v1213 = vcvt.s32.f32 %v1181
    %v1214 = vcvt.s32.f32 %v1182
    %v1215 = vcvt.s32.f32 %v1183
    %v1216 = vcvt.s32.f32 %v1184
    %v1217 = vcvt.s32.f32 %v1185
    %v1218 = vcvt.s32.f32 %v1186
    %v1219 = vcvt.s32.f32 %v1187
    %v1220 = vcvt.s32.f32 %v1188
    %v1221 = vcvt.s32.f32 %v1189
    %v1222 = vcvt.s32.f32 %v1190
    %v1223 = vcvt.s32.f32 %v1191
    %v1224 = vcvt.s32.f32 %v1192
    %v1225 = vcvt.s32.f32 %v1193
    %v1226 = vcvt.s32.f32 %v1194
    %v1227 = vcvt.s32.f32 %v1195
    %v1228 = vcvt.s32.f32 %v1196
    %v1229 = vcvt.s32.f32 %v1197
    %v1230 = vcvt.s32.f32 %v1198
    %v1231 = vcvt.s32.f32 %v1199
    %v1232 = vcvt.s32.f32 %v1200
    %v1233 = vcvt.s32.f32 %v1201
    %v1234 = vcvt.s32.f32 %v1202
    %v1235 = vcvt.s32.f32 %v1203
    %v1236 = vcvt.s32.f32 %v1204
    %v1237 = vcvt.s32.f32 %v1205
    %v1238 = vcvt.s32.f32 %v1206
    %v1239 = vcvt.s32.f32 %v1207
    %v1240 = vadd.f32 %v1016, %v1208
    %v1241 = vadd.f32 %v1017, %v1209
    %v1242 = vadd.f32 %v1018, %v1210
    %v1243 = vadd.f32 %v1019, %v1211
    %v1244 = vadd.f32 %v1020, %v1212
    %v1245 = vadd.f32 %v1021, %v1213
    %v1246 = vadd.f32 %v1022, %v1214
    %v1247 = vadd.f32 %v1023, %v1215
    %v1248 = vadd.f32 %v1024, %v1216
    %v1249 = vadd.f32 %v1025, %v1217
    %v1250 = vadd.f32 %v1026, %v1218
    %v1251 = vadd.f32 %v1027, %v1219
    %v1252 = vadd.f32 %v1028, %v1220
    %v1253 = vadd.f32 %v1029, %v1221
    %v1254 = vadd.f32 %v1030, %v1222
    %v1255 = vadd.f32 %v1031, %v1223
    %v1256 = vadd.f32 %v1032, %v1224
    %v1257 = vadd.f32 %v1033, %v1225
    %v1258 = vadd.f32 %v1034, %v1226
    %v1259 = vadd.f32 %v1035, %v1227
    %v1260 = vadd.f32 %v1036, %v1228
    %v1261 = vadd.f32 %v1037, %v1229
    %v1262 = vadd.f32 %v1038, %v1230
    %v1263 = vadd.f32 %v1039, %v1231
    %v1264 = vadd.f32 %v1040, %v1232
    %v1265 = vadd.f32 %v1041, %v1233
    %v1266 = vadd.f32 %v1042, %v1234
    %v1267 = vadd.f32 %v1043, %v1235
    %v1268 = vadd.f32 %v1044, %v1236
    %v1269 = vadd.f32 %v1045, %v1237
    %v1270 = vadd.f32 %v1046, %v1238
    %v1271 = vadd.f32 %v1047, %v1239
    %1272 = vset.pattern.permute.xlu0 5
    %1273 = vperm.xlu0 %1272, %v115
    %v1274 = vpop.permute.xlu0 %1273
    %1275 = vset.pattern.permute.xlu0 5
    %1276 = vperm.xlu0 %1275, %v116
    %v1277 = vpop.permute.xlu0 %1276
    %1278 = vset.pattern.permute.xlu0 5
    %1279 = vperm.xlu0 %1278, %v117
    %v1280 = vpop.permute.xlu0 %1279
    %1281 = vset.pattern.permute.xlu0 5
    %1282 = vperm.xlu0 %1281, %v118
    %v1283 = vpop.permute.xlu0 %1282
    %1284 = vset.pattern.permute.xlu0 5
    %1285 = vperm.xlu0 %1284, %v119
    %v1286 = vpop.permute.xlu0 %1285
    %1287 = vset.pattern.permute.xlu0 5
    %1288 = vperm.xlu0 %1287, %v120
    %v1289 = vpop.permute.xlu0 %1288
    %1290 = vset.pattern.permute.xlu0 5
    %1291 = vperm.xlu0 %1290, %v121
    %v1292 = vpop.permute.xlu0 %1291
    %1293 = vset.pattern.permute.xlu0 5
    %1294 = vperm.xlu0 %1293, %v122
    %v1295 = vpop.permute.xlu0 %1294
    %1296 = vset.pattern.permute.xlu0 5
    %1297 = vperm.xlu0 %1296, %v123
    %v1298 = vpop.permute.xlu0 %1297
    %1299 = vset.pattern.permute.xlu0 5
    %1300 = vperm.xlu0 %1299, %v124
    %v1301 = vpop.permute.xlu0 %1300
    %1302 = vset.pattern.permute.xlu0 5
    %1303 = vperm.xlu0 %1302, %v125
    %v1304 = vpop.permute.xlu0 %1303
    %1305 = vset.pattern.permute.xlu0 5
    %1306 = vperm.xlu0 %1305, %v126
    %v1307 = vpop.permute.xlu0 %1306
    %1308 = vset.pattern.permute.xlu0 5
    %1309 = vperm.xlu0 %1308, %v127
    %v1310 = vpop.permute.xlu0 %1309
    %1311 = vset.pattern.permute.xlu0 5
    %1312 = vperm.xlu0 %1311, %v128
    %v1313 = vpop.permute.xlu0 %1312
    %1314 = vset.pattern.permute.xlu0 5
    %1315 = vperm.xlu0 %1314, %v129
    %v1316 = vpop.permute.xlu0 %1315
    %1317 = vset.pattern.permute.xlu0 5
    %1318 = vperm.xlu0 %1317, %v130
    %v1319 = vpop.permute.xlu0 %1318
    %1320 = vset.pattern.permute.xlu0 5
    %1321 = vperm.xlu0 %1320, %v131
    %v1322 = vpop.permute.xlu0 %1321
    %1323 = vset.pattern.permute.xlu0 5
    %1324 = vperm.xlu0 %1323, %v132
    %v1325 = vpop.permute.xlu0 %1324
    %1326 = vset.pattern.permute.xlu0 5
    %1327 = vperm.xlu0 %1326, %v133
    %v1328 = vpop.permute.xlu0 %1327
    %1329 = vset.pattern.permute.xlu0 5
    %1330 = vperm.xlu0 %1329, %v134
    %v1331 = vpop.permute.xlu0 %1330
    %1332 = vset.pattern.permute.xlu0 5
    %1333 = vperm.xlu0 %1332, %v135
    %v1334 = vpop.permute.xlu0 %1333
    %1335 = vset.pattern.permute.xlu0 5
    %1336 = vperm.xlu0 %1335, %v136
    %v1337 = vpop.permute.xlu0 %1336
    %1338 = vset.pattern.permute.xlu0 5
    %1339 = vperm.xlu0 %1338, %v137
    %v1340 = vpop.permute.xlu0 %1339
    %1341 = vset.pattern.permute.xlu0 5
    %1342 = vperm.xlu0 %1341, %v138
    %v1343 = vpop.permute.xlu0 %1342
    %1344 = vset.pattern.permute.xlu0 5
    %1345 = vperm.xlu0 %1344, %v139
    %v1346 = vpop.permute.xlu0 %1345
    %1347 = vset.pattern.permute.xlu0 5
    %1348 = vperm.xlu0 %1347, %v140
    %v1349 = vpop.permute.xlu0 %1348
    %1350 = vset.pattern.permute.xlu0 5
    %1351 = vperm.xlu0 %1350, %v141
    %v1352 = vpop.permute.xlu0 %1351
    %1353 = vset.pattern.permute.xlu0 5
    %1354 = vperm.xlu0 %1353, %v142
    %v1355 = vpop.permute.xlu0 %1354
    %1356 = vset.pattern.permute.xlu0 5
    %1357 = vperm.xlu0 %1356, %v143
    %v1358 = vpop.permute.xlu0 %1357
    %1359 = vset.pattern.permute.xlu0 5
    %1360 = vperm.xlu0 %1359, %v144
    %v1361 = vpop.permute.xlu0 %1360
    %1362 = vset.pattern.permute.xlu0 5
    %1363 = vperm.xlu0 %1362, %v145
    %v1364 = vpop.permute.xlu0 %1363
    %1365 = vset.pattern.permute.xlu0 5
    %1366 = vperm.xlu0 %1365, %v146
    %v1367 = vpop.permute.xlu0 %1366
    %vm1368 = vcmp.eq.s32.totalorder %v1274, %v151
    %vm1369 = vcmp.eq.s32.totalorder %v1277, %v151
    %vm1370 = vcmp.eq.s32.totalorder %v1280, %v151
    %vm1371 = vcmp.eq.s32.totalorder %v1283, %v151
    %vm1372 = vcmp.eq.s32.totalorder %v1286, %v151
    %vm1373 = vcmp.eq.s32.totalorder %v1289, %v151
    %vm1374 = vcmp.eq.s32.totalorder %v1292, %v151
    %vm1375 = vcmp.eq.s32.totalorder %v1295, %v151
    %vm1376 = vcmp.eq.s32.totalorder %v1298, %v151
    %vm1377 = vcmp.eq.s32.totalorder %v1301, %v151
    %vm1378 = vcmp.eq.s32.totalorder %v1304, %v151
    %vm1379 = vcmp.eq.s32.totalorder %v1307, %v151
    %vm1380 = vcmp.eq.s32.totalorder %v1310, %v151
    %vm1381 = vcmp.eq.s32.totalorder %v1313, %v151
    %vm1382 = vcmp.eq.s32.totalorder %v1316, %v151
    %vm1383 = vcmp.eq.s32.totalorder %v1319, %v151
    %vm1384 = vcmp.eq.s32.totalorder %v1322, %v151
    %vm1385 = vcmp.eq.s32.totalorder %v1325, %v151
    %vm1386 = vcmp.eq.s32.totalorder %v1328, %v151
    %vm1387 = vcmp.eq.s32.totalorder %v1331, %v151
    %vm1388 = vcmp.eq.s32.totalorder %v1334, %v151
    %vm1389 = vcmp.eq.s32.totalorder %v1337, %v151
    %vm1390 = vcmp.eq.s32.totalorder %v1340, %v151
    %vm1391 = vcmp.eq.s32.totalorder %v1343, %v151
    %vm1392 = vcmp.eq.s32.totalorder %v1346, %v151
    %vm1393 = vcmp.eq.s32.totalorder %v1349, %v151
    %vm1394 = vcmp.eq.s32.totalorder %v1352, %v151
    %vm1395 = vcmp.eq.s32.totalorder %v1355, %v151
    %vm1396 = vcmp.eq.s32.totalorder %v1358, %v151
    %vm1397 = vcmp.eq.s32.totalorder %v1361, %v151
    %vm1398 = vcmp.eq.s32.totalorder %v1364, %v151
    %vm1399 = vcmp.eq.s32.totalorder %v1367, %v151
    %v1400 = vsel %vm1368, 1, 0
    %v1401 = vsel %vm1369, 1, 0
    %v1402 = vsel %vm1370, 1, 0
    %v1403 = vsel %vm1371, 1, 0
    %v1404 = vsel %vm1372, 1, 0
    %v1405 = vsel %vm1373, 1, 0
    %v1406 = vsel %vm1374, 1, 0
    %v1407 = vsel %vm1375, 1, 0
    %v1408 = vsel %vm1376, 1, 0
    %v1409 = vsel %vm1377, 1, 0
    %v1410 = vsel %vm1378, 1, 0
    %v1411 = vsel %vm1379, 1, 0
    %v1412 = vsel %vm1380, 1, 0
    %v1413 = vsel %vm1381, 1, 0
    %v1414 = vsel %vm1382, 1, 0
    %v1415 = vsel %vm1383, 1, 0
    %v1416 = vsel %vm1384, 1, 0
    %v1417 = vsel %vm1385, 1, 0
    %v1418 = vsel %vm1386, 1, 0
    %v1419 = vsel %vm1387, 1, 0
    %v1420 = vsel %vm1388, 1, 0
    %v1421 = vsel %vm1389, 1, 0
    %v1422 = vsel %vm1390, 1, 0
    %v1423 = vsel %vm1391, 1, 0
    %v1424 = vsel %vm1392, 1, 0
    %v1425 = vsel %vm1393, 1, 0
    %v1426 = vsel %vm1394, 1, 0
    %v1427 = vsel %vm1395, 1, 0
    %v1428 = vsel %vm1396, 1, 0
    %v1429 = vsel %vm1397, 1, 0
    %v1430 = vsel %vm1398, 1, 0
    %v1431 = vsel %vm1399, 1, 0
    %v1432 = vcvt.s32.f32 %v1400
    %v1433 = vcvt.s32.f32 %v1401
    %v1434 = vcvt.s32.f32 %v1402
    %v1435 = vcvt.s32.f32 %v1403
    %v1436 = vcvt.s32.f32 %v1404
    %v1437 = vcvt.s32.f32 %v1405
    %v1438 = vcvt.s32.f32 %v1406
    %v1439 = vcvt.s32.f32 %v1407
    %v1440 = vcvt.s32.f32 %v1408
    %v1441 = vcvt.s32.f32 %v1409
    %v1442 = vcvt.s32.f32 %v1410
    %v1443 = vcvt.s32.f32 %v1411
    %v1444 = vcvt.s32.f32 %v1412
    %v1445 = vcvt.s32.f32 %v1413
    %v1446 = vcvt.s32.f32 %v1414
    %v1447 = vcvt.s32.f32 %v1415
    %v1448 = vcvt.s32.f32 %v1416
    %v1449 = vcvt.s32.f32 %v1417
    %v1450 = vcvt.s32.f32 %v1418
    %v1451 = vcvt.s32.f32 %v1419
    %v1452 = vcvt.s32.f32 %v1420
    %v1453 = vcvt.s32.f32 %v1421
    %v1454 = vcvt.s32.f32 %v1422
    %v1455 = vcvt.s32.f32 %v1423
    %v1456 = vcvt.s32.f32 %v1424
    %v1457 = vcvt.s32.f32 %v1425
    %v1458 = vcvt.s32.f32 %v1426
    %v1459 = vcvt.s32.f32 %v1427
    %v1460 = vcvt.s32.f32 %v1428
    %v1461 = vcvt.s32.f32 %v1429
    %v1462 = vcvt.s32.f32 %v1430
    %v1463 = vcvt.s32.f32 %v1431
    %v1464 = vadd.f32 %v1240, %v1432
    %v1465 = vadd.f32 %v1241, %v1433
    %v1466 = vadd.f32 %v1242, %v1434
    %v1467 = vadd.f32 %v1243, %v1435
    %v1468 = vadd.f32 %v1244, %v1436
    %v1469 = vadd.f32 %v1245, %v1437
    %v1470 = vadd.f32 %v1246, %v1438
    %v1471 = vadd.f32 %v1247, %v1439
    %v1472 = vadd.f32 %v1248, %v1440
    %v1473 = vadd.f32 %v1249, %v1441
    %v1474 = vadd.f32 %v1250, %v1442
    %v1475 = vadd.f32 %v1251, %v1443
    %v1476 = vadd.f32 %v1252, %v1444
    %v1477 = vadd.f32 %v1253, %v1445
    %v1478 = vadd.f32 %v1254, %v1446
    %v1479 = vadd.f32 %v1255, %v1447
    %v1480 = vadd.f32 %v1256, %v1448
    %v1481 = vadd.f32 %v1257, %v1449
    %v1482 = vadd.f32 %v1258, %v1450
    %v1483 = vadd.f32 %v1259, %v1451
    %v1484 = vadd.f32 %v1260, %v1452
    %v1485 = vadd.f32 %v1261, %v1453
    %v1486 = vadd.f32 %v1262, %v1454
    %v1487 = vadd.f32 %v1263, %v1455
    %v1488 = vadd.f32 %v1264, %v1456
    %v1489 = vadd.f32 %v1265, %v1457
    %v1490 = vadd.f32 %v1266, %v1458
    %v1491 = vadd.f32 %v1267, %v1459
    %v1492 = vadd.f32 %v1268, %v1460
    %v1493 = vadd.f32 %v1269, %v1461
    %v1494 = vadd.f32 %v1270, %v1462
    %v1495 = vadd.f32 %v1271, %v1463
    %1496 = vset.pattern.permute.xlu0 6
    %1497 = vperm.xlu0 %1496, %v115
    %v1498 = vpop.permute.xlu0 %1497
    %1499 = vset.pattern.permute.xlu0 6
    %1500 = vperm.xlu0 %1499, %v116
    %v1501 = vpop.permute.xlu0 %1500
    %1502 = vset.pattern.permute.xlu0 6
    %1503 = vperm.xlu0 %1502, %v117
    %v1504 = vpop.permute.xlu0 %1503
    %1505 = vset.pattern.permute.xlu0 6
    %1506 = vperm.xlu0 %1505, %v118
    %v1507 = vpop.permute.xlu0 %1506
    %1508 = vset.pattern.permute.xlu0 6
    %1509 = vperm.xlu0 %1508, %v119
    %v1510 = vpop.permute.xlu0 %1509
    %1511 = vset.pattern.permute.xlu0 6
    %1512 = vperm.xlu0 %1511, %v120
    %v1513 = vpop.permute.xlu0 %1512
    %1514 = vset.pattern.permute.xlu0 6
    %1515 = vperm.xlu0 %1514, %v121
    %v1516 = vpop.permute.xlu0 %1515
    %1517 = vset.pattern.permute.xlu0 6
    %1518 = vperm.xlu0 %1517, %v122
    %v1519 = vpop.permute.xlu0 %1518
    %1520 = vset.pattern.permute.xlu0 6
    %1521 = vperm.xlu0 %1520, %v123
    %v1522 = vpop.permute.xlu0 %1521
    %1523 = vset.pattern.permute.xlu0 6
    %1524 = vperm.xlu0 %1523, %v124
    %v1525 = vpop.permute.xlu0 %1524
    %1526 = vset.pattern.permute.xlu0 6
    %1527 = vperm.xlu0 %1526, %v125
    %v1528 = vpop.permute.xlu0 %1527
    %1529 = vset.pattern.permute.xlu0 6
    %1530 = vperm.xlu0 %1529, %v126
    %v1531 = vpop.permute.xlu0 %1530
    %1532 = vset.pattern.permute.xlu0 6
    %1533 = vperm.xlu0 %1532, %v127
    %v1534 = vpop.permute.xlu0 %1533
    %1535 = vset.pattern.permute.xlu0 6
    %1536 = vperm.xlu0 %1535, %v128
    %v1537 = vpop.permute.xlu0 %1536
    %1538 = vset.pattern.permute.xlu0 6
    %1539 = vperm.xlu0 %1538, %v129
    %v1540 = vpop.permute.xlu0 %1539
    %1541 = vset.pattern.permute.xlu0 6
    %1542 = vperm.xlu0 %1541, %v130
    %v1543 = vpop.permute.xlu0 %1542
    %1544 = vset.pattern.permute.xlu0 6
    %1545 = vperm.xlu0 %1544, %v131
    %v1546 = vpop.permute.xlu0 %1545
    %1547 = vset.pattern.permute.xlu0 6
    %1548 = vperm.xlu0 %1547, %v132
    %v1549 = vpop.permute.xlu0 %1548
    %1550 = vset.pattern.permute.xlu0 6
    %1551 = vperm.xlu0 %1550, %v133
    %v1552 = vpop.permute.xlu0 %1551
    %1553 = vset.pattern.permute.xlu0 6
    %1554 = vperm.xlu0 %1553, %v134
    %v1555 = vpop.permute.xlu0 %1554
    %1556 = vset.pattern.permute.xlu0 6
    %1557 = vperm.xlu0 %1556, %v135
    %v1558 = vpop.permute.xlu0 %1557
    %1559 = vset.pattern.permute.xlu0 6
    %1560 = vperm.xlu0 %1559, %v136
    %v1561 = vpop.permute.xlu0 %1560
    %1562 = vset.pattern.permute.xlu0 6
    %1563 = vperm.xlu0 %1562, %v137
    %v1564 = vpop.permute.xlu0 %1563
    %1565 = vset.pattern.permute.xlu0 6
    %1566 = vperm.xlu0 %1565, %v138
    %v1567 = vpop.permute.xlu0 %1566
    %1568 = vset.pattern.permute.xlu0 6
    %1569 = vperm.xlu0 %1568, %v139
    %v1570 = vpop.permute.xlu0 %1569
    %1571 = vset.pattern.permute.xlu0 6
    %1572 = vperm.xlu0 %1571, %v140
    %v1573 = vpop.permute.xlu0 %1572
    %1574 = vset.pattern.permute.xlu0 6
    %1575 = vperm.xlu0 %1574, %v141
    %v1576 = vpop.permute.xlu0 %1575
    %1577 = vset.pattern.permute.xlu0 6
    %1578 = vperm.xlu0 %1577, %v142
    %v1579 = vpop.permute.xlu0 %1578
    %1580 = vset.pattern.permute.xlu0 6
    %1581 = vperm.xlu0 %1580, %v143
    %v1582 = vpop.permute.xlu0 %1581
    %1583 = vset.pattern.permute.xlu0 6
    %1584 = vperm.xlu0 %1583, %v144
    %v1585 = vpop.permute.xlu0 %1584
    %1586 = vset.pattern.permute.xlu0 6
    %1587 = vperm.xlu0 %1586, %v145
    %v1588 = vpop.permute.xlu0 %1587
    %1589 = vset.pattern.permute.xlu0 6
    %1590 = vperm.xlu0 %1589, %v146
    %v1591 = vpop.permute.xlu0 %1590
    %vm1592 = vcmp.eq.s32.totalorder %v1498, %v151
    %vm1593 = vcmp.eq.s32.totalorder %v1501, %v151
    %vm1594 = vcmp.eq.s32.totalorder %v1504, %v151
    %vm1595 = vcmp.eq.s32.totalorder %v1507, %v151
    %vm1596 = vcmp.eq.s32.totalorder %v1510, %v151
    %vm1597 = vcmp.eq.s32.totalorder %v1513, %v151
    %vm1598 = vcmp.eq.s32.totalorder %v1516, %v151
    %vm1599 = vcmp.eq.s32.totalorder %v1519, %v151
    %vm1600 = vcmp.eq.s32.totalorder %v1522, %v151
    %vm1601 = vcmp.eq.s32.totalorder %v1525, %v151
    %vm1602 = vcmp.eq.s32.totalorder %v1528, %v151
    %vm1603 = vcmp.eq.s32.totalorder %v1531, %v151
    %vm1604 = vcmp.eq.s32.totalorder %v1534, %v151
    %vm1605 = vcmp.eq.s32.totalorder %v1537, %v151
    %vm1606 = vcmp.eq.s32.totalorder %v1540, %v151
    %vm1607 = vcmp.eq.s32.totalorder %v1543, %v151
    %vm1608 = vcmp.eq.s32.totalorder %v1546, %v151
    %vm1609 = vcmp.eq.s32.totalorder %v1549, %v151
    %vm1610 = vcmp.eq.s32.totalorder %v1552, %v151
    %vm1611 = vcmp.eq.s32.totalorder %v1555, %v151
    %vm1612 = vcmp.eq.s32.totalorder %v1558, %v151
    %vm1613 = vcmp.eq.s32.totalorder %v1561, %v151
    %vm1614 = vcmp.eq.s32.totalorder %v1564, %v151
    %vm1615 = vcmp.eq.s32.totalorder %v1567, %v151
    %vm1616 = vcmp.eq.s32.totalorder %v1570, %v151
    %vm1617 = vcmp.eq.s32.totalorder %v1573, %v151
    %vm1618 = vcmp.eq.s32.totalorder %v1576, %v151
    %vm1619 = vcmp.eq.s32.totalorder %v1579, %v151
    %vm1620 = vcmp.eq.s32.totalorder %v1582, %v151
    %vm1621 = vcmp.eq.s32.totalorder %v1585, %v151
    %vm1622 = vcmp.eq.s32.totalorder %v1588, %v151
    %vm1623 = vcmp.eq.s32.totalorder %v1591, %v151
    %v1624 = vsel %vm1592, 1, 0
    %v1625 = vsel %vm1593, 1, 0
    %v1626 = vsel %vm1594, 1, 0
    %v1627 = vsel %vm1595, 1, 0
    %v1628 = vsel %vm1596, 1, 0
    %v1629 = vsel %vm1597, 1, 0
    %v1630 = vsel %vm1598, 1, 0
    %v1631 = vsel %vm1599, 1, 0
    %v1632 = vsel %vm1600, 1, 0
    %v1633 = vsel %vm1601, 1, 0
    %v1634 = vsel %vm1602, 1, 0
    %v1635 = vsel %vm1603, 1, 0
    %v1636 = vsel %vm1604, 1, 0
    %v1637 = vsel %vm1605, 1, 0
    %v1638 = vsel %vm1606, 1, 0
    %v1639 = vsel %vm1607, 1, 0
    %v1640 = vsel %vm1608, 1, 0
    %v1641 = vsel %vm1609, 1, 0
    %v1642 = vsel %vm1610, 1, 0
    %v1643 = vsel %vm1611, 1, 0
    %v1644 = vsel %vm1612, 1, 0
    %v1645 = vsel %vm1613, 1, 0
    %v1646 = vsel %vm1614, 1, 0
    %v1647 = vsel %vm1615, 1, 0
    %v1648 = vsel %vm1616, 1, 0
    %v1649 = vsel %vm1617, 1, 0
    %v1650 = vsel %vm1618, 1, 0
    %v1651 = vsel %vm1619, 1, 0
    %v1652 = vsel %vm1620, 1, 0
    %v1653 = vsel %vm1621, 1, 0
    %v1654 = vsel %vm1622, 1, 0
    %v1655 = vsel %vm1623, 1, 0
    %v1656 = vcvt.s32.f32 %v1624
    %v1657 = vcvt.s32.f32 %v1625
    %v1658 = vcvt.s32.f32 %v1626
    %v1659 = vcvt.s32.f32 %v1627
    %v1660 = vcvt.s32.f32 %v1628
    %v1661 = vcvt.s32.f32 %v1629
    %v1662 = vcvt.s32.f32 %v1630
    %v1663 = vcvt.s32.f32 %v1631
    %v1664 = vcvt.s32.f32 %v1632
    %v1665 = vcvt.s32.f32 %v1633
    %v1666 = vcvt.s32.f32 %v1634
    %v1667 = vcvt.s32.f32 %v1635
    %v1668 = vcvt.s32.f32 %v1636
    %v1669 = vcvt.s32.f32 %v1637
    %v1670 = vcvt.s32.f32 %v1638
    %v1671 = vcvt.s32.f32 %v1639
    %v1672 = vcvt.s32.f32 %v1640
    %v1673 = vcvt.s32.f32 %v1641
    %v1674 = vcvt.s32.f32 %v1642
    %v1675 = vcvt.s32.f32 %v1643
    %v1676 = vcvt.s32.f32 %v1644
    %v1677 = vcvt.s32.f32 %v1645
    %v1678 = vcvt.s32.f32 %v1646
    %v1679 = vcvt.s32.f32 %v1647
    %v1680 = vcvt.s32.f32 %v1648
    %v1681 = vcvt.s32.f32 %v1649
    %v1682 = vcvt.s32.f32 %v1650
    %v1683 = vcvt.s32.f32 %v1651
    %v1684 = vcvt.s32.f32 %v1652
    %v1685 = vcvt.s32.f32 %v1653
    %v1686 = vcvt.s32.f32 %v1654
    %v1687 = vcvt.s32.f32 %v1655
    %v1688 = vadd.f32 %v1464, %v1656
    %v1689 = vadd.f32 %v1465, %v1657
    %v1690 = vadd.f32 %v1466, %v1658
    %v1691 = vadd.f32 %v1467, %v1659
    %v1692 = vadd.f32 %v1468, %v1660
    %v1693 = vadd.f32 %v1469, %v1661
    %v1694 = vadd.f32 %v1470, %v1662
    %v1695 = vadd.f32 %v1471, %v1663
    %v1696 = vadd.f32 %v1472, %v1664
    %v1697 = vadd.f32 %v1473, %v1665
    %v1698 = vadd.f32 %v1474, %v1666
    %v1699 = vadd.f32 %v1475, %v1667
    %v1700 = vadd.f32 %v1476, %v1668
    %v1701 = vadd.f32 %v1477, %v1669
    %v1702 = vadd.f32 %v1478, %v1670
    %v1703 = vadd.f32 %v1479, %v1671
    %v1704 = vadd.f32 %v1480, %v1672
    %v1705 = vadd.f32 %v1481, %v1673
    %v1706 = vadd.f32 %v1482, %v1674
    %v1707 = vadd.f32 %v1483, %v1675
    %v1708 = vadd.f32 %v1484, %v1676
    %v1709 = vadd.f32 %v1485, %v1677
    %v1710 = vadd.f32 %v1486, %v1678
    %v1711 = vadd.f32 %v1487, %v1679
    %v1712 = vadd.f32 %v1488, %v1680
    %v1713 = vadd.f32 %v1489, %v1681
    %v1714 = vadd.f32 %v1490, %v1682
    %v1715 = vadd.f32 %v1491, %v1683
    %v1716 = vadd.f32 %v1492, %v1684
    %v1717 = vadd.f32 %v1493, %v1685
    %v1718 = vadd.f32 %v1494, %v1686
    %v1719 = vadd.f32 %v1495, %v1687
    %1720 = vset.pattern.permute.xlu0 7
    %1721 = vperm.xlu0 %1720, %v115
    %v1722 = vpop.permute.xlu0 %1721
    %1723 = vset.pattern.permute.xlu0 7
    %1724 = vperm.xlu0 %1723, %v116
    %v1725 = vpop.permute.xlu0 %1724
    %1726 = vset.pattern.permute.xlu0 7
    %1727 = vperm.xlu0 %1726, %v117
    %v1728 = vpop.permute.xlu0 %1727
    %1729 = vset.pattern.permute.xlu0 7
    %1730 = vperm.xlu0 %1729, %v118
    %v1731 = vpop.permute.xlu0 %1730
    %1732 = vset.pattern.permute.xlu0 7
    %1733 = vperm.xlu0 %1732, %v119
    %v1734 = vpop.permute.xlu0 %1733
    %1735 = vset.pattern.permute.xlu0 7
    %1736 = vperm.xlu0 %1735, %v120
    %v1737 = vpop.permute.xlu0 %1736
    %1738 = vset.pattern.permute.xlu0 7
    %1739 = vperm.xlu0 %1738, %v121
    %v1740 = vpop.permute.xlu0 %1739
    %1741 = vset.pattern.permute.xlu0 7
    %1742 = vperm.xlu0 %1741, %v122
    %v1743 = vpop.permute.xlu0 %1742
    %1744 = vset.pattern.permute.xlu0 7
    %1745 = vperm.xlu0 %1744, %v123
    %v1746 = vpop.permute.xlu0 %1745
    %1747 = vset.pattern.permute.xlu0 7
    %1748 = vperm.xlu0 %1747, %v124
    %v1749 = vpop.permute.xlu0 %1748
    %1750 = vset.pattern.permute.xlu0 7
    %1751 = vperm.xlu0 %1750, %v125
    %v1752 = vpop.permute.xlu0 %1751
    %1753 = vset.pattern.permute.xlu0 7
    %1754 = vperm.xlu0 %1753, %v126
    %v1755 = vpop.permute.xlu0 %1754
    %1756 = vset.pattern.permute.xlu0 7
    %1757 = vperm.xlu0 %1756, %v127
    %v1758 = vpop.permute.xlu0 %1757
    %1759 = vset.pattern.permute.xlu0 7
    %1760 = vperm.xlu0 %1759, %v128
    %v1761 = vpop.permute.xlu0 %1760
    %1762 = vset.pattern.permute.xlu0 7
    %1763 = vperm.xlu0 %1762, %v129
    %v1764 = vpop.permute.xlu0 %1763
    %1765 = vset.pattern.permute.xlu0 7
    %1766 = vperm.xlu0 %1765, %v130
    %v1767 = vpop.permute.xlu0 %1766
    %1768 = vset.pattern.permute.xlu0 7
    %1769 = vperm.xlu0 %1768, %v131
    %v1770 = vpop.permute.xlu0 %1769
    %1771 = vset.pattern.permute.xlu0 7
    %1772 = vperm.xlu0 %1771, %v132
    %v1773 = vpop.permute.xlu0 %1772
    %1774 = vset.pattern.permute.xlu0 7
    %1775 = vperm.xlu0 %1774, %v133
    %v1776 = vpop.permute.xlu0 %1775
    %1777 = vset.pattern.permute.xlu0 7
    %1778 = vperm.xlu0 %1777, %v134
    %v1779 = vpop.permute.xlu0 %1778
    %1780 = vset.pattern.permute.xlu0 7
    %1781 = vperm.xlu0 %1780, %v135
    %v1782 = vpop.permute.xlu0 %1781
    %1783 = vset.pattern.permute.xlu0 7
    %1784 = vperm.xlu0 %1783, %v136
    %v1785 = vpop.permute.xlu0 %1784
    %1786 = vset.pattern.permute.xlu0 7
    %1787 = vperm.xlu0 %1786, %v137
    %v1788 = vpop.permute.xlu0 %1787
    %1789 = vset.pattern.permute.xlu0 7
    %1790 = vperm.xlu0 %1789, %v138
    %v1791 = vpop.permute.xlu0 %1790
    %1792 = vset.pattern.permute.xlu0 7
    %1793 = vperm.xlu0 %1792, %v139
    %v1794 = vpop.permute.xlu0 %1793
    %1795 = vset.pattern.permute.xlu0 7
    %1796 = vperm.xlu0 %1795, %v140
    %v1797 = vpop.permute.xlu0 %1796
    %1798 = vset.pattern.permute.xlu0 7
    %1799 = vperm.xlu0 %1798, %v141
    %v1800 = vpop.permute.xlu0 %1799
    %1801 = vset.pattern.permute.xlu0 7
    %1802 = vperm.xlu0 %1801, %v142
    %v1803 = vpop.permute.xlu0 %1802
    %1804 = vset.pattern.permute.xlu0 7
    %1805 = vperm.xlu0 %1804, %v143
    %v1806 = vpop.permute.xlu0 %1805
    %1807 = vset.pattern.permute.xlu0 7
    %1808 = vperm.xlu0 %1807, %v144
    %v1809 = vpop.permute.xlu0 %1808
    %1810 = vset.pattern.permute.xlu0 7
    %1811 = vperm.xlu0 %1810, %v145
    %v1812 = vpop.permute.xlu0 %1811
    %1813 = vset.pattern.permute.xlu0 7
    %1814 = vperm.xlu0 %1813, %v146
    %v1815 = vpop.permute.xlu0 %1814
    %vm1816 = vcmp.eq.s32.totalorder %v1722, %v151
    %vm1817 = vcmp.eq.s32.totalorder %v1725, %v151
    %vm1818 = vcmp.eq.s32.totalorder %v1728, %v151
    %vm1819 = vcmp.eq.s32.totalorder %v1731, %v151
    %vm1820 = vcmp.eq.s32.totalorder %v1734, %v151
    %vm1821 = vcmp.eq.s32.totalorder %v1737, %v151
    %vm1822 = vcmp.eq.s32.totalorder %v1740, %v151
    %vm1823 = vcmp.eq.s32.totalorder %v1743, %v151
    %vm1824 = vcmp.eq.s32.totalorder %v1746, %v151
    %vm1825 = vcmp.eq.s32.totalorder %v1749, %v151
    %vm1826 = vcmp.eq.s32.totalorder %v1752, %v151
    %vm1827 = vcmp.eq.s32.totalorder %v1755, %v151
    %vm1828 = vcmp.eq.s32.totalorder %v1758, %v151
    %vm1829 = vcmp.eq.s32.totalorder %v1761, %v151
    %vm1830 = vcmp.eq.s32.totalorder %v1764, %v151
    %vm1831 = vcmp.eq.s32.totalorder %v1767, %v151
    %vm1832 = vcmp.eq.s32.totalorder %v1770, %v151
    %vm1833 = vcmp.eq.s32.totalorder %v1773, %v151
    %vm1834 = vcmp.eq.s32.totalorder %v1776, %v151
    %vm1835 = vcmp.eq.s32.totalorder %v1779, %v151
    %vm1836 = vcmp.eq.s32.totalorder %v1782, %v151
    %vm1837 = vcmp.eq.s32.totalorder %v1785, %v151
    %vm1838 = vcmp.eq.s32.totalorder %v1788, %v151
    %vm1839 = vcmp.eq.s32.totalorder %v1791, %v151
    %vm1840 = vcmp.eq.s32.totalorder %v1794, %v151
    %vm1841 = vcmp.eq.s32.totalorder %v1797, %v151
    %vm1842 = vcmp.eq.s32.totalorder %v1800, %v151
    %vm1843 = vcmp.eq.s32.totalorder %v1803, %v151
    %vm1844 = vcmp.eq.s32.totalorder %v1806, %v151
    %vm1845 = vcmp.eq.s32.totalorder %v1809, %v151
    %vm1846 = vcmp.eq.s32.totalorder %v1812, %v151
    %vm1847 = vcmp.eq.s32.totalorder %v1815, %v151
    %v1848 = vsel %vm1816, 1, 0
    %v1849 = vsel %vm1817, 1, 0
    %v1850 = vsel %vm1818, 1, 0
    %v1851 = vsel %vm1819, 1, 0
    %v1852 = vsel %vm1820, 1, 0
    %v1853 = vsel %vm1821, 1, 0
    %v1854 = vsel %vm1822, 1, 0
    %v1855 = vsel %vm1823, 1, 0
    %v1856 = vsel %vm1824, 1, 0
    %v1857 = vsel %vm1825, 1, 0
    %v1858 = vsel %vm1826, 1, 0
    %v1859 = vsel %vm1827, 1, 0
    %v1860 = vsel %vm1828, 1, 0
    %v1861 = vsel %vm1829, 1, 0
    %v1862 = vsel %vm1830, 1, 0
    %v1863 = vsel %vm1831, 1, 0
    %v1864 = vsel %vm1832, 1, 0
    %v1865 = vsel %vm1833, 1, 0
    %v1866 = vsel %vm1834, 1, 0
    %v1867 = vsel %vm1835, 1, 0
    %v1868 = vsel %vm1836, 1, 0
    %v1869 = vsel %vm1837, 1, 0
    %v1870 = vsel %vm1838, 1, 0
    %v1871 = vsel %vm1839, 1, 0
    %v1872 = vsel %vm1840, 1, 0
    %v1873 = vsel %vm1841, 1, 0
    %v1874 = vsel %vm1842, 1, 0
    %v1875 = vsel %vm1843, 1, 0
    %v1876 = vsel %vm1844, 1, 0
    %v1877 = vsel %vm1845, 1, 0
    %v1878 = vsel %vm1846, 1, 0
    %v1879 = vsel %vm1847, 1, 0
    %v1880 = vcvt.s32.f32 %v1848
    %v1881 = vcvt.s32.f32 %v1849
    %v1882 = vcvt.s32.f32 %v1850
    %v1883 = vcvt.s32.f32 %v1851
    %v1884 = vcvt.s32.f32 %v1852
    %v1885 = vcvt.s32.f32 %v1853
    %v1886 = vcvt.s32.f32 %v1854
    %v1887 = vcvt.s32.f32 %v1855
    %v1888 = vcvt.s32.f32 %v1856
    %v1889 = vcvt.s32.f32 %v1857
    %v1890 = vcvt.s32.f32 %v1858
    %v1891 = vcvt.s32.f32 %v1859
    %v1892 = vcvt.s32.f32 %v1860
    %v1893 = vcvt.s32.f32 %v1861
    %v1894 = vcvt.s32.f32 %v1862
    %v1895 = vcvt.s32.f32 %v1863
    %v1896 = vcvt.s32.f32 %v1864
    %v1897 = vcvt.s32.f32 %v1865
    %v1898 = vcvt.s32.f32 %v1866
    %v1899 = vcvt.s32.f32 %v1867
    %v1900 = vcvt.s32.f32 %v1868
    %v1901 = vcvt.s32.f32 %v1869
    %v1902 = vcvt.s32.f32 %v1870
    %v1903 = vcvt.s32.f32 %v1871
    %v1904 = vcvt.s32.f32 %v1872
    %v1905 = vcvt.s32.f32 %v1873
    %v1906 = vcvt.s32.f32 %v1874
    %v1907 = vcvt.s32.f32 %v1875
    %v1908 = vcvt.s32.f32 %v1876
    %v1909 = vcvt.s32.f32 %v1877
    %v1910 = vcvt.s32.f32 %v1878
    %v1911 = vcvt.s32.f32 %v1879
    %v1912 = vadd.f32 %v1688, %v1880
    %v1913 = vadd.f32 %v1689, %v1881
    %v1914 = vadd.f32 %v1690, %v1882
    %v1915 = vadd.f32 %v1691, %v1883
    %v1916 = vadd.f32 %v1692, %v1884
    %v1917 = vadd.f32 %v1693, %v1885
    %v1918 = vadd.f32 %v1694, %v1886
    %v1919 = vadd.f32 %v1695, %v1887
    %v1920 = vadd.f32 %v1696, %v1888
    %v1921 = vadd.f32 %v1697, %v1889
    %v1922 = vadd.f32 %v1698, %v1890
    %v1923 = vadd.f32 %v1699, %v1891
    %v1924 = vadd.f32 %v1700, %v1892
    %v1925 = vadd.f32 %v1701, %v1893
    %v1926 = vadd.f32 %v1702, %v1894
    %v1927 = vadd.f32 %v1703, %v1895
    %v1928 = vadd.f32 %v1704, %v1896
    %v1929 = vadd.f32 %v1705, %v1897
    %v1930 = vadd.f32 %v1706, %v1898
    %v1931 = vadd.f32 %v1707, %v1899
    %v1932 = vadd.f32 %v1708, %v1900
    %v1933 = vadd.f32 %v1709, %v1901
    %v1934 = vadd.f32 %v1710, %v1902
    %v1935 = vadd.f32 %v1711, %v1903
    %v1936 = vadd.f32 %v1712, %v1904
    %v1937 = vadd.f32 %v1713, %v1905
    %v1938 = vadd.f32 %v1714, %v1906
    %v1939 = vadd.f32 %v1715, %v1907
    %v1940 = vadd.f32 %v1716, %v1908
    %v1941 = vadd.f32 %v1717, %v1909
    %v1942 = vadd.f32 %v1718, %v1910
    %v1943 = vadd.f32 %v1719, %v1911
    %v1944 = vld [vmem:[#allocation2] sm:$0xff]
    %v1945 = vld [vmem:[#allocation2 + $0x8] sm:$0xff]
    %v1946 = vld [vmem:[#allocation2 + $0x10] sm:$0xff]
    %v1947 = vld [vmem:[#allocation2 + $0x18] sm:$0xff]
    %v1948 = vld [vmem:[#allocation2 + $0x20] sm:$0xff]
    %v1949 = vld [vmem:[#allocation2 + $0x28] sm:$0xff]
    %v1950 = vld [vmem:[#allocation2 + $0x30] sm:$0xff]
    %v1951 = vld [vmem:[#allocation2 + $0x38] sm:$0xff]
    %v1952 = vld [vmem:[#allocation2 + $0x40] sm:$0xff]
    %v1953 = vld [vmem:[#allocation2 + $0x48] sm:$0xff]
    %v1954 = vld [vmem:[#allocation2 + $0x50] sm:$0xff]
    %v1955 = vld [vmem:[#allocation2 + $0x58] sm:$0xff]
    %v1956 = vld [vmem:[#allocation2 + $0x60] sm:$0xff]
    %v1957 = vld [vmem:[#allocation2 + $0x68] sm:$0xff]
    %v1958 = vld [vmem:[#allocation2 + $0x70] sm:$0xff]
    %v1959 = vld [vmem:[#allocation2 + $0x78] sm:$0xff]
    %v1960 = vld [vmem:[#allocation2 + $0x80] sm:$0xff]
    %v1961 = vld [vmem:[#allocation2 + $0x88] sm:$0xff]
    %v1962 = vld [vmem:[#allocation2 + $0x90] sm:$0xff]
    %v1963 = vld [vmem:[#allocation2 + $0x98] sm:$0xff]
    %v1964 = vld [vmem:[#allocation2 + $0xa0] sm:$0xff]
    %v1965 = vld [vmem:[#allocation2 + $0xa8] sm:$0xff]
    %v1966 = vld [vmem:[#allocation2 + $0xb0] sm:$0xff]
    %v1967 = vld [vmem:[#allocation2 + $0xb8] sm:$0xff]
    %v1968 = vld [vmem:[#allocation2 + $0xc0] sm:$0xff]
    %v1969 = vld [vmem:[#allocation2 + $0xc8] sm:$0xff]
    %v1970 = vld [vmem:[#allocation2 + $0xd0] sm:$0xff]
    %v1971 = vld [vmem:[#allocation2 + $0xd8] sm:$0xff]
    %v1972 = vld [vmem:[#allocation2 + $0xe0] sm:$0xff]
    %v1973 = vld [vmem:[#allocation2 + $0xe8] sm:$0xff]
    %v1974 = vld [vmem:[#allocation2 + $0xf0] sm:$0xff]
    %v1975 = vld [vmem:[#allocation2 + $0xf8] sm:$0xff]
    %v1976 = vpack.c.bf16 %v1913, %v1912
    %v1977 = vpack.c.bf16 %v1915, %v1914
    %v1978 = vpack.c.bf16 %v1917, %v1916
    %v1979 = vpack.c.bf16 %v1919, %v1918
    %v1980 = vpack.c.bf16 %v1921, %v1920
    %v1981 = vpack.c.bf16 %v1923, %v1922
    %v1982 = vpack.c.bf16 %v1925, %v1924
    %v1983 = vpack.c.bf16 %v1927, %v1926
    %v1984 = vpack.c.bf16 %v1929, %v1928
    %v1985 = vpack.c.bf16 %v1931, %v1930
    %v1986 = vpack.c.bf16 %v1933, %v1932
    %v1987 = vpack.c.bf16 %v1935, %v1934
    %v1988 = vpack.c.bf16 %v1937, %v1936
    %v1989 = vpack.c.bf16 %v1939, %v1938
    %v1990 = vpack.c.bf16 %v1941, %v1940
    %v1991 = vpack.c.bf16 %v1943, %v1942
    %v1992 = vld [vmem:[%s1] sm:$0xf]
    %v1993 = vld [vmem:[%s1 + $0x4] sm:$0xf]
    %v1994 = vld [vmem:[%s1 + $0x8] sm:$0xf]
    %v1995 = vld [vmem:[%s1 + $0xc] sm:$0xf]
    %v1996 = vld [vmem:[%s1 + $0x10] sm:$0xf]
    %v1997 = vld [vmem:[%s1 + $0x14] sm:$0xf]
    %v1998 = vld [vmem:[%s1 + $0x18] sm:$0xf]
    %v1999 = vld [vmem:[%s1 + $0x1c] sm:$0xf]
    %v2000 = vld [vmem:[%s1 + $0x20] sm:$0xf]
    %v2001 = vld [vmem:[%s1 + $0x24] sm:$0xf]
    %v2002 = vld [vmem:[%s1 + $0x28] sm:$0xf]
    %v2003 = vld [vmem:[%s1 + $0x2c] sm:$0xf]
    %v2004 = vld [vmem:[%s1 + $0x30] sm:$0xf]
    %v2005 = vld [vmem:[%s1 + $0x34] sm:$0xf]
    %v2006 = vld [vmem:[%s1 + $0x38] sm:$0xf]
    %v2007 = vld [vmem:[%s1 + $0x3c] sm:$0xf]
    %v2024 = vunpack.c.l.b16 %v1992
    %v2025 = vunpack.c.l.b16 %v1993
    %v2026 = vunpack.c.l.b16 %v1994
    %v2027 = vunpack.c.l.b16 %v1995
    %v2028 = vunpack.c.l.b16 %v1996
    %v2029 = vunpack.c.l.b16 %v1997
    %v2030 = vunpack.c.l.b16 %v1998
    %v2031 = vunpack.c.l.b16 %v1999
    %v2032 = vunpack.c.l.b16 %v2000
    %v2033 = vunpack.c.l.b16 %v2001
    %v2034 = vunpack.c.l.b16 %v2002
    %v2035 = vunpack.c.l.b16 %v2003
    %v2036 = vunpack.c.l.b16 %v2004
    %v2037 = vunpack.c.l.b16 %v2005
    %v2038 = vunpack.c.l.b16 %v2006
    %v2039 = vunpack.c.l.b16 %v2007
    %v2040 = vpack.c.b16 %v2025, %v2024
    %v2041 = vpack.c.b16 %v2027, %v2026
    %v2042 = vpack.c.b16 %v2029, %v2028
    %v2043 = vpack.c.b16 %v2031, %v2030
    %v2044 = vpack.c.b16 %v2033, %v2032
    %v2045 = vpack.c.b16 %v2035, %v2034
    %v2046 = vpack.c.b16 %v2037, %v2036
    %v2047 = vpack.c.b16 %v2039, %v2038
    %2056 = vmatpush.bf16.msra.mxu0 %v2047
    %2057 = vmatpush.bf16.msra.mxu0 %v2046
    %2058 = vmatpush.bf16.msra.mxu0 %v2045
    %2059 = vmatpush.bf16.msra.mxu0 %v2044
    %2060 = vmatpush.bf16.msra.mxu0 %v2043
    %2061 = vmatpush.bf16.msra.mxu0 %v2042
    %2062 = vmatpush.bf16.msra.mxu0 %v2041
    %2063 = vmatpush.bf16.msra.mxu0 %v2040
    %2064 = vmatmul.bf16.gmra.mxu0 %v1976
    %v2065 = vpop.f32.mrf.mxu0
    %v2066 = vadd.f32 0.0, %v2065
    %v2067 = vpop.f32.mrf.mxu0
    %v2068 = vadd.f32 0.0, %v2067
    %2069 = vmatmul.bf16.gmra.mxu0 %v1977
    %v2070 = vpop.f32.mrf.mxu0
    %v2071 = vadd.f32 0.0, %v2070
    %v2072 = vpop.f32.mrf.mxu0
    %v2073 = vadd.f32 0.0, %v2072
    %2074 = vmatmul.bf16.gmra.mxu0 %v1978
    %v2075 = vpop.f32.mrf.mxu0
    %v2076 = vadd.f32 0.0, %v2075
    %v2077 = vpop.f32.mrf.mxu0
    %v2078 = vadd.f32 0.0, %v2077
    %2079 = vmatmul.bf16.gmra.mxu0 %v1979
    %v2080 = vpop.f32.mrf.mxu0
    %v2081 = vadd.f32 0.0, %v2080
    %v2082 = vpop.f32.mrf.mxu0
    %v2083 = vadd.f32 0.0, %v2082
    %2084 = vmatmul.bf16.gmra.mxu0 %v1980
    %v2085 = vpop.f32.mrf.mxu0
    %v2086 = vadd.f32 0.0, %v2085
    %v2087 = vpop.f32.mrf.mxu0
    %v2088 = vadd.f32 0.0, %v2087
    %2089 = vmatmul.bf16.gmra.mxu0 %v1981
    %v2090 = vpop.f32.mrf.mxu0
    %v2091 = vadd.f32 0.0, %v2090
    %v2092 = vpop.f32.mrf.mxu0
    %v2093 = vadd.f32 0.0, %v2092
    %2094 = vmatmul.bf16.gmra.mxu0 %v1982
    %v2095 = vpop.f32.mrf.mxu0
    %v2096 = vadd.f32 0.0, %v2095
    %v2097 = vpop.f32.mrf.mxu0
    %v2098 = vadd.f32 0.0, %v2097
    %2099 = vmatmul.bf16.gmra.mxu0 %v1983
    %v2100 = vpop.f32.mrf.mxu0
    %v2101 = vadd.f32 0.0, %v2100
    %v2102 = vpop.f32.mrf.mxu0
    %v2103 = vadd.f32 0.0, %v2102
    %2104 = vmatmul.bf16.gmra.mxu0 %v1984
    %v2105 = vpop.f32.mrf.mxu0
    %v2106 = vadd.f32 0.0, %v2105
    %v2107 = vpop.f32.mrf.mxu0
    %v2108 = vadd.f32 0.0, %v2107
    %2109 = vmatmul.bf16.gmra.mxu0 %v1985
    %v2110 = vpop.f32.mrf.mxu0
    %v2111 = vadd.f32 0.0, %v2110
    %v2112 = vpop.f32.mrf.mxu0
    %v2113 = vadd.f32 0.0, %v2112
    %2114 = vmatmul.bf16.gmra.mxu0 %v1986
    %v2115 = vpop.f32.mrf.mxu0
    %v2116 = vadd.f32 0.0, %v2115
    %v2117 = vpop.f32.mrf.mxu0
    %v2118 = vadd.f32 0.0, %v2117
    %2119 = vmatmul.bf16.gmra.mxu0 %v1987
    %v2120 = vpop.f32.mrf.mxu0
    %v2121 = vadd.f32 0.0, %v2120
    %v2122 = vpop.f32.mrf.mxu0
    %v2123 = vadd.f32 0.0, %v2122
    %2124 = vmatmul.bf16.gmra.mxu0 %v1988
    %v2125 = vpop.f32.mrf.mxu0
    %v2126 = vadd.f32 0.0, %v2125
    %v2127 = vpop.f32.mrf.mxu0
    %v2128 = vadd.f32 0.0, %v2127
    %2129 = vmatmul.bf16.gmra.mxu0 %v1989
    %v2130 = vpop.f32.mrf.mxu0
    %v2131 = vadd.f32 0.0, %v2130
    %v2132 = vpop.f32.mrf.mxu0
    %v2133 = vadd.f32 0.0, %v2132
    %2134 = vmatmul.bf16.gmra.mxu0 %v1990
    %v2135 = vpop.f32.mrf.mxu0
    %v2136 = vadd.f32 0.0, %v2135
    %v2137 = vpop.f32.mrf.mxu0
    %v2138 = vadd.f32 0.0, %v2137
    %2139 = vmatmul.bf16.gmra.mxu0 %v1991
    %v2140 = vpop.f32.mrf.mxu0
    %v2141 = vadd.f32 0.0, %v2140
    %v2142 = vpop.f32.mrf.mxu0
    %v2143 = vadd.f32 0.0, %v2142
    %2144 = vdwg.mxu0
    %v2145 = vadd.f32 %v1944, %v2066
    %v2146 = vadd.f32 %v1945, %v2068
    %v2147 = vadd.f32 %v1946, %v2071
    %v2148 = vadd.f32 %v1947, %v2073
    %v2149 = vadd.f32 %v1948, %v2076
    %v2150 = vadd.f32 %v1949, %v2078
    %v2151 = vadd.f32 %v1950, %v2081
    %v2152 = vadd.f32 %v1951, %v2083
    %v2153 = vadd.f32 %v1952, %v2086
    %v2154 = vadd.f32 %v1953, %v2088
    %v2155 = vadd.f32 %v1954, %v2091
    %v2156 = vadd.f32 %v1955, %v2093
    %v2157 = vadd.f32 %v1956, %v2096
    %v2158 = vadd.f32 %v1957, %v2098
    %v2159 = vadd.f32 %v1958, %v2101
    %v2160 = vadd.f32 %v1959, %v2103
    %v2161 = vadd.f32 %v1960, %v2106
    %v2162 = vadd.f32 %v1961, %v2108
    %v2163 = vadd.f32 %v1962, %v2111
    %v2164 = vadd.f32 %v1963, %v2113
    %v2165 = vadd.f32 %v1964, %v2116
    %v2166 = vadd.f32 %v1965, %v2118
    %v2167 = vadd.f32 %v1966, %v2121
    %v2168 = vadd.f32 %v1967, %v2123
    %v2169 = vadd.f32 %v1968, %v2126
    %v2170 = vadd.f32 %v1969, %v2128
    %v2171 = vadd.f32 %v1970, %v2131
    %v2172 = vadd.f32 %v1971, %v2133
    %v2173 = vadd.f32 %v1972, %v2136
    %v2174 = vadd.f32 %v1973, %v2138
    %v2175 = vadd.f32 %v1974, %v2141
    %v2176 = vadd.f32 %v1975, %v2143
    %2177 = vst [vmem:[#allocation2] sm:$0xff] %v2145
    %2178 = vst [vmem:[#allocation2 + $0x8] sm:$0xff] %v2146
    %2179 = vst [vmem:[#allocation2 + $0x10] sm:$0xff] %v2147
    %2180 = vst [vmem:[#allocation2 + $0x18] sm:$0xff] %v2148
    %2181 = vst [vmem:[#allocation2 + $0x20] sm:$0xff] %v2149
    %2182 = vst [vmem:[#allocation2 + $0x28] sm:$0xff] %v2150
    %2183 = vst [vmem:[#allocation2 + $0x30] sm:$0xff] %v2151
    %2184 = vst [vmem:[#allocation2 + $0x38] sm:$0xff] %v2152
    %2185 = vst [vmem:[#allocation2 + $0x40] sm:$0xff] %v2153
    %2186 = vst [vmem:[#allocation2 + $0x48] sm:$0xff] %v2154
    %2187 = vst [vmem:[#allocation2 + $0x50] sm:$0xff] %v2155
    %2188 = vst [vmem:[#allocation2 + $0x58] sm:$0xff] %v2156
    %2189 = vst [vmem:[#allocation2 + $0x60] sm:$0xff] %v2157
    %2190 = vst [vmem:[#allocation2 + $0x68] sm:$0xff] %v2158
    %2191 = vst [vmem:[#allocation2 + $0x70] sm:$0xff] %v2159
    %2192 = vst [vmem:[#allocation2 + $0x78] sm:$0xff] %v2160
    %2193 = vst [vmem:[#allocation2 + $0x80] sm:$0xff] %v2161
    %2194 = vst [vmem:[#allocation2 + $0x88] sm:$0xff] %v2162
    %2195 = vst [vmem:[#allocation2 + $0x90] sm:$0xff] %v2163
    %2196 = vst [vmem:[#allocation2 + $0x98] sm:$0xff] %v2164
    %2197 = vst [vmem:[#allocation2 + $0xa0] sm:$0xff] %v2165
    %2198 = vst [vmem:[#allocation2 + $0xa8] sm:$0xff] %v2166
    %2199 = vst [vmem:[#allocation2 + $0xb0] sm:$0xff] %v2167
    %2200 = vst [vmem:[#allocation2 + $0xb8] sm:$0xff] %v2168
    %2201 = vst [vmem:[#allocation2 + $0xc0] sm:$0xff] %v2169
    %2202 = vst [vmem:[#allocation2 + $0xc8] sm:$0xff] %v2170
    %2203 = vst [vmem:[#allocation2 + $0xd0] sm:$0xff] %v2171
    %2204 = vst [vmem:[#allocation2 + $0xd8] sm:$0xff] %v2172
    %2205 = vst [vmem:[#allocation2 + $0xe0] sm:$0xff] %v2173
    %2206 = vst [vmem:[#allocation2 + $0xe8] sm:$0xff] %v2174
    %2207 = vst [vmem:[#allocation2 + $0xf0] sm:$0xff] %v2175
    %2208 = vst [vmem:[#allocation2 + $0xf8] sm:$0xff] %v2176
    // Predicated region
    $region18: #{tpu_custom_call.1} parent=1 // pred_check
      %p2209 = pneg %p47
    $region19: #{tpu_custom_call.1} parent=1 // pred_check_branch
      %2211 = sbr.rel (%p2209) target = $region21
    $region20: #{tpu_custom_call.1} parent=1 // pred_region
      %vm2212 = vcmp.ne.s32.totalorder %v15, 0
      %vm2213 = vcmp.ne.s32.totalorder %v16, 0
      %vm2214 = vcmp.ne.s32.totalorder %v17, 0
      %vm2215 = vcmp.ne.s32.totalorder %v18, 0
      %vm2216 = vcmp.ne.s32.totalorder %v19, 0
      %vm2217 = vcmp.ne.s32.totalorder %v20, 0
      %vm2218 = vcmp.ne.s32.totalorder %v21, 0
      %vm2219 = vcmp.ne.s32.totalorder %v22, 0
      %vm2220 = vcmp.ne.s32.totalorder %v23, 0
      %vm2221 = vcmp.ne.s32.totalorder %v24, 0
      %vm2222 = vcmp.ne.s32.totalorder %v25, 0
      %vm2223 = vcmp.ne.s32.totalorder %v26, 0
      %vm2224 = vcmp.ne.s32.totalorder %v27, 0
      %vm2225 = vcmp.ne.s32.totalorder %v28, 0
      %vm2226 = vcmp.ne.s32.totalorder %v29, 0
      %vm2227 = vcmp.ne.s32.totalorder %v30, 0
      %vm2228 = vcmp.ne.s32.totalorder %v31, 0
      %vm2229 = vcmp.ne.s32.totalorder %v32, 0
      %vm2230 = vcmp.ne.s32.totalorder %v33, 0
      %vm2231 = vcmp.ne.s32.totalorder %v34, 0
      %vm2232 = vcmp.ne.s32.totalorder %v35, 0
      %vm2233 = vcmp.ne.s32.totalorder %v36, 0
      %vm2234 = vcmp.ne.s32.totalorder %v37, 0
      %vm2235 = vcmp.ne.s32.totalorder %v38, 0
      %vm2236 = vcmp.ne.s32.totalorder %v39, 0
      %vm2237 = vcmp.ne.s32.totalorder %v40, 0
      %vm2238 = vcmp.ne.s32.totalorder %v41, 0
      %vm2239 = vcmp.ne.s32.totalorder %v42, 0
      %vm2240 = vcmp.ne.s32.totalorder %v43, 0
      %vm2241 = vcmp.ne.s32.totalorder %v44, 0
      %vm2242 = vcmp.ne.s32.totalorder %v45, 0
      %vm2243 = vcmp.ne.s32.totalorder %v46, 0
      %v2244 = vsel %vm2212, 1, 0
      %v2245 = vsel %vm2213, 1, 0
      %v2246 = vsel %vm2214, 1, 0
      %v2247 = vsel %vm2215, 1, 0
      %v2248 = vsel %vm2216, 1, 0
      %v2249 = vsel %vm2217, 1, 0
      %v2250 = vsel %vm2218, 1, 0
      %v2251 = vsel %vm2219, 1, 0
      %v2252 = vsel %vm2220, 1, 0
      %v2253 = vsel %vm2221, 1, 0
      %v2254 = vsel %vm2222, 1, 0
      %v2255 = vsel %vm2223, 1, 0
      %v2256 = vsel %vm2224, 1, 0
      %v2257 = vsel %vm2225, 1, 0
      %v2258 = vsel %vm2226, 1, 0
      %v2259 = vsel %vm2227, 1, 0
      %v2260 = vsel %vm2228, 1, 0
      %v2261 = vsel %vm2229, 1, 0
      %v2262 = vsel %vm2230, 1, 0
      %v2263 = vsel %vm2231, 1, 0
      %v2264 = vsel %vm2232, 1, 0
      %v2265 = vsel %vm2233, 1, 0
      %v2266 = vsel %vm2234, 1, 0
      %v2267 = vsel %vm2235, 1, 0
      %v2268 = vsel %vm2236, 1, 0
      %v2269 = vsel %vm2237, 1, 0
      %v2270 = vsel %vm2238, 1, 0
      %v2271 = vsel %vm2239, 1, 0
      %v2272 = vsel %vm2240, 1, 0
      %v2273 = vsel %vm2241, 1, 0
      %v2274 = vsel %vm2242, 1, 0
      %v2275 = vsel %vm2243, 1, 0
      %v2276 = vcvt.s32.f32 %v2244
      %v2277 = vcvt.s32.f32 %v2245
      %v2278 = vcvt.s32.f32 %v2246
      %v2279 = vcvt.s32.f32 %v2247
      %v2280 = vcvt.s32.f32 %v2248
      %v2281 = vcvt.s32.f32 %v2249
      %v2282 = vcvt.s32.f32 %v2250
      %v2283 = vcvt.s32.f32 %v2251
      %v2284 = vcvt.s32.f32 %v2252
      %v2285 = vcvt.s32.f32 %v2253
      %v2286 = vcvt.s32.f32 %v2254
      %v2287 = vcvt.s32.f32 %v2255
      %v2288 = vcvt.s32.f32 %v2256
      %v2289 = vcvt.s32.f32 %v2257
      %v2290 = vcvt.s32.f32 %v2258
      %v2291 = vcvt.s32.f32 %v2259
      %v2292 = vcvt.s32.f32 %v2260
      %v2293 = vcvt.s32.f32 %v2261
      %v2294 = vcvt.s32.f32 %v2262
      %v2295 = vcvt.s32.f32 %v2263
      %v2296 = vcvt.s32.f32 %v2264
      %v2297 = vcvt.s32.f32 %v2265
      %v2298 = vcvt.s32.f32 %v2266
      %v2299 = vcvt.s32.f32 %v2267
      %v2300 = vcvt.s32.f32 %v2268
      %v2301 = vcvt.s32.f32 %v2269
      %v2302 = vcvt.s32.f32 %v2270
      %v2303 = vcvt.s32.f32 %v2271
      %v2304 = vcvt.s32.f32 %v2272
      %v2305 = vcvt.s32.f32 %v2273
      %v2306 = vcvt.s32.f32 %v2274
      %v2307 = vcvt.s32.f32 %v2275
      %vm2308 = vcmask 64512
      %v2309 = vsel %vm2308, %v2276, 0.0
      %2310 = vadd.xlane.f32.xlu0 %v2309
      %v2311 = vpop.xlane.xlu0 %2310
      %v2312 = vsel %vm2308, %v2277, 0.0
      %2313 = vadd.xlane.f32.xlu0 %v2312
      %v2314 = vpop.xlane.xlu0 %2313
      %v2315 = vsel %vm2308, %v2278, 0.0
      %2316 = vadd.xlane.f32.xlu0 %v2315
      %v2317 = vpop.xlane.xlu0 %2316
      %v2318 = vsel %vm2308, %v2279, 0.0
      %2319 = vadd.xlane.f32.xlu0 %v2318
      %v2320 = vpop.xlane.xlu0 %2319
      %v2321 = vsel %vm2308, %v2280, 0.0
      %2322 = vadd.xlane.f32.xlu0 %v2321
      %v2323 = vpop.xlane.xlu0 %2322
      %v2324 = vsel %vm2308, %v2281, 0.0
      %2325 = vadd.xlane.f32.xlu0 %v2324
      %v2326 = vpop.xlane.xlu0 %2325
      %v2327 = vsel %vm2308, %v2282, 0.0
      %2328 = vadd.xlane.f32.xlu0 %v2327
      %v2329 = vpop.xlane.xlu0 %2328
      %v2330 = vsel %vm2308, %v2283, 0.0
      %2331 = vadd.xlane.f32.xlu0 %v2330
      %v2332 = vpop.xlane.xlu0 %2331
      %v2333 = vsel %vm2308, %v2284, 0.0
      %2334 = vadd.xlane.f32.xlu0 %v2333
      %v2335 = vpop.xlane.xlu0 %2334
      %v2336 = vsel %vm2308, %v2285, 0.0
      %2337 = vadd.xlane.f32.xlu0 %v2336
      %v2338 = vpop.xlane.xlu0 %2337
      %v2339 = vsel %vm2308, %v2286, 0.0
      %2340 = vadd.xlane.f32.xlu0 %v2339
      %v2341 = vpop.xlane.xlu0 %2340
      %v2342 = vsel %vm2308, %v2287, 0.0
      %2343 = vadd.xlane.f32.xlu0 %v2342
      %v2344 = vpop.xlane.xlu0 %2343
      %v2345 = vsel %vm2308, %v2288, 0.0
      %2346 = vadd.xlane.f32.xlu0 %v2345
      %v2347 = vpop.xlane.xlu0 %2346
      %v2348 = vsel %vm2308, %v2289, 0.0
      %2349 = vadd.xlane.f32.xlu0 %v2348
      %v2350 = vpop.xlane.xlu0 %2349
      %v2351 = vsel %vm2308, %v2290, 0.0
      %2352 = vadd.xlane.f32.xlu0 %v2351
      %v2353 = vpop.xlane.xlu0 %2352
      %v2354 = vsel %vm2308, %v2291, 0.0
      %2355 = vadd.xlane.f32.xlu0 %v2354
      %v2356 = vpop.xlane.xlu0 %2355
      %v2357 = vsel %vm2308, %v2292, 0.0
      %2358 = vadd.xlane.f32.xlu0 %v2357
      %v2359 = vpop.xlane.xlu0 %2358
      %v2360 = vsel %vm2308, %v2293, 0.0
      %2361 = vadd.xlane.f32.xlu0 %v2360
      %v2362 = vpop.xlane.xlu0 %2361
      %v2363 = vsel %vm2308, %v2294, 0.0
      %2364 = vadd.xlane.f32.xlu0 %v2363
      %v2365 = vpop.xlane.xlu0 %2364
      %v2366 = vsel %vm2308, %v2295, 0.0
      %2367 = vadd.xlane.f32.xlu0 %v2366
      %v2368 = vpop.xlane.xlu0 %2367
      %v2369 = vsel %vm2308, %v2296, 0.0
      %2370 = vadd.xlane.f32.xlu0 %v2369
      %v2371 = vpop.xlane.xlu0 %2370
      %v2372 = vsel %vm2308, %v2297, 0.0
      %2373 = vadd.xlane.f32.xlu0 %v2372
      %v2374 = vpop.xlane.xlu0 %2373
      %v2375 = vsel %vm2308, %v2298, 0.0
      %2376 = vadd.xlane.f32.xlu0 %v2375
      %v2377 = vpop.xlane.xlu0 %2376
      %v2378 = vsel %vm2308, %v2299, 0.0
      %2379 = vadd.xlane.f32.xlu0 %v2378
      %v2380 = vpop.xlane.xlu0 %2379
      %v2381 = vsel %vm2308, %v2300, 0.0
      %2382 = vadd.xlane.f32.xlu0 %v2381
      %v2383 = vpop.xlane.xlu0 %2382
      %v2384 = vsel %vm2308, %v2301, 0.0
      %2385 = vadd.xlane.f32.xlu0 %v2384
      %v2386 = vpop.xlane.xlu0 %2385
      %v2387 = vsel %vm2308, %v2302, 0.0
      %2388 = vadd.xlane.f32.xlu0 %v2387
      %v2389 = vpop.xlane.xlu0 %2388
      %v2390 = vsel %vm2308, %v2303, 0.0
      %2391 = vadd.xlane.f32.xlu0 %v2390
      %v2392 = vpop.xlane.xlu0 %2391
      %v2393 = vsel %vm2308, %v2304, 0.0
      %2394 = vadd.xlane.f32.xlu0 %v2393
      %v2395 = vpop.xlane.xlu0 %2394
      %v2396 = vsel %vm2308, %v2305, 0.0
      %2397 = vadd.xlane.f32.xlu0 %v2396
      %v2398 = vpop.xlane.xlu0 %2397
      %v2399 = vsel %vm2308, %v2306, 0.0
      %2400 = vadd.xlane.f32.xlu0 %v2399
      %v2401 = vpop.xlane.xlu0 %2400
      %v2402 = vsel %vm2308, %v2307, 0.0
      %2403 = vadd.xlane.f32.xlu0 %v2402
      %v2404 = vpop.xlane.xlu0 %2403
      %v2405 = vmax.f32 %v2311, 1.0
      %v2406 = vmax.f32 %v2314, 1.0
      %v2407 = vmax.f32 %v2317, 1.0
      %v2408 = vmax.f32 %v2320, 1.0
      %v2409 = vmax.f32 %v2323, 1.0
      %v2410 = vmax.f32 %v2326, 1.0
      %v2411 = vmax.f32 %v2329, 1.0
      %v2412 = vmax.f32 %v2332, 1.0
      %v2413 = vmax.f32 %v2335, 1.0
      %v2414 = vmax.f32 %v2338, 1.0
      %v2415 = vmax.f32 %v2341, 1.0
      %v2416 = vmax.f32 %v2344, 1.0
      %v2417 = vmax.f32 %v2347, 1.0
      %v2418 = vmax.f32 %v2350, 1.0
      %v2419 = vmax.f32 %v2353, 1.0
      %v2420 = vmax.f32 %v2356, 1.0
      %v2421 = vmax.f32 %v2359, 1.0
      %v2422 = vmax.f32 %v2362, 1.0
      %v2423 = vmax.f32 %v2365, 1.0
      %v2424 = vmax.f32 %v2368, 1.0
      %v2425 = vmax.f32 %v2371, 1.0
      %v2426 = vmax.f32 %v2374, 1.0
      %v2427 = vmax.f32 %v2377, 1.0
      %v2428 = vmax.f32 %v2380, 1.0
      %v2429 = vmax.f32 %v2383, 1.0
      %v2430 = vmax.f32 %v2386, 1.0
      %v2431 = vmax.f32 %v2389, 1.0
      %v2432 = vmax.f32 %v2392, 1.0
      %v2433 = vmax.f32 %v2395, 1.0
      %v2434 = vmax.f32 %v2398, 1.0
      %v2435 = vmax.f32 %v2401, 1.0
      %v2436 = vmax.f32 %v2404, 1.0
      %v2437 = vrcp.pop %v2405
      %v2438 = vrcp.pop %v2406
      %v2439 = vrcp.pop %v2407
      %v2440 = vrcp.pop %v2408
      %v2441 = vrcp.pop %v2409
      %v2442 = vrcp.pop %v2410
      %v2443 = vrcp.pop %v2411
      %v2444 = vrcp.pop %v2412
      %v2445 = vrcp.pop %v2413
      %v2446 = vrcp.pop %v2414
      %v2447 = vrcp.pop %v2415
      %v2448 = vrcp.pop %v2416
      %v2449 = vrcp.pop %v2417
      %v2450 = vrcp.pop %v2418
      %v2451 = vrcp.pop %v2419
      %v2452 = vrcp.pop %v2420
      %v2453 = vrcp.pop %v2421
      %v2454 = vrcp.pop %v2422
      %v2455 = vrcp.pop %v2423
      %v2456 = vrcp.pop %v2424
      %v2457 = vrcp.pop %v2425
      %v2458 = vrcp.pop %v2426
      %v2459 = vrcp.pop %v2427
      %v2460 = vrcp.pop %v2428
      %v2461 = vrcp.pop %v2429
      %v2462 = vrcp.pop %v2430
      %v2463 = vrcp.pop %v2431
      %v2464 = vrcp.pop %v2432
      %v2465 = vrcp.pop %v2433
      %v2466 = vrcp.pop %v2434
      %v2467 = vrcp.pop %v2435
      %v2468 = vrcp.pop %v2436
      %v2469 = vld [vmem:[#allocation2] sm:$0xff]
      %v2470 = vld [vmem:[#allocation2 + $0x8] sm:$0xff]
      %v2471 = vld [vmem:[#allocation2 + $0x10] sm:$0xff]
      %v2472 = vld [vmem:[#allocation2 + $0x18] sm:$0xff]
      %v2473 = vld [vmem:[#allocation2 + $0x20] sm:$0xff]
      %v2474 = vld [vmem:[#allocation2 + $0x28] sm:$0xff]
      %v2475 = vld [vmem:[#allocation2 + $0x30] sm:$0xff]
      %v2476 = vld [vmem:[#allocation2 + $0x38] sm:$0xff]
      %v2477 = vld [vmem:[#allocation2 + $0x40] sm:$0xff]
      %v2478 = vld [vmem:[#allocation2 + $0x48] sm:$0xff]
      %v2479 = vld [vmem:[#allocation2 + $0x50] sm:$0xff]
      %v2480 = vld [vmem:[#allocation2 + $0x58] sm:$0xff]
      %v2481 = vld [vmem:[#allocation2 + $0x60] sm:$0xff]
      %v2482 = vld [vmem:[#allocation2 + $0x68] sm:$0xff]
      %v2483 = vld [vmem:[#allocation2 + $0x70] sm:$0xff]
      %v2484 = vld [vmem:[#allocation2 + $0x78] sm:$0xff]
      %v2485 = vld [vmem:[#allocation2 + $0x80] sm:$0xff]
      %v2486 = vld [vmem:[#allocation2 + $0x88] sm:$0xff]
      %v2487 = vld [vmem:[#allocation2 + $0x90] sm:$0xff]
      %v2488 = vld [vmem:[#allocation2 + $0x98] sm:$0xff]
      %v2489 = vld [vmem:[#allocation2 + $0xa0] sm:$0xff]
      %v2490 = vld [vmem:[#allocation2 + $0xa8] sm:$0xff]
      %v2491 = vld [vmem:[#allocation2 + $0xb0] sm:$0xff]
      %v2492 = vld [vmem:[#allocation2 + $0xb8] sm:$0xff]
      %v2493 = vld [vmem:[#allocation2 + $0xc0] sm:$0xff]
      %v2494 = vld [vmem:[#allocation2 + $0xc8] sm:$0xff]
      %v2495 = vld [vmem:[#allocation2 + $0xd0] sm:$0xff]
      %v2496 = vld [vmem:[#allocation2 + $0xd8] sm:$0xff]
      %v2497 = vld [vmem:[#allocation2 + $0xe0] sm:$0xff]
      %v2498 = vld [vmem:[#allocation2 + $0xe8] sm:$0xff]
      %v2499 = vld [vmem:[#allocation2 + $0xf0] sm:$0xff]
      %v2500 = vld [vmem:[#allocation2 + $0xf8] sm:$0xff]
      %v2501 = vmul.f32 %v2469, %v2437
      %v2502 = vmul.f32 %v2470, %v2438
      %v2503 = vmul.f32 %v2471, %v2439
      %v2504 = vmul.f32 %v2472, %v2440
      %v2505 = vmul.f32 %v2473, %v2441
      %v2506 = vmul.f32 %v2474, %v2442
      %v2507 = vmul.f32 %v2475, %v2443
      %v2508 = vmul.f32 %v2476, %v2444
      %v2509 = vmul.f32 %v2477, %v2445
      %v2510 = vmul.f32 %v2478, %v2446
      %v2511 = vmul.f32 %v2479, %v2447
      %v2512 = vmul.f32 %v2480, %v2448
      %v2513 = vmul.f32 %v2481, %v2449
      %v2514 = vmul.f32 %v2482, %v2450
      %v2515 = vmul.f32 %v2483, %v2451
      %v2516 = vmul.f32 %v2484, %v2452
      %v2517 = vmul.f32 %v2485, %v2453
      %v2518 = vmul.f32 %v2486, %v2454
      %v2519 = vmul.f32 %v2487, %v2455
      %v2520 = vmul.f32 %v2488, %v2456
      %v2521 = vmul.f32 %v2489, %v2457
      %v2522 = vmul.f32 %v2490, %v2458
      %v2523 = vmul.f32 %v2491, %v2459
      %v2524 = vmul.f32 %v2492, %v2460
      %v2525 = vmul.f32 %v2493, %v2461
      %v2526 = vmul.f32 %v2494, %v2462
      %v2527 = vmul.f32 %v2495, %v2463
      %v2528 = vmul.f32 %v2496, %v2464
      %v2529 = vmul.f32 %v2497, %v2465
      %v2530 = vmul.f32 %v2498, %v2466
      %v2531 = vmul.f32 %v2499, %v2467
      %v2532 = vmul.f32 %v2500, %v2468
      %v2533 = vtanh.pop %v2501
      %v2534 = vtanh.pop %v2502
      %v2535 = vtanh.pop %v2503
      %v2536 = vtanh.pop %v2504
      %v2537 = vtanh.pop %v2505
      %v2538 = vtanh.pop %v2506
      %v2539 = vtanh.pop %v2507
      %v2540 = vtanh.pop %v2508
      %v2541 = vtanh.pop %v2509
      %v2542 = vtanh.pop %v2510
      %v2543 = vtanh.pop %v2511
      %v2544 = vtanh.pop %v2512
      %v2545 = vtanh.pop %v2513
      %v2546 = vtanh.pop %v2514
      %v2547 = vtanh.pop %v2515
      %v2548 = vtanh.pop %v2516
      %v2549 = vtanh.pop %v2517
      %v2550 = vtanh.pop %v2518
      %v2551 = vtanh.pop %v2519
      %v2552 = vtanh.pop %v2520
      %v2553 = vtanh.pop %v2521
      %v2554 = vtanh.pop %v2522
      %v2555 = vtanh.pop %v2523
      %v2556 = vtanh.pop %v2524
      %v2557 = vtanh.pop %v2525
      %v2558 = vtanh.pop %v2526
      %v2559 = vtanh.pop %v2527
      %v2560 = vtanh.pop %v2528
      %v2561 = vtanh.pop %v2529
      %v2562 = vtanh.pop %v2530
      %v2563 = vtanh.pop %v2531
      %v2564 = vtanh.pop %v2532
      %v2565 = vld [vmem:[%s2] sm:$0xf]
      %v2566 = vld [vmem:[%s2 + $0x4] sm:$0xf]
      %v2567 = vld [vmem:[%s2 + $0x8] sm:$0xf]
      %v2568 = vld [vmem:[%s2 + $0xc] sm:$0xf]
      %v2569 = vld [vmem:[%s2 + $0x10] sm:$0xf]
      %v2570 = vld [vmem:[%s2 + $0x14] sm:$0xf]
      %v2571 = vld [vmem:[%s2 + $0x18] sm:$0xf]
      %v2572 = vld [vmem:[%s2 + $0x1c] sm:$0xf]
      %v2573 = vld [vmem:[%s2 + $0x20] sm:$0xf]
      %v2574 = vld [vmem:[%s2 + $0x24] sm:$0xf]
      %v2575 = vld [vmem:[%s2 + $0x28] sm:$0xf]
      %v2576 = vld [vmem:[%s2 + $0x2c] sm:$0xf]
      %v2577 = vld [vmem:[%s2 + $0x30] sm:$0xf]
      %v2578 = vld [vmem:[%s2 + $0x34] sm:$0xf]
      %v2579 = vld [vmem:[%s2 + $0x38] sm:$0xf]
      %v2580 = vld [vmem:[%s2 + $0x3c] sm:$0xf]
      %v2581 = vpack.c.bf16 %v2534, %v2533
      %v2582 = vpack.c.bf16 %v2536, %v2535
      %v2583 = vpack.c.bf16 %v2538, %v2537
      %v2584 = vpack.c.bf16 %v2540, %v2539
      %v2585 = vpack.c.bf16 %v2542, %v2541
      %v2586 = vpack.c.bf16 %v2544, %v2543
      %v2587 = vpack.c.bf16 %v2546, %v2545
      %v2588 = vpack.c.bf16 %v2548, %v2547
      %v2589 = vpack.c.bf16 %v2550, %v2549
      %v2590 = vpack.c.bf16 %v2552, %v2551
      %v2591 = vpack.c.bf16 %v2554, %v2553
      %v2592 = vpack.c.bf16 %v2556, %v2555
      %v2593 = vpack.c.bf16 %v2558, %v2557
      %v2594 = vpack.c.bf16 %v2560, %v2559
      %v2595 = vpack.c.bf16 %v2562, %v2561
      %v2596 = vpack.c.bf16 %v2564, %v2563
      %v2613 = vunpack.c.l.b16 %v2565
      %v2614 = vunpack.c.l.b16 %v2566
      %v2615 = vunpack.c.l.b16 %v2567
      %v2616 = vunpack.c.l.b16 %v2568
      %v2617 = vunpack.c.l.b16 %v2569
      %v2618 = vunpack.c.l.b16 %v2570
      %v2619 = vunpack.c.l.b16 %v2571
      %v2620 = vunpack.c.l.b16 %v2572
      %v2621 = vunpack.c.l.b16 %v2573
      %v2622 = vunpack.c.l.b16 %v2574
      %v2623 = vunpack.c.l.b16 %v2575
      %v2624 = vunpack.c.l.b16 %v2576
      %v2625 = vunpack.c.l.b16 %v2577
      %v2626 = vunpack.c.l.b16 %v2578
      %v2627 = vunpack.c.l.b16 %v2579
      %v2628 = vunpack.c.l.b16 %v2580
      %v2629 = vpack.c.b16 %v2614, %v2613
      %v2630 = vpack.c.b16 %v2616, %v2615
      %v2631 = vpack.c.b16 %v2618, %v2617
      %v2632 = vpack.c.b16 %v2620, %v2619
      %v2633 = vpack.c.b16 %v2622, %v2621
      %v2634 = vpack.c.b16 %v2624, %v2623
      %v2635 = vpack.c.b16 %v2626, %v2625
      %v2636 = vpack.c.b16 %v2628, %v2627
      %2645 = vmatpush.bf16.xpose.msra.mxu0 %v2636
      %2646 = vmatpush.bf16.xpose.msra.mxu0 %v2635
      %2647 = vmatpush.bf16.xpose.msra.mxu0 %v2634
      %2648 = vmatpush.bf16.xpose.msra.mxu0 %v2633
      %2649 = vmatpush.bf16.xpose.msra.mxu0 %v2632
      %2650 = vmatpush.bf16.xpose.msra.mxu0 %v2631
      %2651 = vmatpush.bf16.xpose.msra.mxu0 %v2630
      %2652 = vmatpush.bf16.xpose.msra.mxu0 %v2629
      %2653 = vmatmul.bf16.gmra.mxu0 %v2581
      %v2654 = vpop.f32.mrf.mxu0
      %v2655 = vadd.f32 0.0, %v2654
      %v2656 = vpop.f32.mrf.mxu0
      %v2657 = vadd.f32 0.0, %v2656
      %2658 = vmatmul.bf16.gmra.mxu0 %v2582
      %v2659 = vpop.f32.mrf.mxu0
      %v2660 = vadd.f32 0.0, %v2659
      %v2661 = vpop.f32.mrf.mxu0
      %v2662 = vadd.f32 0.0, %v2661
      %2663 = vmatmul.bf16.gmra.mxu0 %v2583
      %v2664 = vpop.f32.mrf.mxu0
      %v2665 = vadd.f32 0.0, %v2664
      %v2666 = vpop.f32.mrf.mxu0
      %v2667 = vadd.f32 0.0, %v2666
      %2668 = vmatmul.bf16.gmra.mxu0 %v2584
      %v2669 = vpop.f32.mrf.mxu0
      %v2670 = vadd.f32 0.0, %v2669
      %v2671 = vpop.f32.mrf.mxu0
      %v2672 = vadd.f32 0.0, %v2671
      %2673 = vmatmul.bf16.gmra.mxu0 %v2585
      %v2674 = vpop.f32.mrf.mxu0
      %v2675 = vadd.f32 0.0, %v2674
      %v2676 = vpop.f32.mrf.mxu0
      %v2677 = vadd.f32 0.0, %v2676
      %2678 = vmatmul.bf16.gmra.mxu0 %v2586
      %v2679 = vpop.f32.mrf.mxu0
      %v2680 = vadd.f32 0.0, %v2679
      %v2681 = vpop.f32.mrf.mxu0
      %v2682 = vadd.f32 0.0, %v2681
      %2683 = vmatmul.bf16.gmra.mxu0 %v2587
      %v2684 = vpop.f32.mrf.mxu0
      %v2685 = vadd.f32 0.0, %v2684
      %v2686 = vpop.f32.mrf.mxu0
      %v2687 = vadd.f32 0.0, %v2686
      %2688 = vmatmul.bf16.gmra.mxu0 %v2588
      %v2689 = vpop.f32.mrf.mxu0
      %v2690 = vadd.f32 0.0, %v2689
      %v2691 = vpop.f32.mrf.mxu0
      %v2692 = vadd.f32 0.0, %v2691
      %2693 = vmatmul.bf16.gmra.mxu0 %v2589
      %v2694 = vpop.f32.mrf.mxu0
      %v2695 = vadd.f32 0.0, %v2694
      %v2696 = vpop.f32.mrf.mxu0
      %v2697 = vadd.f32 0.0, %v2696
      %2698 = vmatmul.bf16.gmra.mxu0 %v2590
      %v2699 = vpop.f32.mrf.mxu0
      %v2700 = vadd.f32 0.0, %v2699
      %v2701 = vpop.f32.mrf.mxu0
      %v2702 = vadd.f32 0.0, %v2701
      %2703 = vmatmul.bf16.gmra.mxu0 %v2591
      %v2704 = vpop.f32.mrf.mxu0
      %v2705 = vadd.f32 0.0, %v2704
      %v2706 = vpop.f32.mrf.mxu0
      %v2707 = vadd.f32 0.0, %v2706
      %2708 = vmatmul.bf16.gmra.mxu0 %v2592
      %v2709 = vpop.f32.mrf.mxu0
      %v2710 = vadd.f32 0.0, %v2709
      %v2711 = vpop.f32.mrf.mxu0
      %v2712 = vadd.f32 0.0, %v2711
      %2713 = vmatmul.bf16.gmra.mxu0 %v2593
      %v2714 = vpop.f32.mrf.mxu0
      %v2715 = vadd.f32 0.0, %v2714
      %v2716 = vpop.f32.mrf.mxu0
      %v2717 = vadd.f32 0.0, %v2716
      %2718 = vmatmul.bf16.gmra.mxu0 %v2594
      %v2719 = vpop.f32.mrf.mxu0
      %v2720 = vadd.f32 0.0, %v2719
      %v2721 = vpop.f32.mrf.mxu0
      %v2722 = vadd.f32 0.0, %v2721
      %2723 = vmatmul.bf16.gmra.mxu0 %v2595
      %v2724 = vpop.f32.mrf.mxu0
      %v2725 = vadd.f32 0.0, %v2724
      %v2726 = vpop.f32.mrf.mxu0
      %v2727 = vadd.f32 0.0, %v2726
      %2728 = vmatmul.bf16.gmra.mxu0 %v2596
      %v2729 = vpop.f32.mrf.mxu0
      %v2730 = vadd.f32 0.0, %v2729
      %v2731 = vpop.f32.mrf.mxu0
      %v2732 = vadd.f32 0.0, %v2731
      %2733 = vdwg.mxu0
      %2734 = vmax.xlane.f32.xlu0 %v2655
      %v2735 = vpop.xlane.xlu0 %2734
      %2736 = vmax.xlane.f32.xlu0 %v2657
      %v2737 = vpop.xlane.xlu0 %2736
      %2738 = vmax.xlane.f32.xlu0 %v2660
      %v2739 = vpop.xlane.xlu0 %2738
      %2740 = vmax.xlane.f32.xlu0 %v2662
      %v2741 = vpop.xlane.xlu0 %2740
      %2742 = vmax.xlane.f32.xlu0 %v2665
      %v2743 = vpop.xlane.xlu0 %2742
      %2744 = vmax.xlane.f32.xlu0 %v2667
      %v2745 = vpop.xlane.xlu0 %2744
      %2746 = vmax.xlane.f32.xlu0 %v2670
      %v2747 = vpop.xlane.xlu0 %2746
      %2748 = vmax.xlane.f32.xlu0 %v2672
      %v2749 = vpop.xlane.xlu0 %2748
      %2750 = vmax.xlane.f32.xlu0 %v2675
      %v2751 = vpop.xlane.xlu0 %2750
      %2752 = vmax.xlane.f32.xlu0 %v2677
      %v2753 = vpop.xlane.xlu0 %2752
      %2754 = vmax.xlane.f32.xlu0 %v2680
      %v2755 = vpop.xlane.xlu0 %2754
      %2756 = vmax.xlane.f32.xlu0 %v2682
      %v2757 = vpop.xlane.xlu0 %2756
      %2758 = vmax.xlane.f32.xlu0 %v2685
      %v2759 = vpop.xlane.xlu0 %2758
      %2760 = vmax.xlane.f32.xlu0 %v2687
      %v2761 = vpop.xlane.xlu0 %2760
      %2762 = vmax.xlane.f32.xlu0 %v2690
      %v2763 = vpop.xlane.xlu0 %2762
      %2764 = vmax.xlane.f32.xlu0 %v2692
      %v2765 = vpop.xlane.xlu0 %2764
      %2766 = vmax.xlane.f32.xlu0 %v2695
      %v2767 = vpop.xlane.xlu0 %2766
      %2768 = vmax.xlane.f32.xlu0 %v2697
      %v2769 = vpop.xlane.xlu0 %2768
      %2770 = vmax.xlane.f32.xlu0 %v2700
      %v2771 = vpop.xlane.xlu0 %2770
      %2772 = vmax.xlane.f32.xlu0 %v2702
      %v2773 = vpop.xlane.xlu0 %2772
      %2774 = vmax.xlane.f32.xlu0 %v2705
      %v2775 = vpop.xlane.xlu0 %2774
      %2776 = vmax.xlane.f32.xlu0 %v2707
      %v2777 = vpop.xlane.xlu0 %2776
      %2778 = vmax.xlane.f32.xlu0 %v2710
      %v2779 = vpop.xlane.xlu0 %2778
      %2780 = vmax.xlane.f32.xlu0 %v2712
      %v2781 = vpop.xlane.xlu0 %2780
      %2782 = vmax.xlane.f32.xlu0 %v2715
      %v2783 = vpop.xlane.xlu0 %2782
      %2784 = vmax.xlane.f32.xlu0 %v2717
      %v2785 = vpop.xlane.xlu0 %2784
      %2786 = vmax.xlane.f32.xlu0 %v2720
      %v2787 = vpop.xlane.xlu0 %2786
      %2788 = vmax.xlane.f32.xlu0 %v2722
      %v2789 = vpop.xlane.xlu0 %2788
      %2790 = vmax.xlane.f32.xlu0 %v2725
      %v2791 = vpop.xlane.xlu0 %2790
      %2792 = vmax.xlane.f32.xlu0 %v2727
      %v2793 = vpop.xlane.xlu0 %2792
      %2794 = vmax.xlane.f32.xlu0 %v2730
      %v2795 = vpop.xlane.xlu0 %2794
      %2796 = vmax.xlane.f32.xlu0 %v2732
      %v2797 = vpop.xlane.xlu0 %2796
      %v2798 = vsub.f32 %v2655, %v2735
      %v2799 = vsub.f32 %v2657, %v2737
      %v2800 = vsub.f32 %v2660, %v2739
      %v2801 = vsub.f32 %v2662, %v2741
      %v2802 = vsub.f32 %v2665, %v2743
      %v2803 = vsub.f32 %v2667, %v2745
      %v2804 = vsub.f32 %v2670, %v2747
      %v2805 = vsub.f32 %v2672, %v2749
      %v2806 = vsub.f32 %v2675, %v2751
      %v2807 = vsub.f32 %v2677, %v2753
      %v2808 = vsub.f32 %v2680, %v2755
      %v2809 = vsub.f32 %v2682, %v2757
      %v2810 = vsub.f32 %v2685, %v2759
      %v2811 = vsub.f32 %v2687, %v2761
      %v2812 = vsub.f32 %v2690, %v2763
      %v2813 = vsub.f32 %v2692, %v2765
      %v2814 = vsub.f32 %v2695, %v2767
      %v2815 = vsub.f32 %v2697, %v2769
      %v2816 = vsub.f32 %v2700, %v2771
      %v2817 = vsub.f32 %v2702, %v2773
      %v2818 = vsub.f32 %v2705, %v2775
      %v2819 = vsub.f32 %v2707, %v2777
      %v2820 = vsub.f32 %v2710, %v2779
      %v2821 = vsub.f32 %v2712, %v2781
      %v2822 = vsub.f32 %v2715, %v2783
      %v2823 = vsub.f32 %v2717, %v2785
      %v2824 = vsub.f32 %v2720, %v2787
      %v2825 = vsub.f32 %v2722, %v2789
      %v2826 = vsub.f32 %v2725, %v2791
      %v2827 = vsub.f32 %v2727, %v2793
      %v2828 = vsub.f32 %v2730, %v2795
      %v2829 = vsub.f32 %v2732, %v2797
      %v2830 = vmul.f32 %v2798, 1.442695
      %v2831 = vpow.pop %v2830
      %v2832 = vmul.f32 %v2799, 1.442695
      %v2833 = vpow.pop %v2832
      %v2834 = vmul.f32 %v2800, 1.442695
      %v2835 = vpow.pop %v2834
      %v2836 = vmul.f32 %v2801, 1.442695
      %v2837 = vpow.pop %v2836
      %v2838 = vmul.f32 %v2802, 1.442695
      %v2839 = vpow.pop %v2838
      %v2840 = vmul.f32 %v2803, 1.442695
      %v2841 = vpow.pop %v2840
      %v2842 = vmul.f32 %v2804, 1.442695
      %v2843 = vpow.pop %v2842
      %v2844 = vmul.f32 %v2805, 1.442695
      %v2845 = vpow.pop %v2844
      %v2846 = vmul.f32 %v2806, 1.442695
      %v2847 = vpow.pop %v2846
      %v2848 = vmul.f32 %v2807, 1.442695
      %v2849 = vpow.pop %v2848
      %v2850 = vmul.f32 %v2808, 1.442695
      %v2851 = vpow.pop %v2850
      %v2852 = vmul.f32 %v2809, 1.442695
      %v2853 = vpow.pop %v2852
      %v2854 = vmul.f32 %v2810, 1.442695
      %v2855 = vpow.pop %v2854
      %v2856 = vmul.f32 %v2811, 1.442695
      %v2857 = vpow.pop %v2856
      %v2858 = vmul.f32 %v2812, 1.442695
      %v2859 = vpow.pop %v2858
      %v2860 = vmul.f32 %v2813, 1.442695
      %v2861 = vpow.pop %v2860
      %v2862 = vmul.f32 %v2814, 1.442695
      %v2863 = vpow.pop %v2862
      %v2864 = vmul.f32 %v2815, 1.442695
      %v2865 = vpow.pop %v2864
      %v2866 = vmul.f32 %v2816, 1.442695
      %v2867 = vpow.pop %v2866
      %v2868 = vmul.f32 %v2817, 1.442695
      %v2869 = vpow.pop %v2868
      %v2870 = vmul.f32 %v2818, 1.442695
      %v2871 = vpow.pop %v2870
      %v2872 = vmul.f32 %v2819, 1.442695
      %v2873 = vpow.pop %v2872
      %v2874 = vmul.f32 %v2820, 1.442695
      %v2875 = vpow.pop %v2874
      %v2876 = vmul.f32 %v2821, 1.442695
      %v2877 = vpow.pop %v2876
      %v2878 = vmul.f32 %v2822, 1.442695
      %v2879 = vpow.pop %v2878
      %v2880 = vmul.f32 %v2823, 1.442695
      %v2881 = vpow.pop %v2880
      %v2882 = vmul.f32 %v2824, 1.442695
      %v2883 = vpow.pop %v2882
      %v2884 = vmul.f32 %v2825, 1.442695
      %v2885 = vpow.pop %v2884
      %v2886 = vmul.f32 %v2826, 1.442695
      %v2887 = vpow.pop %v2886
      %v2888 = vmul.f32 %v2827, 1.442695
      %v2889 = vpow.pop %v2888
      %v2890 = vmul.f32 %v2828, 1.442695
      %v2891 = vpow.pop %v2890
      %v2892 = vmul.f32 %v2829, 1.442695
      %v2893 = vpow.pop %v2892
      %2894 = vadd.xlane.f32.xlu0 %v2831
      %v2895 = vpop.xlane.xlu0 %2894
      %2896 = vadd.xlane.f32.xlu0 %v2833
      %v2897 = vpop.xlane.xlu0 %2896
      %2898 = vadd.xlane.f32.xlu0 %v2835
      %v2899 = vpop.xlane.xlu0 %2898
      %2900 = vadd.xlane.f32.xlu0 %v2837
      %v2901 = vpop.xlane.xlu0 %2900
      %2902 = vadd.xlane.f32.xlu0 %v2839
      %v2903 = vpop.xlane.xlu0 %2902
      %2904 = vadd.xlane.f32.xlu0 %v2841
      %v2905 = vpop.xlane.xlu0 %2904
      %2906 = vadd.xlane.f32.xlu0 %v2843
      %v2907 = vpop.xlane.xlu0 %2906
      %2908 = vadd.xlane.f32.xlu0 %v2845
      %v2909 = vpop.xlane.xlu0 %2908
      %2910 = vadd.xlane.f32.xlu0 %v2847
      %v2911 = vpop.xlane.xlu0 %2910
      %2912 = vadd.xlane.f32.xlu0 %v2849
      %v2913 = vpop.xlane.xlu0 %2912
      %2914 = vadd.xlane.f32.xlu0 %v2851
      %v2915 = vpop.xlane.xlu0 %2914
      %2916 = vadd.xlane.f32.xlu0 %v2853
      %v2917 = vpop.xlane.xlu0 %2916
      %2918 = vadd.xlane.f32.xlu0 %v2855
      %v2919 = vpop.xlane.xlu0 %2918
      %2920 = vadd.xlane.f32.xlu0 %v2857
      %v2921 = vpop.xlane.xlu0 %2920
      %2922 = vadd.xlane.f32.xlu0 %v2859
      %v2923 = vpop.xlane.xlu0 %2922
      %2924 = vadd.xlane.f32.xlu0 %v2861
      %v2925 = vpop.xlane.xlu0 %2924
      %2926 = vadd.xlane.f32.xlu0 %v2863
      %v2927 = vpop.xlane.xlu0 %2926
      %2928 = vadd.xlane.f32.xlu0 %v2865
      %v2929 = vpop.xlane.xlu0 %2928
      %2930 = vadd.xlane.f32.xlu0 %v2867
      %v2931 = vpop.xlane.xlu0 %2930
      %2932 = vadd.xlane.f32.xlu0 %v2869
      %v2933 = vpop.xlane.xlu0 %2932
      %2934 = vadd.xlane.f32.xlu0 %v2871
      %v2935 = vpop.xlane.xlu0 %2934
      %2936 = vadd.xlane.f32.xlu0 %v2873
      %v2937 = vpop.xlane.xlu0 %2936
      %2938 = vadd.xlane.f32.xlu0 %v2875
      %v2939 = vpop.xlane.xlu0 %2938
      %2940 = vadd.xlane.f32.xlu0 %v2877
      %v2941 = vpop.xlane.xlu0 %2940
      %2942 = vadd.xlane.f32.xlu0 %v2879
      %v2943 = vpop.xlane.xlu0 %2942
      %2944 = vadd.xlane.f32.xlu0 %v2881
      %v2945 = vpop.xlane.xlu0 %2944
      %2946 = vadd.xlane.f32.xlu0 %v2883
      %v2947 = vpop.xlane.xlu0 %2946
      %2948 = vadd.xlane.f32.xlu0 %v2885
      %v2949 = vpop.xlane.xlu0 %2948
      %2950 = vadd.xlane.f32.xlu0 %v2887
      %v2951 = vpop.xlane.xlu0 %2950
      %2952 = vadd.xlane.f32.xlu0 %v2889
      %v2953 = vpop.xlane.xlu0 %2952
      %2954 = vadd.xlane.f32.xlu0 %v2891
      %v2955 = vpop.xlane.xlu0 %2954
      %2956 = vadd.xlane.f32.xlu0 %v2893
      %v2957 = vpop.xlane.xlu0 %2956
      %v2958 = vrcp.pop %v2895
      %v2959 = vrcp.pop %v2897
      %v2960 = vrcp.pop %v2899
      %v2961 = vrcp.pop %v2901
      %v2962 = vrcp.pop %v2903
      %v2963 = vrcp.pop %v2905
      %v2964 = vrcp.pop %v2907
      %v2965 = vrcp.pop %v2909
      %v2966 = vrcp.pop %v2911
      %v2967 = vrcp.pop %v2913
      %v2968 = vrcp.pop %v2915
      %v2969 = vrcp.pop %v2917
      %v2970 = vrcp.pop %v2919
      %v2971 = vrcp.pop %v2921
      %v2972 = vrcp.pop %v2923
      %v2973 = vrcp.pop %v2925
      %v2974 = vrcp.pop %v2927
      %v2975 = vrcp.pop %v2929
      %v2976 = vrcp.pop %v2931
      %v2977 = vrcp.pop %v2933
      %v2978 = vrcp.pop %v2935
      %v2979 = vrcp.pop %v2937
      %v2980 = vrcp.pop %v2939
      %v2981 = vrcp.pop %v2941
      %v2982 = vrcp.pop %v2943
      %v2983 = vrcp.pop %v2945
      %v2984 = vrcp.pop %v2947
      %v2985 = vrcp.pop %v2949
      %v2986 = vrcp.pop %v2951
      %v2987 = vrcp.pop %v2953
      %v2988 = vrcp.pop %v2955
      %v2989 = vrcp.pop %v2957
      %v2990 = vmul.f32 %v2831, %v2958
      %v2991 = vmul.f32 %v2833, %v2959
      %v2992 = vmul.f32 %v2835, %v2960
      %v2993 = vmul.f32 %v2837, %v2961
      %v2994 = vmul.f32 %v2839, %v2962
      %v2995 = vmul.f32 %v2841, %v2963
      %v2996 = vmul.f32 %v2843, %v2964
      %v2997 = vmul.f32 %v2845, %v2965
      %v2998 = vmul.f32 %v2847, %v2966
      %v2999 = vmul.f32 %v2849, %v2967
      %v3000 = vmul.f32 %v2851, %v2968
      %v3001 = vmul.f32 %v2853, %v2969
      %v3002 = vmul.f32 %v2855, %v2970
      %v3003 = vmul.f32 %v2857, %v2971
      %v3004 = vmul.f32 %v2859, %v2972
      %v3005 = vmul.f32 %v2861, %v2973
      %v3006 = vmul.f32 %v2863, %v2974
      %v3007 = vmul.f32 %v2865, %v2975
      %v3008 = vmul.f32 %v2867, %v2976
      %v3009 = vmul.f32 %v2869, %v2977
      %v3010 = vmul.f32 %v2871, %v2978
      %v3011 = vmul.f32 %v2873, %v2979
      %v3012 = vmul.f32 %v2875, %v2980
      %v3013 = vmul.f32 %v2877, %v2981
      %v3014 = vmul.f32 %v2879, %v2982
      %v3015 = vmul.f32 %v2881, %v2983
      %v3016 = vmul.f32 %v2883, %v2984
      %v3017 = vmul.f32 %v2885, %v2985
      %v3018 = vmul.f32 %v2887, %v2986
      %v3019 = vmul.f32 %v2889, %v2987
      %v3020 = vmul.f32 %v2891, %v2988
      %v3021 = vmul.f32 %v2893, %v2989
      %v3022 = vpack.c.bf16 %v2991, %v2990
      %v3023 = vpack.c.bf16 %v2993, %v2992
      %v3024 = vpack.c.bf16 %v2995, %v2994
      %v3025 = vpack.c.bf16 %v2997, %v2996
      %v3026 = vpack.c.bf16 %v2999, %v2998
      %v3027 = vpack.c.bf16 %v3001, %v3000
      %v3028 = vpack.c.bf16 %v3003, %v3002
      %v3029 = vpack.c.bf16 %v3005, %v3004
      %v3030 = vpack.c.bf16 %v3007, %v3006
      %v3031 = vpack.c.bf16 %v3009, %v3008
      %v3032 = vpack.c.bf16 %v3011, %v3010
      %v3033 = vpack.c.bf16 %v3013, %v3012
      %v3034 = vpack.c.bf16 %v3015, %v3014
      %v3035 = vpack.c.bf16 %v3017, %v3016
      %v3036 = vpack.c.bf16 %v3019, %v3018
      %v3037 = vpack.c.bf16 %v3021, %v3020
      %3038 = vmatpush.bf16.msra.mxu0 %v2636
      %3039 = vmatpush.bf16.msra.mxu0 %v2635
      %3040 = vmatpush.bf16.msra.mxu0 %v2634
      %3041 = vmatpush.bf16.msra.mxu0 %v2633
      %3042 = vmatpush.bf16.msra.mxu0 %v2632
      %3043 = vmatpush.bf16.msra.mxu0 %v2631
      %3044 = vmatpush.bf16.msra.mxu0 %v2630
      %3045 = vmatpush.bf16.msra.mxu0 %v2629
      %3046 = vmatmul.bf16.gmra.mxu0 %v3022
      %v3047 = vpop.f32.mrf.mxu0
      %v3048 = vadd.f32 0.0, %v3047
      %v3049 = vpop.f32.mrf.mxu0
      %v3050 = vadd.f32 0.0, %v3049
      %3051 = vmatmul.bf16.gmra.mxu0 %v3023
      %v3052 = vpop.f32.mrf.mxu0
      %v3053 = vadd.f32 0.0, %v3052
      %v3054 = vpop.f32.mrf.mxu0
      %v3055 = vadd.f32 0.0, %v3054
      %3056 = vmatmul.bf16.gmra.mxu0 %v3024
      %v3057 = vpop.f32.mrf.mxu0
      %v3058 = vadd.f32 0.0, %v3057
      %v3059 = vpop.f32.mrf.mxu0
      %v3060 = vadd.f32 0.0, %v3059
      %3061 = vmatmul.bf16.gmra.mxu0 %v3025
      %v3062 = vpop.f32.mrf.mxu0
      %v3063 = vadd.f32 0.0, %v3062
      %v3064 = vpop.f32.mrf.mxu0
      %v3065 = vadd.f32 0.0, %v3064
      %3066 = vmatmul.bf16.gmra.mxu0 %v3026
      %v3067 = vpop.f32.mrf.mxu0
      %v3068 = vadd.f32 0.0, %v3067
      %v3069 = vpop.f32.mrf.mxu0
      %v3070 = vadd.f32 0.0, %v3069
      %3071 = vmatmul.bf16.gmra.mxu0 %v3027
      %v3072 = vpop.f32.mrf.mxu0
      %v3073 = vadd.f32 0.0, %v3072
      %v3074 = vpop.f32.mrf.mxu0
      %v3075 = vadd.f32 0.0, %v3074
      %3076 = vmatmul.bf16.gmra.mxu0 %v3028
      %v3077 = vpop.f32.mrf.mxu0
      %v3078 = vadd.f32 0.0, %v3077
      %v3079 = vpop.f32.mrf.mxu0
      %v3080 = vadd.f32 0.0, %v3079
      %3081 = vmatmul.bf16.gmra.mxu0 %v3029
      %v3082 = vpop.f32.mrf.mxu0
      %v3083 = vadd.f32 0.0, %v3082
      %v3084 = vpop.f32.mrf.mxu0
      %v3085 = vadd.f32 0.0, %v3084
      %3086 = vmatmul.bf16.gmra.mxu0 %v3030
      %v3087 = vpop.f32.mrf.mxu0
      %v3088 = vadd.f32 0.0, %v3087
      %v3089 = vpop.f32.mrf.mxu0
      %v3090 = vadd.f32 0.0, %v3089
      %3091 = vmatmul.bf16.gmra.mxu0 %v3031
      %v3092 = vpop.f32.mrf.mxu0
      %v3093 = vadd.f32 0.0, %v3092
      %v3094 = vpop.f32.mrf.mxu0
      %v3095 = vadd.f32 0.0, %v3094
      %3096 = vmatmul.bf16.gmra.mxu0 %v3032
      %v3097 = vpop.f32.mrf.mxu0
      %v3098 = vadd.f32 0.0, %v3097
      %v3099 = vpop.f32.mrf.mxu0
      %v3100 = vadd.f32 0.0, %v3099
      %3101 = vmatmul.bf16.gmra.mxu0 %v3033
      %v3102 = vpop.f32.mrf.mxu0
      %v3103 = vadd.f32 0.0, %v3102
      %v3104 = vpop.f32.mrf.mxu0
      %v3105 = vadd.f32 0.0, %v3104
      %3106 = vmatmul.bf16.gmra.mxu0 %v3034
      %v3107 = vpop.f32.mrf.mxu0
      %v3108 = vadd.f32 0.0, %v3107
      %v3109 = vpop.f32.mrf.mxu0
      %v3110 = vadd.f32 0.0, %v3109
      %3111 = vmatmul.bf16.gmra.mxu0 %v3035
      %v3112 = vpop.f32.mrf.mxu0
      %v3113 = vadd.f32 0.0, %v3112
      %v3114 = vpop.f32.mrf.mxu0
      %v3115 = vadd.f32 0.0, %v3114
      %3116 = vmatmul.bf16.gmra.mxu0 %v3036
      %v3117 = vpop.f32.mrf.mxu0
      %v3118 = vadd.f32 0.0, %v3117
      %v3119 = vpop.f32.mrf.mxu0
      %v3120 = vadd.f32 0.0, %v3119
      %3121 = vmatmul.bf16.gmra.mxu0 %v3037
      %v3122 = vpop.f32.mrf.mxu0
      %v3123 = vadd.f32 0.0, %v3122
      %v3124 = vpop.f32.mrf.mxu0
      %v3125 = vadd.f32 0.0, %v3124
      %3126 = vdwg.mxu0
      %v3127 = vadd.f32 %v2533, %v3048
      %v3128 = vadd.f32 %v2534, %v3050
      %v3129 = vadd.f32 %v2535, %v3053
      %v3130 = vadd.f32 %v2536, %v3055
      %v3131 = vadd.f32 %v2537, %v3058
      %v3132 = vadd.f32 %v2538, %v3060
      %v3133 = vadd.f32 %v2539, %v3063
      %v3134 = vadd.f32 %v2540, %v3065
      %v3135 = vadd.f32 %v2541, %v3068
      %v3136 = vadd.f32 %v2542, %v3070
      %v3137 = vadd.f32 %v2543, %v3073
      %v3138 = vadd.f32 %v2544, %v3075
      %v3139 = vadd.f32 %v2545, %v3078
      %v3140 = vadd.f32 %v2546, %v3080
      %v3141 = vadd.f32 %v2547, %v3083
      %v3142 = vadd.f32 %v2548, %v3085
      %v3143 = vadd.f32 %v2549, %v3088
      %v3144 = vadd.f32 %v2550, %v3090
      %v3145 = vadd.f32 %v2551, %v3093
      %v3146 = vadd.f32 %v2552, %v3095
      %v3147 = vadd.f32 %v2553, %v3098
      %v3148 = vadd.f32 %v2554, %v3100
      %v3149 = vadd.f32 %v2555, %v3103
      %v3150 = vadd.f32 %v2556, %v3105
      %v3151 = vadd.f32 %v2557, %v3108
      %v3152 = vadd.f32 %v2558, %v3110
      %v3153 = vadd.f32 %v2559, %v3113
      %v3154 = vadd.f32 %v2560, %v3115
      %v3155 = vadd.f32 %v2561, %v3118
      %v3156 = vadd.f32 %v2562, %v3120
      %v3157 = vadd.f32 %v2563, %v3123
      %v3158 = vadd.f32 %v2564, %v3125
      %3159 = vst [vmem:[#allocation3] sm:$0xff] %v3127
      %3160 = vst [vmem:[#allocation3 + $0x8] sm:$0xff] %v3128
      %3161 = vst [vmem:[#allocation3 + $0x10] sm:$0xff] %v3129
      %3162 = vst [vmem:[#allocation3 + $0x18] sm:$0xff] %v3130
      %3163 = vst [vmem:[#allocation3 + $0x20] sm:$0xff] %v3131
      %3164 = vst [vmem:[#allocation3 + $0x28] sm:$0xff] %v3132
      %3165 = vst [vmem:[#allocation3 + $0x30] sm:$0xff] %v3133
      %3166 = vst [vmem:[#allocation3 + $0x38] sm:$0xff] %v3134
      %3167 = vst [vmem:[#allocation3 + $0x40] sm:$0xff] %v3135
      %3168 = vst [vmem:[#allocation3 + $0x48] sm:$0xff] %v3136
      %3169 = vst [vmem:[#allocation3 + $0x50] sm:$0xff] %v3137
      %3170 = vst [vmem:[#allocation3 + $0x58] sm:$0xff] %v3138
      %3171 = vst [vmem:[#allocation3 + $0x60] sm:$0xff] %v3139
      %3172 = vst [vmem:[#allocation3 + $0x68] sm:$0xff] %v3140
      %3173 = vst [vmem:[#allocation3 + $0x70] sm:$0xff] %v3141
      %3174 = vst [vmem:[#allocation3 + $0x78] sm:$0xff] %v3142
      %3175 = vst [vmem:[#allocation3 + $0x80] sm:$0xff] %v3143
      %3176 = vst [vmem:[#allocation3 + $0x88] sm:$0xff] %v3144
      %3177 = vst [vmem:[#allocation3 + $0x90] sm:$0xff] %v3145
      %3178 = vst [vmem:[#allocation3 + $0x98] sm:$0xff] %v3146
      %3179 = vst [vmem:[#allocation3 + $0xa0] sm:$0xff] %v3147
      %3180 = vst [vmem:[#allocation3 + $0xa8] sm:$0xff] %v3148
      %3181 = vst [vmem:[#allocation3 + $0xb0] sm:$0xff] %v3149
      %3182 = vst [vmem:[#allocation3 + $0xb8] sm:$0xff] %v3150
      %3183 = vst [vmem:[#allocation3 + $0xc0] sm:$0xff] %v3151
      %3184 = vst [vmem:[#allocation3 + $0xc8] sm:$0xff] %v3152
      %3185 = vst [vmem:[#allocation3 + $0xd0] sm:$0xff] %v3153
      %3186 = vst [vmem:[#allocation3 + $0xd8] sm:$0xff] %v3154
      %3187 = vst [vmem:[#allocation3 + $0xe0] sm:$0xff] %v3155
      %3188 = vst [vmem:[#allocation3 + $0xe8] sm:$0xff] %v3156
      %3189 = vst [vmem:[#allocation3 + $0xf0] sm:$0xff] %v3157
      %3190 = vst [vmem:[#allocation3 + $0xf8] sm:$0xff] %v3158
    $region21: #{tpu_custom_call.1} parent=1 // pred_fallthru
      _
    // Predicated region
    $region22: #{tpu_custom_call.1} parent=1 // pred_check
      _
    $region23: #{tpu_custom_call.1} parent=1 // pred_check_branch
      %3192 = sbr.rel (0) target = $region25
    $region24: #{tpu_custom_call.1} parent=1 // pred_region
      %3194 = vsyncadd [#allocation4], 0
      %s3195 = sshll.u32 [#allocation3], 4
      %s3196 = int_to_ptr.vmem [resolvable:$true] %s3195
      %s3197 = sshll.u32 %s3, 4
      %s3198 = int_to_ptr.hbm [resolvable:$true] %s3197
      %3203 = dma.vmem_to_hbm [thread:$0]  %s3196, 4096, %s3198, [#allocation4], 128, 128, 8
    $region25: #{tpu_custom_call.1} parent=1 // pred_fallthru
      _
    // Predicated region
    $region26: #{tpu_custom_call.1} parent=1 // pred_check
      _
    $region27: #{tpu_custom_call.1} parent=1 // pred_check_branch
      %3205 = sbr.rel (0) target = $region29
    $region28: #{tpu_custom_call.1} parent=1 // pred_region
      %3207 = dma.done [#allocation4], 4096
    $region29: #{tpu_custom_call.1} parent=1 // pred_fallthru
      _
    %3208 = vsyncpa [#allocation4], 1

</llo_original>
